<compile_context>
chip_gen: v7x
topology: tpu7x:2x2x1
jax: 0.10.0
libtpu: 0.0.40
codegen_flags: <defaults>
</compile_context>

<pallas_src>
import functools

import numpy as np
import jax
import jax.numpy as jnp
from jax.experimental import pallas as pl
from jax.experimental.pallas import tpu as pltpu

LANE = 128
GN_EPS = 1e-6       # GroupNorm eps used by Normalize()
LN_EPS = 1e-5       # nn.LayerNorm default eps
NEG_BIG = -1e30     # finite additive key-mask -> online softmax stays NaN-free
VMEM_LIMIT = 64 * 1024 * 1024   # <= v7x physical VMEM; well under v5e/v6e's 128 MiB


def _round_up(a, b):
  return ((a + b - 1) // b) * b


def _layernorm(t, g_ref, b_ref):
  mu = jnp.mean(t, axis=-1, keepdims=True)
  tc = t - mu
  v = jnp.mean(tc * tc, axis=-1, keepdims=True)
  return tc * jax.lax.rsqrt(v + LN_EPS) * g_ref[...] + b_ref[...]


# --------------------------------------------------------------------------------------
# Pass 1 (grid=(B,)): GroupNorm -> proj_in -> LN1 -> self-attn K/V and cross-attn K/V.
# --------------------------------------------------------------------------------------
def _prologue_kernel(x_ref, ctx_ref, pool_ref, gn_g_ref, gn_b_ref,
                     w_in_ref, b_in_ref, ln1_g_ref, ln1_b_ref,
                     wk1_ref, wv1_ref, wk2_ref, wv2_ref,
                     h0_ref, k1_ref, v1_ref, kc_ref, vc_ref,
                     *, n_valid, mxu_dtype):
  f32 = jnp.float32
  x = x_ref[...]                                   # (Np, Cp) f32; pad rows/lanes are exact zeros

  # GroupNorm(32, eps=1e-6): two-pass centered group statistics via a pooling matrix.
  s1 = jnp.sum(x, axis=0, keepdims=True)                                  # (1, Cp) column sums
  mean = jnp.dot(s1, pool_ref[...], preferred_element_type=f32)           # per-channel group mean
  xc = x - mean
  if x.shape[0] != n_valid:                        # padded rows: x==0 but x-mean != 0 -> mask them
    rows = jax.lax.broadcasted_iota(jnp.int32, (x.shape[0], 1), 0)
    xc = jnp.where(rows < n_valid, xc, 0.0)
  s2 = jnp.sum(xc * xc, axis=0, keepdims=True)
  var = jnp.dot(s2, pool_ref[...], preferred_element_type=f32)            # biased group variance
  xn = xc * jax.lax.rsqrt(var + GN_EPS) * gn_g_ref[...] + gn_b_ref[...]   # pad lanes stay 0

  # proj_in: 1x1 conv == per-token Linear (Cp -> inner); pad rows of W are zero.
  h0 = jnp.dot(xn.astype(mxu_dtype), w_in_ref[...],
               preferred_element_type=f32) + b_in_ref[...]
  h0_ref[...] = h0

  # LN1 + fused K/V projections for the self-attention (stored bf16, used by every q-tile).
  n1 = _layernorm(h0, ln1_g_ref, ln1_b_ref).astype(mxu_dtype)
  k1_ref[...] = jnp.dot(n1, wk1_ref[...], preferred_element_type=f32).astype(k1_ref.dtype)
  v1_ref[...] = jnp.dot(n1, wv1_ref[...], preferred_element_type=f32).astype(v1_ref.dtype)

  # Cross-attention K/V from the (row-padded) context; pad rows are zero and masked later.
  ctx = ctx_ref[...].astype(mxu_dtype)
  kc_ref[...] = jnp.dot(ctx, wk2_ref[...], preferred_element_type=f32).astype(kc_ref.dtype)
  vc_ref[...] = jnp.dot(ctx, wv2_ref[...], preferred_element_type=f32).astype(vc_ref.dtype)


# --------------------------------------------------------------------------------------
# Pass 2 (grid=(B, N//tq), both parallel): per q-tile transformer block + proj_out + residual.
# --------------------------------------------------------------------------------------
def _block_kernel(x_ref, h0_ref, k1_ref, v1_ref, kc_ref, vc_ref,
                  ln1_g_ref, ln1_b_ref, wq1_ref, wo1_ref, bo1_ref,
                  ln2_g_ref, ln2_b_ref, wq2_ref, wo2_ref, bo2_ref,
                  ln3_g_ref, ln3_b_ref, w_ff1_ref, b_ff1_ref, w_ff2_ref, b_ff2_ref,
                  w_out_ref, b_out_ref,
                  o_ref,
                  o_scr,
                  *, heads, dim_head, ff_inner, n_valid, m_valid, tkv, mxu_dtype):
  f32 = jnp.float32
  h = h0_ref[...]                                   # (tq, inner) f32
  tq = h.shape[0]
  n_keys = k1_ref.shape[0]                          # Np (padded sequence length)
  n_kv = n_keys // tkv
  dn = (((1,), (1,)), ((), ()))                     # contract last dims (no materialized k.T)

  # TODO(synk): optional boolean attention mask (masked_fill with -finfo.max) not wired; this
  # is the mask=None path — the only one SpatialTransformer ever uses.

  # ---------------- attn1: self-attention, KV-tiled online softmax (flash) ----------------
  n1 = _layernorm(h, ln1_g_ref, ln1_b_ref)
  q1 = jnp.dot(n1.astype(mxu_dtype), wq1_ref[...],            # softmax scale folded into Wq
               preferred_element_type=f32).astype(mxu_dtype)  # cast ONCE for all heads
  for hh in range(heads):                                      # static -> static scratch offsets
    lo = hh * dim_head
    qh = q1[:, lo:lo + dim_head]

    def kv_step(t, carry):
      m_i, l_i, acc = carry
      start = pl.multiple_of(t * tkv, tkv)
      kt = k1_ref[pl.ds(start, tkv), lo:lo + dim_head]         # (tkv, d) bf16
      vt = v1_ref[pl.ds(start, tkv), lo:lo + dim_head]
      s = jax.lax.dot_general(qh, kt, dn, preferred_element_type=f32)   # (tq, tkv)
      if n_keys != n_valid:                                    # mask padded key rows
        key_id = jax.lax.broadcasted_iota(jnp.int32, (1, tkv), 1) + start
        s = s + jnp.where(key_id < n_valid, 0.0, NEG_BIG)
      m_new = jnp.maximum(m_i, jnp.max(s, axis=-1, keepdims=True))
      alpha = jnp.exp(m_i - m_new)
      p = jnp.exp(s - m_new)
      l_new = alpha * l_i + jnp.sum(p, axis=-1, keepdims=True)
      acc_new = alpha * acc + jnp.dot(p.astype(mxu_dtype), vt, preferred_element_type=f32)
      return m_new, l_new, acc_new

    _, l_f, acc_f = jax.lax.fori_loop(                          # loop boundary bounds live ranges
        0, n_kv, kv_step,
        (jnp.full((tq, 1), -jnp.inf, f32), jnp.zeros((tq, 1), f32),
         jnp.zeros((tq, dim_head), f32)))
    o_scr[:, lo:lo + dim_head] = (
        acc_f * pl.reciprocal(l_f, approx=True)).astype(o_scr.dtype)

  # single fused to_out projection: (tq, H*d) @ (H*d, inner)
  h = h + jnp.dot(o_scr[...], wo1_ref[...], preferred_element_type=f32) + bo1_ref[...]

  # ---------------- attn2: cross-attention over the lane-dense padded context ----------------
  n2 = _layernorm(h, ln2_g_ref, ln2_b_ref)
  q2 = jnp.dot(n2.astype(mxu_dtype), wq2_ref[...],
               preferred_element_type=f32).astype(mxu_dtype)
  m_keys = kc_ref.shape[0]
  ctx_bias = None
  if m_keys != m_valid:
    ctx_bias = jnp.where(
        jax.lax.broadcasted_iota(jnp.int32, (1, m_keys), 1) < m_valid, 0.0, NEG_BIG)
  for hh in range(heads):
    lo = hh * dim_head
    qh = q2[:, lo:lo + dim_head]
    kh = kc_ref[:, lo:lo + dim_head]                            # (Mp, d) bf16, fully resident
    vh = vc_ref[:, lo:lo + dim_head]
    s = jax.lax.dot_general(qh, kh, dn, preferred_element_type=f32)      # (tq, Mp)
    if ctx_bias is not None:
      s = s + ctx_bias
    s = s - jnp.max(s, axis=-1, keepdims=True)
    p = jnp.exp(s)
    p = p * pl.reciprocal(jnp.sum(p, axis=-1, keepdims=True), approx=True)
    o_scr[:, lo:lo + dim_head] = jnp.dot(
        p.astype(mxu_dtype), vh, preferred_element_type=f32).astype(o_scr.dtype)
  h = h + jnp.dot(o_scr[...], wo2_ref[...], preferred_element_type=f32) + bo2_ref[...]

  # ---------------- GEGLU feed-forward, tiled over the q axis ----------------
  n3 = _layernorm(h, ln3_g_ref, ln3_b_ref)
  g = jnp.dot(n3.astype(mxu_dtype), w_ff1_ref[...],
              preferred_element_type=f32) + b_ff1_ref[...]               # (tq, 2*ffi)
  a, gate = g[:, :ff_inner], g[:, ff_inner:]
  # TODO(synk): PyTorch F.gelu defaults to the exact erf form; tanh approximation used here
  # (difference < 1e-3 absolute).
  ff = a * jax.nn.gelu(gate, approximate=True)
  h = h + jnp.dot(ff.astype(mxu_dtype), w_ff2_ref[...],
                  preferred_element_type=f32) + b_ff2_ref[...]

  # ---------------- proj_out (1x1 conv) + image residual; lane-dense full-width store ----------
  y = jnp.dot(h.astype(mxu_dtype), w_out_ref[...],
              preferred_element_type=f32) + b_out_ref[...] + x_ref[...]
  o_ref[...] = y.astype(o_ref.dtype)


# --------------------------------------------------------------------------------------
# Wrapper
# --------------------------------------------------------------------------------------
def spatial_transformer_forward(x_img, context, params, *, heads, dim_head, n_groups=32,
                                tq=None, tkv=None, mxu_dtype=jnp.bfloat16):
  """x_img: (B, C, H, W); context: (B, M, Dc).
  Weights are in y = x @ W orientation (transposed vs. the PyTorch .weight tensors).
  Only dims == 2 is wired; dims == 3 differs only in the wrapper-side spatial flatten."""
  f32 = jnp.float32
  B, C, Hh, Ww = x_img.shape
  N = Hh * Ww
  inner = heads * dim_head
  ff_inner = params["w_ff2"].shape[0]
  M, Dc = context.shape[1], context.shape[2]
  Cp = _round_up(C, LANE)                 # channel dim padded to a lane multiple
  Mp = _round_up(M, LANE)                 # context length padded to a lane multiple (item: lane-dense)
  if tq is None:                          # q-row tile: 256 fits v7x's 64 MiB budget at real shapes
    tq = min(256, _round_up(N, 8))
  tq = _round_up(tq, 8)
  Np = _round_up(N, tq)                   # padded sequence length
  if tkv is None:
    tkv = min(256, Np)
  assert Np % tq == 0 and Np % tkv == 0, "q/kv tiles must divide the padded sequence length"
  scale = float(dim_head) ** -0.5

  # ---- layout prep: b c h w -> b (h w) c, zero-padded to (Np rows, Cp lanes) ----
  x_tok = x_img.astype(f32).transpose(0, 2, 3, 1).reshape(B, N, C)
  x_tok = jnp.pad(x_tok, [(0, 0), (0, Np - N), (0, Cp - C)])
  ctx_p = jnp.pad(context.astype(f32), [(0, 0), (0, Mp - M), (0, 0)])

  # GroupNorm pooling matrix: (row_sums @ pool)[c] = group mean of channel c; 0 for pad lanes.
  cg = C // n_groups
  ids = np.arange(Cp)
  grp = np.where(ids < C, ids // cg, -1)
  pool = ((grp[:, None] == grp[None, :]) & (grp[:, None] >= 0)).astype(np.float32)
  pool = jnp.asarray(pool / float(N * cg))

  pad_c = [(0, 0), (0, Cp - C)]
  row = lambda v: v.reshape(1, -1).astype(f32)
  mx = lambda w: w.astype(mxu_dtype)       # bf16 MXU operands; f32 accumulation in-kernel

  gn_g = jnp.pad(row(params["gn_gamma"]), pad_c)
  gn_b = jnp.pad(row(params["gn_beta"]), pad_c)
  w_in = mx(jnp.pad(params["w_in"], [(0, Cp - C), (0, 0)]))
  w_out = mx(jnp.pad(params["w_out"], [(0, 0), (0, Cp - C)]))
  b_out = jnp.pad(row(params["b_out"]), pad_c)
  ln1_g, ln1_b = row(params["ln1_g"]), row(params["ln1_b"])

  def const_spec(arr):
    zeros = (0,) * arr.ndim
    return pl.BlockSpec(arr.shape, lambda *_a, _z=zeros: _z)

  # ---------------- pass 1: GroupNorm + proj_in + LN1 + K/V projections ----------------
  pro_ops = [x_tok, ctx_p, pool, gn_g, gn_b, w_in, row(params["b_in"]), ln1_g, ln1_b,
             mx(params["wk1"]), mx(params["wv1"]), mx(params["wk2"]), mx(params["wv2"])]
  pro_specs = ([pl.BlockSpec((None, Np, Cp), lambda b: (b, 0, 0)),
                pl.BlockSpec((None, Mp, Dc), lambda b: (b, 0, 0))]
               + [const_spec(a) for a in pro_ops[2:]])
  seq_out = lambda rows: pl.BlockSpec((None, rows, inner), lambda b: (b, 0, 0))

  h0, k1, v1, kc, vc = pl.pallas_call(
      functools.partial(_prologue_kernel, n_valid=N, mxu_dtype=mxu_dtype),
      out_shape=(jax.ShapeDtypeStruct((B, Np, inner), f32),
                 jax.ShapeDtypeStruct((B, Np, inner), mxu_dtype),
                 jax.ShapeDtypeStruct((B, Np, inner), mxu_dtype),
                 jax.ShapeDtypeStruct((B, Mp, inner), mxu_dtype),
                 jax.ShapeDtypeStruct((B, Mp, inner), mxu_dtype)),
      grid_spec=pltpu.PrefetchScalarGridSpec(
          num_scalar_prefetch=0, grid=(B,),
          in_specs=pro_specs,
          out_specs=(seq_out(Np), seq_out(Np), seq_out(Np), seq_out(Mp), seq_out(Mp))),
      compiler_params=pltpu.CompilerParams(
          dimension_semantics=("parallel",), vmem_limit_bytes=VMEM_LIMIT),
  )(*pro_ops)

  # ---------------- pass 2: q-tiled transformer block + proj_out + residual ----------------
  main_ops = [
      x_tok, h0, k1, v1, kc, vc,
      ln1_g, ln1_b, mx(params["wq1"] * scale), mx(params["wo1"]), row(params["bo1"]),
      row(params["ln2_g"]), row(params["ln2_b"]),
      mx(params["wq2"] * scale), mx(params["wo2"]), row(params["bo2"]),
      row(params["ln3_g"]), row(params["ln3_b"]),
      mx(params["w_ff1"]), row(params["b_ff1"]), mx(params["w_ff2"]), row(params["b_ff2"]),
      w_out, b_out,
  ]

  def q_tiled(arr):
    return pl.BlockSpec((None, tq, arr.shape[-1]), lambda b, q: (b, q, 0))

  def per_batch(arr):
    return pl.BlockSpec((None,) + arr.shape[1:], lambda b, q: (b, 0, 0))

  main_specs = ([q_tiled(x_tok), q_tiled(h0), per_batch(k1), per_batch(v1),
                 per_batch(kc), per_batch(vc)]
                + [const_spec(a) for a in main_ops[6:]])

  out = pl.pallas_call(
      functools.partial(_block_kernel, heads=heads, dim_head=dim_head, ff_inner=ff_inner,
                        n_valid=N, m_valid=M, tkv=tkv, mxu_dtype=mxu_dtype),
      out_shape=jax.ShapeDtypeStruct((B, Np, Cp), f32),
      grid_spec=pltpu.PrefetchScalarGridSpec(
          num_scalar_prefetch=0, grid=(B, Np // tq),
          in_specs=main_specs,
          out_specs=pl.BlockSpec((None, tq, Cp), lambda b, q: (b, q, 0)),
          scratch_shapes=[pltpu.VMEM((tq, inner), mxu_dtype)]),     # fused to_out staging
      input_output_aliases={0: 0},            # reuse x_tok's HBM buffer for the output
      compiler_params=pltpu.CompilerParams(
          dimension_semantics=("parallel", "parallel"), vmem_limit_bytes=VMEM_LIMIT),
  )(*main_ops)

  # un-pad and back to image layout: b (h w) c -> b c h w
  return out[:, :N, :C].reshape(B, Hh, Ww, C).transpose(0, 3, 1, 2)


# --------------------------------------------------------------------------------------
# Pure-JAX f32 reference mirroring the PyTorch forward (math attention branch).
# --------------------------------------------------------------------------------------
def spatial_transformer_ref(x_img, context, params, *, heads, dim_head, n_groups=32):
  B, C, Hh, Ww = x_img.shape
  N = Hh * Ww
  scale = float(dim_head) ** -0.5
  xg = x_img.reshape(B, n_groups, C // n_groups, Hh, Ww)
  mu = jnp.mean(xg, axis=(2, 3, 4), keepdims=True)
  var = jnp.var(xg, axis=(2, 3, 4), keepdims=True)
  xg = ((xg - mu) / jnp.sqrt(var + GN_EPS)).reshape(B, C, Hh, Ww)
  xg = xg * params["gn_gamma"].reshape(1, C, 1, 1) + params["gn_beta"].reshape(1, C, 1, 1)
  x_tok = xg.transpose(0, 2, 3, 1).reshape(B, N, C)
  h = x_tok @ params["w_in"] + params["b_in"]

  def ln(t, g, b):
    m = jnp.mean(t, axis=-1, keepdims=True)
    v = jnp.var(t, axis=-1, keepdims=True)
    return (t - m) / jnp.sqrt(v + LN_EPS) * g + b

  def attn(xq, ctx_, wq, wk, wv, wo, bo):
    q = xq @ wq; k = ctx_ @ wk; v = ctx_ @ wv
    Bq, Nq, _ = q.shape; Mq = k.shape[1]
    q = q.reshape(Bq, Nq, heads, dim_head).transpose(0, 2, 1, 3)
    k = k.reshape(Bq, Mq, heads, dim_head).transpose(0, 2, 1, 3)
    v = v.reshape(Bq, Mq, heads, dim_head).transpose(0, 2, 1, 3)
    sim = jnp.einsum('bhid,bhjd->bhij', q, k) * scale
    a = jax.nn.softmax(sim, axis=-1)
    o = jnp.einsum('bhij,bhjd->bhid', a, v)
    o = o.transpose(0, 2, 1, 3).reshape(Bq, Nq, heads * dim_head)
    return o @ wo + bo

  n1 = ln(h, params["ln1_g"], params["ln1_b"])
  h = h + attn(n1, n1, params["wq1"], params["wk1"], params["wv1"], params["wo1"], params["bo1"])
  n2 = ln(h, params["ln2_g"], params["ln2_b"])
  h = h + attn(n2, context, params["wq2"], params["wk2"], params["wv2"], params["wo2"], params["bo2"])
  n3 = ln(h, params["ln3_g"], params["ln3_b"])
  g = n3 @ params["w_ff1"] + params["b_ff1"]
  ffi = params["w_ff2"].shape[0]
  a_, gate = g[..., :ffi], g[..., ffi:]
  h = h + ((a_ * jax.nn.gelu(gate, approximate=True)) @ params["w_ff2"] + params["b_ff2"])
  y = h @ params["w_out"] + params["b_out"]
  y = y.reshape(B, Hh, Ww, C).transpose(0, 3, 1, 2)
  return y + x_img


if __name__ == "__main__":
  # SpatialTransformer(dims=2, in_channels=32, n_heads=2, d_head=16, depth=1, context_dim=32)
  # GroupNorm(num_groups=32) requires in_channels % 32 == 0.  H=W=6 -> N=36 is deliberately NOT
  # a tile multiple so the sequence-padding masks, multiple q-tiles and multiple kv-tiles of the
  # online softmax are all exercised.
  B, C, Hh, Ww = 2, 32, 6, 6
  heads, dim_head = 2, 16
  inner = heads * dim_head            # 32
  M, Dc = 8, 32                       # context length padded to 128 lanes inside the wrapper
  ffi = 4 * inner                     # 128

  key = jax.random.PRNGKey(0)
  keys = iter(jax.random.split(key, 40))
  nrm = lambda k, shape, s=0.1: s * jax.random.normal(k, shape, dtype=jnp.float32)

  x_img = jax.random.normal(next(keys), (B, C, Hh, Ww), dtype=jnp.float32)
  context = jax.random.normal(next(keys), (B, M, Dc), dtype=jnp.float32)

  params = dict(
      gn_gamma=1.0 + nrm(next(keys), (C,)), gn_beta=nrm(next(keys), (C,), 0.05),
      w_in=nrm(next(keys), (C, inner)), b_in=nrm(next(keys), (inner,), 0.02),
      ln1_g=1.0 + nrm(next(keys), (inner,)), ln1_b=nrm(next(keys), (inner,), 0.02),
      wq1=nrm(next(keys), (inner, inner)), wk1=nrm(next(keys), (inner, inner)),
      wv1=nrm(next(keys), (inner, inner)), wo1=nrm(next(keys), (inner, inner)),
      bo1=nrm(next(keys), (inner,), 0.02),
      ln2_g=1.0 + nrm(next(keys), (inner,)), ln2_b=nrm(next(keys), (inner,), 0.02),
      wq2=nrm(next(keys), (inner, inner)), wk2=nrm(next(keys), (Dc, inner)),
      wv2=nrm(next(keys), (Dc, inner)), wo2=nrm(next(keys), (inner, inner)),
      bo2=nrm(next(keys), (inner,), 0.02),
      ln3_g=1.0 + nrm(next(keys), (inner,)), ln3_b=nrm(next(keys), (inner,), 0.02),
      w_ff1=nrm(next(keys), (inner, 2 * ffi)), b_ff1=nrm(next(keys), (2 * ffi,), 0.02),
      w_ff2=nrm(next(keys), (ffi, inner), 0.05), b_ff2=nrm(next(keys), (inner,), 0.02),
      # proj_out is zero-initialized by zero_module() in the PyTorch module; random weights are
      # used here so the whole path is exercised — the forward formula is identical.
      w_out=nrm(next(keys), (inner, C), 0.05), b_out=nrm(next(keys), (C,), 0.02),
  )

  # jit the whole forward so x_tok is an internal buffer (clean in-place aliasing of the output)
  # and the wrapper layout/pad ops fuse.  tq/tkv chosen to exercise 2 q-tiles x 2 kv-tiles.
  fwd = jax.jit(functools.partial(spatial_transformer_forward, heads=heads, dim_head=dim_head,
                                  n_groups=32, tq=32, tkv=32))
  out = jax.block_until_ready(fwd(x_img, context, params))

  ref = spatial_transformer_ref(x_img, context, params, heads=heads,
                                dim_head=dim_head, n_groups=32)
  assert out.shape == x_img.shape
  err = float(jnp.max(jnp.abs(out - ref)))
  # bf16 MXU operands / bf16 K,V staging (f32 accumulation) + approx reciprocal vs. pure-f32 ref.
  assert err < 5e-2, f"max abs err {err}"
  print("KERNEL_OK")
</pallas_src>

<mosaic_0001>
module attributes {stable_mosaic.version = 11 : i64} {
  func.func @_prologue_kernel(%arg0: i32, %arg1: memref<1x64x128xf32, #tpu.memory_space<vmem>>, %arg2: memref<1x128x32xf32, #tpu.memory_space<vmem>>, %arg3: memref<128x128xf32, #tpu.memory_space<vmem>>, %arg4: memref<1x128xf32, #tpu.memory_space<vmem>>, %arg5: memref<1x128xf32, #tpu.memory_space<vmem>>, %arg6: memref<128x32xbf16, #tpu.memory_space<vmem>>, %arg7: memref<1x32xf32, #tpu.memory_space<vmem>>, %arg8: memref<1x32xf32, #tpu.memory_space<vmem>>, %arg9: memref<1x32xf32, #tpu.memory_space<vmem>>, %arg10: memref<32x32xbf16, #tpu.memory_space<vmem>>, %arg11: memref<32x32xbf16, #tpu.memory_space<vmem>>, %arg12: memref<32x32xbf16, #tpu.memory_space<vmem>>, %arg13: memref<32x32xbf16, #tpu.memory_space<vmem>>, %arg14: memref<1x64x32xf32, #tpu.memory_space<vmem>>, %arg15: memref<1x64x32xbf16, #tpu.memory_space<vmem>>, %arg16: memref<1x64x32xbf16, #tpu.memory_space<vmem>>, %arg17: memref<1x128x32xbf16, #tpu.memory_space<vmem>>, %arg18: memref<1x128x32xbf16, #tpu.memory_space<vmem>>) attributes {dimension_semantics = [#tpu.dimension_semantics<parallel>], iteration_bounds = array<i64: 2>, scalar_prefetch = 0 : i64, scratch_operands = 0 : i64, tpu.core_type = #tpu.core_type<tc>, window_params = [{transform_indices = @transform_0, window_bounds = array<i64: 1, 64, 128>}, {transform_indices = @transform_1, window_bounds = array<i64: 1, 128, 32>}, {pipeline_mode = #tpu.pipeline_mode<synchronous>, transform_indices = @transform_2, window_bounds = array<i64: 128, 128>}, {pipeline_mode = #tpu.pipeline_mode<synchronous>, transform_indices = @transform_3, window_bounds = array<i64: 1, 128>}, {pipeline_mode = #tpu.pipeline_mode<synchronous>, transform_indices = @transform_4, window_bounds = array<i64: 1, 128>}, {pipeline_mode = #tpu.pipeline_mode<synchronous>, transform_indices = @transform_5, window_bounds = array<i64: 128, 32>}, {pipeline_mode = #tpu.pipeline_mode<synchronous>, transform_indices = @transform_6, window_bounds = array<i64: 1, 32>}, {pipeline_mode = #tpu.pipeline_mode<synchronous>, transform_indices = @transform_7, window_bounds = array<i64: 1, 32>}, {pipeline_mode = #tpu.pipeline_mode<synchronous>, transform_indices = @transform_8, window_bounds = array<i64: 1, 32>}, {pipeline_mode = #tpu.pipeline_mode<synchronous>, transform_indices = @transform_9, window_bounds = array<i64: 32, 32>}, {pipeline_mode = #tpu.pipeline_mode<synchronous>, transform_indices = @transform_10, window_bounds = array<i64: 32, 32>}, {pipeline_mode = #tpu.pipeline_mode<synchronous>, transform_indices = @transform_11, window_bounds = array<i64: 32, 32>}, {pipeline_mode = #tpu.pipeline_mode<synchronous>, transform_indices = @transform_12, window_bounds = array<i64: 32, 32>}, {transform_indices = @transform_13, window_bounds = array<i64: 1, 64, 32>}, {transform_indices = @transform_14, window_bounds = array<i64: 1, 64, 32>}, {transform_indices = @transform_15, window_bounds = array<i64: 1, 64, 32>}, {transform_indices = @transform_16, window_bounds = array<i64: 1, 128, 32>}, {transform_indices = @transform_17, window_bounds = array<i64: 1, 128, 32>}]} {
    %c0 = arith.constant 0 : index
    %c0_0 = arith.constant 0 : index
    %c0_1 = arith.constant 0 : index
    %0 = vector.load %arg1[%c0, %c0_0, %c0_1] : memref<1x64x128xf32, #tpu.memory_space<vmem>>, vector<1x64x128xf32>
    %1 = vector.shape_cast %0 : vector<1x64x128xf32> to vector<64x128xf32>
    %cst = arith.constant dense<0.000000e+00> : vector<128xf32>
    %2 = vector.multi_reduction <add>, %1, %cst [0] : vector<64x128xf32> to vector<128xf32>
    %3 = vector.shape_cast %2 : vector<128xf32> to vector<1x128xf32>
    %c0_2 = arith.constant 0 : index
    %c0_3 = arith.constant 0 : index
    %4 = vector.load %arg3[%c0_2, %c0_3] : memref<128x128xf32, #tpu.memory_space<vmem>>, vector<128x128xf32>
    %cst_4 = arith.constant dense<0.000000e+00> : vector<1x128xf32>
    %5 = tpu.matmul %3, %4, %cst_4 {dimension_numbers = #tpu.dot_dimension_numbers<[1], [0], [0], [1], [0, 0, 1, 1], [], []>} : vector<1x128xf32>, vector<128x128xf32>, vector<1x128xf32> -> vector<1x128xf32>
    %6 = vector.broadcast %5 : vector<1x128xf32> to vector<64x128xf32>
    %7 = arith.subf %1, %6 : vector<64x128xf32>
    %8 = tpu.iota {dimensions = array<i32: 0>} : vector<64x1xi32>
    %c36_i32 = arith.constant 36 : i32
    %9 = vector.broadcast %c36_i32 : i32 to vector<64x1xi32>
    %10 = arith.cmpi slt, %8, %9 : vector<64x1xi32>
    %cst_5 = arith.constant 0.000000e+00 : f32
    %11 = vector.shape_cast %10 : vector<64x1xi1> to vector<64x1xi1>
    %12 = vector.broadcast %11 : vector<64x1xi1> to vector<64x128xi1>
    %13 = vector.broadcast %cst_5 : f32 to vector<64x128xf32>
    %14 = arith.select %12, %7, %13 : vector<64x128xi1>, vector<64x128xf32>
    %15 = arith.mulf %14, %14 : vector<64x128xf32>
    %cst_6 = arith.constant dense<0.000000e+00> : vector<128xf32>
    %16 = vector.multi_reduction <add>, %15, %cst_6 [0] : vector<64x128xf32> to vector<128xf32>
    %17 = vector.shape_cast %16 : vector<128xf32> to vector<1x128xf32>
    %c0_7 = arith.constant 0 : index
    %c0_8 = arith.constant 0 : index
    %18 = vector.load %arg3[%c0_7, %c0_8] : memref<128x128xf32, #tpu.memory_space<vmem>>, vector<128x128xf32>
    %cst_9 = arith.constant dense<0.000000e+00> : vector<1x128xf32>
    %19 = tpu.matmul %17, %18, %cst_9 {dimension_numbers = #tpu.dot_dimension_numbers<[1], [0], [0], [1], [0, 0, 1, 1], [], []>} : vector<1x128xf32>, vector<128x128xf32>, vector<1x128xf32> -> vector<1x128xf32>
    %cst_10 = arith.constant 9.99999997E-7 : f32
    %20 = vector.broadcast %cst_10 : f32 to vector<1x128xf32>
    %21 = arith.addf %19, %20 : vector<1x128xf32>
    %22 = math.rsqrt %21 : vector<1x128xf32>
    %23 = vector.broadcast %22 : vector<1x128xf32> to vector<64x128xf32>
    %24 = arith.mulf %14, %23 : vector<64x128xf32>
    %c0_11 = arith.constant 0 : index
    %c0_12 = arith.constant 0 : index
    %25 = vector.load %arg4[%c0_11, %c0_12] : memref<1x128xf32, #tpu.memory_space<vmem>>, vector<1x128xf32>
    %26 = vector.broadcast %25 : vector<1x128xf32> to vector<64x128xf32>
    %27 = arith.mulf %24, %26 : vector<64x128xf32>
    %c0_13 = arith.constant 0 : index
    %c0_14 = arith.constant 0 : index
    %28 = vector.load %arg5[%c0_13, %c0_14] : memref<1x128xf32, #tpu.memory_space<vmem>>, vector<1x128xf32>
    %29 = vector.broadcast %28 : vector<1x128xf32> to vector<64x128xf32>
    %30 = arith.addf %27, %29 : vector<64x128xf32>
    %31 = arith.truncf %30 : vector<64x128xf32> to vector<64x128xbf16>
    %c0_15 = arith.constant 0 : index
    %c0_16 = arith.constant 0 : index
    %32 = vector.load %arg6[%c0_15, %c0_16] : memref<128x32xbf16, #tpu.memory_space<vmem>>, vector<128x32xbf16>
    %cst_17 = arith.constant dense<0.000000e+00> : vector<64x32xf32>
    %33 = tpu.matmul %31, %32, %cst_17 {dimension_numbers = #tpu.dot_dimension_numbers<[1], [0], [0], [1], [0, 0, 1, 1], [], []>} : vector<64x128xbf16>, vector<128x32xbf16>, vector<64x32xf32> -> vector<64x32xf32>
    %c0_18 = arith.constant 0 : index
    %c0_19 = arith.constant 0 : index
    %34 = vector.load %arg7[%c0_18, %c0_19] : memref<1x32xf32, #tpu.memory_space<vmem>>, vector<1x32xf32>
    %35 = vector.broadcast %34 : vector<1x32xf32> to vector<64x32xf32>
    %36 = arith.addf %33, %35 : vector<64x32xf32>
    %c0_20 = arith.constant 0 : index
    %c0_21 = arith.constant 0 : index
    %c0_22 = arith.constant 0 : index
    %37 = vector.load %arg14[%c0_20, %c0_21, %c0_22] : memref<1x64x32xf32, #tpu.memory_space<vmem>>, vector<1x64x32xf32>
    %38 = vector.shape_cast %37 : vector<1x64x32xf32> to vector<64x32xf32>
    %39 = vector.shape_cast %36 : vector<64x32xf32> to vector<1x64x32xf32>
    tpu.vector_store %arg14[%c0_20, %c0_21, %c0_22], %39 {strides = array<i32>} : memref<1x64x32xf32, #tpu.memory_space<vmem>>, vector<1x64x32xf32>,
    %cst_23 = arith.constant dense<0.000000e+00> : vector<64xf32>
    %40 = vector.multi_reduction <add>, %36, %cst_23 [1] : vector<64x32xf32> to vector<64xf32>
    %41 = vector.shape_cast %40 : vector<64xf32> to vector<64x1xf32>
    %cst_24 = arith.constant 3.200000e+01 : f32
    %42 = vector.broadcast %cst_24 : f32 to vector<64x1xf32>
    %43 = arith.divf %41, %42 : vector<64x1xf32>
    %44 = vector.broadcast %43 : vector<64x1xf32> to vector<64x32xf32>
    %45 = arith.subf %36, %44 : vector<64x32xf32>
    %46 = arith.mulf %45, %45 : vector<64x32xf32>
    %cst_25 = arith.constant dense<0.000000e+00> : vector<64xf32>
    %47 = vector.multi_reduction <add>, %46, %cst_25 [1] : vector<64x32xf32> to vector<64xf32>
    %48 = vector.shape_cast %47 : vector<64xf32> to vector<64x1xf32>
    %cst_26 = arith.constant 3.200000e+01 : f32
    %49 = vector.broadcast %cst_26 : f32 to vector<64x1xf32>
    %50 = arith.divf %48, %49 : vector<64x1xf32>
    %cst_27 = arith.constant 9.99999974E-6 : f32
    %51 = vector.broadcast %cst_27 : f32 to vector<64x1xf32>
    %52 = arith.addf %50, %51 : vector<64x1xf32>
    %53 = math.rsqrt %52 : vector<64x1xf32>
    %54 = vector.broadcast %53 : vector<64x1xf32> to vector<64x32xf32>
    %55 = arith.mulf %45, %54 : vector<64x32xf32>
    %c0_28 = arith.constant 0 : index
    %c0_29 = arith.constant 0 : index
    %56 = vector.load %arg8[%c0_28, %c0_29] : memref<1x32xf32, #tpu.memory_space<vmem>>, vector<1x32xf32>
    %57 = vector.broadcast %56 : vector<1x32xf32> to vector<64x32xf32>
    %58 = arith.mulf %55, %57 : vector<64x32xf32>
    %c0_30 = arith.constant 0 : index
    %c0_31 = arith.constant 0 : index
    %59 = vector.load %arg9[%c0_30, %c0_31] : memref<1x32xf32, #tpu.memory_space<vmem>>, vector<1x32xf32>
    %60 = vector.broadcast %59 : vector<1x32xf32> to vector<64x32xf32>
    %61 = arith.addf %58, %60 : vector<64x32xf32>
    %62 = arith.truncf %61 : vector<64x32xf32> to vector<64x32xbf16>
    %c0_32 = arith.constant 0 : index
    %c0_33 = arith.constant 0 : index
    %63 = vector.load %arg10[%c0_32, %c0_33] : memref<32x32xbf16, #tpu.memory_space<vmem>>, vector<32x32xbf16>
    %cst_34 = arith.constant dense<0.000000e+00> : vector<64x32xf32>
    %64 = tpu.matmul %62, %63, %cst_34 {dimension_numbers = #tpu.dot_dimension_numbers<[1], [0], [0], [1], [0, 0, 1, 1], [], []>} : vector<64x32xbf16>, vector<32x32xbf16>, vector<64x32xf32> -> vector<64x32xf32>
    %65 = arith.truncf %64 : vector<64x32xf32> to vector<64x32xbf16>
    %c0_35 = arith.constant 0 : index
    %c0_36 = arith.constant 0 : index
    %c0_37 = arith.constant 0 : index
    %66 = vector.load %arg15[%c0_35, %c0_36, %c0_37] : memref<1x64x32xbf16, #tpu.memory_space<vmem>>, vector<1x64x32xbf16>
    %67 = vector.shape_cast %66 : vector<1x64x32xbf16> to vector<64x32xbf16>
    %68 = vector.shape_cast %65 : vector<64x32xbf16> to vector<1x64x32xbf16>
    tpu.vector_store %arg15[%c0_35, %c0_36, %c0_37], %68 {strides = array<i32>} : memref<1x64x32xbf16, #tpu.memory_space<vmem>>, vector<1x64x32xbf16>,
    %c0_38 = arith.constant 0 : index
    %c0_39 = arith.constant 0 : index
    %69 = vector.load %arg11[%c0_38, %c0_39] : memref<32x32xbf16, #tpu.memory_space<vmem>>, vector<32x32xbf16>
    %cst_40 = arith.constant dense<0.000000e+00> : vector<64x32xf32>
    %70 = tpu.matmul %62, %69, %cst_40 {dimension_numbers = #tpu.dot_dimension_numbers<[1], [0], [0], [1], [0, 0, 1, 1], [], []>} : vector<64x32xbf16>, vector<32x32xbf16>, vector<64x32xf32> -> vector<64x32xf32>
    %71 = arith.truncf %70 : vector<64x32xf32> to vector<64x32xbf16>
    %c0_41 = arith.constant 0 : index
    %c0_42 = arith.constant 0 : index
    %c0_43 = arith.constant 0 : index
    %72 = vector.load %arg16[%c0_41, %c0_42, %c0_43] : memref<1x64x32xbf16, #tpu.memory_space<vmem>>, vector<1x64x32xbf16>
    %73 = vector.shape_cast %72 : vector<1x64x32xbf16> to vector<64x32xbf16>
    %74 = vector.shape_cast %71 : vector<64x32xbf16> to vector<1x64x32xbf16>
    tpu.vector_store %arg16[%c0_41, %c0_42, %c0_43], %74 {strides = array<i32>} : memref<1x64x32xbf16, #tpu.memory_space<vmem>>, vector<1x64x32xbf16>,
    %c0_44 = arith.constant 0 : index
    %c0_45 = arith.constant 0 : index
    %c0_46 = arith.constant 0 : index
    %75 = vector.load %arg2[%c0_44, %c0_45, %c0_46] : memref<1x128x32xf32, #tpu.memory_space<vmem>>, vector<1x128x32xf32>
    %76 = vector.shape_cast %75 : vector<1x128x32xf32> to vector<128x32xf32>
    %77 = arith.truncf %76 : vector<128x32xf32> to vector<128x32xbf16>
    %c0_47 = arith.constant 0 : index
    %c0_48 = arith.constant 0 : index
    %78 = vector.load %arg12[%c0_47, %c0_48] : memref<32x32xbf16, #tpu.memory_space<vmem>>, vector<32x32xbf16>
    %cst_49 = arith.constant dense<0.000000e+00> : vector<128x32xf32>
    %79 = tpu.matmul %77, %78, %cst_49 {dimension_numbers = #tpu.dot_dimension_numbers<[1], [0], [0], [1], [0, 0, 1, 1], [], []>} : vector<128x32xbf16>, vector<32x32xbf16>, vector<128x32xf32> -> vector<128x32xf32>
    %80 = arith.truncf %79 : vector<128x32xf32> to vector<128x32xbf16>
    %c0_50 = arith.constant 0 : index
    %c0_51 = arith.constant 0 : index
    %c0_52 = arith.constant 0 : index
    %81 = vector.load %arg17[%c0_50, %c0_51, %c0_52] : memref<1x128x32xbf16, #tpu.memory_space<vmem>>, vector<1x128x32xbf16>
    %82 = vector.shape_cast %81 : vector<1x128x32xbf16> to vector<128x32xbf16>
    %83 = vector.shape_cast %80 : vector<128x32xbf16> to vector<1x128x32xbf16>
    tpu.vector_store %arg17[%c0_50, %c0_51, %c0_52], %83 {strides = array<i32>} : memref<1x128x32xbf16, #tpu.memory_space<vmem>>, vector<1x128x32xbf16>,
    %c0_53 = arith.constant 0 : index
    %c0_54 = arith.constant 0 : index
    %84 = vector.load %arg13[%c0_53, %c0_54] : memref<32x32xbf16, #tpu.memory_space<vmem>>, vector<32x32xbf16>
    %cst_55 = arith.constant dense<0.000000e+00> : vector<128x32xf32>
    %85 = tpu.matmul %77, %84, %cst_55 {dimension_numbers = #tpu.dot_dimension_numbers<[1], [0], [0], [1], [0, 0, 1, 1], [], []>} : vector<128x32xbf16>, vector<32x32xbf16>, vector<128x32xf32> -> vector<128x32xf32>
    %86 = arith.truncf %85 : vector<128x32xf32> to vector<128x32xbf16>
    %c0_56 = arith.constant 0 : index
    %c0_57 = arith.constant 0 : index
    %c0_58 = arith.constant 0 : index
    %87 = vector.load %arg18[%c0_56, %c0_57, %c0_58] : memref<1x128x32xbf16, #tpu.memory_space<vmem>>, vector<1x128x32xbf16>
    %88 = vector.shape_cast %87 : vector<1x128x32xbf16> to vector<128x32xbf16>
    %89 = vector.shape_cast %86 : vector<128x32xbf16> to vector<1x128x32xbf16>
    tpu.vector_store %arg18[%c0_56, %c0_57, %c0_58], %89 {strides = array<i32>} : memref<1x128x32xbf16, #tpu.memory_space<vmem>>, vector<1x128x32xbf16>,
    return
  }
  func.func @transform_0(%arg0: i32) -> (i32, i32, i32) {
    %c0_i32 = arith.constant 0 : i32
    %c0_i32_0 = arith.constant 0 : i32
    %c0_i32_1 = arith.constant 0 : i32
    return %arg0, %c0_i32, %c0_i32_0 : i32, i32, i32
  }
  func.func @transform_1(%arg0: i32) -> (i32, i32, i32) {
    %c0_i32 = arith.constant 0 : i32
    %c0_i32_0 = arith.constant 0 : i32
    %c0_i32_1 = arith.constant 0 : i32
    return %arg0, %c0_i32, %c0_i32_0 : i32, i32, i32
  }
  func.func @transform_2(%arg0: i32) -> (i32, i32) {
    %c0_i32 = arith.constant 0 : i32
    %c0_i32_0 = arith.constant 0 : i32
    %c0_i32_1 = arith.constant 0 : i32
    return %c0_i32, %c0_i32_0 : i32, i32
  }
  func.func @transform_3(%arg0: i32) -> (i32, i32) {
    %c0_i32 = arith.constant 0 : i32
    %c0_i32_0 = arith.constant 0 : i32
    %c0_i32_1 = arith.constant 0 : i32
    return %c0_i32, %c0_i32_0 : i32, i32
  }
  func.func @transform_4(%arg0: i32) -> (i32, i32) {
    %c0_i32 = arith.constant 0 : i32
    %c0_i32_0 = arith.constant 0 : i32
    %c0_i32_1 = arith.constant 0 : i32
    return %c0_i32, %c0_i32_0 : i32, i32
  }
  func.func @transform_5(%arg0: i32) -> (i32, i32) {
    %c0_i32 = arith.constant 0 : i32
    %c0_i32_0 = arith.constant 0 : i32
    %c0_i32_1 = arith.constant 0 : i32
    return %c0_i32, %c0_i32_0 : i32, i32
  }
  func.func @transform_6(%arg0: i32) -> (i32, i32) {
    %c0_i32 = arith.constant 0 : i32
    %c0_i32_0 = arith.constant 0 : i32
    %c0_i32_1 = arith.constant 0 : i32
    return %c0_i32, %c0_i32_0 : i32, i32
  }
  func.func @transform_7(%arg0: i32) -> (i32, i32) {
    %c0_i32 = arith.constant 0 : i32
    %c0_i32_0 = arith.constant 0 : i32
    %c0_i32_1 = arith.constant 0 : i32
    return %c0_i32, %c0_i32_0 : i32, i32
  }
  func.func @transform_8(%arg0: i32) -> (i32, i32) {
    %c0_i32 = arith.constant 0 : i32
    %c0_i32_0 = arith.constant 0 : i32
    %c0_i32_1 = arith.constant 0 : i32
    return %c0_i32, %c0_i32_0 : i32, i32
  }
  func.func @transform_9(%arg0: i32) -> (i32, i32) {
    %c0_i32 = arith.constant 0 : i32
    %c0_i32_0 = arith.constant 0 : i32
    %c0_i32_1 = arith.constant 0 : i32
    return %c0_i32, %c0_i32_0 : i32, i32
  }
  func.func @transform_10(%arg0: i32) -> (i32, i32) {
    %c0_i32 = arith.constant 0 : i32
    %c0_i32_0 = arith.constant 0 : i32
    %c0_i32_1 = arith.constant 0 : i32
    return %c0_i32, %c0_i32_0 : i32, i32
  }
  func.func @transform_11(%arg0: i32) -> (i32, i32) {
    %c0_i32 = arith.constant 0 : i32
    %c0_i32_0 = arith.constant 0 : i32
    %c0_i32_1 = arith.constant 0 : i32
    return %c0_i32, %c0_i32_0 : i32, i32
  }
  func.func @transform_12(%arg0: i32) -> (i32, i32) {
    %c0_i32 = arith.constant 0 : i32
    %c0_i32_0 = arith.constant 0 : i32
    %c0_i32_1 = arith.constant 0 : i32
    return %c0_i32, %c0_i32_0 : i32, i32
  }
  func.func @transform_13(%arg0: i32) -> (i32, i32, i32) {
    %c0_i32 = arith.constant 0 : i32
    %c0_i32_0 = arith.constant 0 : i32
    %c0_i32_1 = arith.constant 0 : i32
    return %arg0, %c0_i32, %c0_i32_0 : i32, i32, i32
  }
  func.func @transform_14(%arg0: i32) -> (i32, i32, i32) {
    %c0_i32 = arith.constant 0 : i32
    %c0_i32_0 = arith.constant 0 : i32
    %c0_i32_1 = arith.constant 0 : i32
    return %arg0, %c0_i32, %c0_i32_0 : i32, i32, i32
  }
  func.func @transform_15(%arg0: i32) -> (i32, i32, i32) {
    %c0_i32 = arith.constant 0 : i32
    %c0_i32_0 = arith.constant 0 : i32
    %c0_i32_1 = arith.constant 0 : i32
    return %arg0, %c0_i32, %c0_i32_0 : i32, i32, i32
  }
  func.func @transform_16(%arg0: i32) -> (i32, i32, i32) {
    %c0_i32 = arith.constant 0 : i32
    %c0_i32_0 = arith.constant 0 : i32
    %c0_i32_1 = arith.constant 0 : i32
    return %arg0, %c0_i32, %c0_i32_0 : i32, i32, i32
  }
  func.func @transform_17(%arg0: i32) -> (i32, i32, i32) {
    %c0_i32 = arith.constant 0 : i32
    %c0_i32_0 = arith.constant 0 : i32
    %c0_i32_1 = arith.constant 0 : i32
    return %arg0, %c0_i32, %c0_i32_0 : i32, i32, i32
  }
}

module attributes {stable_mosaic.version = 11 : i64} {
  func.func @_block_kernel(%arg0: i32, %arg1: i32, %arg2: memref<1x32x128xf32, #tpu.memory_space<vmem>>, %arg3: memref<1x32x32xf32, #tpu.memory_space<vmem>>, %arg4: memref<1x64x32xbf16, #tpu.memory_space<vmem>>, %arg5: memref<1x64x32xbf16, #tpu.memory_space<vmem>>, %arg6: memref<1x128x32xbf16, #tpu.memory_space<vmem>>, %arg7: memref<1x128x32xbf16, #tpu.memory_space<vmem>>, %arg8: memref<1x32xf32, #tpu.memory_space<vmem>>, %arg9: memref<1x32xf32, #tpu.memory_space<vmem>>, %arg10: memref<32x32xbf16, #tpu.memory_space<vmem>>, %arg11: memref<32x32xbf16, #tpu.memory_space<vmem>>, %arg12: memref<1x32xf32, #tpu.memory_space<vmem>>, %arg13: memref<1x32xf32, #tpu.memory_space<vmem>>, %arg14: memref<1x32xf32, #tpu.memory_space<vmem>>, %arg15: memref<32x32xbf16, #tpu.memory_space<vmem>>, %arg16: memref<32x32xbf16, #tpu.memory_space<vmem>>, %arg17: memref<1x32xf32, #tpu.memory_space<vmem>>, %arg18: memref<1x32xf32, #tpu.memory_space<vmem>>, %arg19: memref<1x32xf32, #tpu.memory_space<vmem>>, %arg20: memref<32x256xbf16, #tpu.memory_space<vmem>>, %arg21: memref<1x256xf32, #tpu.memory_space<vmem>>, %arg22: memref<128x32xbf16, #tpu.memory_space<vmem>>, %arg23: memref<1x32xf32, #tpu.memory_space<vmem>>, %arg24: memref<32x128xbf16, #tpu.memory_space<vmem>>, %arg25: memref<1x128xf32, #tpu.memory_space<vmem>>, %arg26: memref<1x32x128xf32, #tpu.memory_space<vmem>>, %arg27: memref<32x32xbf16, #tpu.memory_space<vmem>>) attributes {dimension_semantics = [#tpu.dimension_semantics<parallel>, #tpu.dimension_semantics<parallel>], iteration_bounds = array<i64: 2, 2>, scalar_prefetch = 0 : i64, scratch_operands = 1 : i64, tpu.core_type = #tpu.core_type<tc>, window_params = [{transform_indices = @transform_0, window_bounds = array<i64: 1, 32, 128>}, {transform_indices = @transform_1, window_bounds = array<i64: 1, 32, 32>}, {transform_indices = @transform_2, window_bounds = array<i64: 1, 64, 32>}, {transform_indices = @transform_3, window_bounds = array<i64: 1, 64, 32>}, {transform_indices = @transform_4, window_bounds = array<i64: 1, 128, 32>}, {transform_indices = @transform_5, window_bounds = array<i64: 1, 128, 32>}, {pipeline_mode = #tpu.pipeline_mode<synchronous>, transform_indices = @transform_6, window_bounds = array<i64: 1, 32>}, {pipeline_mode = #tpu.pipeline_mode<synchronous>, transform_indices = @transform_7, window_bounds = array<i64: 1, 32>}, {pipeline_mode = #tpu.pipeline_mode<synchronous>, transform_indices = @transform_8, window_bounds = array<i64: 32, 32>}, {pipeline_mode = #tpu.pipeline_mode<synchronous>, transform_indices = @transform_9, window_bounds = array<i64: 32, 32>}, {pipeline_mode = #tpu.pipeline_mode<synchronous>, transform_indices = @transform_10, window_bounds = array<i64: 1, 32>}, {pipeline_mode = #tpu.pipeline_mode<synchronous>, transform_indices = @transform_11, window_bounds = array<i64: 1, 32>}, {pipeline_mode = #tpu.pipeline_mode<synchronous>, transform_indices = @transform_12, window_bounds = array<i64: 1, 32>}, {pipeline_mode = #tpu.pipeline_mode<synchronous>, transform_indices = @transform_13, window_bounds = array<i64: 32, 32>}, {pipeline_mode = #tpu.pipeline_mode<synchronous>, transform_indices = @transform_14, window_bounds = array<i64: 32, 32>}, {pipeline_mode = #tpu.pipeline_mode<synchronous>, transform_indices = @transform_15, window_bounds = array<i64: 1, 32>}, {pipeline_mode = #tpu.pipeline_mode<synchronous>, transform_indices = @transform_16, window_bounds = array<i64: 1, 32>}, {pipeline_mode = #tpu.pipeline_mode<synchronous>, transform_indices = @transform_17, window_bounds = array<i64: 1, 32>}, {pipeline_mode = #tpu.pipeline_mode<synchronous>, transform_indices = @transform_18, window_bounds = array<i64: 32, 256>}, {pipeline_mode = #tpu.pipeline_mode<synchronous>, transform_indices = @transform_19, window_bounds = array<i64: 1, 256>}, {pipeline_mode = #tpu.pipeline_mode<synchronous>, transform_indices = @transform_20, window_bounds = array<i64: 128, 32>}, {pipeline_mode = #tpu.pipeline_mode<synchronous>, transform_indices = @transform_21, window_bounds = array<i64: 1, 32>}, {pipeline_mode = #tpu.pipeline_mode<synchronous>, transform_indices = @transform_22, window_bounds = array<i64: 32, 128>}, {pipeline_mode = #tpu.pipeline_mode<synchronous>, transform_indices = @transform_23, window_bounds = array<i64: 1, 128>}, {transform_indices = @transform_24, window_bounds = array<i64: 1, 32, 128>}]} {
    %c0 = arith.constant 0 : index
    %c0_0 = arith.constant 0 : index
    %c0_1 = arith.constant 0 : index
    %0 = vector.load %arg3[%c0, %c0_0, %c0_1] : memref<1x32x32xf32, #tpu.memory_space<vmem>>, vector<1x32x32xf32>
    %1 = vector.shape_cast %0 : vector<1x32x32xf32> to vector<32x32xf32>
    %cst = arith.constant dense<0.000000e+00> : vector<32xf32>
    %2 = vector.multi_reduction <add>, %1, %cst [1] : vector<32x32xf32> to vector<32xf32>
    %3 = vector.shape_cast %2 : vector<32xf32> to vector<32x1xf32>
    %cst_2 = arith.constant 3.200000e+01 : f32
    %4 = vector.broadcast %cst_2 : f32 to vector<32x1xf32>
    %5 = arith.divf %3, %4 : vector<32x1xf32>
    %6 = vector.broadcast %5 : vector<32x1xf32> to vector<32x32xf32>
    %7 = arith.subf %1, %6 : vector<32x32xf32>
    %8 = arith.mulf %7, %7 : vector<32x32xf32>
    %cst_3 = arith.constant dense<0.000000e+00> : vector<32xf32>
    %9 = vector.multi_reduction <add>, %8, %cst_3 [1] : vector<32x32xf32> to vector<32xf32>
    %10 = vector.shape_cast %9 : vector<32xf32> to vector<32x1xf32>
    %cst_4 = arith.constant 3.200000e+01 : f32
    %11 = vector.broadcast %cst_4 : f32 to vector<32x1xf32>
    %12 = arith.divf %10, %11 : vector<32x1xf32>
    %cst_5 = arith.constant 9.99999974E-6 : f32
    %13 = vector.broadcast %cst_5 : f32 to vector<32x1xf32>
    %14 = arith.addf %12, %13 : vector<32x1xf32>
    %15 = math.rsqrt %14 : vector<32x1xf32>
    %16 = vector.broadcast %15 : vector<32x1xf32> to vector<32x32xf32>
    %17 = arith.mulf %7, %16 : vector<32x32xf32>
    %c0_6 = arith.constant 0 : index
    %c0_7 = arith.constant 0 : index
    %18 = vector.load %arg8[%c0_6, %c0_7] : memref<1x32xf32, #tpu.memory_space<vmem>>, vector<1x32xf32>
    %19 = vector.broadcast %18 : vector<1x32xf32> to vector<32x32xf32>
    %20 = arith.mulf %17, %19 : vector<32x32xf32>
    %c0_8 = arith.constant 0 : index
    %c0_9 = arith.constant 0 : index
    %21 = vector.load %arg9[%c0_8, %c0_9] : memref<1x32xf32, #tpu.memory_space<vmem>>, vector<1x32xf32>
    %22 = vector.broadcast %21 : vector<1x32xf32> to vector<32x32xf32>
    %23 = arith.addf %20, %22 : vector<32x32xf32>
    %24 = arith.truncf %23 : vector<32x32xf32> to vector<32x32xbf16>
    %c0_10 = arith.constant 0 : index
    %c0_11 = arith.constant 0 : index
    %25 = vector.load %arg10[%c0_10, %c0_11] : memref<32x32xbf16, #tpu.memory_space<vmem>>, vector<32x32xbf16>
    %cst_12 = arith.constant dense<0.000000e+00> : vector<32x32xf32>
    %26 = tpu.matmul %24, %25, %cst_12 {dimension_numbers = #tpu.dot_dimension_numbers<[1], [0], [0], [1], [0, 0, 1, 1], [], []>} : vector<32x32xbf16>, vector<32x32xbf16>, vector<32x32xf32> -> vector<32x32xf32>
    %27 = arith.truncf %26 : vector<32x32xf32> to vector<32x32xbf16>
    %28 = vector.extract_strided_slice %27 {offsets = [0, 0], sizes = [32, 16], strides = [1, 1]} : vector<32x32xbf16> to vector<32x16xbf16>
    %cst_13 = arith.constant 0xFF800000 : f32
    %29 = vector.broadcast %cst_13 : f32 to vector<32x1xf32>
    %cst_14 = arith.constant 0.000000e+00 : f32
    %30 = vector.broadcast %cst_14 : f32 to vector<32x1xf32>
    %cst_15 = arith.constant 0.000000e+00 : f32
    %31 = vector.broadcast %cst_15 : f32 to vector<32x16xf32>
    %c0_i32 = arith.constant 0 : i32
    %c2_i32 = arith.constant 2 : i32
    %32 = arith.addi %c0_i32, %c2_i32 : i32
    %c1_i32 = arith.constant 1 : i32
    %33:3 = scf.for %arg28 = %c0_i32 to %32 step %c1_i32 iter_args(%arg29 = %29, %arg30 = %30, %arg31 = %31) -> (vector<32x1xf32>, vector<32x1xf32>, vector<32x16xf32>)  : i32 {
      %c32_i32 = arith.constant 32 : i32
      %203 = arith.muli %arg28, %c32_i32 : i32
      %204 = tpu.assume_multiple %203, 32 : i32
      %c0_113 = arith.constant 0 : index
      %205 = arith.index_cast %204 : i32 to index
      %c0_114 = arith.constant 0 : index
      %206 = vector.load %arg4[%c0_113, %205, %c0_114] : memref<1x64x32xbf16, #tpu.memory_space<vmem>>, vector<1x32x16xbf16>
      %207 = vector.shape_cast %206 : vector<1x32x16xbf16> to vector<32x16xbf16>
      %c0_115 = arith.constant 0 : index
      %208 = arith.index_cast %204 : i32 to index
      %c0_116 = arith.constant 0 : index
      %209 = vector.load %arg5[%c0_115, %208, %c0_116] : memref<1x64x32xbf16, #tpu.memory_space<vmem>>, vector<1x32x16xbf16>
      %210 = vector.shape_cast %209 : vector<1x32x16xbf16> to vector<32x16xbf16>
      %cst_117 = arith.constant dense<0.000000e+00> : vector<32x32xf32>
      %211 = tpu.matmul %28, %207, %cst_117 {dimension_numbers = #tpu.dot_dimension_numbers<[1], [1], [0], [0], [0, 0, 1, 0], [], []>} : vector<32x16xbf16>, vector<32x16xbf16>, vector<32x32xf32> -> vector<32x32xf32>
      %212 = tpu.iota {dimensions = array<i32: 1>} : vector<1x32xi32>
      %213 = vector.broadcast %204 : i32 to vector<1x32xi32>
      %214 = arith.addi %212, %213 : vector<1x32xi32>
      %c36_i32 = arith.constant 36 : i32
      %215 = vector.broadcast %c36_i32 : i32 to vector<1x32xi32>
      %216 = arith.cmpi slt, %214, %215 : vector<1x32xi32>
      %cst_118 = arith.constant 0.000000e+00 : f32
      %cst_119 = arith.constant -1.000000e+30 : f32
      %217 = vector.broadcast %cst_118 : f32 to vector<1x32xf32>
      %218 = vector.broadcast %cst_119 : f32 to vector<1x32xf32>
      %219 = arith.select %216, %217, %218 : vector<1x32xi1>, vector<1x32xf32>
      %220 = vector.broadcast %219 : vector<1x32xf32> to vector<32x32xf32>
      %221 = arith.addf %211, %220 : vector<32x32xf32>
      %cst_120 = arith.constant dense<0xFF800000> : vector<32xf32>
      %222 = vector.multi_reduction <maximumf>, %221, %cst_120 [1] : vector<32x32xf32> to vector<32xf32>
      %223 = vector.shape_cast %222 : vector<32xf32> to vector<32x1xf32>
      %224 = arith.maximumf %arg29, %223 : vector<32x1xf32>
      %225 = arith.subf %arg29, %224 : vector<32x1xf32>
      %226 = math.exp %225 : vector<32x1xf32>
      %227 = vector.broadcast %224 : vector<32x1xf32> to vector<32x32xf32>
      %228 = arith.subf %221, %227 : vector<32x32xf32>
      %229 = math.exp %228 : vector<32x32xf32>
      %230 = arith.mulf %226, %arg30 : vector<32x1xf32>
      %cst_121 = arith.constant dense<0.000000e+00> : vector<32xf32>
      %231 = vector.multi_reduction <add>, %229, %cst_121 [1] : vector<32x32xf32> to vector<32xf32>
      %232 = vector.shape_cast %231 : vector<32xf32> to vector<32x1xf32>
      %233 = arith.addf %230, %232 : vector<32x1xf32>
      %234 = vector.broadcast %226 : vector<32x1xf32> to vector<32x16xf32>
      %235 = arith.mulf %234, %arg31 : vector<32x16xf32>
      %236 = arith.truncf %229 : vector<32x32xf32> to vector<32x32xbf16>
      %cst_122 = arith.constant dense<0.000000e+00> : vector<32x16xf32>
      %237 = tpu.matmul %236, %210, %cst_122 {dimension_numbers = #tpu.dot_dimension_numbers<[1], [0], [0], [1], [0, 0, 1, 1], [], []>} : vector<32x32xbf16>, vector<32x16xbf16>, vector<32x16xf32> -> vector<32x16xf32>
      %238 = arith.addf %235, %237 : vector<32x16xf32>
      scf.yield %224, %233, %238 : vector<32x1xf32>, vector<32x1xf32>, vector<32x16xf32>
    }
    %c2_i32_16 = arith.constant 2 : i32
    %34 = tpu.reciprocal %33#1 {approx = true} : vector<32x1xf32> -> vector<32x1xf32>
    %35 = vector.broadcast %34 : vector<32x1xf32> to vector<32x16xf32>
    %36 = arith.mulf %33#2, %35 : vector<32x16xf32>
    %37 = arith.truncf %36 : vector<32x16xf32> to vector<32x16xbf16>
    %c0_17 = arith.constant 0 : index
    %c0_18 = arith.constant 0 : index
    %38 = vector.load %arg27[%c0_17, %c0_18] : memref<32x32xbf16, #tpu.memory_space<vmem>>, vector<32x16xbf16>
    tpu.vector_store %arg27[%c0_17, %c0_18], %37 {strides = array<i32>} : memref<32x32xbf16, #tpu.memory_space<vmem>>, vector<32x16xbf16>,
    %39 = vector.extract_strided_slice %27 {offsets = [0, 16], sizes = [32, 16], strides = [1, 1]} : vector<32x32xbf16> to vector<32x16xbf16>
    %cst_19 = arith.constant 0xFF800000 : f32
    %40 = vector.broadcast %cst_19 : f32 to vector<32x1xf32>
    %cst_20 = arith.constant 0.000000e+00 : f32
    %41 = vector.broadcast %cst_20 : f32 to vector<32x1xf32>
    %cst_21 = arith.constant 0.000000e+00 : f32
    %42 = vector.broadcast %cst_21 : f32 to vector<32x16xf32>
    %c0_i32_22 = arith.constant 0 : i32
    %c2_i32_23 = arith.constant 2 : i32
    %43 = arith.addi %c0_i32_22, %c2_i32_23 : i32
    %c1_i32_24 = arith.constant 1 : i32
    %44:3 = scf.for %arg28 = %c0_i32_22 to %43 step %c1_i32_24 iter_args(%arg29 = %40, %arg30 = %41, %arg31 = %42) -> (vector<32x1xf32>, vector<32x1xf32>, vector<32x16xf32>)  : i32 {
      %c32_i32 = arith.constant 32 : i32
      %203 = arith.muli %arg28, %c32_i32 : i32
      %204 = tpu.assume_multiple %203, 32 : i32
      %c0_113 = arith.constant 0 : index
      %205 = arith.index_cast %204 : i32 to index
      %c16_114 = arith.constant 16 : index
      %206 = vector.load %arg4[%c0_113, %205, %c16_114] : memref<1x64x32xbf16, #tpu.memory_space<vmem>>, vector<1x32x16xbf16>
      %207 = vector.shape_cast %206 : vector<1x32x16xbf16> to vector<32x16xbf16>
      %c0_115 = arith.constant 0 : index
      %208 = arith.index_cast %204 : i32 to index
      %c16_116 = arith.constant 16 : index
      %209 = vector.load %arg5[%c0_115, %208, %c16_116] : memref<1x64x32xbf16, #tpu.memory_space<vmem>>, vector<1x32x16xbf16>
      %210 = vector.shape_cast %209 : vector<1x32x16xbf16> to vector<32x16xbf16>
      %cst_117 = arith.constant dense<0.000000e+00> : vector<32x32xf32>
      %211 = tpu.matmul %39, %207, %cst_117 {dimension_numbers = #tpu.dot_dimension_numbers<[1], [1], [0], [0], [0, 0, 1, 0], [], []>} : vector<32x16xbf16>, vector<32x16xbf16>, vector<32x32xf32> -> vector<32x32xf32>
      %212 = tpu.iota {dimensions = array<i32: 1>} : vector<1x32xi32>
      %213 = vector.broadcast %204 : i32 to vector<1x32xi32>
      %214 = arith.addi %212, %213 : vector<1x32xi32>
      %c36_i32 = arith.constant 36 : i32
      %215 = vector.broadcast %c36_i32 : i32 to vector<1x32xi32>
      %216 = arith.cmpi slt, %214, %215 : vector<1x32xi32>
      %cst_118 = arith.constant 0.000000e+00 : f32
      %cst_119 = arith.constant -1.000000e+30 : f32
      %217 = vector.broadcast %cst_118 : f32 to vector<1x32xf32>
      %218 = vector.broadcast %cst_119 : f32 to vector<1x32xf32>
      %219 = arith.select %216, %217, %218 : vector<1x32xi1>, vector<1x32xf32>
      %220 = vector.broadcast %219 : vector<1x32xf32> to vector<32x32xf32>
      %221 = arith.addf %211, %220 : vector<32x32xf32>
      %cst_120 = arith.constant dense<0xFF800000> : vector<32xf32>
      %222 = vector.multi_reduction <maximumf>, %221, %cst_120 [1] : vector<32x32xf32> to vector<32xf32>
      %223 = vector.shape_cast %222 : vector<32xf32> to vector<32x1xf32>
      %224 = arith.maximumf %arg29, %223 : vector<32x1xf32>
      %225 = arith.subf %arg29, %224 : vector<32x1xf32>
      %226 = math.exp %225 : vector<32x1xf32>
      %227 = vector.broadcast %224 : vector<32x1xf32> to vector<32x32xf32>
      %228 = arith.subf %221, %227 : vector<32x32xf32>
      %229 = math.exp %228 : vector<32x32xf32>
      %230 = arith.mulf %226, %arg30 : vector<32x1xf32>
      %cst_121 = arith.constant dense<0.000000e+00> : vector<32xf32>
      %231 = vector.multi_reduction <add>, %229, %cst_121 [1] : vector<32x32xf32> to vector<32xf32>
      %232 = vector.shape_cast %231 : vector<32xf32> to vector<32x1xf32>
      %233 = arith.addf %230, %232 : vector<32x1xf32>
      %234 = vector.broadcast %226 : vector<32x1xf32> to vector<32x16xf32>
      %235 = arith.mulf %234, %arg31 : vector<32x16xf32>
      %236 = arith.truncf %229 : vector<32x32xf32> to vector<32x32xbf16>
      %cst_122 = arith.constant dense<0.000000e+00> : vector<32x16xf32>
      %237 = tpu.matmul %236, %210, %cst_122 {dimension_numbers = #tpu.dot_dimension_numbers<[1], [0], [0], [1], [0, 0, 1, 1], [], []>} : vector<32x32xbf16>, vector<32x16xbf16>, vector<32x16xf32> -> vector<32x16xf32>
      %238 = arith.addf %235, %237 : vector<32x16xf32>
      scf.yield %224, %233, %238 : vector<32x1xf32>, vector<32x1xf32>, vector<32x16xf32>
    }
    %c2_i32_25 = arith.constant 2 : i32
    %45 = tpu.reciprocal %44#1 {approx = true} : vector<32x1xf32> -> vector<32x1xf32>
    %46 = vector.broadcast %45 : vector<32x1xf32> to vector<32x16xf32>
    %47 = arith.mulf %44#2, %46 : vector<32x16xf32>
    %48 = arith.truncf %47 : vector<32x16xf32> to vector<32x16xbf16>
    %c0_26 = arith.constant 0 : index
    %c16 = arith.constant 16 : index
    %49 = vector.load %arg27[%c0_26, %c16] : memref<32x32xbf16, #tpu.memory_space<vmem>>, vector<32x16xbf16>
    tpu.vector_store %arg27[%c0_26, %c16], %48 {strides = array<i32>} : memref<32x32xbf16, #tpu.memory_space<vmem>>, vector<32x16xbf16>,
    %c0_27 = arith.constant 0 : index
    %c0_28 = arith.constant 0 : index
    %50 = vector.load %arg27[%c0_27, %c0_28] : memref<32x32xbf16, #tpu.memory_space<vmem>>, vector<32x32xbf16>
    %c0_29 = arith.constant 0 : index
    %c0_30 = arith.constant 0 : index
    %51 = vector.load %arg11[%c0_29, %c0_30] : memref<32x32xbf16, #tpu.memory_space<vmem>>, vector<32x32xbf16>
    %cst_31 = arith.constant dense<0.000000e+00> : vector<32x32xf32>
    %52 = tpu.matmul %50, %51, %cst_31 {dimension_numbers = #tpu.dot_dimension_numbers<[1], [0], [0], [1], [0, 0, 1, 1], [], []>} : vector<32x32xbf16>, vector<32x32xbf16>, vector<32x32xf32> -> vector<32x32xf32>
    %53 = arith.addf %1, %52 : vector<32x32xf32>
    %c0_32 = arith.constant 0 : index
    %c0_33 = arith.constant 0 : index
    %54 = vector.load %arg12[%c0_32, %c0_33] : memref<1x32xf32, #tpu.memory_space<vmem>>, vector<1x32xf32>
    %55 = vector.broadcast %54 : vector<1x32xf32> to vector<32x32xf32>
    %56 = arith.addf %53, %55 : vector<32x32xf32>
    %cst_34 = arith.constant dense<0.000000e+00> : vector<32xf32>
    %57 = vector.multi_reduction <add>, %56, %cst_34 [1] : vector<32x32xf32> to vector<32xf32>
    %58 = vector.shape_cast %57 : vector<32xf32> to vector<32x1xf32>
    %cst_35 = arith.constant 3.200000e+01 : f32
    %59 = vector.broadcast %cst_35 : f32 to vector<32x1xf32>
    %60 = arith.divf %58, %59 : vector<32x1xf32>
    %61 = vector.broadcast %60 : vector<32x1xf32> to vector<32x32xf32>
    %62 = arith.subf %56, %61 : vector<32x32xf32>
    %63 = arith.mulf %62, %62 : vector<32x32xf32>
    %cst_36 = arith.constant dense<0.000000e+00> : vector<32xf32>
    %64 = vector.multi_reduction <add>, %63, %cst_36 [1] : vector<32x32xf32> to vector<32xf32>
    %65 = vector.shape_cast %64 : vector<32xf32> to vector<32x1xf32>
    %cst_37 = arith.constant 3.200000e+01 : f32
    %66 = vector.broadcast %cst_37 : f32 to vector<32x1xf32>
    %67 = arith.divf %65, %66 : vector<32x1xf32>
    %cst_38 = arith.constant 9.99999974E-6 : f32
    %68 = vector.broadcast %cst_38 : f32 to vector<32x1xf32>
    %69 = arith.addf %67, %68 : vector<32x1xf32>
    %70 = math.rsqrt %69 : vector<32x1xf32>
    %71 = vector.broadcast %70 : vector<32x1xf32> to vector<32x32xf32>
    %72 = arith.mulf %62, %71 : vector<32x32xf32>
    %c0_39 = arith.constant 0 : index
    %c0_40 = arith.constant 0 : index
    %73 = vector.load %arg13[%c0_39, %c0_40] : memref<1x32xf32, #tpu.memory_space<vmem>>, vector<1x32xf32>
    %74 = vector.broadcast %73 : vector<1x32xf32> to vector<32x32xf32>
    %75 = arith.mulf %72, %74 : vector<32x32xf32>
    %c0_41 = arith.constant 0 : index
    %c0_42 = arith.constant 0 : index
    %76 = vector.load %arg14[%c0_41, %c0_42] : memref<1x32xf32, #tpu.memory_space<vmem>>, vector<1x32xf32>
    %77 = vector.broadcast %76 : vector<1x32xf32> to vector<32x32xf32>
    %78 = arith.addf %75, %77 : vector<32x32xf32>
    %79 = arith.truncf %78 : vector<32x32xf32> to vector<32x32xbf16>
    %c0_43 = arith.constant 0 : index
    %c0_44 = arith.constant 0 : index
    %80 = vector.load %arg15[%c0_43, %c0_44] : memref<32x32xbf16, #tpu.memory_space<vmem>>, vector<32x32xbf16>
    %cst_45 = arith.constant dense<0.000000e+00> : vector<32x32xf32>
    %81 = tpu.matmul %79, %80, %cst_45 {dimension_numbers = #tpu.dot_dimension_numbers<[1], [0], [0], [1], [0, 0, 1, 1], [], []>} : vector<32x32xbf16>, vector<32x32xbf16>, vector<32x32xf32> -> vector<32x32xf32>
    %82 = arith.truncf %81 : vector<32x32xf32> to vector<32x32xbf16>
    %83 = tpu.iota {dimensions = array<i32: 1>} : vector<1x128xi32>
    %c8_i32 = arith.constant 8 : i32
    %84 = vector.broadcast %c8_i32 : i32 to vector<1x128xi32>
    %85 = arith.cmpi slt, %83, %84 : vector<1x128xi32>
    %cst_46 = arith.constant 0.000000e+00 : f32
    %cst_47 = arith.constant -1.000000e+30 : f32
    %86 = vector.broadcast %cst_46 : f32 to vector<1x128xf32>
    %87 = vector.broadcast %cst_47 : f32 to vector<1x128xf32>
    %88 = arith.select %85, %86, %87 : vector<1x128xi1>, vector<1x128xf32>
    %89 = vector.extract_strided_slice %82 {offsets = [0, 0], sizes = [32, 16], strides = [1, 1]} : vector<32x32xbf16> to vector<32x16xbf16>
    %c0_48 = arith.constant 0 : index
    %c0_49 = arith.constant 0 : index
    %c0_50 = arith.constant 0 : index
    %90 = vector.load %arg6[%c0_48, %c0_49, %c0_50] : memref<1x128x32xbf16, #tpu.memory_space<vmem>>, vector<1x128x16xbf16>
    %91 = vector.shape_cast %90 : vector<1x128x16xbf16> to vector<128x16xbf16>
    %c0_51 = arith.constant 0 : index
    %c0_52 = arith.constant 0 : index
    %c0_53 = arith.constant 0 : index
    %92 = vector.load %arg7[%c0_51, %c0_52, %c0_53] : memref<1x128x32xbf16, #tpu.memory_space<vmem>>, vector<1x128x16xbf16>
    %93 = vector.shape_cast %92 : vector<1x128x16xbf16> to vector<128x16xbf16>
    %cst_54 = arith.constant dense<0.000000e+00> : vector<32x128xf32>
    %94 = tpu.matmul %89, %91, %cst_54 {dimension_numbers = #tpu.dot_dimension_numbers<[1], [1], [0], [0], [0, 0, 1, 0], [], []>} : vector<32x16xbf16>, vector<128x16xbf16>, vector<32x128xf32> -> vector<32x128xf32>
    %95 = vector.broadcast %88 : vector<1x128xf32> to vector<32x128xf32>
    %96 = arith.addf %94, %95 : vector<32x128xf32>
    %cst_55 = arith.constant dense<0xFF800000> : vector<32xf32>
    %97 = vector.multi_reduction <maximumf>, %96, %cst_55 [1] : vector<32x128xf32> to vector<32xf32>
    %98 = vector.shape_cast %97 : vector<32xf32> to vector<32x1xf32>
    %99 = vector.broadcast %98 : vector<32x1xf32> to vector<32x128xf32>
    %100 = arith.subf %96, %99 : vector<32x128xf32>
    %101 = math.exp %100 : vector<32x128xf32>
    %cst_56 = arith.constant dense<0.000000e+00> : vector<32xf32>
    %102 = vector.multi_reduction <add>, %101, %cst_56 [1] : vector<32x128xf32> to vector<32xf32>
    %103 = vector.shape_cast %102 : vector<32xf32> to vector<32x1xf32>
    %104 = tpu.reciprocal %103 {approx = true} : vector<32x1xf32> -> vector<32x1xf32>
    %105 = vector.broadcast %104 : vector<32x1xf32> to vector<32x128xf32>
    %106 = arith.mulf %101, %105 : vector<32x128xf32>
    %107 = arith.truncf %106 : vector<32x128xf32> to vector<32x128xbf16>
    %cst_57 = arith.constant dense<0.000000e+00> : vector<32x16xf32>
    %108 = tpu.matmul %107, %93, %cst_57 {dimension_numbers = #tpu.dot_dimension_numbers<[1], [0], [0], [1], [0, 0, 1, 1], [], []>} : vector<32x128xbf16>, vector<128x16xbf16>, vector<32x16xf32> -> vector<32x16xf32>
    %109 = arith.truncf %108 : vector<32x16xf32> to vector<32x16xbf16>
    %c0_58 = arith.constant 0 : index
    %c0_59 = arith.constant 0 : index
    %110 = vector.load %arg27[%c0_58, %c0_59] : memref<32x32xbf16, #tpu.memory_space<vmem>>, vector<32x16xbf16>
    tpu.vector_store %arg27[%c0_58, %c0_59], %109 {strides = array<i32>} : memref<32x32xbf16, #tpu.memory_space<vmem>>, vector<32x16xbf16>,
    %111 = vector.extract_strided_slice %82 {offsets = [0, 16], sizes = [32, 16], strides = [1, 1]} : vector<32x32xbf16> to vector<32x16xbf16>
    %c0_60 = arith.constant 0 : index
    %c0_61 = arith.constant 0 : index
    %c16_62 = arith.constant 16 : index
    %112 = vector.load %arg6[%c0_60, %c0_61, %c16_62] : memref<1x128x32xbf16, #tpu.memory_space<vmem>>, vector<1x128x16xbf16>
    %113 = vector.shape_cast %112 : vector<1x128x16xbf16> to vector<128x16xbf16>
    %c0_63 = arith.constant 0 : index
    %c0_64 = arith.constant 0 : index
    %c16_65 = arith.constant 16 : index
    %114 = vector.load %arg7[%c0_63, %c0_64, %c16_65] : memref<1x128x32xbf16, #tpu.memory_space<vmem>>, vector<1x128x16xbf16>
    %115 = vector.shape_cast %114 : vector<1x128x16xbf16> to vector<128x16xbf16>
    %cst_66 = arith.constant dense<0.000000e+00> : vector<32x128xf32>
    %116 = tpu.matmul %111, %113, %cst_66 {dimension_numbers = #tpu.dot_dimension_numbers<[1], [1], [0], [0], [0, 0, 1, 0], [], []>} : vector<32x16xbf16>, vector<128x16xbf16>, vector<32x128xf32> -> vector<32x128xf32>
    %117 = vector.broadcast %88 : vector<1x128xf32> to vector<32x128xf32>
    %118 = arith.addf %116, %117 : vector<32x128xf32>
    %cst_67 = arith.constant dense<0xFF800000> : vector<32xf32>
    %119 = vector.multi_reduction <maximumf>, %118, %cst_67 [1] : vector<32x128xf32> to vector<32xf32>
    %120 = vector.shape_cast %119 : vector<32xf32> to vector<32x1xf32>
    %121 = vector.broadcast %120 : vector<32x1xf32> to vector<32x128xf32>
    %122 = arith.subf %118, %121 : vector<32x128xf32>
    %123 = math.exp %122 : vector<32x128xf32>
    %cst_68 = arith.constant dense<0.000000e+00> : vector<32xf32>
    %124 = vector.multi_reduction <add>, %123, %cst_68 [1] : vector<32x128xf32> to vector<32xf32>
    %125 = vector.shape_cast %124 : vector<32xf32> to vector<32x1xf32>
    %126 = tpu.reciprocal %125 {approx = true} : vector<32x1xf32> -> vector<32x1xf32>
    %127 = vector.broadcast %126 : vector<32x1xf32> to vector<32x128xf32>
    %128 = arith.mulf %123, %127 : vector<32x128xf32>
    %129 = arith.truncf %128 : vector<32x128xf32> to vector<32x128xbf16>
    %cst_69 = arith.constant dense<0.000000e+00> : vector<32x16xf32>
    %130 = tpu.matmul %129, %115, %cst_69 {dimension_numbers = #tpu.dot_dimension_numbers<[1], [0], [0], [1], [0, 0, 1, 1], [], []>} : vector<32x128xbf16>, vector<128x16xbf16>, vector<32x16xf32> -> vector<32x16xf32>
    %131 = arith.truncf %130 : vector<32x16xf32> to vector<32x16xbf16>
    %c0_70 = arith.constant 0 : index
    %c16_71 = arith.constant 16 : index
    %132 = vector.load %arg27[%c0_70, %c16_71] : memref<32x32xbf16, #tpu.memory_space<vmem>>, vector<32x16xbf16>
    tpu.vector_store %arg27[%c0_70, %c16_71], %131 {strides = array<i32>} : memref<32x32xbf16, #tpu.memory_space<vmem>>, vector<32x16xbf16>,
    %c0_72 = arith.constant 0 : index
    %c0_73 = arith.constant 0 : index
    %133 = vector.load %arg27[%c0_72, %c0_73] : memref<32x32xbf16, #tpu.memory_space<vmem>>, vector<32x32xbf16>
    %c0_74 = arith.constant 0 : index
    %c0_75 = arith.constant 0 : index
    %134 = vector.load %arg16[%c0_74, %c0_75] : memref<32x32xbf16, #tpu.memory_space<vmem>>, vector<32x32xbf16>
    %cst_76 = arith.constant dense<0.000000e+00> : vector<32x32xf32>
    %135 = tpu.matmul %133, %134, %cst_76 {dimension_numbers = #tpu.dot_dimension_numbers<[1], [0], [0], [1], [0, 0, 1, 1], [], []>} : vector<32x32xbf16>, vector<32x32xbf16>, vector<32x32xf32> -> vector<32x32xf32>
    %136 = arith.addf %56, %135 : vector<32x32xf32>
    %c0_77 = arith.constant 0 : index
    %c0_78 = arith.constant 0 : index
    %137 = vector.load %arg17[%c0_77, %c0_78] : memref<1x32xf32, #tpu.memory_space<vmem>>, vector<1x32xf32>
    %138 = vector.broadcast %137 : vector<1x32xf32> to vector<32x32xf32>
    %139 = arith.addf %136, %138 : vector<32x32xf32>
    %cst_79 = arith.constant dense<0.000000e+00> : vector<32xf32>
    %140 = vector.multi_reduction <add>, %139, %cst_79 [1] : vector<32x32xf32> to vector<32xf32>
    %141 = vector.shape_cast %140 : vector<32xf32> to vector<32x1xf32>
    %cst_80 = arith.constant 3.200000e+01 : f32
    %142 = vector.broadcast %cst_80 : f32 to vector<32x1xf32>
    %143 = arith.divf %141, %142 : vector<32x1xf32>
    %144 = vector.broadcast %143 : vector<32x1xf32> to vector<32x32xf32>
    %145 = arith.subf %139, %144 : vector<32x32xf32>
    %146 = arith.mulf %145, %145 : vector<32x32xf32>
    %cst_81 = arith.constant dense<0.000000e+00> : vector<32xf32>
    %147 = vector.multi_reduction <add>, %146, %cst_81 [1] : vector<32x32xf32> to vector<32xf32>
    %148 = vector.shape_cast %147 : vector<32xf32> to vector<32x1xf32>
    %cst_82 = arith.constant 3.200000e+01 : f32
    %149 = vector.broadcast %cst_82 : f32 to vector<32x1xf32>
    %150 = arith.divf %148, %149 : vector<32x1xf32>
    %cst_83 = arith.constant 9.99999974E-6 : f32
    %151 = vector.broadcast %cst_83 : f32 to vector<32x1xf32>
    %152 = arith.addf %150, %151 : vector<32x1xf32>
    %153 = math.rsqrt %152 : vector<32x1xf32>
    %154 = vector.broadcast %153 : vector<32x1xf32> to vector<32x32xf32>
    %155 = arith.mulf %145, %154 : vector<32x32xf32>
    %c0_84 = arith.constant 0 : index
    %c0_85 = arith.constant 0 : index
    %156 = vector.load %arg18[%c0_84, %c0_85] : memref<1x32xf32, #tpu.memory_space<vmem>>, vector<1x32xf32>
    %157 = vector.broadcast %156 : vector<1x32xf32> to vector<32x32xf32>
    %158 = arith.mulf %155, %157 : vector<32x32xf32>
    %c0_86 = arith.constant 0 : index
    %c0_87 = arith.constant 0 : index
    %159 = vector.load %arg19[%c0_86, %c0_87] : memref<1x32xf32, #tpu.memory_space<vmem>>, vector<1x32xf32>
    %160 = vector.broadcast %159 : vector<1x32xf32> to vector<32x32xf32>
    %161 = arith.addf %158, %160 : vector<32x32xf32>
    %162 = arith.truncf %161 : vector<32x32xf32> to vector<32x32xbf16>
    %c0_88 = arith.constant 0 : index
    %c0_89 = arith.constant 0 : index
    %163 = vector.load %arg20[%c0_88, %c0_89] : memref<32x256xbf16, #tpu.memory_space<vmem>>, vector<32x256xbf16>
    %cst_90 = arith.constant dense<0.000000e+00> : vector<32x256xf32>
    %164 = tpu.matmul %162, %163, %cst_90 {dimension_numbers = #tpu.dot_dimension_numbers<[1], [0], [0], [1], [0, 0, 1, 1], [], []>} : vector<32x32xbf16>, vector<32x256xbf16>, vector<32x256xf32> -> vector<32x256xf32>
    %c0_91 = arith.constant 0 : index
    %c0_92 = arith.constant 0 : index
    %165 = vector.load %arg21[%c0_91, %c0_92] : memref<1x256xf32, #tpu.memory_space<vmem>>, vector<1x256xf32>
    %166 = vector.broadcast %165 : vector<1x256xf32> to vector<32x256xf32>
    %167 = arith.addf %164, %166 : vector<32x256xf32>
    %168 = vector.extract_strided_slice %167 {offsets = [0, 0], sizes = [32, 128], strides = [1, 1]} : vector<32x256xf32> to vector<32x128xf32>
    %169 = vector.extract_strided_slice %167 {offsets = [0, 128], sizes = [32, 128], strides = [1, 1]} : vector<32x256xf32> to vector<32x128xf32>
    %170 = arith.mulf %169, %169 : vector<32x128xf32>
    %171 = arith.mulf %169, %170 : vector<32x128xf32>
    %cst_93 = arith.constant 4.471500e-02 : f32
    %172 = vector.broadcast %cst_93 : f32 to vector<32x128xf32>
    %173 = arith.mulf %172, %171 : vector<32x128xf32>
    %174 = arith.addf %169, %173 : vector<32x128xf32>
    %cst_94 = arith.constant 0.797884583 : f32
    %175 = vector.broadcast %cst_94 : f32 to vector<32x128xf32>
    %176 = arith.mulf %175, %174 : vector<32x128xf32>
    %177 = math.tanh %176 : vector<32x128xf32>
    %cst_95 = arith.constant 1.000000e+00 : f32
    %178 = vector.broadcast %cst_95 : f32 to vector<32x128xf32>
    %179 = arith.addf %178, %177 : vector<32x128xf32>
    %cst_96 = arith.constant 5.000000e-01 : f32
    %180 = vector.broadcast %cst_96 : f32 to vector<32x128xf32>
    %181 = arith.mulf %180, %179 : vector<32x128xf32>
    %182 = arith.mulf %169, %181 : vector<32x128xf32>
    %183 = arith.mulf %168, %182 : vector<32x128xf32>
    %184 = arith.truncf %183 : vector<32x128xf32> to vector<32x128xbf16>
    %c0_97 = arith.constant 0 : index
    %c0_98 = arith.constant 0 : index
    %185 = vector.load %arg22[%c0_97, %c0_98] : memref<128x32xbf16, #tpu.memory_space<vmem>>, vector<128x32xbf16>
    %cst_99 = arith.constant dense<0.000000e+00> : vector<32x32xf32>
    %186 = tpu.matmul %184, %185, %cst_99 {dimension_numbers = #tpu.dot_dimension_numbers<[1], [0], [0], [1], [0, 0, 1, 1], [], []>} : vector<32x128xbf16>, vector<128x32xbf16>, vector<32x32xf32> -> vector<32x32xf32>
    %187 = arith.addf %139, %186 : vector<32x32xf32>
    %c0_100 = arith.constant 0 : index
    %c0_101 = arith.constant 0 : index
    %188 = vector.load %arg23[%c0_100, %c0_101] : memref<1x32xf32, #tpu.memory_space<vmem>>, vector<1x32xf32>
    %189 = vector.broadcast %188 : vector<1x32xf32> to vector<32x32xf32>
    %190 = arith.addf %187, %189 : vector<32x32xf32>
    %191 = arith.truncf %190 : vector<32x32xf32> to vector<32x32xbf16>
    %c0_102 = arith.constant 0 : index
    %c0_103 = arith.constant 0 : index
    %192 = vector.load %arg24[%c0_102, %c0_103] : memref<32x128xbf16, #tpu.memory_space<vmem>>, vector<32x128xbf16>
    %cst_104 = arith.constant dense<0.000000e+00> : vector<32x128xf32>
    %193 = tpu.matmul %191, %192, %cst_104 {dimension_numbers = #tpu.dot_dimension_numbers<[1], [0], [0], [1], [0, 0, 1, 1], [], []>} : vector<32x32xbf16>, vector<32x128xbf16>, vector<32x128xf32> -> vector<32x128xf32>
    %c0_105 = arith.constant 0 : index
    %c0_106 = arith.constant 0 : index
    %194 = vector.load %arg25[%c0_105, %c0_106] : memref<1x128xf32, #tpu.memory_space<vmem>>, vector<1x128xf32>
    %195 = vector.broadcast %194 : vector<1x128xf32> to vector<32x128xf32>
    %196 = arith.addf %193, %195 : vector<32x128xf32>
    %c0_107 = arith.constant 0 : index
    %c0_108 = arith.constant 0 : index
    %c0_109 = arith.constant 0 : index
    %197 = vector.load %arg2[%c0_107, %c0_108, %c0_109] : memref<1x32x128xf32, #tpu.memory_space<vmem>>, vector<1x32x128xf32>
    %198 = vector.shape_cast %197 : vector<1x32x128xf32> to vector<32x128xf32>
    %199 = arith.addf %196, %198 : vector<32x128xf32>
    %c0_110 = arith.constant 0 : index
    %c0_111 = arith.constant 0 : index
    %c0_112 = arith.constant 0 : index
    %200 = vector.load %arg26[%c0_110, %c0_111, %c0_112] : memref<1x32x128xf32, #tpu.memory_space<vmem>>, vector<1x32x128xf32>
    %201 = vector.shape_cast %200 : vector<1x32x128xf32> to vector<32x128xf32>
    %202 = vector.shape_cast %199 : vector<32x128xf32> to vector<1x32x128xf32>
    tpu.vector_store %arg26[%c0_110, %c0_111, %c0_112], %202 {strides = array<i32>} : memref<1x32x128xf32, #tpu.memory_space<vmem>>, vector<1x32x128xf32>,
    return
  }
  func.func @transform_0(%arg0: i32, %arg1: i32) -> (i32, i32, i32) {
    %c0_i32 = arith.constant 0 : i32
    %c0_i32_0 = arith.constant 0 : i32
    return %arg0, %arg1, %c0_i32 : i32, i32, i32
  }
  func.func @transform_1(%arg0: i32, %arg1: i32) -> (i32, i32, i32) {
    %c0_i32 = arith.constant 0 : i32
    %c0_i32_0 = arith.constant 0 : i32
    return %arg0, %arg1, %c0_i32 : i32, i32, i32
  }
  func.func @transform_2(%arg0: i32, %arg1: i32) -> (i32, i32, i32) {
    %c0_i32 = arith.constant 0 : i32
    %c0_i32_0 = arith.constant 0 : i32
    %c0_i32_1 = arith.constant 0 : i32
    return %arg0, %c0_i32, %c0_i32_0 : i32, i32, i32
  }
  func.func @transform_3(%arg0: i32, %arg1: i32) -> (i32, i32, i32) {
    %c0_i32 = arith.constant 0 : i32
    %c0_i32_0 = arith.constant 0 : i32
    %c0_i32_1 = arith.constant 0 : i32
    return %arg0, %c0_i32, %c0_i32_0 : i32, i32, i32
  }
  func.func @transform_4(%arg0: i32, %arg1: i32) -> (i32, i32, i32) {
    %c0_i32 = arith.constant 0 : i32
    %c0_i32_0 = arith.constant 0 : i32
    %c0_i32_1 = arith.constant 0 : i32
    return %arg0, %c0_i32, %c0_i32_0 : i32, i32, i32
  }
  func.func @transform_5(%arg0: i32, %arg1: i32) -> (i32, i32, i32) {
    %c0_i32 = arith.constant 0 : i32
    %c0_i32_0 = arith.constant 0 : i32
    %c0_i32_1 = arith.constant 0 : i32
    return %arg0, %c0_i32, %c0_i32_0 : i32, i32, i32
  }
  func.func @transform_6(%arg0: i32, %arg1: i32) -> (i32, i32) {
    %c0_i32 = arith.constant 0 : i32
    %c0_i32_0 = arith.constant 0 : i32
    %c0_i32_1 = arith.constant 0 : i32
    return %c0_i32, %c0_i32_0 : i32, i32
  }
  func.func @transform_7(%arg0: i32, %arg1: i32) -> (i32, i32) {
    %c0_i32 = arith.constant 0 : i32
    %c0_i32_0 = arith.constant 0 : i32
    %c0_i32_1 = arith.constant 0 : i32
    return %c0_i32, %c0_i32_0 : i32, i32
  }
  func.func @transform_8(%arg0: i32, %arg1: i32) -> (i32, i32) {
    %c0_i32 = arith.constant 0 : i32
    %c0_i32_0 = arith.constant 0 : i32
    %c0_i32_1 = arith.constant 0 : i32
    return %c0_i32, %c0_i32_0 : i32, i32
  }
  func.func @transform_9(%arg0: i32, %arg1: i32) -> (i32, i32) {
    %c0_i32 = arith.constant 0 : i32
    %c0_i32_0 = arith.constant 0 : i32
    %c0_i32_1 = arith.constant 0 : i32
    return %c0_i32, %c0_i32_0 : i32, i32
  }
  func.func @transform_10(%arg0: i32, %arg1: i32) -> (i32, i32) {
    %c0_i32 = arith.constant 0 : i32
    %c0_i32_0 = arith.constant 0 : i32
    %c0_i32_1 = arith.constant 0 : i32
    return %c0_i32, %c0_i32_0 : i32, i32
  }
  func.func @transform_11(%arg0: i32, %arg1: i32) -> (i32, i32) {
    %c0_i32 = arith.constant 0 : i32
    %c0_i32_0 = arith.constant 0 : i32
    %c0_i32_1 = arith.constant 0 : i32
    return %c0_i32, %c0_i32_0 : i32, i32
  }
  func.func @transform_12(%arg0: i32, %arg1: i32) -> (i32, i32) {
    %c0_i32 = arith.constant 0 : i32
    %c0_i32_0 = arith.constant 0 : i32
    %c0_i32_1 = arith.constant 0 : i32
    return %c0_i32, %c0_i32_0 : i32, i32
  }
  func.func @transform_13(%arg0: i32, %arg1: i32) -> (i32, i32) {
    %c0_i32 = arith.constant 0 : i32
    %c0_i32_0 = arith.constant 0 : i32
    %c0_i32_1 = arith.constant 0 : i32
    return %c0_i32, %c0_i32_0 : i32, i32
  }
  func.func @transform_14(%arg0: i32, %arg1: i32) -> (i32, i32) {
    %c0_i32 = arith.constant 0 : i32
    %c0_i32_0 = arith.constant 0 : i32
    %c0_i32_1 = arith.constant 0 : i32
    return %c0_i32, %c0_i32_0 : i32, i32
  }
  func.func @transform_15(%arg0: i32, %arg1: i32) -> (i32, i32) {
    %c0_i32 = arith.constant 0 : i32
    %c0_i32_0 = arith.constant 0 : i32
    %c0_i32_1 = arith.constant 0 : i32
    return %c0_i32, %c0_i32_0 : i32, i32
  }
  func.func @transform_16(%arg0: i32, %arg1: i32) -> (i32, i32) {
    %c0_i32 = arith.constant 0 : i32
    %c0_i32_0 = arith.constant 0 : i32
    %c0_i32_1 = arith.constant 0 : i32
    return %c0_i32, %c0_i32_0 : i32, i32
  }
  func.func @transform_17(%arg0: i32, %arg1: i32) -> (i32, i32) {
    %c0_i32 = arith.constant 0 : i32
    %c0_i32_0 = arith.constant 0 : i32
    %c0_i32_1 = arith.constant 0 : i32
    return %c0_i32, %c0_i32_0 : i32, i32
  }
  func.func @transform_18(%arg0: i32, %arg1: i32) -> (i32, i32) {
    %c0_i32 = arith.constant 0 : i32
    %c0_i32_0 = arith.constant 0 : i32
    %c0_i32_1 = arith.constant 0 : i32
    return %c0_i32, %c0_i32_0 : i32, i32
  }
  func.func @transform_19(%arg0: i32, %arg1: i32) -> (i32, i32) {
    %c0_i32 = arith.constant 0 : i32
    %c0_i32_0 = arith.constant 0 : i32
    %c0_i32_1 = arith.constant 0 : i32
    return %c0_i32, %c0_i32_0 : i32, i32
  }
  func.func @transform_20(%arg0: i32, %arg1: i32) -> (i32, i32) {
    %c0_i32 = arith.constant 0 : i32
    %c0_i32_0 = arith.constant 0 : i32
    %c0_i32_1 = arith.constant 0 : i32
    return %c0_i32, %c0_i32_0 : i32, i32
  }
  func.func @transform_21(%arg0: i32, %arg1: i32) -> (i32, i32) {
    %c0_i32 = arith.constant 0 : i32
    %c0_i32_0 = arith.constant 0 : i32
    %c0_i32_1 = arith.constant 0 : i32
    return %c0_i32, %c0_i32_0 : i32, i32
  }
  func.func @transform_22(%arg0: i32, %arg1: i32) -> (i32, i32) {
    %c0_i32 = arith.constant 0 : i32
    %c0_i32_0 = arith.constant 0 : i32
    %c0_i32_1 = arith.constant 0 : i32
    return %c0_i32, %c0_i32_0 : i32, i32
  }
  func.func @transform_23(%arg0: i32, %arg1: i32) -> (i32, i32) {
    %c0_i32 = arith.constant 0 : i32
    %c0_i32_0 = arith.constant 0 : i32
    %c0_i32_1 = arith.constant 0 : i32
    return %c0_i32, %c0_i32_0 : i32, i32
  }
  func.func @transform_24(%arg0: i32, %arg1: i32) -> (i32, i32, i32) {
    %c0_i32 = arith.constant 0 : i32
    %c0_i32_0 = arith.constant 0 : i32
    return %arg0, %arg1, %c0_i32 : i32, i32, i32
  }
}

</mosaic_0001>

<llo_original>
// kernel: spatial_transformer_forward.2
$region0: #{spatial_transformer_forward.2}
  #allocation0 [shape = 'u32[]', space=smem, size = 0x4, offset = 0x4, fixed_abs, tag = 'smem constant byte address 0x4 - core index']
  #allocation1 [shape = 'u32[144,128]{1,0:T(1,128)}', space=vmem, size = 0x12000, scoped, tag = 'internal scratch']
  %s0 = inlined_call_operand.hbm [shape: f32[2,64,128], index: 0, kind: input, shape index: {}]
  %s1 = inlined_call_operand.hbm [shape: f32[2,128,32], index: 1, kind: input, shape index: {}]
  %s2 = inlined_call_operand.hbm [shape: f32[128,128], index: 2, kind: input, shape index: {}]
  %s3 = inlined_call_operand.hbm [shape: f32[1,128], index: 3, kind: input, shape index: {}]
  %s4 = inlined_call_operand.hbm [shape: f32[1,128], index: 4, kind: input, shape index: {}]
  %s5 = inlined_call_operand.hbm [shape: bf16[128,32], index: 5, kind: input, shape index: {}]
  %s6 = inlined_call_operand.hbm [shape: f32[1,32], index: 6, kind: input, shape index: {}]
  %s7 = inlined_call_operand.hbm [shape: f32[1,32], index: 7, kind: input, shape index: {}]
  %s8 = inlined_call_operand.hbm [shape: f32[1,32], index: 8, kind: input, shape index: {}]
  %s9 = inlined_call_operand.hbm [shape: bf16[32,32], index: 9, kind: input, shape index: {}]
  %s10 = inlined_call_operand.hbm [shape: bf16[32,32], index: 10, kind: input, shape index: {}]
  %s11 = inlined_call_operand.hbm [shape: bf16[32,32], index: 11, kind: input, shape index: {}]
  %s12 = inlined_call_operand.hbm [shape: bf16[32,32], index: 12, kind: input, shape index: {}]
  %s13 = inlined_call_operand.hbm [shape: f32[2,64,32], index: 13, kind: output, shape index: {0}]
  %s14 = inlined_call_operand.hbm [shape: bf16[2,64,32], index: 14, kind: output, shape index: {1}]
  %s15 = inlined_call_operand.hbm [shape: bf16[2,64,32], index: 15, kind: output, shape index: {2}]
  %s16 = inlined_call_operand.hbm [shape: bf16[2,128,32], index: 16, kind: output, shape index: {3}]
  %s17 = inlined_call_operand.hbm [shape: bf16[2,128,32], index: 17, kind: output, shape index: {4}]
  %18 = xla_tuple %s13, %s14, %s15, %s16, %s17
  %s19 = sld [smem:[#allocation0]]
  $region169: #{spatial_transformer_forward.2} parent=0
    _
  %s21 = ssub.s32 1, %s19
  %s22 = scalar_select 0, %s21, %s19
  $region1: #{spatial_transformer_forward.2} parent=0
    #allocation2 [shape = 'u8[65536]{0}', space=vmem, size = 0x10000, scoped, tag = 'input window, operand 0']
    #allocation3 [shape = 's32[2]{0}', space=sflag, size = 0x8, scoped, tag = 'scoped memory for spatial_transformer_forward.2']
    #allocation4 [shape = 's32[2]{0}', space=sflag, size = 0x8, scoped, tag = 'scoped memory for spatial_transformer_forward.2']
    #allocation5 [shape = 'u8[131072]{0}', space=vmem, size = 0x20000, scoped, tag = 'input window, operand 1']
    #allocation6 [shape = 's32[2]{0}', space=sflag, size = 0x8, scoped, tag = 'scoped memory for spatial_transformer_forward.2']
    #allocation7 [shape = 'u8[65536]{0}', space=vmem, size = 0x10000, scoped, tag = 'input window, operand 2, single buffered']
    #allocation8 [shape = 'u8[512]{0}', space=vmem, size = 0x400, scoped, tag = 'input window, operand 3, single buffered']
    #allocation9 [shape = 's32[1]{0}', space=sflag, size = 0x4, scoped, tag = 'scoped memory for spatial_transformer_forward.2']
    #allocation10 [shape = 'u8[512]{0}', space=vmem, size = 0x400, scoped, tag = 'input window, operand 4, single buffered']
    #allocation11 [shape = 'u8[32768]{0}', space=vmem, size = 0x8000, scoped, tag = 'input window, operand 5, single buffered']
    #allocation12 [shape = 's32[1]{0}', space=sflag, size = 0x4, scoped, tag = 'scoped memory for spatial_transformer_forward.2']
    #allocation13 [shape = 'u8[512]{0}', space=vmem, size = 0x400, scoped, tag = 'input window, operand 6, single buffered']
    #allocation14 [shape = 'u8[512]{0}', space=vmem, size = 0x400, scoped, tag = 'input window, operand 7, single buffered']
    #allocation15 [shape = 's32[1]{0}', space=sflag, size = 0x4, scoped, tag = 'scoped memory for spatial_transformer_forward.2']
    #allocation16 [shape = 'u8[512]{0}', space=vmem, size = 0x400, scoped, tag = 'input window, operand 8, single buffered']
    #allocation17 [shape = 'u8[8192]{0}', space=vmem, size = 0x2000, scoped, tag = 'input window, operand 9, single buffered']
    #allocation18 [shape = 's32[1]{0}', space=sflag, size = 0x4, scoped, tag = 'scoped memory for spatial_transformer_forward.2']
    #allocation19 [shape = 'u8[8192]{0}', space=vmem, size = 0x2000, scoped, tag = 'input window, operand 10, single buffered']
    #allocation20 [shape = 'u8[8192]{0}', space=vmem, size = 0x2000, scoped, tag = 'input window, operand 11, single buffered']
    #allocation21 [shape = 's32[1]{0}', space=sflag, size = 0x4, scoped, tag = 'scoped memory for spatial_transformer_forward.2']
    #allocation22 [shape = 'u8[8192]{0}', space=vmem, size = 0x2000, scoped, tag = 'input window, operand 12, single buffered']
    #allocation23 [shape = 'u8[65536]{0}', space=vmem, size = 0x10000, scoped, tag = 'output window, operand 0']
    #allocation24 [shape = 'u8[32768]{0}', space=vmem, size = 0x8000, scoped, tag = 'output window, operand 1']
    #allocation25 [shape = 's32[2]{0}', space=sflag, size = 0x8, scoped, tag = 'scoped memory for spatial_transformer_forward.2']
    #allocation26 [shape = 'u8[32768]{0}', space=vmem, size = 0x8000, scoped, tag = 'output window, operand 2']
    #allocation27 [shape = 'u8[65536]{0}', space=vmem, size = 0x10000, scoped, tag = 'output window, operand 3']
    #allocation28 [shape = 's32[2]{0}', space=sflag, size = 0x8, scoped, tag = 'scoped memory for spatial_transformer_forward.2']
    #allocation29 [shape = 'u8[65536]{0}', space=vmem, size = 0x10000, scoped, tag = 'output window, operand 4']
    %23 = vsyncpa [#allocation3], 0
    %s24 = scalar_lea.sflag [#allocation3], 1
    %25 = vsyncpa %s24, 0
    %26 = vsyncpa [#allocation6], 0
    %s27 = scalar_lea.sflag [#allocation6], 1
    %28 = vsyncpa %s27, 0
    %29 = vsyncpa [#allocation9], 0
    %30 = vsyncpa [#allocation12], 0
    %31 = vsyncpa [#allocation15], 0
    %32 = vsyncpa [#allocation18], 0
    %33 = vsyncpa [#allocation21], 0
    %34 = vsyncpa [#allocation4], 0
    %s35 = scalar_lea.sflag [#allocation4], 1
    %36 = vsyncpa %s35, 0
    %37 = vsyncpa [#allocation25], 0
    %s38 = scalar_lea.sflag [#allocation25], 1
    %39 = vsyncpa %s38, 0
    %40 = vsyncpa [#allocation28], 0
    %s41 = scalar_lea.sflag [#allocation28], 1
    %42 = vsyncpa %s41, 0
    loop: start=0, step=1, limit=4
    $region2: #{spatial_transformer_forward.2} parent=1 // loop_pre_header
      _
    $region3: #{spatial_transformer_forward.2} parent=1 // loop_header
      %s44 = sphi 0, %s48
      %p45 = scmp.ge.s32.totalorder %s44, 4
      %s54 = sphi 0, %s56
      %s57 = sphi 0, %s54
      %s58 = sphi 0, %s57
      %s74 = sphi 0, %s58
      %s80 = sphi 0, %s82
      %s83 = sphi 0, %s80
      %s84 = sphi 0, %s83
      %s100 = sphi 0, %s84
      %s104 = sphi 0, %s104
      %s106 = sphi 0, %s104
      %s107 = sphi 0, %s106
      %s121 = sphi 0, %s107
      %s125 = sphi 0, %s125
      %s127 = sphi 0, %s125
      %s128 = sphi 0, %s127
      %s142 = sphi 0, %s128
      %s146 = sphi 0, %s146
      %s148 = sphi 0, %s146
      %s149 = sphi 0, %s148
      %s163 = sphi 0, %s149
      %s167 = sphi 0, %s167
      %s169 = sphi 0, %s167
      %s170 = sphi 0, %s169
      %s184 = sphi 0, %s170
      %s188 = sphi 0, %s188
      %s190 = sphi 0, %s188
      %s191 = sphi 0, %s190
      %s205 = sphi 0, %s191
      %s209 = sphi 0, %s209
      %s211 = sphi 0, %s209
      %s212 = sphi 0, %s211
      %s226 = sphi 0, %s212
      %s230 = sphi 0, %s230
      %s232 = sphi 0, %s230
      %s233 = sphi 0, %s232
      %s247 = sphi 0, %s233
      %s251 = sphi 0, %s251
      %s253 = sphi 0, %s251
      %s254 = sphi 0, %s253
      %s268 = sphi 0, %s254
      %s272 = sphi 0, %s272
      %s274 = sphi 0, %s272
      %s275 = sphi 0, %s274
      %s289 = sphi 0, %s275
      %s293 = sphi 0, %s293
      %s295 = sphi 0, %s293
      %s296 = sphi 0, %s295
      %s310 = sphi 0, %s296
      %s314 = sphi 0, %s314
      %s316 = sphi 0, %s314
      %s317 = sphi 0, %s316
      %s331 = sphi 0, %s317
      %s337 = sphi 0, %s339
      %s340 = sphi 0, %s337
      %s341 = sphi 0, %s340
      %s357 = sphi 0, %s341
      %s363 = sphi 0, %s365
      %s366 = sphi 0, %s363
      %s367 = sphi 0, %s366
      %s383 = sphi 0, %s367
      %s389 = sphi 0, %s391
      %s392 = sphi 0, %s389
      %s393 = sphi 0, %s392
      %s409 = sphi 0, %s393
      %s415 = sphi 0, %s417
      %s418 = sphi 0, %s415
      %s419 = sphi 0, %s418
      %s435 = sphi 0, %s419
      %s441 = sphi 0, %s443
      %s444 = sphi 0, %s441
      %s445 = sphi 0, %s444
      %s461 = sphi 0, %s445
    $region4: #{spatial_transformer_forward.2} parent=1 // loop_header_branch
      %47 = sbr.rel (%p45) target = $region8
    $region5: #{spatial_transformer_forward.2} parent=1 // loop_body
      %s49 = ssub.s32 %s44, 1
      %s50 = ssub.s32 %s44, 2
      %s51 = sadd.s32 %s44, 1
      %s52 = ssub.s32 %s44, %s51
      %p53 = scmp.eq.s32.totalorder %s52, 0
      %s55 = sadd.s32 %s54, 1
      %s56 = scalar_select %p53, %s54, %s55
      %p59 = pneg %p53
      %p60 = scmp.eq.s32.totalorder %s44, 1
      %p61 = por %p59, %p60
      %p62 = scmp.ne.s32.totalorder %s54, %s57
      %p63 = scmp.eq.s32.totalorder %s44, 0
      %p64 = por %p62, %p63
      %p65 = scmp.ne.s32.totalorder %s54, %s57
      %p66 = scmp.eq.s32.totalorder %s49, 1
      %p67 = por %p65, %p66
      %p68 = scmp.ne.s32.totalorder %s57, %s58
      %p69 = scmp.eq.s32.totalorder %s49, 0
      %p70 = por %p68, %p69
      %p71 = scmp.ne.s32.totalorder %s57, %s58
      %p72 = scmp.eq.s32.totalorder %s50, 1
      %p73 = por %p71, %p72
      %p75 = scmp.ne.s32.totalorder %s58, %s74
      %p76 = scmp.eq.s32.totalorder %s50, 0
      %p77 = por %p75, %p76
      %s78 = ssub.s32 %s44, %s51
      %p79 = scmp.eq.s32.totalorder %s78, 0
      %s81 = sadd.s32 %s80, 1
      %s82 = scalar_select %p79, %s80, %s81
      %p85 = pneg %p79
      %p86 = scmp.eq.s32.totalorder %s44, 1
      %p87 = por %p85, %p86
      %p88 = scmp.ne.s32.totalorder %s80, %s83
      %p89 = scmp.eq.s32.totalorder %s44, 0
      %p90 = por %p88, %p89
      %p91 = scmp.ne.s32.totalorder %s80, %s83
      %p92 = scmp.eq.s32.totalorder %s49, 1
      %p93 = por %p91, %p92
      %p94 = scmp.ne.s32.totalorder %s83, %s84
      %p95 = scmp.eq.s32.totalorder %s49, 0
      %p96 = por %p94, %p95
      %p97 = scmp.ne.s32.totalorder %s83, %s84
      %p98 = scmp.eq.s32.totalorder %s50, 1
      %p99 = por %p97, %p98
      %p101 = scmp.ne.s32.totalorder %s84, %s100
      %p102 = scmp.eq.s32.totalorder %s50, 0
      %p103 = por %p101, %p102
      %s105 = sadd.s32 %s104, 1
      %p108 = scmp.eq.s32.totalorder %s44, 1
      %p109 = scmp.ne.s32.totalorder %s104, %s106
      %p110 = scmp.eq.s32.totalorder %s44, 0
      %p111 = por %p109, %p110
      %p112 = scmp.ne.s32.totalorder %s104, %s106
      %p113 = scmp.eq.s32.totalorder %s49, 1
      %p114 = por %p112, %p113
      %p115 = scmp.ne.s32.totalorder %s106, %s107
      %p116 = scmp.eq.s32.totalorder %s49, 0
      %p117 = por %p115, %p116
      %p118 = scmp.ne.s32.totalorder %s106, %s107
      %p119 = scmp.eq.s32.totalorder %s50, 1
      %p120 = por %p118, %p119
      %p122 = scmp.ne.s32.totalorder %s107, %s121
      %p123 = scmp.eq.s32.totalorder %s50, 0
      %p124 = por %p122, %p123
      %s126 = sadd.s32 %s125, 1
      %p129 = scmp.eq.s32.totalorder %s44, 1
      %p130 = scmp.ne.s32.totalorder %s125, %s127
      %p131 = scmp.eq.s32.totalorder %s44, 0
      %p132 = por %p130, %p131
      %p133 = scmp.ne.s32.totalorder %s125, %s127
      %p134 = scmp.eq.s32.totalorder %s49, 1
      %p135 = por %p133, %p134
      %p136 = scmp.ne.s32.totalorder %s127, %s128
      %p137 = scmp.eq.s32.totalorder %s49, 0
      %p138 = por %p136, %p137
      %p139 = scmp.ne.s32.totalorder %s127, %s128
      %p140 = scmp.eq.s32.totalorder %s50, 1
      %p141 = por %p139, %p140
      %p143 = scmp.ne.s32.totalorder %s128, %s142
      %p144 = scmp.eq.s32.totalorder %s50, 0
      %p145 = por %p143, %p144
      %s147 = sadd.s32 %s146, 1
      %p150 = scmp.eq.s32.totalorder %s44, 1
      %p151 = scmp.ne.s32.totalorder %s146, %s148
      %p152 = scmp.eq.s32.totalorder %s44, 0
      %p153 = por %p151, %p152
      %p154 = scmp.ne.s32.totalorder %s146, %s148
      %p155 = scmp.eq.s32.totalorder %s49, 1
      %p156 = por %p154, %p155
      %p157 = scmp.ne.s32.totalorder %s148, %s149
      %p158 = scmp.eq.s32.totalorder %s49, 0
      %p159 = por %p157, %p158
      %p160 = scmp.ne.s32.totalorder %s148, %s149
      %p161 = scmp.eq.s32.totalorder %s50, 1
      %p162 = por %p160, %p161
      %p164 = scmp.ne.s32.totalorder %s149, %s163
      %p165 = scmp.eq.s32.totalorder %s50, 0
      %p166 = por %p164, %p165
      %s168 = sadd.s32 %s167, 1
      %p171 = scmp.eq.s32.totalorder %s44, 1
      %p172 = scmp.ne.s32.totalorder %s167, %s169
      %p173 = scmp.eq.s32.totalorder %s44, 0
      %p174 = por %p172, %p173
      %p175 = scmp.ne.s32.totalorder %s167, %s169
      %p176 = scmp.eq.s32.totalorder %s49, 1
      %p177 = por %p175, %p176
      %p178 = scmp.ne.s32.totalorder %s169, %s170
      %p179 = scmp.eq.s32.totalorder %s49, 0
      %p180 = por %p178, %p179
      %p181 = scmp.ne.s32.totalorder %s169, %s170
      %p182 = scmp.eq.s32.totalorder %s50, 1
      %p183 = por %p181, %p182
      %p185 = scmp.ne.s32.totalorder %s170, %s184
      %p186 = scmp.eq.s32.totalorder %s50, 0
      %p187 = por %p185, %p186
      %s189 = sadd.s32 %s188, 1
      %p192 = scmp.eq.s32.totalorder %s44, 1
      %p193 = scmp.ne.s32.totalorder %s188, %s190
      %p194 = scmp.eq.s32.totalorder %s44, 0
      %p195 = por %p193, %p194
      %p196 = scmp.ne.s32.totalorder %s188, %s190
      %p197 = scmp.eq.s32.totalorder %s49, 1
      %p198 = por %p196, %p197
      %p199 = scmp.ne.s32.totalorder %s190, %s191
      %p200 = scmp.eq.s32.totalorder %s49, 0
      %p201 = por %p199, %p200
      %p202 = scmp.ne.s32.totalorder %s190, %s191
      %p203 = scmp.eq.s32.totalorder %s50, 1
      %p204 = por %p202, %p203
      %p206 = scmp.ne.s32.totalorder %s191, %s205
      %p207 = scmp.eq.s32.totalorder %s50, 0
      %p208 = por %p206, %p207
      %s210 = sadd.s32 %s209, 1
      %p213 = scmp.eq.s32.totalorder %s44, 1
      %p214 = scmp.ne.s32.totalorder %s209, %s211
      %p215 = scmp.eq.s32.totalorder %s44, 0
      %p216 = por %p214, %p215
      %p217 = scmp.ne.s32.totalorder %s209, %s211
      %p218 = scmp.eq.s32.totalorder %s49, 1
      %p219 = por %p217, %p218
      %p220 = scmp.ne.s32.totalorder %s211, %s212
      %p221 = scmp.eq.s32.totalorder %s49, 0
      %p222 = por %p220, %p221
      %p223 = scmp.ne.s32.totalorder %s211, %s212
      %p224 = scmp.eq.s32.totalorder %s50, 1
      %p225 = por %p223, %p224
      %p227 = scmp.ne.s32.totalorder %s212, %s226
      %p228 = scmp.eq.s32.totalorder %s50, 0
      %p229 = por %p227, %p228
      %s231 = sadd.s32 %s230, 1
      %p234 = scmp.eq.s32.totalorder %s44, 1
      %p235 = scmp.ne.s32.totalorder %s230, %s232
      %p236 = scmp.eq.s32.totalorder %s44, 0
      %p237 = por %p235, %p236
      %p238 = scmp.ne.s32.totalorder %s230, %s232
      %p239 = scmp.eq.s32.totalorder %s49, 1
      %p240 = por %p238, %p239
      %p241 = scmp.ne.s32.totalorder %s232, %s233
      %p242 = scmp.eq.s32.totalorder %s49, 0
      %p243 = por %p241, %p242
      %p244 = scmp.ne.s32.totalorder %s232, %s233
      %p245 = scmp.eq.s32.totalorder %s50, 1
      %p246 = por %p244, %p245
      %p248 = scmp.ne.s32.totalorder %s233, %s247
      %p249 = scmp.eq.s32.totalorder %s50, 0
      %p250 = por %p248, %p249
      %s252 = sadd.s32 %s251, 1
      %p255 = scmp.eq.s32.totalorder %s44, 1
      %p256 = scmp.ne.s32.totalorder %s251, %s253
      %p257 = scmp.eq.s32.totalorder %s44, 0
      %p258 = por %p256, %p257
      %p259 = scmp.ne.s32.totalorder %s251, %s253
      %p260 = scmp.eq.s32.totalorder %s49, 1
      %p261 = por %p259, %p260
      %p262 = scmp.ne.s32.totalorder %s253, %s254
      %p263 = scmp.eq.s32.totalorder %s49, 0
      %p264 = por %p262, %p263
      %p265 = scmp.ne.s32.totalorder %s253, %s254
      %p266 = scmp.eq.s32.totalorder %s50, 1
      %p267 = por %p265, %p266
      %p269 = scmp.ne.s32.totalorder %s254, %s268
      %p270 = scmp.eq.s32.totalorder %s50, 0
      %p271 = por %p269, %p270
      %s273 = sadd.s32 %s272, 1
      %p276 = scmp.eq.s32.totalorder %s44, 1
      %p277 = scmp.ne.s32.totalorder %s272, %s274
      %p278 = scmp.eq.s32.totalorder %s44, 0
      %p279 = por %p277, %p278
      %p280 = scmp.ne.s32.totalorder %s272, %s274
      %p281 = scmp.eq.s32.totalorder %s49, 1
      %p282 = por %p280, %p281
      %p283 = scmp.ne.s32.totalorder %s274, %s275
      %p284 = scmp.eq.s32.totalorder %s49, 0
      %p285 = por %p283, %p284
      %p286 = scmp.ne.s32.totalorder %s274, %s275
      %p287 = scmp.eq.s32.totalorder %s50, 1
      %p288 = por %p286, %p287
      %p290 = scmp.ne.s32.totalorder %s275, %s289
      %p291 = scmp.eq.s32.totalorder %s50, 0
      %p292 = por %p290, %p291
      %s294 = sadd.s32 %s293, 1
      %p297 = scmp.eq.s32.totalorder %s44, 1
      %p298 = scmp.ne.s32.totalorder %s293, %s295
      %p299 = scmp.eq.s32.totalorder %s44, 0
      %p300 = por %p298, %p299
      %p301 = scmp.ne.s32.totalorder %s293, %s295
      %p302 = scmp.eq.s32.totalorder %s49, 1
      %p303 = por %p301, %p302
      %p304 = scmp.ne.s32.totalorder %s295, %s296
      %p305 = scmp.eq.s32.totalorder %s49, 0
      %p306 = por %p304, %p305
      %p307 = scmp.ne.s32.totalorder %s295, %s296
      %p308 = scmp.eq.s32.totalorder %s50, 1
      %p309 = por %p307, %p308
      %p311 = scmp.ne.s32.totalorder %s296, %s310
      %p312 = scmp.eq.s32.totalorder %s50, 0
      %p313 = por %p311, %p312
      %s315 = sadd.s32 %s314, 1
      %p318 = scmp.eq.s32.totalorder %s44, 1
      %p319 = scmp.ne.s32.totalorder %s314, %s316
      %p320 = scmp.eq.s32.totalorder %s44, 0
      %p321 = por %p319, %p320
      %p322 = scmp.ne.s32.totalorder %s314, %s316
      %p323 = scmp.eq.s32.totalorder %s49, 1
      %p324 = por %p322, %p323
      %p325 = scmp.ne.s32.totalorder %s316, %s317
      %p326 = scmp.eq.s32.totalorder %s49, 0
      %p327 = por %p325, %p326
      %p328 = scmp.ne.s32.totalorder %s316, %s317
      %p329 = scmp.eq.s32.totalorder %s50, 1
      %p330 = por %p328, %p329
      %p332 = scmp.ne.s32.totalorder %s317, %s331
      %p333 = scmp.eq.s32.totalorder %s50, 0
      %p334 = por %p332, %p333
      %s335 = ssub.s32 %s44, %s51
      %p336 = scmp.eq.s32.totalorder %s335, 0
      %s338 = sadd.s32 %s337, 1
      %s339 = scalar_select %p336, %s337, %s338
      %p342 = pneg %p336
      %p343 = scmp.eq.s32.totalorder %s44, 1
      %p344 = por %p342, %p343
      %p345 = scmp.ne.s32.totalorder %s337, %s340
      %p346 = scmp.eq.s32.totalorder %s44, 0
      %p347 = por %p345, %p346
      %p348 = scmp.ne.s32.totalorder %s337, %s340
      %p349 = scmp.eq.s32.totalorder %s49, 1
      %p350 = por %p348, %p349
      %p351 = scmp.ne.s32.totalorder %s340, %s341
      %p352 = scmp.eq.s32.totalorder %s49, 0
      %p353 = por %p351, %p352
      %p354 = scmp.ne.s32.totalorder %s340, %s341
      %p355 = scmp.eq.s32.totalorder %s50, 1
      %p356 = por %p354, %p355
      %p358 = scmp.ne.s32.totalorder %s341, %s357
      %p359 = scmp.eq.s32.totalorder %s50, 0
      %p360 = por %p358, %p359
      %s361 = ssub.s32 %s44, %s51
      %p362 = scmp.eq.s32.totalorder %s361, 0
      %s364 = sadd.s32 %s363, 1
      %s365 = scalar_select %p362, %s363, %s364
      %p368 = pneg %p362
      %p369 = scmp.eq.s32.totalorder %s44, 1
      %p370 = por %p368, %p369
      %p371 = scmp.ne.s32.totalorder %s363, %s366
      %p372 = scmp.eq.s32.totalorder %s44, 0
      %p373 = por %p371, %p372
      %p374 = scmp.ne.s32.totalorder %s363, %s366
      %p375 = scmp.eq.s32.totalorder %s49, 1
      %p376 = por %p374, %p375
      %p377 = scmp.ne.s32.totalorder %s366, %s367
      %p378 = scmp.eq.s32.totalorder %s49, 0
      %p379 = por %p377, %p378
      %p380 = scmp.ne.s32.totalorder %s366, %s367
      %p381 = scmp.eq.s32.totalorder %s50, 1
      %p382 = por %p380, %p381
      %p384 = scmp.ne.s32.totalorder %s367, %s383
      %p385 = scmp.eq.s32.totalorder %s50, 0
      %p386 = por %p384, %p385
      %s387 = ssub.s32 %s44, %s51
      %p388 = scmp.eq.s32.totalorder %s387, 0
      %s390 = sadd.s32 %s389, 1
      %s391 = scalar_select %p388, %s389, %s390
      %p394 = pneg %p388
      %p395 = scmp.eq.s32.totalorder %s44, 1
      %p396 = por %p394, %p395
      %p397 = scmp.ne.s32.totalorder %s389, %s392
      %p398 = scmp.eq.s32.totalorder %s44, 0
      %p399 = por %p397, %p398
      %p400 = scmp.ne.s32.totalorder %s389, %s392
      %p401 = scmp.eq.s32.totalorder %s49, 1
      %p402 = por %p400, %p401
      %p403 = scmp.ne.s32.totalorder %s392, %s393
      %p404 = scmp.eq.s32.totalorder %s49, 0
      %p405 = por %p403, %p404
      %p406 = scmp.ne.s32.totalorder %s392, %s393
      %p407 = scmp.eq.s32.totalorder %s50, 1
      %p408 = por %p406, %p407
      %p410 = scmp.ne.s32.totalorder %s393, %s409
      %p411 = scmp.eq.s32.totalorder %s50, 0
      %p412 = por %p410, %p411
      %s413 = ssub.s32 %s44, %s51
      %p414 = scmp.eq.s32.totalorder %s413, 0
      %s416 = sadd.s32 %s415, 1
      %s417 = scalar_select %p414, %s415, %s416
      %p420 = pneg %p414
      %p421 = scmp.eq.s32.totalorder %s44, 1
      %p422 = por %p420, %p421
      %p423 = scmp.ne.s32.totalorder %s415, %s418
      %p424 = scmp.eq.s32.totalorder %s44, 0
      %p425 = por %p423, %p424
      %p426 = scmp.ne.s32.totalorder %s415, %s418
      %p427 = scmp.eq.s32.totalorder %s49, 1
      %p428 = por %p426, %p427
      %p429 = scmp.ne.s32.totalorder %s418, %s419
      %p430 = scmp.eq.s32.totalorder %s49, 0
      %p431 = por %p429, %p430
      %p432 = scmp.ne.s32.totalorder %s418, %s419
      %p433 = scmp.eq.s32.totalorder %s50, 1
      %p434 = por %p432, %p433
      %p436 = scmp.ne.s32.totalorder %s419, %s435
      %p437 = scmp.eq.s32.totalorder %s50, 0
      %p438 = por %p436, %p437
      %s439 = ssub.s32 %s44, %s51
      %p440 = scmp.eq.s32.totalorder %s439, 0
      %s442 = sadd.s32 %s441, 1
      %s443 = scalar_select %p440, %s441, %s442
      %p446 = pneg %p440
      %p447 = scmp.eq.s32.totalorder %s44, 1
      %p448 = por %p446, %p447
      %p449 = scmp.ne.s32.totalorder %s441, %s444
      %p450 = scmp.eq.s32.totalorder %s44, 0
      %p451 = por %p449, %p450
      %p452 = scmp.ne.s32.totalorder %s441, %s444
      %p453 = scmp.eq.s32.totalorder %s49, 1
      %p454 = por %p452, %p453
      %p455 = scmp.ne.s32.totalorder %s444, %s445
      %p456 = scmp.eq.s32.totalorder %s49, 0
      %p457 = por %p455, %p456
      %p458 = scmp.ne.s32.totalorder %s444, %s445
      %p459 = scmp.eq.s32.totalorder %s50, 1
      %p460 = por %p458, %p459
      %p462 = scmp.ne.s32.totalorder %s445, %s461
      %p463 = scmp.eq.s32.totalorder %s50, 0
      %p464 = por %p462, %p463
      %p465 = scmp.le.s32.totalorder 1, %s44
      %p466 = scmp.lt.s32.totalorder %s44, 3
      %p467 = pnand %p465, %p466
      %p468 = pneg %p467
      // Predicated region
      $region9: #{spatial_transformer_forward.2} parent=5 // pred_check
        _
      $region10: #{spatial_transformer_forward.2} parent=5 // pred_check_branch
        %470 = sbr.rel (%p467) target = $region12
      $region11: #{spatial_transformer_forward.2} parent=5 // pred_region
        %s471 = ssub.s32 %s44, 1
        // Predicated region
        $region13: #{spatial_transformer_forward.2} parent=11 // pred_check
          %p472 = pneg %p117
        $region14: #{spatial_transformer_forward.2} parent=11 // pred_check_branch
          %474 = sbr.rel (%p472) target = $region16
        $region15: #{spatial_transformer_forward.2} parent=11 // pred_region
          %s476 = ssub.s32 2048, 2048
          %477 = vsyncadd [#allocation6], %s476
          %s478 = sshll.u32 [#allocation7], 4
          %s479 = int_to_ptr.vmem [resolvable:$true] %s478
          %484 = dma.hbm_to_vmem [thread:$0]  %s2, 2048, %s479, [#allocation6], 128, 128, 8
        $region16: #{spatial_transformer_forward.2} parent=11 // pred_fallthru
          _
        // Predicated region
        $region17: #{spatial_transformer_forward.2} parent=11 // pred_check
          %p485 = pneg %p138
        $region18: #{spatial_transformer_forward.2} parent=11 // pred_check_branch
          %487 = sbr.rel (%p485) target = $region20
        $region19: #{spatial_transformer_forward.2} parent=11 // pred_region
          %s489 = ssub.s32 16, 16
          %490 = vsyncadd [#allocation9], %s489
          %s492 = sshll.u32 [#allocation8], 4
          %s493 = int_to_ptr.vmem [resolvable:$true] %s492
          %495 = dma.hbm_to_vmem [thread:$0]  %s3, 16, %s493, [#allocation9]
        $region20: #{spatial_transformer_forward.2} parent=11 // pred_fallthru
          _
        // Predicated region
        $region21: #{spatial_transformer_forward.2} parent=11 // pred_check
          %p496 = pneg %p159
        $region22: #{spatial_transformer_forward.2} parent=11 // pred_check_branch
          %498 = sbr.rel (%p496) target = $region24
        $region23: #{spatial_transformer_forward.2} parent=11 // pred_region
          %s500 = ssub.s32 16, 16
          %501 = vsyncadd [#allocation9], %s500
          %s503 = sshll.u32 [#allocation10], 4
          %s504 = int_to_ptr.vmem [resolvable:$true] %s503
          %506 = dma.hbm_to_vmem [thread:$0]  %s4, 16, %s504, [#allocation9]
        $region24: #{spatial_transformer_forward.2} parent=11 // pred_fallthru
          _
        // Predicated region
        $region25: #{spatial_transformer_forward.2} parent=11 // pred_check
          %p507 = pneg %p180
        $region26: #{spatial_transformer_forward.2} parent=11 // pred_check_branch
          %509 = sbr.rel (%p507) target = $region28
        $region27: #{spatial_transformer_forward.2} parent=11 // pred_region
          %s511 = ssub.s32 1024, 1024
          %512 = vsyncadd [#allocation12], %s511
          %s513 = sshll.u32 [#allocation11], 4
          %s514 = int_to_ptr.vmem [resolvable:$true] %s513
          %519 = dma.hbm_to_vmem [thread:$0]  %s5, 1024, %s514, [#allocation12], 64, 64, 4
        $region28: #{spatial_transformer_forward.2} parent=11 // pred_fallthru
          _
        // Predicated region
        $region29: #{spatial_transformer_forward.2} parent=11 // pred_check
          %p520 = pneg %p201
        $region30: #{spatial_transformer_forward.2} parent=11 // pred_check_branch
          %522 = sbr.rel (%p520) target = $region32
        $region31: #{spatial_transformer_forward.2} parent=11 // pred_region
          %s524 = ssub.s32 16, 16
          %525 = vsyncadd [#allocation12], %s524
          %s527 = sshll.u32 [#allocation13], 4
          %s528 = int_to_ptr.vmem [resolvable:$true] %s527
          %530 = dma.hbm_to_vmem [thread:$0]  %s6, 16, %s528, [#allocation12]
        $region32: #{spatial_transformer_forward.2} parent=11 // pred_fallthru
          _
        // Predicated region
        $region33: #{spatial_transformer_forward.2} parent=11 // pred_check
          %p531 = pneg %p222
        $region34: #{spatial_transformer_forward.2} parent=11 // pred_check_branch
          %533 = sbr.rel (%p531) target = $region36
        $region35: #{spatial_transformer_forward.2} parent=11 // pred_region
          %s535 = ssub.s32 16, 16
          %536 = vsyncadd [#allocation15], %s535
          %s538 = sshll.u32 [#allocation14], 4
          %s539 = int_to_ptr.vmem [resolvable:$true] %s538
          %541 = dma.hbm_to_vmem [thread:$0]  %s7, 16, %s539, [#allocation15]
        $region36: #{spatial_transformer_forward.2} parent=11 // pred_fallthru
          _
        // Predicated region
        $region37: #{spatial_transformer_forward.2} parent=11 // pred_check
          %p542 = pneg %p243
        $region38: #{spatial_transformer_forward.2} parent=11 // pred_check_branch
          %544 = sbr.rel (%p542) target = $region40
        $region39: #{spatial_transformer_forward.2} parent=11 // pred_region
          %s546 = ssub.s32 16, 16
          %547 = vsyncadd [#allocation15], %s546
          %s549 = sshll.u32 [#allocation16], 4
          %s550 = int_to_ptr.vmem [resolvable:$true] %s549
          %552 = dma.hbm_to_vmem [thread:$0]  %s8, 16, %s550, [#allocation15]
        $region40: #{spatial_transformer_forward.2} parent=11 // pred_fallthru
          _
        // Predicated region
        $region41: #{spatial_transformer_forward.2} parent=11 // pred_check
          %p553 = pneg %p264
        $region42: #{spatial_transformer_forward.2} parent=11 // pred_check_branch
          %555 = sbr.rel (%p553) target = $region44
        $region43: #{spatial_transformer_forward.2} parent=11 // pred_region
          %s557 = ssub.s32 256, 256
          %558 = vsyncadd [#allocation18], %s557
          %s559 = sshll.u32 [#allocation17], 4
          %s560 = int_to_ptr.vmem [resolvable:$true] %s559
          %565 = dma.hbm_to_vmem [thread:$0]  %s9, 256, %s560, [#allocation18], 64, 64, 4
        $region44: #{spatial_transformer_forward.2} parent=11 // pred_fallthru
          _
        // Predicated region
        $region45: #{spatial_transformer_forward.2} parent=11 // pred_check
          %p566 = pneg %p285
        $region46: #{spatial_transformer_forward.2} parent=11 // pred_check_branch
          %568 = sbr.rel (%p566) target = $region48
        $region47: #{spatial_transformer_forward.2} parent=11 // pred_region
          %s570 = ssub.s32 256, 256
          %571 = vsyncadd [#allocation18], %s570
          %s572 = sshll.u32 [#allocation19], 4
          %s573 = int_to_ptr.vmem [resolvable:$true] %s572
          %578 = dma.hbm_to_vmem [thread:$0]  %s10, 256, %s573, [#allocation18], 64, 64, 4
        $region48: #{spatial_transformer_forward.2} parent=11 // pred_fallthru
          _
        // Predicated region
        $region49: #{spatial_transformer_forward.2} parent=11 // pred_check
          %p579 = pneg %p306
        $region50: #{spatial_transformer_forward.2} parent=11 // pred_check_branch
          %581 = sbr.rel (%p579) target = $region52
        $region51: #{spatial_transformer_forward.2} parent=11 // pred_region
          %s583 = ssub.s32 256, 256
          %584 = vsyncadd [#allocation21], %s583
          %s585 = sshll.u32 [#allocation20], 4
          %s586 = int_to_ptr.vmem [resolvable:$true] %s585
          %591 = dma.hbm_to_vmem [thread:$0]  %s11, 256, %s586, [#allocation21], 64, 64, 4
        $region52: #{spatial_transformer_forward.2} parent=11 // pred_fallthru
          _
        // Predicated region
        $region53: #{spatial_transformer_forward.2} parent=11 // pred_check
          %p592 = pneg %p327
        $region54: #{spatial_transformer_forward.2} parent=11 // pred_check_branch
          %594 = sbr.rel (%p592) target = $region56
        $region55: #{spatial_transformer_forward.2} parent=11 // pred_region
          %s596 = ssub.s32 256, 256
          %597 = vsyncadd [#allocation21], %s596
          %s598 = sshll.u32 [#allocation22], 4
          %s599 = int_to_ptr.vmem [resolvable:$true] %s598
          %604 = dma.hbm_to_vmem [thread:$0]  %s12, 256, %s599, [#allocation21], 64, 64, 4
        $region56: #{spatial_transformer_forward.2} parent=11 // pred_fallthru
          _
      $region12: #{spatial_transformer_forward.2} parent=5 // pred_fallthru
        _
      %p605 = scmp.lt.s32.totalorder %s44, 2
      // Predicated region
      $region57: #{spatial_transformer_forward.2} parent=5 // pred_check
        %p606 = pneg %p605
      $region58: #{spatial_transformer_forward.2} parent=5 // pred_check_branch
        %608 = sbr.rel (%p606) target = $region60
      $region59: #{spatial_transformer_forward.2} parent=5 // pred_region
        // Predicated region
        $region61: #{spatial_transformer_forward.2} parent=59 // pred_check
          %p609 = pneg %p64
        $region62: #{spatial_transformer_forward.2} parent=59 // pred_check_branch
          %611 = sbr.rel (%p609) target = $region64
        $region63: #{spatial_transformer_forward.2} parent=59 // pred_region
          %s612 = sand.u32 %s54, 1
          %s613 = scalar_lea.sflag [#allocation3], %s612
          %s614 = sand.u32 %s54, 1
          %s615 = smul.addr %s614, 64
          %s616 = scalar_lea.vmem [#allocation2], %s615
          %s618 = ssub.s32 1024, 1024
          %619 = vsyncadd %s613, %s618
          %s620 = smul.addr %s44, 8
          %s621 = smul.addr %s620, 128
          %s622 = scalar_lea.hbm %s0, %s621
          %s623 = sshll.u32 %s616, 4
          %s624 = int_to_ptr.vmem [resolvable:$true] %s623
          %629 = dma.hbm_to_vmem [thread:$0]  %s622, 1024, %s624, %s613, 128, 128, 8
        $region64: #{spatial_transformer_forward.2} parent=59 // pred_fallthru
          _
        // Predicated region
        $region65: #{spatial_transformer_forward.2} parent=59 // pred_check
          %p630 = pneg %p90
        $region66: #{spatial_transformer_forward.2} parent=59 // pred_check_branch
          %632 = sbr.rel (%p630) target = $region68
        $region67: #{spatial_transformer_forward.2} parent=59 // pred_region
          %s633 = sand.u32 %s44, 1
          %s634 = scalar_lea.sflag [#allocation6], %s633
          %s635 = sand.u32 %s80, 1
          %s636 = smul.addr %s635, 128
          %s637 = scalar_lea.vmem [#allocation5], %s636
          %s639 = ssub.s32 2048, 2048
          %640 = vsyncadd %s634, %s639
          %s641 = smul.addr %s44, 16
          %s642 = smul.addr %s641, 128
          %s643 = scalar_lea.hbm %s1, %s642
          %s644 = sshll.u32 %s637, 4
          %s645 = int_to_ptr.vmem [resolvable:$true] %s644
          %650 = dma.hbm_to_vmem [thread:$0]  %s643, 2048, %s645, %s634, 128, 128, 8
        $region68: #{spatial_transformer_forward.2} parent=59 // pred_fallthru
          _
      $region60: #{spatial_transformer_forward.2} parent=5 // pred_fallthru
        _
      %p651 = scmp.le.s32.totalorder 1, %s44
      %p652 = scmp.lt.s32.totalorder %s44, 3
      %p653 = pnand %p651, %p652
      %p654 = pneg %p653
      // Predicated region
      $region69: #{spatial_transformer_forward.2} parent=5 // pred_check
        _
      $region70: #{spatial_transformer_forward.2} parent=5 // pred_check_branch
        %656 = sbr.rel (%p653) target = $region72
      $region71: #{spatial_transformer_forward.2} parent=5 // pred_region
        %s657 = ssub.s32 %s44, 1
        %s658 = sand.u32 %s57, 1
        %s659 = scalar_lea.sflag [#allocation3], %s658
        %s660 = sand.u32 %s57, 1
        %s661 = smul.addr %s660, 64
        %s662 = scalar_lea.vmem [#allocation2], %s661
        // Predicated region
        $region73: #{spatial_transformer_forward.2} parent=71 // pred_check
          %p663 = pneg %p70
        $region74: #{spatial_transformer_forward.2} parent=71 // pred_check_branch
          %665 = sbr.rel (%p663) target = $region76
        $region75: #{spatial_transformer_forward.2} parent=71 // pred_region
          %666 = dma.done %s659, 1024
        $region76: #{spatial_transformer_forward.2} parent=71 // pred_fallthru
          _
        %s667 = sand.u32 %s49, 1
        %s668 = scalar_lea.sflag [#allocation6], %s667
        %s669 = sand.u32 %s83, 1
        %s670 = smul.addr %s669, 128
        %s671 = scalar_lea.vmem [#allocation5], %s670
        // Predicated region
        $region77: #{spatial_transformer_forward.2} parent=71 // pred_check
          %p672 = pneg %p96
        $region78: #{spatial_transformer_forward.2} parent=71 // pred_check_branch
          %674 = sbr.rel (%p672) target = $region80
        $region79: #{spatial_transformer_forward.2} parent=71 // pred_region
          %675 = dma.done %s668, 2048
        $region80: #{spatial_transformer_forward.2} parent=71 // pred_fallthru
          _
        // Predicated region
        $region81: #{spatial_transformer_forward.2} parent=71 // pred_check
          %p676 = pneg %p117
        $region82: #{spatial_transformer_forward.2} parent=71 // pred_check_branch
          %678 = sbr.rel (%p676) target = $region84
        $region83: #{spatial_transformer_forward.2} parent=71 // pred_region
          %679 = dma.done [#allocation6], 2048
        $region84: #{spatial_transformer_forward.2} parent=71 // pred_fallthru
          _
        // Predicated region
        $region85: #{spatial_transformer_forward.2} parent=71 // pred_check
          %p680 = pneg %p138
        $region86: #{spatial_transformer_forward.2} parent=71 // pred_check_branch
          %682 = sbr.rel (%p680) target = $region88
        $region87: #{spatial_transformer_forward.2} parent=71 // pred_region
          %683 = dma.done [#allocation9], 16
        $region88: #{spatial_transformer_forward.2} parent=71 // pred_fallthru
          _
        // Predicated region
        $region89: #{spatial_transformer_forward.2} parent=71 // pred_check
          %p684 = pneg %p159
        $region90: #{spatial_transformer_forward.2} parent=71 // pred_check_branch
          %686 = sbr.rel (%p684) target = $region92
        $region91: #{spatial_transformer_forward.2} parent=71 // pred_region
          %687 = dma.done [#allocation9], 16
        $region92: #{spatial_transformer_forward.2} parent=71 // pred_fallthru
          _
        // Predicated region
        $region93: #{spatial_transformer_forward.2} parent=71 // pred_check
          %p688 = pneg %p180
        $region94: #{spatial_transformer_forward.2} parent=71 // pred_check_branch
          %690 = sbr.rel (%p688) target = $region96
        $region95: #{spatial_transformer_forward.2} parent=71 // pred_region
          %691 = dma.done [#allocation12], 1024
        $region96: #{spatial_transformer_forward.2} parent=71 // pred_fallthru
          _
        // Predicated region
        $region97: #{spatial_transformer_forward.2} parent=71 // pred_check
          %p692 = pneg %p201
        $region98: #{spatial_transformer_forward.2} parent=71 // pred_check_branch
          %694 = sbr.rel (%p692) target = $region100
        $region99: #{spatial_transformer_forward.2} parent=71 // pred_region
          %695 = dma.done [#allocation12], 16
        $region100: #{spatial_transformer_forward.2} parent=71 // pred_fallthru
          _
        // Predicated region
        $region101: #{spatial_transformer_forward.2} parent=71 // pred_check
          %p696 = pneg %p222
        $region102: #{spatial_transformer_forward.2} parent=71 // pred_check_branch
          %698 = sbr.rel (%p696) target = $region104
        $region103: #{spatial_transformer_forward.2} parent=71 // pred_region
          %699 = dma.done [#allocation15], 16
        $region104: #{spatial_transformer_forward.2} parent=71 // pred_fallthru
          _
        // Predicated region
        $region105: #{spatial_transformer_forward.2} parent=71 // pred_check
          %p700 = pneg %p243
        $region106: #{spatial_transformer_forward.2} parent=71 // pred_check_branch
          %702 = sbr.rel (%p700) target = $region108
        $region107: #{spatial_transformer_forward.2} parent=71 // pred_region
          %703 = dma.done [#allocation15], 16
        $region108: #{spatial_transformer_forward.2} parent=71 // pred_fallthru
          _
        // Predicated region
        $region109: #{spatial_transformer_forward.2} parent=71 // pred_check
          %p704 = pneg %p264
        $region110: #{spatial_transformer_forward.2} parent=71 // pred_check_branch
          %706 = sbr.rel (%p704) target = $region112
        $region111: #{spatial_transformer_forward.2} parent=71 // pred_region
          %707 = dma.done [#allocation18], 256
        $region112: #{spatial_transformer_forward.2} parent=71 // pred_fallthru
          _
        // Predicated region
        $region113: #{spatial_transformer_forward.2} parent=71 // pred_check
          %p708 = pneg %p285
        $region114: #{spatial_transformer_forward.2} parent=71 // pred_check_branch
          %710 = sbr.rel (%p708) target = $region116
        $region115: #{spatial_transformer_forward.2} parent=71 // pred_region
          %711 = dma.done [#allocation18], 256
        $region116: #{spatial_transformer_forward.2} parent=71 // pred_fallthru
          _
        // Predicated region
        $region117: #{spatial_transformer_forward.2} parent=71 // pred_check
          %p712 = pneg %p306
        $region118: #{spatial_transformer_forward.2} parent=71 // pred_check_branch
          %714 = sbr.rel (%p712) target = $region120
        $region119: #{spatial_transformer_forward.2} parent=71 // pred_region
          %715 = dma.done [#allocation21], 256
        $region120: #{spatial_transformer_forward.2} parent=71 // pred_fallthru
          _
        // Predicated region
        $region121: #{spatial_transformer_forward.2} parent=71 // pred_check
          %p716 = pneg %p327
        $region122: #{spatial_transformer_forward.2} parent=71 // pred_check_branch
          %718 = sbr.rel (%p716) target = $region124
        $region123: #{spatial_transformer_forward.2} parent=71 // pred_region
          %719 = dma.done [#allocation21], 256
        $region124: #{spatial_transformer_forward.2} parent=71 // pred_fallthru
          _
        %s720 = sand.u32 %s57, 1
        %s721 = scalar_lea.sflag [#allocation3], %s720
        %s722 = sand.u32 %s57, 1
        %s723 = smul.addr %s722, 64
        %s724 = scalar_lea.vmem [#allocation2], %s723
        %p725 = pneg %p70
        %p726 = pneg %p67
        %s727 = sand.u32 %s49, 1
        %s728 = scalar_lea.sflag [#allocation6], %s727
        %s729 = sand.u32 %s83, 1
        %s730 = smul.addr %s729, 128
        %s731 = scalar_lea.vmem [#allocation5], %s730
        %p732 = pneg %p96
        %p733 = pneg %p93
        %p734 = pneg %p117
        %p735 = pneg %p114
        %p736 = pneg %p138
        %p737 = pneg %p135
        %p738 = pneg %p159
        %p739 = pneg %p156
        %p740 = pneg %p180
        %p741 = pneg %p177
        %p742 = pneg %p201
        %p743 = pneg %p198
        %p744 = pneg %p222
        %p745 = pneg %p219
        %p746 = pneg %p243
        %p747 = pneg %p240
        %p748 = pneg %p264
        %p749 = pneg %p261
        %p750 = pneg %p285
        %p751 = pneg %p282
        %p752 = pneg %p306
        %p753 = pneg %p303
        %p754 = pneg %p327
        %p755 = pneg %p324
        %p756 = pneg %p353
        %p757 = pneg %p350
        %s758 = sand.u32 %s340, 1
        %s759 = scalar_lea.sflag [#allocation4], %s758
        %s760 = sand.u32 %s340, 1
        %s761 = smul.addr %s760, 64
        %s762 = scalar_lea.vmem [#allocation23], %s761
        %p763 = pneg %p379
        %p764 = pneg %p376
        %s765 = sand.u32 %s49, 1
        %s766 = scalar_lea.sflag [#allocation25], %s765
        %s767 = sand.u32 %s366, 1
        %s768 = smul.addr %s767, 32
        %s769 = scalar_lea.vmem [#allocation24], %s768
        %p770 = pneg %p405
        %p771 = pneg %p402
        %s772 = sand.u32 %s49, 1
        %s773 = scalar_lea.sflag [#allocation25], %s772
        %s774 = sand.u32 %s392, 1
        %s775 = smul.addr %s774, 32
        %s776 = scalar_lea.vmem [#allocation26], %s775
        %p777 = pneg %p431
        %p778 = pneg %p428
        %s779 = sand.u32 %s49, 1
        %s780 = scalar_lea.sflag [#allocation28], %s779
        %s781 = sand.u32 %s418, 1
        %s782 = smul.addr %s781, 64
        %s783 = scalar_lea.vmem [#allocation27], %s782
        %p784 = pneg %p457
        %p785 = pneg %p454
        %s786 = sand.u32 %s49, 1
        %s787 = scalar_lea.sflag [#allocation28], %s786
        %s788 = sand.u32 %s444, 1
        %s789 = smul.addr %s788, 64
        %s790 = scalar_lea.vmem [#allocation29], %s789
        %v792 = vld [vmem:[%s662] sm:$0xff]
        %v793 = vld [vmem:[%s662 + $0x8] sm:$0xff]
        %v794 = vld [vmem:[%s662 + $0x10] sm:$0xff]
        %v795 = vld [vmem:[%s662 + $0x18] sm:$0xff]
        %v796 = vld [vmem:[%s662 + $0x20] sm:$0xff]
        %v797 = vld [vmem:[%s662 + $0x28] sm:$0xff]
        %v798 = vld [vmem:[%s662 + $0x30] sm:$0xff]
        %v799 = vld [vmem:[%s662 + $0x38] sm:$0xff]
        %v800 = vadd.f32 %v792, %v793
        %v801 = vadd.f32 %v800, %v794
        %v802 = vadd.f32 %v801, %v795
        %v803 = vadd.f32 %v802, %v796
        %v804 = vadd.f32 %v803, %v797
        %v805 = vadd.f32 %v804, %v798
        %v806 = vadd.f32 %v805, %v799
        %v807 = vrot.slane %v806, 4
        %v808 = vadd.f32 %v806, %v807
        %v809 = vrot.slane %v808, 2
        %v810 = vadd.f32 %v808, %v809
        %v811 = vrot.slane %v810, 1
        %v812 = vadd.f32 %v810, %v811
        %v813 = vld [vmem:[#allocation7] sm:$0xff]
        %v814 = vld [vmem:[#allocation7 + $0x8] sm:$0xff]
        %v815 = vld [vmem:[#allocation7 + $0x10] sm:$0xff]
        %v816 = vld [vmem:[#allocation7 + $0x18] sm:$0xff]
        %v817 = vld [vmem:[#allocation7 + $0x20] sm:$0xff]
        %v818 = vld [vmem:[#allocation7 + $0x28] sm:$0xff]
        %v819 = vld [vmem:[#allocation7 + $0x30] sm:$0xff]
        %v820 = vld [vmem:[#allocation7 + $0x38] sm:$0xff]
        %v821 = vld [vmem:[#allocation7 + $0x40] sm:$0xff]
        %v822 = vld [vmem:[#allocation7 + $0x48] sm:$0xff]
        %v823 = vld [vmem:[#allocation7 + $0x50] sm:$0xff]
        %v824 = vld [vmem:[#allocation7 + $0x58] sm:$0xff]
        %v825 = vld [vmem:[#allocation7 + $0x60] sm:$0xff]
        %v826 = vld [vmem:[#allocation7 + $0x68] sm:$0xff]
        %v827 = vld [vmem:[#allocation7 + $0x70] sm:$0xff]
        %v828 = vld [vmem:[#allocation7 + $0x78] sm:$0xff]
        %829 = vmatprep.subr.mxu0 0.0
        %830 = vmatpush1.msra.mxu0 %v813
        %831 = vmatprep.subr.mxu0 0.0
        %832 = vmatpush1.msra.mxu0 %v814
        %833 = vmatprep.subr.mxu0 0.0
        %834 = vmatpush1.msra.mxu0 %v815
        %835 = vmatprep.subr.mxu0 0.0
        %836 = vmatpush1.msra.mxu0 %v816
        %837 = vmatprep.subr.mxu0 0.0
        %838 = vmatpush1.msra.mxu0 %v817
        %839 = vmatprep.subr.mxu0 0.0
        %840 = vmatpush1.msra.mxu0 %v818
        %841 = vmatprep.subr.mxu0 0.0
        %842 = vmatpush1.msra.mxu0 %v819
        %843 = vmatprep.subr.mxu0 0.0
        %844 = vmatpush1.msra.mxu0 %v820
        %845 = vmatprep.subr.mxu0 0.0
        %846 = vmatpush1.msra.mxu0 %v821
        %847 = vmatprep.subr.mxu0 0.0
        %848 = vmatpush1.msra.mxu0 %v822
        %849 = vmatprep.subr.mxu0 0.0
        %850 = vmatpush1.msra.mxu0 %v823
        %851 = vmatprep.subr.mxu0 0.0
        %852 = vmatpush1.msra.mxu0 %v824
        %853 = vmatprep.subr.mxu0 0.0
        %854 = vmatpush1.msra.mxu0 %v825
        %855 = vmatprep.subr.mxu0 0.0
        %856 = vmatpush1.msra.mxu0 %v826
        %857 = vmatprep.subr.mxu0 0.0
        %858 = vmatpush1.msra.mxu0 %v827
        %859 = vmatprep.subr.mxu0 0.0
        %860 = vmatpush1.msra.mxu0 %v828
        %861 = vmatprep.subr.mxu0 0.0
        %862 = vmatpush1.msra.mxu0 0.0
        %863 = vmatprep.subr.mxu0 0.0
        %864 = vmatpush1.msra.mxu0 0.0
        %865 = vmatprep.subr.mxu0 0.0
        %866 = vmatpush1.msra.mxu0 0.0
        %867 = vmatprep.subr.mxu0 0.0
        %868 = vmatpush1.msra.mxu0 0.0
        %869 = vmatprep.subr.mxu0 0.0
        %870 = vmatpush1.msra.mxu0 0.0
        %871 = vmatprep.subr.mxu0 0.0
        %872 = vmatpush1.msra.mxu0 0.0
        %873 = vmatprep.subr.mxu0 0.0
        %874 = vmatpush1.msra.mxu0 0.0
        %875 = vmatprep.subr.mxu0 0.0
        %876 = vmatpush1.msra.mxu0 0.0
        %877 = vmatprep.subr.mxu0 0.0
        %878 = vmatpush1.msra.mxu0 0.0
        %879 = vmatprep.subr.mxu0 0.0
        %880 = vmatpush1.msra.mxu0 0.0
        %881 = vmatprep.subr.mxu0 0.0
        %882 = vmatpush1.msra.mxu0 0.0
        %883 = vmatprep.subr.mxu0 0.0
        %884 = vmatpush1.msra.mxu0 0.0
        %885 = vmatprep.subr.mxu0 0.0
        %886 = vmatpush1.msra.mxu0 0.0
        %887 = vmatprep.subr.mxu0 0.0
        %888 = vmatpush1.msra.mxu0 0.0
        %889 = vmatprep.subr.mxu0 0.0
        %890 = vmatpush1.msra.mxu0 0.0
        %891 = vmatprep.subr.mxu0 0.0
        %892 = vmatpush1.msra.mxu0 0.0
        %893 = vmatprep.mubr.f32.mxu0 0.0
        %894 = vmatmul.mubr.f32.gmra.mrb[0].mxu0 %v812
        %v895 = vpop.f32.mrb[0].mxu0
        %v896 = vadd.f32 0.0, %v895
        %v897 = vpop.f32.mrb[0].mxu0
        %898 = vdwg.mxu0
        %v899 = vlaneseq
        %v900 = vshrl.u32 %v899, 7
        %v901 = vsub.s32 0, %v900
        %v902 = vrot.slane %v896, %v901
        %v903 = vsub.f32 %v792, %v902
        %v904 = vsub.f32 %v793, %v902
        %v905 = vsub.f32 %v794, %v902
        %v906 = vsub.f32 %v795, %v902
        %v907 = vsub.f32 %v796, %v902
        %v908 = vsub.f32 %v797, %v902
        %v909 = vsub.f32 %v798, %v902
        %v910 = vsub.f32 %v799, %v902
        %v911 = vlaneseq
        %v912 = vshrl.u32 %v911, 7
        %v913 = vadd.s32 %v912, 8
        %v914 = vadd.s32 %v912, 16
        %v915 = vadd.s32 %v912, 24
        %v916 = vadd.s32 %v912, 32
        %v917 = vadd.s32 %v912, 40
        %v918 = vadd.s32 %v912, 48
        %v919 = vadd.s32 %v912, 56
        %vm920 = vcmp.lt.s32.totalorder %v912, 36
        %vm921 = vcmp.lt.s32.totalorder %v913, 36
        %vm922 = vcmp.lt.s32.totalorder %v914, 36
        %vm923 = vcmp.lt.s32.totalorder %v915, 36
        %vm924 = vcmp.lt.s32.totalorder %v916, 36
        %vm925 = vcmp.lt.s32.totalorder %v917, 36
        %vm926 = vcmp.lt.s32.totalorder %v918, 36
        %vm927 = vcmp.lt.s32.totalorder %v919, 36
        %v928 = vsel %vm920, 1, 0
        %v929 = vsel %vm921, 1, 0
        %v930 = vsel %vm922, 1, 0
        %v931 = vsel %vm923, 1, 0
        %v932 = vsel %vm924, 1, 0
        %v933 = vsel %vm925, 1, 0
        %v934 = vsel %vm926, 1, 0
        %v935 = vsel %vm927, 1, 0
        %vm936 = vcmp.eq.s32.totalorder %v928, 1
        %vm937 = vcmp.eq.s32.totalorder %v929, 1
        %vm938 = vcmp.eq.s32.totalorder %v930, 1
        %vm939 = vcmp.eq.s32.totalorder %v931, 1
        %vm940 = vcmp.eq.s32.totalorder %v932, 1
        %vm941 = vcmp.eq.s32.totalorder %v933, 1
        %vm942 = vcmp.eq.s32.totalorder %v934, 1
        %vm943 = vcmp.eq.s32.totalorder %v935, 1
        %v944 = vsel %vm936, %v903, 0.0
        %v945 = vsel %vm937, %v904, 0.0
        %v946 = vsel %vm938, %v905, 0.0
        %v947 = vsel %vm939, %v906, 0.0
        %v948 = vsel %vm940, %v907, 0.0
        %v949 = vsel %vm941, %v908, 0.0
        %v950 = vsel %vm942, %v909, 0.0
        %v951 = vsel %vm943, %v910, 0.0
        %v952 = vmul.f32 %v944, %v944
        %v953 = vmul.f32 %v945, %v945
        %v954 = vmul.f32 %v946, %v946
        %v955 = vmul.f32 %v947, %v947
        %v956 = vmul.f32 %v948, %v948
        %v957 = vmul.f32 %v949, %v949
        %v958 = vmul.f32 %v950, %v950
        %v959 = vmul.f32 %v951, %v951
        %v960 = vadd.f32 %v952, %v953
        %v961 = vadd.f32 %v960, %v954
        %v962 = vadd.f32 %v961, %v955
        %v963 = vadd.f32 %v962, %v956
        %v964 = vadd.f32 %v963, %v957
        %v965 = vadd.f32 %v964, %v958
        %v966 = vadd.f32 %v965, %v959
        %v967 = vrot.slane %v966, 4
        %v968 = vadd.f32 %v966, %v967
        %v969 = vrot.slane %v968, 2
        %v970 = vadd.f32 %v968, %v969
        %v971 = vrot.slane %v970, 1
        %v972 = vadd.f32 %v970, %v971
        %973 = vmatprep.subr.mxu0 0.0
        %974 = vmatpush1.msra.mxu0 %v813
        %975 = vmatprep.subr.mxu0 0.0
        %976 = vmatpush1.msra.mxu0 %v814
        %977 = vmatprep.subr.mxu0 0.0
        %978 = vmatpush1.msra.mxu0 %v815
        %979 = vmatprep.subr.mxu0 0.0
        %980 = vmatpush1.msra.mxu0 %v816
        %981 = vmatprep.subr.mxu0 0.0
        %982 = vmatpush1.msra.mxu0 %v817
        %983 = vmatprep.subr.mxu0 0.0
        %984 = vmatpush1.msra.mxu0 %v818
        %985 = vmatprep.subr.mxu0 0.0
        %986 = vmatpush1.msra.mxu0 %v819
        %987 = vmatprep.subr.mxu0 0.0
        %988 = vmatpush1.msra.mxu0 %v820
        %989 = vmatprep.subr.mxu0 0.0
        %990 = vmatpush1.msra.mxu0 %v821
        %991 = vmatprep.subr.mxu0 0.0
        %992 = vmatpush1.msra.mxu0 %v822
        %993 = vmatprep.subr.mxu0 0.0
        %994 = vmatpush1.msra.mxu0 %v823
        %995 = vmatprep.subr.mxu0 0.0
        %996 = vmatpush1.msra.mxu0 %v824
        %997 = vmatprep.subr.mxu0 0.0
        %998 = vmatpush1.msra.mxu0 %v825
        %999 = vmatprep.subr.mxu0 0.0
        %1000 = vmatpush1.msra.mxu0 %v826
        %1001 = vmatprep.subr.mxu0 0.0
        %1002 = vmatpush1.msra.mxu0 %v827
        %1003 = vmatprep.subr.mxu0 0.0
        %1004 = vmatpush1.msra.mxu0 %v828
        %1005 = vmatprep.subr.mxu0 0.0
        %1006 = vmatpush1.msra.mxu0 0.0
        %1007 = vmatprep.subr.mxu0 0.0
        %1008 = vmatpush1.msra.mxu0 0.0
        %1009 = vmatprep.subr.mxu0 0.0
        %1010 = vmatpush1.msra.mxu0 0.0
        %1011 = vmatprep.subr.mxu0 0.0
        %1012 = vmatpush1.msra.mxu0 0.0
        %1013 = vmatprep.subr.mxu0 0.0
        %1014 = vmatpush1.msra.mxu0 0.0
        %1015 = vmatprep.subr.mxu0 0.0
        %1016 = vmatpush1.msra.mxu0 0.0
        %1017 = vmatprep.subr.mxu0 0.0
        %1018 = vmatpush1.msra.mxu0 0.0
        %1019 = vmatprep.subr.mxu0 0.0
        %1020 = vmatpush1.msra.mxu0 0.0
        %1021 = vmatprep.subr.mxu0 0.0
        %1022 = vmatpush1.msra.mxu0 0.0
        %1023 = vmatprep.subr.mxu0 0.0
        %1024 = vmatpush1.msra.mxu0 0.0
        %1025 = vmatprep.subr.mxu0 0.0
        %1026 = vmatpush1.msra.mxu0 0.0
        %1027 = vmatprep.subr.mxu0 0.0
        %1028 = vmatpush1.msra.mxu0 0.0
        %1029 = vmatprep.subr.mxu0 0.0
        %1030 = vmatpush1.msra.mxu0 0.0
        %1031 = vmatprep.subr.mxu0 0.0
        %1032 = vmatpush1.msra.mxu0 0.0
        %1033 = vmatprep.subr.mxu0 0.0
        %1034 = vmatpush1.msra.mxu0 0.0
        %1035 = vmatprep.subr.mxu0 0.0
        %1036 = vmatpush1.msra.mxu0 0.0
        %1037 = vmatprep.mubr.f32.mxu0 0.0
        %1038 = vmatmul.mubr.f32.gmra.mrb[0].mxu0 %v972
        %v1039 = vpop.f32.mrb[0].mxu0
        %v1040 = vadd.f32 1e-06, %v1039
        %v1041 = vpop.f32.mrb[0].mxu0
        %1042 = vdwg.mxu0
        %v1043 = vrsqrt.pop %v1040
        %v1044 = vlaneseq
        %v1045 = vshrl.u32 %v1044, 7
        %v1046 = vsub.s32 0, %v1045
        %v1047 = vrot.slane %v1043, %v1046
        %v1048 = vmul.f32 %v944, %v1047
        %v1049 = vmul.f32 %v945, %v1047
        %v1050 = vmul.f32 %v946, %v1047
        %v1051 = vmul.f32 %v947, %v1047
        %v1052 = vmul.f32 %v948, %v1047
        %v1053 = vmul.f32 %v949, %v1047
        %v1054 = vmul.f32 %v950, %v1047
        %v1055 = vmul.f32 %v951, %v1047
        %v1056 = vld [vmem:[#allocation8] sm:$0x1]
        %v1058 = vlaneseq
        %v1059 = vshrl.u32 %v1058, 7
        %v1060 = vsub.s32 0, %v1059
        %v1061 = vrot.slane %v1056, %v1060
        %v1063 = vmul.f32 %v1048, %v1061
        %v1064 = vmul.f32 %v1049, %v1061
        %v1065 = vmul.f32 %v1050, %v1061
        %v1066 = vmul.f32 %v1051, %v1061
        %v1067 = vmul.f32 %v1052, %v1061
        %v1068 = vmul.f32 %v1053, %v1061
        %v1069 = vmul.f32 %v1054, %v1061
        %v1070 = vmul.f32 %v1055, %v1061
        %v1071 = vld [vmem:[#allocation10] sm:$0x1]
        %v1073 = vlaneseq
        %v1074 = vshrl.u32 %v1073, 7
        %v1075 = vsub.s32 0, %v1074
        %v1076 = vrot.slane %v1071, %v1075
        %v1078 = vadd.f32 %v1063, %v1076
        %v1079 = vadd.f32 %v1064, %v1076
        %v1080 = vadd.f32 %v1065, %v1076
        %v1081 = vadd.f32 %v1066, %v1076
        %v1082 = vadd.f32 %v1067, %v1076
        %v1083 = vadd.f32 %v1068, %v1076
        %v1084 = vadd.f32 %v1069, %v1076
        %v1085 = vadd.f32 %v1070, %v1076
        %v1086 = vpack.c.bf16 %v1079, %v1078
        %v1087 = vpack.c.bf16 %v1081, %v1080
        %v1088 = vpack.c.bf16 %v1083, %v1082
        %v1089 = vpack.c.bf16 %v1085, %v1084
        %v1090 = vld [vmem:[#allocation11] sm:$0xf]
        %v1091 = vld [vmem:[#allocation11 + $0x4] sm:$0xf]
        %v1092 = vld [vmem:[#allocation11 + $0x8] sm:$0xf]
        %v1093 = vld [vmem:[#allocation11 + $0xc] sm:$0xf]
        %v1094 = vld [vmem:[#allocation11 + $0x10] sm:$0xf]
        %v1095 = vld [vmem:[#allocation11 + $0x14] sm:$0xf]
        %v1096 = vld [vmem:[#allocation11 + $0x18] sm:$0xf]
        %v1097 = vld [vmem:[#allocation11 + $0x1c] sm:$0xf]
        %v1098 = vld [vmem:[#allocation11 + $0x20] sm:$0xf]
        %v1099 = vld [vmem:[#allocation11 + $0x24] sm:$0xf]
        %v1100 = vld [vmem:[#allocation11 + $0x28] sm:$0xf]
        %v1101 = vld [vmem:[#allocation11 + $0x2c] sm:$0xf]
        %v1102 = vld [vmem:[#allocation11 + $0x30] sm:$0xf]
        %v1103 = vld [vmem:[#allocation11 + $0x34] sm:$0xf]
        %v1104 = vld [vmem:[#allocation11 + $0x38] sm:$0xf]
        %v1105 = vld [vmem:[#allocation11 + $0x3c] sm:$0xf]
        %v1106 = vld [vmem:[#allocation13] sm:$0x1]
        %v1108 = vlaneseq
        %v1109 = vshrl.u32 %v1108, 7
        %v1110 = vsub.s32 0, %v1109
        %v1111 = vrot.slane %v1106, %v1110
        %v1129 = vunpack.c.l.b16 %v1090
        %v1130 = vunpack.c.l.b16 %v1091
        %v1131 = vunpack.c.l.b16 %v1092
        %v1132 = vunpack.c.l.b16 %v1093
        %v1133 = vunpack.c.l.b16 %v1094
        %v1134 = vunpack.c.l.b16 %v1095
        %v1135 = vunpack.c.l.b16 %v1096
        %v1136 = vunpack.c.l.b16 %v1097
        %v1137 = vunpack.c.l.b16 %v1098
        %v1138 = vunpack.c.l.b16 %v1099
        %v1139 = vunpack.c.l.b16 %v1100
        %v1140 = vunpack.c.l.b16 %v1101
        %v1141 = vunpack.c.l.b16 %v1102
        %v1142 = vunpack.c.l.b16 %v1103
        %v1143 = vunpack.c.l.b16 %v1104
        %v1144 = vunpack.c.l.b16 %v1105
        %v1145 = vpack.c.b16 %v1130, %v1129
        %v1146 = vpack.c.b16 %v1132, %v1131
        %v1147 = vpack.c.b16 %v1134, %v1133
        %v1148 = vpack.c.b16 %v1136, %v1135
        %v1149 = vpack.c.b16 %v1138, %v1137
        %v1150 = vpack.c.b16 %v1140, %v1139
        %v1151 = vpack.c.b16 %v1142, %v1141
        %v1152 = vpack.c.b16 %v1144, %v1143
        %1161 = vmatprep.subr.bf16.mxu0 0
        %1162 = vmatpush1.bf16.msra.mxu0 %v1145
        %1163 = vmatprep.subr.bf16.mxu0 0
        %1164 = vmatpush1.bf16.msra.mxu0 %v1146
        %1165 = vmatprep.subr.bf16.mxu0 0
        %1166 = vmatpush1.bf16.msra.mxu0 %v1147
        %1167 = vmatprep.subr.bf16.mxu0 0
        %1168 = vmatpush1.bf16.msra.mxu0 %v1148
        %1169 = vmatprep.subr.bf16.mxu0 0
        %1170 = vmatpush1.bf16.msra.mxu0 %v1149
        %1171 = vmatprep.subr.bf16.mxu0 0
        %1172 = vmatpush1.bf16.msra.mxu0 %v1150
        %1173 = vmatprep.subr.bf16.mxu0 0
        %1174 = vmatpush1.bf16.msra.mxu0 %v1151
        %1175 = vmatprep.subr.bf16.mxu0 0
        %1176 = vmatpush1.bf16.msra.mxu0 %v1152
        %1177 = vmatprep.subr.bf16.mxu0 0
        %1178 = vmatpush1.bf16.msra.mxu0 0
        %1179 = vmatprep.subr.bf16.mxu0 0
        %1180 = vmatpush1.bf16.msra.mxu0 0
        %1181 = vmatprep.subr.bf16.mxu0 0
        %1182 = vmatpush1.bf16.msra.mxu0 0
        %1183 = vmatprep.subr.bf16.mxu0 0
        %1184 = vmatpush1.bf16.msra.mxu0 0
        %1185 = vmatprep.subr.bf16.mxu0 0
        %1186 = vmatpush1.bf16.msra.mxu0 0
        %1187 = vmatprep.subr.bf16.mxu0 0
        %1188 = vmatpush1.bf16.msra.mxu0 0
        %1189 = vmatprep.subr.bf16.mxu0 0
        %1190 = vmatpush1.bf16.msra.mxu0 0
        %1191 = vmatprep.subr.bf16.mxu0 0
        %1192 = vmatpush1.bf16.msra.mxu0 0
        %1193 = vmatprep.mubr.bf16.mxu0 0
        %1194 = vmatmul.mubr.bf16.gmra.mrb[0].mxu0 %v1086
        %v1195 = vpop.f32.mrb[0].mxu0
        %v1196 = vadd.f32 %v1111, %v1195
        %v1197 = vpop.f32.mrb[0].mxu0
        %v1198 = vpop.f32.mrb[0].mxu0
        %v1199 = vadd.f32 %v1111, %v1198
        %v1200 = vpop.f32.mrb[0].mxu0
        %1201 = vmatprep.mubr.bf16.mxu0 0
        %1202 = vmatmul.mubr.bf16.gmra.mrb[0].mxu0 %v1087
        %v1203 = vpop.f32.mrb[0].mxu0
        %v1204 = vadd.f32 %v1111, %v1203
        %v1205 = vpop.f32.mrb[0].mxu0
        %v1206 = vpop.f32.mrb[0].mxu0
        %v1207 = vadd.f32 %v1111, %v1206
        %v1208 = vpop.f32.mrb[0].mxu0
        %1209 = vmatprep.mubr.bf16.mxu0 0
        %1210 = vmatmul.mubr.bf16.gmra.mrb[0].mxu0 %v1088
        %v1211 = vpop.f32.mrb[0].mxu0
        %v1212 = vadd.f32 %v1111, %v1211
        %v1213 = vpop.f32.mrb[0].mxu0
        %v1214 = vpop.f32.mrb[0].mxu0
        %v1215 = vadd.f32 %v1111, %v1214
        %v1216 = vpop.f32.mrb[0].mxu0
        %1217 = vmatprep.mubr.bf16.mxu0 0
        %1218 = vmatmul.mubr.bf16.gmra.mrb[0].mxu0 %v1089
        %v1219 = vpop.f32.mrb[0].mxu0
        %v1220 = vadd.f32 %v1111, %v1219
        %v1221 = vpop.f32.mrb[0].mxu0
        %v1222 = vpop.f32.mrb[0].mxu0
        %v1223 = vadd.f32 %v1111, %v1222
        %v1224 = vpop.f32.mrb[0].mxu0
        %1225 = vdwg.mxu0
        %vm1226 = vcmask 261120
        %1227 = vst.msk [vmem:[%s762] sm:$0xff] %vm1226, %v1196
        %1228 = vst.msk [vmem:[%s762 + $0x8] sm:$0xff] %vm1226, %v1199
        %1229 = vst.msk [vmem:[%s762 + $0x10] sm:$0xff] %vm1226, %v1204
        %1230 = vst.msk [vmem:[%s762 + $0x18] sm:$0xff] %vm1226, %v1207
        %1231 = vst.msk [vmem:[%s762 + $0x20] sm:$0xff] %vm1226, %v1212
        %1232 = vst.msk [vmem:[%s762 + $0x28] sm:$0xff] %vm1226, %v1215
        %1233 = vst.msk [vmem:[%s762 + $0x30] sm:$0xff] %vm1226, %v1220
        %1234 = vst.msk [vmem:[%s762 + $0x38] sm:$0xff] %vm1226, %v1223
        %v1235 = vsel %vm1226, %v1196, 0.0
        %1236 = vadd.xlane.f32.xlu0 %v1235
        %v1237 = vpop.xlane.xlu0 %1236
        %v1238 = vsel %vm1226, %v1199, 0.0
        %1239 = vadd.xlane.f32.xlu0 %v1238
        %v1240 = vpop.xlane.xlu0 %1239
        %v1241 = vsel %vm1226, %v1204, 0.0
        %1242 = vadd.xlane.f32.xlu0 %v1241
        %v1243 = vpop.xlane.xlu0 %1242
        %v1244 = vsel %vm1226, %v1207, 0.0
        %1245 = vadd.xlane.f32.xlu0 %v1244
        %v1246 = vpop.xlane.xlu0 %1245
        %v1247 = vsel %vm1226, %v1212, 0.0
        %1248 = vadd.xlane.f32.xlu0 %v1247
        %v1249 = vpop.xlane.xlu0 %1248
        %v1250 = vsel %vm1226, %v1215, 0.0
        %1251 = vadd.xlane.f32.xlu0 %v1250
        %v1252 = vpop.xlane.xlu0 %1251
        %v1253 = vsel %vm1226, %v1220, 0.0
        %1254 = vadd.xlane.f32.xlu0 %v1253
        %v1255 = vpop.xlane.xlu0 %1254
        %v1256 = vsel %vm1226, %v1223, 0.0
        %1257 = vadd.xlane.f32.xlu0 %v1256
        %v1258 = vpop.xlane.xlu0 %1257
        %v1259 = vrcp.pop 32.0
        %v1260 = vmul.f32 %v1237, %v1259
        %v1261 = vmul.f32 %v1240, %v1259
        %v1262 = vmul.f32 %v1243, %v1259
        %v1263 = vmul.f32 %v1246, %v1259
        %v1264 = vmul.f32 %v1249, %v1259
        %v1265 = vmul.f32 %v1252, %v1259
        %v1266 = vmul.f32 %v1255, %v1259
        %v1267 = vmul.f32 %v1258, %v1259
        %v1268 = vsub.f32 %v1196, %v1260
        %v1269 = vsub.f32 %v1199, %v1261
        %v1270 = vsub.f32 %v1204, %v1262
        %v1271 = vsub.f32 %v1207, %v1263
        %v1272 = vsub.f32 %v1212, %v1264
        %v1273 = vsub.f32 %v1215, %v1265
        %v1274 = vsub.f32 %v1220, %v1266
        %v1275 = vsub.f32 %v1223, %v1267
        %v1276 = vmul.f32 %v1268, %v1268
        %v1277 = vmul.f32 %v1269, %v1269
        %v1278 = vmul.f32 %v1270, %v1270
        %v1279 = vmul.f32 %v1271, %v1271
        %v1280 = vmul.f32 %v1272, %v1272
        %v1281 = vmul.f32 %v1273, %v1273
        %v1282 = vmul.f32 %v1274, %v1274
        %v1283 = vmul.f32 %v1275, %v1275
        %v1284 = vsel %vm1226, %v1276, 0.0
        %1285 = vadd.xlane.f32.xlu0 %v1284
        %v1286 = vpop.xlane.xlu0 %1285
        %v1287 = vsel %vm1226, %v1277, 0.0
        %1288 = vadd.xlane.f32.xlu0 %v1287
        %v1289 = vpop.xlane.xlu0 %1288
        %v1290 = vsel %vm1226, %v1278, 0.0
        %1291 = vadd.xlane.f32.xlu0 %v1290
        %v1292 = vpop.xlane.xlu0 %1291
        %v1293 = vsel %vm1226, %v1279, 0.0
        %1294 = vadd.xlane.f32.xlu0 %v1293
        %v1295 = vpop.xlane.xlu0 %1294
        %v1296 = vsel %vm1226, %v1280, 0.0
        %1297 = vadd.xlane.f32.xlu0 %v1296
        %v1298 = vpop.xlane.xlu0 %1297
        %v1299 = vsel %vm1226, %v1281, 0.0
        %1300 = vadd.xlane.f32.xlu0 %v1299
        %v1301 = vpop.xlane.xlu0 %1300
        %v1302 = vsel %vm1226, %v1282, 0.0
        %1303 = vadd.xlane.f32.xlu0 %v1302
        %v1304 = vpop.xlane.xlu0 %1303
        %v1305 = vsel %vm1226, %v1283, 0.0
        %1306 = vadd.xlane.f32.xlu0 %v1305
        %v1307 = vpop.xlane.xlu0 %1306
        %v1308 = vmul.f32 %v1286, %v1259
        %v1309 = vmul.f32 %v1289, %v1259
        %v1310 = vmul.f32 %v1292, %v1259
        %v1311 = vmul.f32 %v1295, %v1259
        %v1312 = vmul.f32 %v1298, %v1259
        %v1313 = vmul.f32 %v1301, %v1259
        %v1314 = vmul.f32 %v1304, %v1259
        %v1315 = vmul.f32 %v1307, %v1259
        %v1316 = vadd.f32 %v1308, 1e-05
        %v1317 = vadd.f32 %v1309, 1e-05
        %v1318 = vadd.f32 %v1310, 1e-05
        %v1319 = vadd.f32 %v1311, 1e-05
        %v1320 = vadd.f32 %v1312, 1e-05
        %v1321 = vadd.f32 %v1313, 1e-05
        %v1322 = vadd.f32 %v1314, 1e-05
        %v1323 = vadd.f32 %v1315, 1e-05
        %v1324 = vrsqrt.pop %v1316
        %v1325 = vrsqrt.pop %v1317
        %v1326 = vrsqrt.pop %v1318
        %v1327 = vrsqrt.pop %v1319
        %v1328 = vrsqrt.pop %v1320
        %v1329 = vrsqrt.pop %v1321
        %v1330 = vrsqrt.pop %v1322
        %v1331 = vrsqrt.pop %v1323
        %v1332 = vmul.f32 %v1268, %v1324
        %v1333 = vmul.f32 %v1269, %v1325
        %v1334 = vmul.f32 %v1270, %v1326
        %v1335 = vmul.f32 %v1271, %v1327
        %v1336 = vmul.f32 %v1272, %v1328
        %v1337 = vmul.f32 %v1273, %v1329
        %v1338 = vmul.f32 %v1274, %v1330
        %v1339 = vmul.f32 %v1275, %v1331
        %v1340 = vld [vmem:[#allocation14] sm:$0x1]
        %v1342 = vlaneseq
        %v1343 = vshrl.u32 %v1342, 7
        %v1344 = vsub.s32 0, %v1343
        %v1345 = vrot.slane %v1340, %v1344
        %v1347 = vmul.f32 %v1332, %v1345
        %v1348 = vmul.f32 %v1333, %v1345
        %v1349 = vmul.f32 %v1334, %v1345
        %v1350 = vmul.f32 %v1335, %v1345
        %v1351 = vmul.f32 %v1336, %v1345
        %v1352 = vmul.f32 %v1337, %v1345
        %v1353 = vmul.f32 %v1338, %v1345
        %v1354 = vmul.f32 %v1339, %v1345
        %v1355 = vld [vmem:[#allocation16] sm:$0x1]
        %v1357 = vlaneseq
        %v1358 = vshrl.u32 %v1357, 7
        %v1359 = vsub.s32 0, %v1358
        %v1360 = vrot.slane %v1355, %v1359
        %v1362 = vadd.f32 %v1347, %v1360
        %v1363 = vadd.f32 %v1348, %v1360
        %v1364 = vadd.f32 %v1349, %v1360
        %v1365 = vadd.f32 %v1350, %v1360
        %v1366 = vadd.f32 %v1351, %v1360
        %v1367 = vadd.f32 %v1352, %v1360
        %v1368 = vadd.f32 %v1353, %v1360
        %v1369 = vadd.f32 %v1354, %v1360
        %v1370 = vpack.c.bf16 %v1363, %v1362
        %v1371 = vpack.c.bf16 %v1365, %v1364
        %v1372 = vpack.c.bf16 %v1367, %v1366
        %v1373 = vpack.c.bf16 %v1369, %v1368
        %v1374 = vld [vmem:[#allocation17] sm:$0xf]
        %v1375 = vld [vmem:[#allocation17 + $0x4] sm:$0xf]
        %v1376 = vld [vmem:[#allocation17 + $0x8] sm:$0xf]
        %v1377 = vld [vmem:[#allocation17 + $0xc] sm:$0xf]
        %v1382 = vunpack.c.l.b16 %v1374
        %v1383 = vunpack.c.l.b16 %v1375
        %v1384 = vunpack.c.l.b16 %v1376
        %v1385 = vunpack.c.l.b16 %v1377
        %v1386 = vpack.c.b16 %v1383, %v1382
        %v1387 = vpack.c.b16 %v1385, %v1384
        %v1391 = vsel %vm1226, %v1370, 0
        %v1394 = vsel %vm1226, %v1371, 0
        %v1397 = vsel %vm1226, %v1372, 0
        %v1400 = vsel %vm1226, %v1373, 0
        %1402 = vmatprep.subr.bf16.mxu0 0
        %1403 = vmatpush1.bf16.msra.mxu0 %v1386
        %1404 = vmatprep.subr.bf16.mxu0 0
        %1405 = vmatpush1.bf16.msra.mxu0 %v1387
        %1406 = vmatprep.subr.bf16.mxu0 0
        %1407 = vmatpush1.bf16.msra.mxu0 0
        %1408 = vmatprep.subr.bf16.mxu0 0
        %1409 = vmatpush1.bf16.msra.mxu0 0
        %1410 = vmatprep.subr.bf16.mxu0 0
        %1411 = vmatpush1.bf16.msra.mxu0 0
        %1412 = vmatprep.subr.bf16.mxu0 0
        %1413 = vmatpush1.bf16.msra.mxu0 0
        %1414 = vmatprep.subr.bf16.mxu0 0
        %1415 = vmatpush1.bf16.msra.mxu0 0
        %1416 = vmatprep.subr.bf16.mxu0 0
        %1417 = vmatpush1.bf16.msra.mxu0 0
        %1418 = vmatprep.subr.bf16.mxu0 0
        %1419 = vmatpush1.bf16.msra.mxu0 0
        %1420 = vmatprep.subr.bf16.mxu0 0
        %1421 = vmatpush1.bf16.msra.mxu0 0
        %1422 = vmatprep.subr.bf16.mxu0 0
        %1423 = vmatpush1.bf16.msra.mxu0 0
        %1424 = vmatprep.subr.bf16.mxu0 0
        %1425 = vmatpush1.bf16.msra.mxu0 0
        %1426 = vmatprep.subr.bf16.mxu0 0
        %1427 = vmatpush1.bf16.msra.mxu0 0
        %1428 = vmatprep.subr.bf16.mxu0 0
        %1429 = vmatpush1.bf16.msra.mxu0 0
        %1430 = vmatprep.subr.bf16.mxu0 0
        %1431 = vmatpush1.bf16.msra.mxu0 0
        %1432 = vmatprep.subr.bf16.mxu0 0
        %1433 = vmatpush1.bf16.msra.mxu0 0
        %1434 = vmatprep.mubr.bf16.mxu0 0
        %1435 = vmatmul.mubr.bf16.gmra.mrb[0].mxu0 %v1391
        %v1436 = vpop.f32.mrb[0].mxu0
        %v1437 = vadd.f32 0.0, %v1436
        %v1438 = vpop.f32.mrb[0].mxu0
        %v1439 = vpop.f32.mrb[0].mxu0
        %v1440 = vadd.f32 0.0, %v1439
        %v1441 = vpop.f32.mrb[0].mxu0
        %1442 = vmatprep.mubr.bf16.mxu0 0
        %1443 = vmatmul.mubr.bf16.gmra.mrb[0].mxu0 %v1394
        %v1444 = vpop.f32.mrb[0].mxu0
        %v1445 = vadd.f32 0.0, %v1444
        %v1446 = vpop.f32.mrb[0].mxu0
        %v1447 = vpop.f32.mrb[0].mxu0
        %v1448 = vadd.f32 0.0, %v1447
        %v1449 = vpop.f32.mrb[0].mxu0
        %1450 = vmatprep.mubr.bf16.mxu0 0
        %1451 = vmatmul.mubr.bf16.gmra.mrb[0].mxu0 %v1397
        %v1452 = vpop.f32.mrb[0].mxu0
        %v1453 = vadd.f32 0.0, %v1452
        %v1454 = vpop.f32.mrb[0].mxu0
        %v1455 = vpop.f32.mrb[0].mxu0
        %v1456 = vadd.f32 0.0, %v1455
        %v1457 = vpop.f32.mrb[0].mxu0
        %1458 = vmatprep.mubr.bf16.mxu0 0
        %1459 = vmatmul.mubr.bf16.gmra.mrb[0].mxu0 %v1400
        %v1460 = vpop.f32.mrb[0].mxu0
        %v1461 = vadd.f32 0.0, %v1460
        %v1462 = vpop.f32.mrb[0].mxu0
        %v1463 = vpop.f32.mrb[0].mxu0
        %v1464 = vadd.f32 0.0, %v1463
        %v1465 = vpop.f32.mrb[0].mxu0
        %1466 = vdwg.mxu0
        %v1467 = vpack.c.bf16 %v1440, %v1437
        %v1468 = vpack.c.bf16 %v1448, %v1445
        %v1469 = vpack.c.bf16 %v1456, %v1453
        %v1470 = vpack.c.bf16 %v1464, %v1461
        %v1475 = vunpack.c.l.b16 %v1467
        %v1476 = vunpack.c.h.b16 %v1467
        %v1477 = vunpack.c.l.b16 %v1468
        %v1478 = vunpack.c.h.b16 %v1468
        %v1479 = vunpack.c.l.b16 %v1469
        %v1480 = vunpack.c.h.b16 %v1469
        %v1481 = vunpack.c.l.b16 %v1470
        %v1482 = vunpack.c.h.b16 %v1470
        %v1483 = vpack.c.b16 %v1475, %v1475
        %v1484 = vpack.c.b16 %v1476, %v1476
        %v1485 = vpack.c.b16 %v1477, %v1477
        %v1486 = vpack.c.b16 %v1478, %v1478
        %v1487 = vpack.c.b16 %v1479, %v1479
        %v1488 = vpack.c.b16 %v1480, %v1480
        %v1489 = vpack.c.b16 %v1481, %v1481
        %v1490 = vpack.c.b16 %v1482, %v1482
        %vm1499 = vcmask 257024
        %1500 = vst.msk [vmem:[%s769] sm:$0xf] %vm1499, %v1483
        %1501 = vst.msk [vmem:[%s769 + $0x4] sm:$0xf] %vm1499, %v1484
        %1502 = vst.msk [vmem:[%s769 + $0x8] sm:$0xf] %vm1499, %v1485
        %1503 = vst.msk [vmem:[%s769 + $0xc] sm:$0xf] %vm1499, %v1486
        %1504 = vst.msk [vmem:[%s769 + $0x10] sm:$0xf] %vm1499, %v1487
        %1505 = vst.msk [vmem:[%s769 + $0x14] sm:$0xf] %vm1499, %v1488
        %1506 = vst.msk [vmem:[%s769 + $0x18] sm:$0xf] %vm1499, %v1489
        %1507 = vst.msk [vmem:[%s769 + $0x1c] sm:$0xf] %vm1499, %v1490
        %v1508 = vld [vmem:[#allocation19] sm:$0xf]
        %v1509 = vld [vmem:[#allocation19 + $0x4] sm:$0xf]
        %v1510 = vld [vmem:[#allocation19 + $0x8] sm:$0xf]
        %v1511 = vld [vmem:[#allocation19 + $0xc] sm:$0xf]
        %v1516 = vunpack.c.l.b16 %v1508
        %v1517 = vunpack.c.l.b16 %v1509
        %v1518 = vunpack.c.l.b16 %v1510
        %v1519 = vunpack.c.l.b16 %v1511
        %v1520 = vpack.c.b16 %v1517, %v1516
        %v1521 = vpack.c.b16 %v1519, %v1518
        %1524 = vmatprep.subr.bf16.mxu0 0
        %1525 = vmatpush1.bf16.msra.mxu0 %v1520
        %1526 = vmatprep.subr.bf16.mxu0 0
        %1527 = vmatpush1.bf16.msra.mxu0 %v1521
        %1528 = vmatprep.subr.bf16.mxu0 0
        %1529 = vmatpush1.bf16.msra.mxu0 0
        %1530 = vmatprep.subr.bf16.mxu0 0
        %1531 = vmatpush1.bf16.msra.mxu0 0
        %1532 = vmatprep.subr.bf16.mxu0 0
        %1533 = vmatpush1.bf16.msra.mxu0 0
        %1534 = vmatprep.subr.bf16.mxu0 0
        %1535 = vmatpush1.bf16.msra.mxu0 0
        %1536 = vmatprep.subr.bf16.mxu0 0
        %1537 = vmatpush1.bf16.msra.mxu0 0
        %1538 = vmatprep.subr.bf16.mxu0 0
        %1539 = vmatpush1.bf16.msra.mxu0 0
        %1540 = vmatprep.subr.bf16.mxu0 0
        %1541 = vmatpush1.bf16.msra.mxu0 0
        %1542 = vmatprep.subr.bf16.mxu0 0
        %1543 = vmatpush1.bf16.msra.mxu0 0
        %1544 = vmatprep.subr.bf16.mxu0 0
        %1545 = vmatpush1.bf16.msra.mxu0 0
        %1546 = vmatprep.subr.bf16.mxu0 0
        %1547 = vmatpush1.bf16.msra.mxu0 0
        %1548 = vmatprep.subr.bf16.mxu0 0
        %1549 = vmatpush1.bf16.msra.mxu0 0
        %1550 = vmatprep.subr.bf16.mxu0 0
        %1551 = vmatpush1.bf16.msra.mxu0 0
        %1552 = vmatprep.subr.bf16.mxu0 0
        %1553 = vmatpush1.bf16.msra.mxu0 0
        %1554 = vmatprep.subr.bf16.mxu0 0
        %1555 = vmatpush1.bf16.msra.mxu0 0
        %1556 = vmatprep.mubr.bf16.mxu0 0
        %1557 = vmatmul.mubr.bf16.gmra.mrb[0].mxu0 %v1391
        %v1558 = vpop.f32.mrb[0].mxu0
        %v1559 = vadd.f32 0.0, %v1558
        %v1560 = vpop.f32.mrb[0].mxu0
        %v1561 = vpop.f32.mrb[0].mxu0
        %v1562 = vadd.f32 0.0, %v1561
        %v1563 = vpop.f32.mrb[0].mxu0
        %1564 = vmatprep.mubr.bf16.mxu0 0
        %1565 = vmatmul.mubr.bf16.gmra.mrb[0].mxu0 %v1394
        %v1566 = vpop.f32.mrb[0].mxu0
        %v1567 = vadd.f32 0.0, %v1566
        %v1568 = vpop.f32.mrb[0].mxu0
        %v1569 = vpop.f32.mrb[0].mxu0
        %v1570 = vadd.f32 0.0, %v1569
        %v1571 = vpop.f32.mrb[0].mxu0
        %1572 = vmatprep.mubr.bf16.mxu0 0
        %1573 = vmatmul.mubr.bf16.gmra.mrb[0].mxu0 %v1397
        %v1574 = vpop.f32.mrb[0].mxu0
        %v1575 = vadd.f32 0.0, %v1574
        %v1576 = vpop.f32.mrb[0].mxu0
        %v1577 = vpop.f32.mrb[0].mxu0
        %v1578 = vadd.f32 0.0, %v1577
        %v1579 = vpop.f32.mrb[0].mxu0
        %1580 = vmatprep.mubr.bf16.mxu0 0
        %1581 = vmatmul.mubr.bf16.gmra.mrb[0].mxu0 %v1400
        %v1582 = vpop.f32.mrb[0].mxu0
        %v1583 = vadd.f32 0.0, %v1582
        %v1584 = vpop.f32.mrb[0].mxu0
        %v1585 = vpop.f32.mrb[0].mxu0
        %v1586 = vadd.f32 0.0, %v1585
        %v1587 = vpop.f32.mrb[0].mxu0
        %1588 = vdwg.mxu0
        %v1589 = vpack.c.bf16 %v1562, %v1559
        %v1590 = vpack.c.bf16 %v1570, %v1567
        %v1591 = vpack.c.bf16 %v1578, %v1575
        %v1592 = vpack.c.bf16 %v1586, %v1583
        %v1597 = vunpack.c.l.b16 %v1589
        %v1598 = vunpack.c.h.b16 %v1589
        %v1599 = vunpack.c.l.b16 %v1590
        %v1600 = vunpack.c.h.b16 %v1590
        %v1601 = vunpack.c.l.b16 %v1591
        %v1602 = vunpack.c.h.b16 %v1591
        %v1603 = vunpack.c.l.b16 %v1592
        %v1604 = vunpack.c.h.b16 %v1592
        %v1605 = vpack.c.b16 %v1597, %v1597
        %v1606 = vpack.c.b16 %v1598, %v1598
        %v1607 = vpack.c.b16 %v1599, %v1599
        %v1608 = vpack.c.b16 %v1600, %v1600
        %v1609 = vpack.c.b16 %v1601, %v1601
        %v1610 = vpack.c.b16 %v1602, %v1602
        %v1611 = vpack.c.b16 %v1603, %v1603
        %v1612 = vpack.c.b16 %v1604, %v1604
        %1621 = vst.msk [vmem:[%s776] sm:$0xf] %vm1499, %v1605
        %1622 = vst.msk [vmem:[%s776 + $0x4] sm:$0xf] %vm1499, %v1606
        %1623 = vst.msk [vmem:[%s776 + $0x8] sm:$0xf] %vm1499, %v1607
        %1624 = vst.msk [vmem:[%s776 + $0xc] sm:$0xf] %vm1499, %v1608
        %1625 = vst.msk [vmem:[%s776 + $0x10] sm:$0xf] %vm1499, %v1609
        %1626 = vst.msk [vmem:[%s776 + $0x14] sm:$0xf] %vm1499, %v1610
        %1627 = vst.msk [vmem:[%s776 + $0x18] sm:$0xf] %vm1499, %v1611
        %1628 = vst.msk [vmem:[%s776 + $0x1c] sm:$0xf] %vm1499, %v1612
        %v1629 = vld [vmem:[%s671] sm:$0xff]
        %v1630 = vld [vmem:[%s671 + $0x8] sm:$0xff]
        %v1631 = vld [vmem:[%s671 + $0x10] sm:$0xff]
        %v1632 = vld [vmem:[%s671 + $0x18] sm:$0xff]
        %v1633 = vld [vmem:[%s671 + $0x20] sm:$0xff]
        %v1634 = vld [vmem:[%s671 + $0x28] sm:$0xff]
        %v1635 = vld [vmem:[%s671 + $0x30] sm:$0xff]
        %v1636 = vld [vmem:[%s671 + $0x38] sm:$0xff]
        %v1637 = vld [vmem:[%s671 + $0x40] sm:$0xff]
        %v1638 = vld [vmem:[%s671 + $0x48] sm:$0xff]
        %v1639 = vld [vmem:[%s671 + $0x50] sm:$0xff]
        %v1640 = vld [vmem:[%s671 + $0x58] sm:$0xff]
        %v1641 = vld [vmem:[%s671 + $0x60] sm:$0xff]
        %v1642 = vld [vmem:[%s671 + $0x68] sm:$0xff]
        %v1643 = vld [vmem:[%s671 + $0x70] sm:$0xff]
        %v1644 = vld [vmem:[%s671 + $0x78] sm:$0xff]
        %v1645 = vpack.c.bf16 %v1630, %v1629
        %v1646 = vpack.c.bf16 %v1632, %v1631
        %v1647 = vpack.c.bf16 %v1634, %v1633
        %v1648 = vpack.c.bf16 %v1636, %v1635
        %v1649 = vpack.c.bf16 %v1638, %v1637
        %v1650 = vpack.c.bf16 %v1640, %v1639
        %v1651 = vpack.c.bf16 %v1642, %v1641
        %v1652 = vpack.c.bf16 %v1644, %v1643
        %v1653 = vld [vmem:[#allocation20] sm:$0xf]
        %v1654 = vld [vmem:[#allocation20 + $0x4] sm:$0xf]
        %v1655 = vld [vmem:[#allocation20 + $0x8] sm:$0xf]
        %v1656 = vld [vmem:[#allocation20 + $0xc] sm:$0xf]
        %v1661 = vunpack.c.l.b16 %v1653
        %v1662 = vunpack.c.l.b16 %v1654
        %v1663 = vunpack.c.l.b16 %v1655
        %v1664 = vunpack.c.l.b16 %v1656
        %v1665 = vpack.c.b16 %v1662, %v1661
        %v1666 = vpack.c.b16 %v1664, %v1663
        %v1670 = vsel %vm1226, %v1645, 0
        %v1673 = vsel %vm1226, %v1646, 0
        %v1676 = vsel %vm1226, %v1647, 0
        %v1679 = vsel %vm1226, %v1648, 0
        %v1682 = vsel %vm1226, %v1649, 0
        %v1685 = vsel %vm1226, %v1650, 0
        %v1688 = vsel %vm1226, %v1651, 0
        %v1691 = vsel %vm1226, %v1652, 0
        %1693 = vmatprep.subr.bf16.mxu0 0
        %1694 = vmatpush1.bf16.msra.mxu0 %v1665
        %1695 = vmatprep.subr.bf16.mxu0 0
        %1696 = vmatpush1.bf16.msra.mxu0 %v1666
        %1697 = vmatprep.subr.bf16.mxu0 0
        %1698 = vmatpush1.bf16.msra.mxu0 0
        %1699 = vmatprep.subr.bf16.mxu0 0
        %1700 = vmatpush1.bf16.msra.mxu0 0
        %1701 = vmatprep.subr.bf16.mxu0 0
        %1702 = vmatpush1.bf16.msra.mxu0 0
        %1703 = vmatprep.subr.bf16.mxu0 0
        %1704 = vmatpush1.bf16.msra.mxu0 0
        %1705 = vmatprep.subr.bf16.mxu0 0
        %1706 = vmatpush1.bf16.msra.mxu0 0
        %1707 = vmatprep.subr.bf16.mxu0 0
        %1708 = vmatpush1.bf16.msra.mxu0 0
        %1709 = vmatprep.subr.bf16.mxu0 0
        %1710 = vmatpush1.bf16.msra.mxu0 0
        %1711 = vmatprep.subr.bf16.mxu0 0
        %1712 = vmatpush1.bf16.msra.mxu0 0
        %1713 = vmatprep.subr.bf16.mxu0 0
        %1714 = vmatpush1.bf16.msra.mxu0 0
        %1715 = vmatprep.subr.bf16.mxu0 0
        %1716 = vmatpush1.bf16.msra.mxu0 0
        %1717 = vmatprep.subr.bf16.mxu0 0
        %1718 = vmatpush1.bf16.msra.mxu0 0
        %1719 = vmatprep.subr.bf16.mxu0 0
        %1720 = vmatpush1.bf16.msra.mxu0 0
        %1721 = vmatprep.subr.bf16.mxu0 0
        %1722 = vmatpush1.bf16.msra.mxu0 0
        %1723 = vmatprep.subr.bf16.mxu0 0
        %1724 = vmatpush1.bf16.msra.mxu0 0
        %1725 = vmatprep.mubr.bf16.mxu0 0
        %1726 = vmatmul.mubr.bf16.gmra.mrb[0].mxu0 %v1670
        %v1727 = vpop.f32.mrb[0].mxu0
        %v1728 = vadd.f32 0.0, %v1727
        %v1729 = vpop.f32.mrb[0].mxu0
        %v1730 = vpop.f32.mrb[0].mxu0
        %v1731 = vadd.f32 0.0, %v1730
        %v1732 = vpop.f32.mrb[0].mxu0
        %1733 = vmatprep.mubr.bf16.mxu0 0
        %1734 = vmatmul.mubr.bf16.gmra.mrb[0].mxu0 %v1673
        %v1735 = vpop.f32.mrb[0].mxu0
        %v1736 = vadd.f32 0.0, %v1735
        %v1737 = vpop.f32.mrb[0].mxu0
        %v1738 = vpop.f32.mrb[0].mxu0
        %v1739 = vadd.f32 0.0, %v1738
        %v1740 = vpop.f32.mrb[0].mxu0
        %1741 = vmatprep.mubr.bf16.mxu0 0
        %1742 = vmatmul.mubr.bf16.gmra.mrb[0].mxu0 %v1676
        %v1743 = vpop.f32.mrb[0].mxu0
        %v1744 = vadd.f32 0.0, %v1743
        %v1745 = vpop.f32.mrb[0].mxu0
        %v1746 = vpop.f32.mrb[0].mxu0
        %v1747 = vadd.f32 0.0, %v1746
        %v1748 = vpop.f32.mrb[0].mxu0
        %1749 = vmatprep.mubr.bf16.mxu0 0
        %1750 = vmatmul.mubr.bf16.gmra.mrb[0].mxu0 %v1679
        %v1751 = vpop.f32.mrb[0].mxu0
        %v1752 = vadd.f32 0.0, %v1751
        %v1753 = vpop.f32.mrb[0].mxu0
        %v1754 = vpop.f32.mrb[0].mxu0
        %v1755 = vadd.f32 0.0, %v1754
        %v1756 = vpop.f32.mrb[0].mxu0
        %1757 = vmatprep.mubr.bf16.mxu0 0
        %1758 = vmatmul.mubr.bf16.gmra.mrb[0].mxu0 %v1682
        %v1759 = vpop.f32.mrb[0].mxu0
        %v1760 = vadd.f32 0.0, %v1759
        %v1761 = vpop.f32.mrb[0].mxu0
        %v1762 = vpop.f32.mrb[0].mxu0
        %v1763 = vadd.f32 0.0, %v1762
        %v1764 = vpop.f32.mrb[0].mxu0
        %1765 = vmatprep.mubr.bf16.mxu0 0
        %1766 = vmatmul.mubr.bf16.gmra.mrb[0].mxu0 %v1685
        %v1767 = vpop.f32.mrb[0].mxu0
        %v1768 = vadd.f32 0.0, %v1767
        %v1769 = vpop.f32.mrb[0].mxu0
        %v1770 = vpop.f32.mrb[0].mxu0
        %v1771 = vadd.f32 0.0, %v1770
        %v1772 = vpop.f32.mrb[0].mxu0
        %1773 = vmatprep.mubr.bf16.mxu0 0
        %1774 = vmatmul.mubr.bf16.gmra.mrb[0].mxu0 %v1688
        %v1775 = vpop.f32.mrb[0].mxu0
        %v1776 = vadd.f32 0.0, %v1775
        %v1777 = vpop.f32.mrb[0].mxu0
        %v1778 = vpop.f32.mrb[0].mxu0
        %v1779 = vadd.f32 0.0, %v1778
        %v1780 = vpop.f32.mrb[0].mxu0
        %1781 = vmatprep.mubr.bf16.mxu0 0
        %1782 = vmatmul.mubr.bf16.gmra.mrb[0].mxu0 %v1691
        %v1783 = vpop.f32.mrb[0].mxu0
        %v1784 = vadd.f32 0.0, %v1783
        %v1785 = vpop.f32.mrb[0].mxu0
        %v1786 = vpop.f32.mrb[0].mxu0
        %v1787 = vadd.f32 0.0, %v1786
        %v1788 = vpop.f32.mrb[0].mxu0
        %1789 = vdwg.mxu0
        %v1790 = vpack.c.bf16 %v1731, %v1728
        %v1791 = vpack.c.bf16 %v1739, %v1736
        %v1792 = vpack.c.bf16 %v1747, %v1744
        %v1793 = vpack.c.bf16 %v1755, %v1752
        %v1794 = vpack.c.bf16 %v1763, %v1760
        %v1795 = vpack.c.bf16 %v1771, %v1768
        %v1796 = vpack.c.bf16 %v1779, %v1776
        %v1797 = vpack.c.bf16 %v1787, %v1784
        %v1806 = vunpack.c.l.b16 %v1790
        %v1807 = vunpack.c.h.b16 %v1790
        %v1808 = vunpack.c.l.b16 %v1791
        %v1809 = vunpack.c.h.b16 %v1791
        %v1810 = vunpack.c.l.b16 %v1792
        %v1811 = vunpack.c.h.b16 %v1792
        %v1812 = vunpack.c.l.b16 %v1793
        %v1813 = vunpack.c.h.b16 %v1793
        %v1814 = vunpack.c.l.b16 %v1794
        %v1815 = vunpack.c.h.b16 %v1794
        %v1816 = vunpack.c.l.b16 %v1795
        %v1817 = vunpack.c.h.b16 %v1795
        %v1818 = vunpack.c.l.b16 %v1796
        %v1819 = vunpack.c.h.b16 %v1796
        %v1820 = vunpack.c.l.b16 %v1797
        %v1821 = vunpack.c.h.b16 %v1797
        %v1822 = vpack.c.b16 %v1806, %v1806
        %v1823 = vpack.c.b16 %v1807, %v1807
        %v1824 = vpack.c.b16 %v1808, %v1808
        %v1825 = vpack.c.b16 %v1809, %v1809
        %v1826 = vpack.c.b16 %v1810, %v1810
        %v1827 = vpack.c.b16 %v1811, %v1811
        %v1828 = vpack.c.b16 %v1812, %v1812
        %v1829 = vpack.c.b16 %v1813, %v1813
        %v1830 = vpack.c.b16 %v1814, %v1814
        %v1831 = vpack.c.b16 %v1815, %v1815
        %v1832 = vpack.c.b16 %v1816, %v1816
        %v1833 = vpack.c.b16 %v1817, %v1817
        %v1834 = vpack.c.b16 %v1818, %v1818
        %v1835 = vpack.c.b16 %v1819, %v1819
        %v1836 = vpack.c.b16 %v1820, %v1820
        %v1837 = vpack.c.b16 %v1821, %v1821
        %1854 = vst.msk [vmem:[%s783] sm:$0xf] %vm1499, %v1822
        %1855 = vst.msk [vmem:[%s783 + $0x4] sm:$0xf] %vm1499, %v1823
        %1856 = vst.msk [vmem:[%s783 + $0x8] sm:$0xf] %vm1499, %v1824
        %1857 = vst.msk [vmem:[%s783 + $0xc] sm:$0xf] %vm1499, %v1825
        %1858 = vst.msk [vmem:[%s783 + $0x10] sm:$0xf] %vm1499, %v1826
        %1859 = vst.msk [vmem:[%s783 + $0x14] sm:$0xf] %vm1499, %v1827
        %1860 = vst.msk [vmem:[%s783 + $0x18] sm:$0xf] %vm1499, %v1828
        %1861 = vst.msk [vmem:[%s783 + $0x1c] sm:$0xf] %vm1499, %v1829
        %1862 = vst.msk [vmem:[%s783 + $0x20] sm:$0xf] %vm1499, %v1830
        %1863 = vst.msk [vmem:[%s783 + $0x24] sm:$0xf] %vm1499, %v1831
        %1864 = vst.msk [vmem:[%s783 + $0x28] sm:$0xf] %vm1499, %v1832
        %1865 = vst.msk [vmem:[%s783 + $0x2c] sm:$0xf] %vm1499, %v1833
        %1866 = vst.msk [vmem:[%s783 + $0x30] sm:$0xf] %vm1499, %v1834
        %1867 = vst.msk [vmem:[%s783 + $0x34] sm:$0xf] %vm1499, %v1835
        %1868 = vst.msk [vmem:[%s783 + $0x38] sm:$0xf] %vm1499, %v1836
        %1869 = vst.msk [vmem:[%s783 + $0x3c] sm:$0xf] %vm1499, %v1837
        %v1870 = vld [vmem:[#allocation22] sm:$0xf]
        %v1871 = vld [vmem:[#allocation22 + $0x4] sm:$0xf]
        %v1872 = vld [vmem:[#allocation22 + $0x8] sm:$0xf]
        %v1873 = vld [vmem:[#allocation22 + $0xc] sm:$0xf]
        %v1878 = vunpack.c.l.b16 %v1870
        %v1879 = vunpack.c.l.b16 %v1871
        %v1880 = vunpack.c.l.b16 %v1872
        %v1881 = vunpack.c.l.b16 %v1873
        %v1882 = vpack.c.b16 %v1879, %v1878
        %v1883 = vpack.c.b16 %v1881, %v1880
        %1886 = vmatprep.subr.bf16.mxu0 0
        %1887 = vmatpush1.bf16.msra.mxu0 %v1882
        %1888 = vmatprep.subr.bf16.mxu0 0
        %1889 = vmatpush1.bf16.msra.mxu0 %v1883
        %1890 = vmatprep.subr.bf16.mxu0 0
        %1891 = vmatpush1.bf16.msra.mxu0 0
        %1892 = vmatprep.subr.bf16.mxu0 0
        %1893 = vmatpush1.bf16.msra.mxu0 0
        %1894 = vmatprep.subr.bf16.mxu0 0
        %1895 = vmatpush1.bf16.msra.mxu0 0
        %1896 = vmatprep.subr.bf16.mxu0 0
        %1897 = vmatpush1.bf16.msra.mxu0 0
        %1898 = vmatprep.subr.bf16.mxu0 0
        %1899 = vmatpush1.bf16.msra.mxu0 0
        %1900 = vmatprep.subr.bf16.mxu0 0
        %1901 = vmatpush1.bf16.msra.mxu0 0
        %1902 = vmatprep.subr.bf16.mxu0 0
        %1903 = vmatpush1.bf16.msra.mxu0 0
        %1904 = vmatprep.subr.bf16.mxu0 0
        %1905 = vmatpush1.bf16.msra.mxu0 0
        %1906 = vmatprep.subr.bf16.mxu0 0
        %1907 = vmatpush1.bf16.msra.mxu0 0
        %1908 = vmatprep.subr.bf16.mxu0 0
        %1909 = vmatpush1.bf16.msra.mxu0 0
        %1910 = vmatprep.subr.bf16.mxu0 0
        %1911 = vmatpush1.bf16.msra.mxu0 0
        %1912 = vmatprep.subr.bf16.mxu0 0
        %1913 = vmatpush1.bf16.msra.mxu0 0
        %1914 = vmatprep.subr.bf16.mxu0 0
        %1915 = vmatpush1.bf16.msra.mxu0 0
        %1916 = vmatprep.subr.bf16.mxu0 0
        %1917 = vmatpush1.bf16.msra.mxu0 0
        %1918 = vmatprep.mubr.bf16.mxu0 0
        %1919 = vmatmul.mubr.bf16.gmra.mrb[0].mxu0 %v1670
        %v1920 = vpop.f32.mrb[0].mxu0
        %v1921 = vadd.f32 0.0, %v1920
        %v1922 = vpop.f32.mrb[0].mxu0
        %v1923 = vpop.f32.mrb[0].mxu0
        %v1924 = vadd.f32 0.0, %v1923
        %v1925 = vpop.f32.mrb[0].mxu0
        %1926 = vmatprep.mubr.bf16.mxu0 0
        %1927 = vmatmul.mubr.bf16.gmra.mrb[0].mxu0 %v1673
        %v1928 = vpop.f32.mrb[0].mxu0
        %v1929 = vadd.f32 0.0, %v1928
        %v1930 = vpop.f32.mrb[0].mxu0
        %v1931 = vpop.f32.mrb[0].mxu0
        %v1932 = vadd.f32 0.0, %v1931
        %v1933 = vpop.f32.mrb[0].mxu0
        %1934 = vmatprep.mubr.bf16.mxu0 0
        %1935 = vmatmul.mubr.bf16.gmra.mrb[0].mxu0 %v1676
        %v1936 = vpop.f32.mrb[0].mxu0
        %v1937 = vadd.f32 0.0, %v1936
        %v1938 = vpop.f32.mrb[0].mxu0
        %v1939 = vpop.f32.mrb[0].mxu0
        %v1940 = vadd.f32 0.0, %v1939
        %v1941 = vpop.f32.mrb[0].mxu0
        %1942 = vmatprep.mubr.bf16.mxu0 0
        %1943 = vmatmul.mubr.bf16.gmra.mrb[0].mxu0 %v1679
        %v1944 = vpop.f32.mrb[0].mxu0
        %v1945 = vadd.f32 0.0, %v1944
        %v1946 = vpop.f32.mrb[0].mxu0
        %v1947 = vpop.f32.mrb[0].mxu0
        %v1948 = vadd.f32 0.0, %v1947
        %v1949 = vpop.f32.mrb[0].mxu0
        %1950 = vmatprep.mubr.bf16.mxu0 0
        %1951 = vmatmul.mubr.bf16.gmra.mrb[0].mxu0 %v1682
        %v1952 = vpop.f32.mrb[0].mxu0
        %v1953 = vadd.f32 0.0, %v1952
        %v1954 = vpop.f32.mrb[0].mxu0
        %v1955 = vpop.f32.mrb[0].mxu0
        %v1956 = vadd.f32 0.0, %v1955
        %v1957 = vpop.f32.mrb[0].mxu0
        %1958 = vmatprep.mubr.bf16.mxu0 0
        %1959 = vmatmul.mubr.bf16.gmra.mrb[0].mxu0 %v1685
        %v1960 = vpop.f32.mrb[0].mxu0
        %v1961 = vadd.f32 0.0, %v1960
        %v1962 = vpop.f32.mrb[0].mxu0
        %v1963 = vpop.f32.mrb[0].mxu0
        %v1964 = vadd.f32 0.0, %v1963
        %v1965 = vpop.f32.mrb[0].mxu0
        %1966 = vmatprep.mubr.bf16.mxu0 0
        %1967 = vmatmul.mubr.bf16.gmra.mrb[0].mxu0 %v1688
        %v1968 = vpop.f32.mrb[0].mxu0
        %v1969 = vadd.f32 0.0, %v1968
        %v1970 = vpop.f32.mrb[0].mxu0
        %v1971 = vpop.f32.mrb[0].mxu0
        %v1972 = vadd.f32 0.0, %v1971
        %v1973 = vpop.f32.mrb[0].mxu0
        %1974 = vmatprep.mubr.bf16.mxu0 0
        %1975 = vmatmul.mubr.bf16.gmra.mrb[0].mxu0 %v1691
        %v1976 = vpop.f32.mrb[0].mxu0
        %v1977 = vadd.f32 0.0, %v1976
        %v1978 = vpop.f32.mrb[0].mxu0
        %v1979 = vpop.f32.mrb[0].mxu0
        %v1980 = vadd.f32 0.0, %v1979
        %v1981 = vpop.f32.mrb[0].mxu0
        %1982 = vdwg.mxu0
        %v1983 = vpack.c.bf16 %v1924, %v1921
        %v1984 = vpack.c.bf16 %v1932, %v1929
        %v1985 = vpack.c.bf16 %v1940, %v1937
        %v1986 = vpack.c.bf16 %v1948, %v1945
        %v1987 = vpack.c.bf16 %v1956, %v1953
        %v1988 = vpack.c.bf16 %v1964, %v1961
        %v1989 = vpack.c.bf16 %v1972, %v1969
        %v1990 = vpack.c.bf16 %v1980, %v1977
        %v1999 = vunpack.c.l.b16 %v1983
        %v2000 = vunpack.c.h.b16 %v1983
        %v2001 = vunpack.c.l.b16 %v1984
        %v2002 = vunpack.c.h.b16 %v1984
        %v2003 = vunpack.c.l.b16 %v1985
        %v2004 = vunpack.c.h.b16 %v1985
        %v2005 = vunpack.c.l.b16 %v1986
        %v2006 = vunpack.c.h.b16 %v1986
        %v2007 = vunpack.c.l.b16 %v1987
        %v2008 = vunpack.c.h.b16 %v1987
        %v2009 = vunpack.c.l.b16 %v1988
        %v2010 = vunpack.c.h.b16 %v1988
        %v2011 = vunpack.c.l.b16 %v1989
        %v2012 = vunpack.c.h.b16 %v1989
        %v2013 = vunpack.c.l.b16 %v1990
        %v2014 = vunpack.c.h.b16 %v1990
        %v2015 = vpack.c.b16 %v1999, %v1999
        %v2016 = vpack.c.b16 %v2000, %v2000
        %v2017 = vpack.c.b16 %v2001, %v2001
        %v2018 = vpack.c.b16 %v2002, %v2002
        %v2019 = vpack.c.b16 %v2003, %v2003
        %v2020 = vpack.c.b16 %v2004, %v2004
        %v2021 = vpack.c.b16 %v2005, %v2005
        %v2022 = vpack.c.b16 %v2006, %v2006
        %v2023 = vpack.c.b16 %v2007, %v2007
        %v2024 = vpack.c.b16 %v2008, %v2008
        %v2025 = vpack.c.b16 %v2009, %v2009
        %v2026 = vpack.c.b16 %v2010, %v2010
        %v2027 = vpack.c.b16 %v2011, %v2011
        %v2028 = vpack.c.b16 %v2012, %v2012
        %v2029 = vpack.c.b16 %v2013, %v2013
        %v2030 = vpack.c.b16 %v2014, %v2014
        %2047 = vst.msk [vmem:[%s790] sm:$0xf] %vm1499, %v2015
        %2048 = vst.msk [vmem:[%s790 + $0x4] sm:$0xf] %vm1499, %v2016
        %2049 = vst.msk [vmem:[%s790 + $0x8] sm:$0xf] %vm1499, %v2017
        %2050 = vst.msk [vmem:[%s790 + $0xc] sm:$0xf] %vm1499, %v2018
        %2051 = vst.msk [vmem:[%s790 + $0x10] sm:$0xf] %vm1499, %v2019
        %2052 = vst.msk [vmem:[%s790 + $0x14] sm:$0xf] %vm1499, %v2020
        %2053 = vst.msk [vmem:[%s790 + $0x18] sm:$0xf] %vm1499, %v2021
        %2054 = vst.msk [vmem:[%s790 + $0x1c] sm:$0xf] %vm1499, %v2022
        %2055 = vst.msk [vmem:[%s790 + $0x20] sm:$0xf] %vm1499, %v2023
        %2056 = vst.msk [vmem:[%s790 + $0x24] sm:$0xf] %vm1499, %v2024
        %2057 = vst.msk [vmem:[%s790 + $0x28] sm:$0xf] %vm1499, %v2025
        %2058 = vst.msk [vmem:[%s790 + $0x2c] sm:$0xf] %vm1499, %v2026
        %2059 = vst.msk [vmem:[%s790 + $0x30] sm:$0xf] %vm1499, %v2027
        %2060 = vst.msk [vmem:[%s790 + $0x34] sm:$0xf] %vm1499, %v2028
        %2061 = vst.msk [vmem:[%s790 + $0x38] sm:$0xf] %vm1499, %v2029
        %2062 = vst.msk [vmem:[%s790 + $0x3c] sm:$0xf] %vm1499, %v2030
        %s2063 = sand.u32 %s340, 1
        %s2064 = scalar_lea.sflag [#allocation4], %s2063
        %s2065 = sand.u32 %s340, 1
        %s2066 = smul.addr %s2065, 64
        %s2067 = scalar_lea.vmem [#allocation23], %s2066
        %s2068 = sand.u32 %s49, 1
        %s2069 = scalar_lea.sflag [#allocation25], %s2068
        %s2070 = sand.u32 %s366, 1
        %s2071 = smul.addr %s2070, 32
        %s2072 = scalar_lea.vmem [#allocation24], %s2071
        %s2073 = sand.u32 %s49, 1
        %s2074 = scalar_lea.sflag [#allocation25], %s2073
        %s2075 = sand.u32 %s392, 1
        %s2076 = smul.addr %s2075, 32
        %s2077 = scalar_lea.vmem [#allocation26], %s2076
        %s2078 = sand.u32 %s49, 1
        %s2079 = scalar_lea.sflag [#allocation28], %s2078
        %s2080 = sand.u32 %s418, 1
        %s2081 = smul.addr %s2080, 64
        %s2082 = scalar_lea.vmem [#allocation27], %s2081
        %s2083 = sand.u32 %s49, 1
        %s2084 = scalar_lea.sflag [#allocation28], %s2083
        %s2085 = sand.u32 %s444, 1
        %s2086 = smul.addr %s2085, 64
        %s2087 = scalar_lea.vmem [#allocation29], %s2086
        // Predicated region
        $region125: #{spatial_transformer_forward.2} parent=71 // pred_check
          %p2088 = pneg %p350
        $region126: #{spatial_transformer_forward.2} parent=71 // pred_check_branch
          %2090 = sbr.rel (%p2088) target = $region128
        $region127: #{spatial_transformer_forward.2} parent=71 // pred_region
          %s2092 = ssub.s32 1024, 1024
          %2093 = vsyncadd %s2064, %s2092
          %s2094 = smul.addr %s49, 8
          %s2095 = smul.addr %s2094, 128
          %s2096 = scalar_lea.hbm %s13, %s2095
          %s2097 = sshll.u32 %s2067, 4
          %s2098 = int_to_ptr.vmem [resolvable:$true] %s2097
          %2103 = dma.vmem_to_hbm [thread:$0]  %s2098, 1024, %s2096, %s2064, 128, 128, 8
        $region128: #{spatial_transformer_forward.2} parent=71 // pred_fallthru
          _
        // Predicated region
        $region129: #{spatial_transformer_forward.2} parent=71 // pred_check
          %p2104 = pneg %p376
        $region130: #{spatial_transformer_forward.2} parent=71 // pred_check_branch
          %2106 = sbr.rel (%p2104) target = $region132
        $region131: #{spatial_transformer_forward.2} parent=71 // pred_region
          %s2108 = ssub.s32 512, 512
          %2109 = vsyncadd %s2069, %s2108
          %s2110 = smul.addr %s49, 8
          %s2111 = smul.addr %s2110, 64
          %s2112 = scalar_lea.hbm %s14, %s2111
          %s2113 = sshll.u32 %s2072, 4
          %s2114 = int_to_ptr.vmem [resolvable:$true] %s2113
          %2119 = dma.vmem_to_hbm [thread:$0]  %s2114, 512, %s2112, %s2069, 64, 64, 4
        $region132: #{spatial_transformer_forward.2} parent=71 // pred_fallthru
          _
        // Predicated region
        $region133: #{spatial_transformer_forward.2} parent=71 // pred_check
          %p2120 = pneg %p402
        $region134: #{spatial_transformer_forward.2} parent=71 // pred_check_branch
          %2122 = sbr.rel (%p2120) target = $region136
        $region135: #{spatial_transformer_forward.2} parent=71 // pred_region
          %s2124 = ssub.s32 512, 512
          %2125 = vsyncadd %s2074, %s2124
          %s2126 = smul.addr %s49, 8
          %s2127 = smul.addr %s2126, 64
          %s2128 = scalar_lea.hbm %s15, %s2127
          %s2129 = sshll.u32 %s2077, 4
          %s2130 = int_to_ptr.vmem [resolvable:$true] %s2129
          %2135 = dma.vmem_to_hbm [thread:$0]  %s2130, 512, %s2128, %s2074, 64, 64, 4
        $region136: #{spatial_transformer_forward.2} parent=71 // pred_fallthru
          _
        // Predicated region
        $region137: #{spatial_transformer_forward.2} parent=71 // pred_check
          %p2136 = pneg %p428
        $region138: #{spatial_transformer_forward.2} parent=71 // pred_check_branch
          %2138 = sbr.rel (%p2136) target = $region140
        $region139: #{spatial_transformer_forward.2} parent=71 // pred_region
          %s2140 = ssub.s32 1024, 1024
          %2141 = vsyncadd %s2079, %s2140
          %s2142 = smul.addr %s49, 16
          %s2143 = smul.addr %s2142, 64
          %s2144 = scalar_lea.hbm %s16, %s2143
          %s2145 = sshll.u32 %s2082, 4
          %s2146 = int_to_ptr.vmem [resolvable:$true] %s2145
          %2151 = dma.vmem_to_hbm [thread:$0]  %s2146, 1024, %s2144, %s2079, 64, 64, 4
        $region140: #{spatial_transformer_forward.2} parent=71 // pred_fallthru
          _
        // Predicated region
        $region141: #{spatial_transformer_forward.2} parent=71 // pred_check
          %p2152 = pneg %p454
        $region142: #{spatial_transformer_forward.2} parent=71 // pred_check_branch
          %2154 = sbr.rel (%p2152) target = $region144
        $region143: #{spatial_transformer_forward.2} parent=71 // pred_region
          %s2156 = ssub.s32 1024, 1024
          %2157 = vsyncadd %s2084, %s2156
          %s2158 = smul.addr %s49, 16
          %s2159 = smul.addr %s2158, 64
          %s2160 = scalar_lea.hbm %s17, %s2159
          %s2161 = sshll.u32 %s2087, 4
          %s2162 = int_to_ptr.vmem [resolvable:$true] %s2161
          %2167 = dma.vmem_to_hbm [thread:$0]  %s2162, 1024, %s2160, %s2084, 64, 64, 4
        $region144: #{spatial_transformer_forward.2} parent=71 // pred_fallthru
          _
      $region72: #{spatial_transformer_forward.2} parent=5 // pred_fallthru
        _
      %p2168 = scmp.le.s32.totalorder 2, %s44
      // Predicated region
      $region145: #{spatial_transformer_forward.2} parent=5 // pred_check
        %p2169 = pneg %p2168
      $region146: #{spatial_transformer_forward.2} parent=5 // pred_check_branch
        %2171 = sbr.rel (%p2169) target = $region148
      $region147: #{spatial_transformer_forward.2} parent=5 // pred_region
        %s2172 = ssub.s32 %s44, 2
        // Predicated region
        $region149: #{spatial_transformer_forward.2} parent=147 // pred_check
          %p2173 = pneg %p356
        $region150: #{spatial_transformer_forward.2} parent=147 // pred_check_branch
          %2175 = sbr.rel (%p2173) target = $region152
        $region151: #{spatial_transformer_forward.2} parent=147 // pred_region
          %s2176 = sand.u32 %s341, 1
          %s2177 = scalar_lea.sflag [#allocation4], %s2176
          %s2178 = sand.u32 %s341, 1
          %s2179 = smul.addr %s2178, 64
          %s2180 = scalar_lea.vmem [#allocation23], %s2179
          %2181 = dma.done %s2177, 1024
        $region152: #{spatial_transformer_forward.2} parent=147 // pred_fallthru
          _
        // Predicated region
        $region153: #{spatial_transformer_forward.2} parent=147 // pred_check
          %p2182 = pneg %p382
        $region154: #{spatial_transformer_forward.2} parent=147 // pred_check_branch
          %2184 = sbr.rel (%p2182) target = $region156
        $region155: #{spatial_transformer_forward.2} parent=147 // pred_region
          %s2185 = sand.u32 %s50, 1
          %s2186 = scalar_lea.sflag [#allocation25], %s2185
          %s2187 = sand.u32 %s367, 1
          %s2188 = smul.addr %s2187, 32
          %s2189 = scalar_lea.vmem [#allocation24], %s2188
          %2190 = dma.done %s2186, 512
        $region156: #{spatial_transformer_forward.2} parent=147 // pred_fallthru
          _
        // Predicated region
        $region157: #{spatial_transformer_forward.2} parent=147 // pred_check
          %p2191 = pneg %p408
        $region158: #{spatial_transformer_forward.2} parent=147 // pred_check_branch
          %2193 = sbr.rel (%p2191) target = $region160
        $region159: #{spatial_transformer_forward.2} parent=147 // pred_region
          %s2194 = sand.u32 %s50, 1
          %s2195 = scalar_lea.sflag [#allocation25], %s2194
          %s2196 = sand.u32 %s393, 1
          %s2197 = smul.addr %s2196, 32
          %s2198 = scalar_lea.vmem [#allocation26], %s2197
          %2199 = dma.done %s2195, 512
        $region160: #{spatial_transformer_forward.2} parent=147 // pred_fallthru
          _
        // Predicated region
        $region161: #{spatial_transformer_forward.2} parent=147 // pred_check
          %p2200 = pneg %p434
        $region162: #{spatial_transformer_forward.2} parent=147 // pred_check_branch
          %2202 = sbr.rel (%p2200) target = $region164
        $region163: #{spatial_transformer_forward.2} parent=147 // pred_region
          %s2203 = sand.u32 %s50, 1
          %s2204 = scalar_lea.sflag [#allocation28], %s2203
          %s2205 = sand.u32 %s419, 1
          %s2206 = smul.addr %s2205, 64
          %s2207 = scalar_lea.vmem [#allocation27], %s2206
          %2208 = dma.done %s2204, 1024
        $region164: #{spatial_transformer_forward.2} parent=147 // pred_fallthru
          _
        // Predicated region
        $region165: #{spatial_transformer_forward.2} parent=147 // pred_check
          %p2209 = pneg %p460
        $region166: #{spatial_transformer_forward.2} parent=147 // pred_check_branch
          %2211 = sbr.rel (%p2209) target = $region168
        $region167: #{spatial_transformer_forward.2} parent=147 // pred_region
          %s2212 = sand.u32 %s50, 1
          %s2213 = scalar_lea.sflag [#allocation28], %s2212
          %s2214 = sand.u32 %s445, 1
          %s2215 = smul.addr %s2214, 64
          %s2216 = scalar_lea.vmem [#allocation29], %s2215
          %2217 = dma.done %s2213, 1024
        $region168: #{spatial_transformer_forward.2} parent=147 // pred_fallthru
          _
      $region148: #{spatial_transformer_forward.2} parent=5 // pred_fallthru
        _
    $region6: #{spatial_transformer_forward.2} parent=1 // loop_footer
      %s48 = sadd.s32 1, %s44
    $region7: #{spatial_transformer_forward.2} parent=1 // loop_footer_branch
      %43 = sbr.rel target = $region3
    $region8: #{spatial_transformer_forward.2} parent=1 // loop_exit
      _
    %2218 = vsyncpa [#allocation3], 1
    %s2219 = scalar_lea.sflag [#allocation3], 1
    %2220 = vsyncpa %s2219, 1
    %2221 = vsyncpa [#allocation6], 1
    %s2222 = scalar_lea.sflag [#allocation6], 1
    %2223 = vsyncpa %s2222, 1
    %2224 = vsyncpa [#allocation9], 1
    %2225 = vsyncpa [#allocation12], 1
    %2226 = vsyncpa [#allocation15], 1
    %2227 = vsyncpa [#allocation18], 1
    %2228 = vsyncpa [#allocation21], 1
    %2229 = vsyncpa [#allocation4], 1
    %s2230 = scalar_lea.sflag [#allocation4], 1
    %2231 = vsyncpa %s2230, 1
    %2232 = vsyncpa [#allocation25], 1
    %s2233 = scalar_lea.sflag [#allocation25], 1
    %2234 = vsyncpa %s2233, 1
    %2235 = vsyncpa [#allocation28], 1
    %s2236 = scalar_lea.sflag [#allocation28], 1
    %2237 = vsyncpa %s2236, 1

// kernel: spatial_transformer_forward.3
$region0: #{spatial_transformer_forward.3}
  #allocation0 [shape = 'u32[]', space=smem, size = 0x4, offset = 0x4, fixed_abs, tag = 'smem constant byte address 0x4 - core index']
  #allocation1 [shape = 'u32[144,128]{1,0:T(1,128)}', space=vmem, size = 0x12000, scoped, tag = 'internal scratch']
  #allocation2 [shape = 'bf16[32,32]{1,0:T(16,128)(2,1)}', space=vmem, size = 0x2000, scoped, tag = 'scratch operand']
  %s0 = inlined_call_operand.hbm [shape: f32[2,64,128], index: 0, kind: input, shape index: {}, may-alias: {0,24}]
  %s1 = inlined_call_operand.hbm [shape: f32[2,64,32], index: 1, kind: input, shape index: {}]
  %s2 = inlined_call_operand.hbm [shape: bf16[2,64,32], index: 2, kind: input, shape index: {}]
  %s3 = inlined_call_operand.hbm [shape: bf16[2,64,32], index: 3, kind: input, shape index: {}]
  %s4 = inlined_call_operand.hbm [shape: bf16[2,128,32], index: 4, kind: input, shape index: {}]
  %s5 = inlined_call_operand.hbm [shape: bf16[2,128,32], index: 5, kind: input, shape index: {}]
  %s6 = inlined_call_operand.hbm [shape: f32[1,32], index: 6, kind: input, shape index: {}]
  %s7 = inlined_call_operand.hbm [shape: f32[1,32], index: 7, kind: input, shape index: {}]
  %s8 = inlined_call_operand.hbm [shape: bf16[32,32], index: 8, kind: input, shape index: {}]
  %s9 = inlined_call_operand.hbm [shape: bf16[32,32], index: 9, kind: input, shape index: {}]
  %s10 = inlined_call_operand.hbm [shape: f32[1,32], index: 10, kind: input, shape index: {}]
  %s11 = inlined_call_operand.hbm [shape: f32[1,32], index: 11, kind: input, shape index: {}]
  %s12 = inlined_call_operand.hbm [shape: f32[1,32], index: 12, kind: input, shape index: {}]
  %s13 = inlined_call_operand.hbm [shape: bf16[32,32], index: 13, kind: input, shape index: {}]
  %s14 = inlined_call_operand.hbm [shape: bf16[32,32], index: 14, kind: input, shape index: {}]
  %s15 = inlined_call_operand.hbm [shape: f32[1,32], index: 15, kind: input, shape index: {}]
  %s16 = inlined_call_operand.hbm [shape: f32[1,32], index: 16, kind: input, shape index: {}]
  %s17 = inlined_call_operand.hbm [shape: f32[1,32], index: 17, kind: input, shape index: {}]
  %s18 = inlined_call_operand.hbm [shape: bf16[32,256], index: 18, kind: input, shape index: {}]
  %s19 = inlined_call_operand.hbm [shape: f32[1,256], index: 19, kind: input, shape index: {}]
  %s20 = inlined_call_operand.hbm [shape: bf16[128,32], index: 20, kind: input, shape index: {}]
  %s21 = inlined_call_operand.hbm [shape: f32[1,32], index: 21, kind: input, shape index: {}]
  %s22 = inlined_call_operand.hbm [shape: bf16[32,128], index: 22, kind: input, shape index: {}]
  %s23 = inlined_call_operand.hbm [shape: f32[1,128], index: 23, kind: input, shape index: {}]
  %s24 = inlined_call_operand.hbm [shape: f32[2,64,128], index: 24, kind: output, shape index: {}, may-alias: {0,24}]
  %s25 = sld [smem:[#allocation0]]
  $region239: #{spatial_transformer_forward.3} parent=0
    _
  %s27 = ssub.s32 1, %s25
  %s28 = scalar_select 0, %s27, %s25
  $region1: #{spatial_transformer_forward.3} parent=0
    #allocation3 [shape = 'u8[32768]{0}', space=vmem, size = 0x8000, scoped, tag = 'input window, operand 0']
    #allocation4 [shape = 's32[2]{0}', space=sflag, size = 0x8, scoped, tag = 'scoped memory for spatial_transformer_forward.3']
    #allocation5 [shape = 's32[2]{0}', space=sflag, size = 0x8, scoped, tag = 'scoped memory for spatial_transformer_forward.3']
    #allocation6 [shape = 'u8[32768]{0}', space=vmem, size = 0x8000, scoped, tag = 'input window, operand 1']
    #allocation7 [shape = 's32[2]{0}', space=sflag, size = 0x8, scoped, tag = 'scoped memory for spatial_transformer_forward.3']
    #allocation8 [shape = 'u8[32768]{0}', space=vmem, size = 0x8000, scoped, tag = 'input window, operand 2']
    #allocation9 [shape = 'u8[32768]{0}', space=vmem, size = 0x8000, scoped, tag = 'input window, operand 3']
    #allocation10 [shape = 's32[2]{0}', space=sflag, size = 0x8, scoped, tag = 'scoped memory for spatial_transformer_forward.3']
    #allocation11 [shape = 'u8[65536]{0}', space=vmem, size = 0x10000, scoped, tag = 'input window, operand 4']
    #allocation12 [shape = 'u8[65536]{0}', space=vmem, size = 0x10000, scoped, tag = 'input window, operand 5']
    #allocation13 [shape = 's32[2]{0}', space=sflag, size = 0x8, scoped, tag = 'scoped memory for spatial_transformer_forward.3']
    #allocation14 [shape = 'u8[512]{0}', space=vmem, size = 0x400, scoped, tag = 'input window, operand 6, single buffered']
    #allocation15 [shape = 'u8[512]{0}', space=vmem, size = 0x400, scoped, tag = 'input window, operand 7, single buffered']
    #allocation16 [shape = 's32[1]{0}', space=sflag, size = 0x4, scoped, tag = 'scoped memory for spatial_transformer_forward.3']
    #allocation17 [shape = 'u8[8192]{0}', space=vmem, size = 0x2000, scoped, tag = 'input window, operand 8, single buffered']
    #allocation18 [shape = 'u8[8192]{0}', space=vmem, size = 0x2000, scoped, tag = 'input window, operand 9, single buffered']
    #allocation19 [shape = 's32[1]{0}', space=sflag, size = 0x4, scoped, tag = 'scoped memory for spatial_transformer_forward.3']
    #allocation20 [shape = 'u8[512]{0}', space=vmem, size = 0x400, scoped, tag = 'input window, operand 10, single buffered']
    #allocation21 [shape = 'u8[512]{0}', space=vmem, size = 0x400, scoped, tag = 'input window, operand 11, single buffered']
    #allocation22 [shape = 's32[1]{0}', space=sflag, size = 0x4, scoped, tag = 'scoped memory for spatial_transformer_forward.3']
    #allocation23 [shape = 'u8[512]{0}', space=vmem, size = 0x400, scoped, tag = 'input window, operand 12, single buffered']
    #allocation24 [shape = 'u8[8192]{0}', space=vmem, size = 0x2000, scoped, tag = 'input window, operand 13, single buffered']
    #allocation25 [shape = 's32[1]{0}', space=sflag, size = 0x4, scoped, tag = 'scoped memory for spatial_transformer_forward.3']
    #allocation26 [shape = 'u8[8192]{0}', space=vmem, size = 0x2000, scoped, tag = 'input window, operand 14, single buffered']
    #allocation27 [shape = 'u8[512]{0}', space=vmem, size = 0x400, scoped, tag = 'input window, operand 15, single buffered']
    #allocation28 [shape = 's32[1]{0}', space=sflag, size = 0x4, scoped, tag = 'scoped memory for spatial_transformer_forward.3']
    #allocation29 [shape = 'u8[512]{0}', space=vmem, size = 0x400, scoped, tag = 'input window, operand 16, single buffered']
    #allocation30 [shape = 'u8[512]{0}', space=vmem, size = 0x400, scoped, tag = 'input window, operand 17, single buffered']
    #allocation31 [shape = 's32[1]{0}', space=sflag, size = 0x4, scoped, tag = 'scoped memory for spatial_transformer_forward.3']
    #allocation32 [shape = 'u8[16384]{0}', space=vmem, size = 0x4000, scoped, tag = 'input window, operand 18, single buffered']
    #allocation33 [shape = 'u8[1024]{0}', space=vmem, size = 0x400, scoped, tag = 'input window, operand 19, single buffered']
    #allocation34 [shape = 's32[1]{0}', space=sflag, size = 0x4, scoped, tag = 'scoped memory for spatial_transformer_forward.3']
    #allocation35 [shape = 'u8[32768]{0}', space=vmem, size = 0x8000, scoped, tag = 'input window, operand 20, single buffered']
    #allocation36 [shape = 'u8[512]{0}', space=vmem, size = 0x400, scoped, tag = 'input window, operand 21, single buffered']
    #allocation37 [shape = 's32[1]{0}', space=sflag, size = 0x4, scoped, tag = 'scoped memory for spatial_transformer_forward.3']
    #allocation38 [shape = 'u8[8192]{0}', space=vmem, size = 0x2000, scoped, tag = 'input window, operand 22, single buffered']
    #allocation39 [shape = 'u8[512]{0}', space=vmem, size = 0x400, scoped, tag = 'input window, operand 23, single buffered']
    #allocation40 [shape = 's32[1]{0}', space=sflag, size = 0x4, scoped, tag = 'scoped memory for spatial_transformer_forward.3']
    #allocation41 [shape = 'u8[32768]{0}', space=vmem, size = 0x8000, scoped, tag = 'output window, operand 0']
    %29 = vsyncpa [#allocation4], 0
    %s30 = scalar_lea.sflag [#allocation4], 1
    %31 = vsyncpa %s30, 0
    %32 = vsyncpa [#allocation7], 0
    %s33 = scalar_lea.sflag [#allocation7], 1
    %34 = vsyncpa %s33, 0
    %35 = vsyncpa [#allocation10], 0
    %s36 = scalar_lea.sflag [#allocation10], 1
    %37 = vsyncpa %s36, 0
    %38 = vsyncpa [#allocation13], 0
    %s39 = scalar_lea.sflag [#allocation13], 1
    %40 = vsyncpa %s39, 0
    %41 = vsyncpa [#allocation16], 0
    %42 = vsyncpa [#allocation19], 0
    %43 = vsyncpa [#allocation22], 0
    %44 = vsyncpa [#allocation25], 0
    %45 = vsyncpa [#allocation28], 0
    %46 = vsyncpa [#allocation31], 0
    %47 = vsyncpa [#allocation34], 0
    %48 = vsyncpa [#allocation37], 0
    %49 = vsyncpa [#allocation40], 0
    %50 = vsyncpa [#allocation5], 0
    %s51 = scalar_lea.sflag [#allocation5], 1
    %52 = vsyncpa %s51, 0
    loop: start=0, step=1, limit=6
    $region2: #{spatial_transformer_forward.3} parent=1 // loop_pre_header
      _
    $region3: #{spatial_transformer_forward.3} parent=1 // loop_header
      %s54 = sphi 0, %s58
      %p55 = scmp.ge.s32.totalorder %s54, 6
      %s61 = sphi 0, %s73
      %s62 = sphi 0, %s69
      %s63 = sphi 0, %s61
      %s64 = sphi 0, %s62
      %s65 = sphi 0, %s63
      %s66 = sphi 0, %s64
      %s78 = sphi 0, %s80
      %s81 = sphi 0, %s78
      %s82 = sphi 0, %s81
      %s98 = sphi 0, %s82
      %s106 = sphi 0, %s108
      %s109 = sphi 0, %s106
      %s110 = sphi 0, %s109
      %s126 = sphi 0, %s110
      %s132 = sphi 0, %s134
      %s135 = sphi 0, %s132
      %s136 = sphi 0, %s135
      %s152 = sphi 0, %s136
      %s158 = sphi 0, %s160
      %s161 = sphi 0, %s158
      %s162 = sphi 0, %s161
      %s178 = sphi 0, %s162
      %s184 = sphi 0, %s186
      %s187 = sphi 0, %s184
      %s188 = sphi 0, %s187
      %s204 = sphi 0, %s188
      %s210 = sphi 0, %s212
      %s213 = sphi 0, %s210
      %s214 = sphi 0, %s213
      %s230 = sphi 0, %s214
      %s234 = sphi 0, %s234
      %s236 = sphi 0, %s234
      %s237 = sphi 0, %s236
      %s251 = sphi 0, %s237
      %s255 = sphi 0, %s255
      %s257 = sphi 0, %s255
      %s258 = sphi 0, %s257
      %s272 = sphi 0, %s258
      %s276 = sphi 0, %s276
      %s278 = sphi 0, %s276
      %s279 = sphi 0, %s278
      %s293 = sphi 0, %s279
      %s297 = sphi 0, %s297
      %s299 = sphi 0, %s297
      %s300 = sphi 0, %s299
      %s314 = sphi 0, %s300
      %s318 = sphi 0, %s318
      %s320 = sphi 0, %s318
      %s321 = sphi 0, %s320
      %s335 = sphi 0, %s321
      %s339 = sphi 0, %s339
      %s341 = sphi 0, %s339
      %s342 = sphi 0, %s341
      %s356 = sphi 0, %s342
      %s360 = sphi 0, %s360
      %s362 = sphi 0, %s360
      %s363 = sphi 0, %s362
      %s377 = sphi 0, %s363
      %s381 = sphi 0, %s381
      %s383 = sphi 0, %s381
      %s384 = sphi 0, %s383
      %s398 = sphi 0, %s384
      %s402 = sphi 0, %s402
      %s404 = sphi 0, %s402
      %s405 = sphi 0, %s404
      %s419 = sphi 0, %s405
      %s423 = sphi 0, %s423
      %s425 = sphi 0, %s423
      %s426 = sphi 0, %s425
      %s440 = sphi 0, %s426
      %s444 = sphi 0, %s444
      %s446 = sphi 0, %s444
      %s447 = sphi 0, %s446
      %s461 = sphi 0, %s447
      %s465 = sphi 0, %s465
      %s467 = sphi 0, %s465
      %s468 = sphi 0, %s467
      %s482 = sphi 0, %s468
      %s486 = sphi 0, %s486
      %s488 = sphi 0, %s486
      %s489 = sphi 0, %s488
      %s503 = sphi 0, %s489
      %s507 = sphi 0, %s507
      %s509 = sphi 0, %s507
      %s510 = sphi 0, %s509
      %s524 = sphi 0, %s510
      %s528 = sphi 0, %s528
      %s530 = sphi 0, %s528
      %s531 = sphi 0, %s530
      %s545 = sphi 0, %s531
      %s549 = sphi 0, %s549
      %s551 = sphi 0, %s549
      %s552 = sphi 0, %s551
      %s566 = sphi 0, %s552
      %s570 = sphi 0, %s570
      %s572 = sphi 0, %s570
      %s573 = sphi 0, %s572
      %s587 = sphi 0, %s573
      %s591 = sphi 0, %s591
      %s593 = sphi 0, %s591
      %s594 = sphi 0, %s593
      %s608 = sphi 0, %s594
      %s616 = sphi 0, %s618
      %s619 = sphi 0, %s616
      %s620 = sphi 0, %s619
      %s636 = sphi 0, %s620
    $region4: #{spatial_transformer_forward.3} parent=1 // loop_header_branch
      %57 = sbr.rel (%p55) target = $region8
    $region5: #{spatial_transformer_forward.3} parent=1 // loop_body
      %s59 = ssub.s32 %s54, 1
      %s60 = ssub.s32 %s54, 2
      %s67 = sadd.s32 1, %s62
      %p68 = scmp.ge.s32.totalorder %s67, 2
      %s69 = scalar_select %p68, 0, %s67
      %s70 = sadd.s32 1, %s61
      %s71 = scalar_select %p68, %s70, %s61
      %p72 = scmp.ge.s32.totalorder %s71, 2
      %s73 = scalar_select %p72, 0, %s71
      %s74 = ssub.s32 %s61, %s73
      %s75 = ssub.s32 %s62, %s69
      %s76 = sor.u32 %s74, %s75
      %p77 = scmp.eq.s32.totalorder %s76, 0
      %s79 = sadd.s32 %s78, 1
      %s80 = scalar_select %p77, %s78, %s79
      %p83 = pneg %p77
      %p84 = scmp.eq.s32.totalorder %s54, 3
      %p85 = por %p83, %p84
      %p86 = scmp.ne.s32.totalorder %s78, %s81
      %p87 = scmp.eq.s32.totalorder %s54, 0
      %p88 = por %p86, %p87
      %p89 = scmp.ne.s32.totalorder %s78, %s81
      %p90 = scmp.eq.s32.totalorder %s59, 3
      %p91 = por %p89, %p90
      %p92 = scmp.ne.s32.totalorder %s81, %s82
      %p93 = scmp.eq.s32.totalorder %s59, 0
      %p94 = por %p92, %p93
      %p95 = scmp.ne.s32.totalorder %s81, %s82
      %p96 = scmp.eq.s32.totalorder %s60, 3
      %p97 = por %p95, %p96
      %p99 = scmp.ne.s32.totalorder %s82, %s98
      %p100 = scmp.eq.s32.totalorder %s60, 0
      %p101 = por %p99, %p100
      %s102 = ssub.s32 %s61, %s73
      %s103 = ssub.s32 %s62, %s69
      %s104 = sor.u32 %s102, %s103
      %p105 = scmp.eq.s32.totalorder %s104, 0
      %s107 = sadd.s32 %s106, 1
      %s108 = scalar_select %p105, %s106, %s107
      %p111 = pneg %p105
      %p112 = scmp.eq.s32.totalorder %s54, 3
      %p113 = por %p111, %p112
      %p114 = scmp.ne.s32.totalorder %s106, %s109
      %p115 = scmp.eq.s32.totalorder %s54, 0
      %p116 = por %p114, %p115
      %p117 = scmp.ne.s32.totalorder %s106, %s109
      %p118 = scmp.eq.s32.totalorder %s59, 3
      %p119 = por %p117, %p118
      %p120 = scmp.ne.s32.totalorder %s109, %s110
      %p121 = scmp.eq.s32.totalorder %s59, 0
      %p122 = por %p120, %p121
      %p123 = scmp.ne.s32.totalorder %s109, %s110
      %p124 = scmp.eq.s32.totalorder %s60, 3
      %p125 = por %p123, %p124
      %p127 = scmp.ne.s32.totalorder %s110, %s126
      %p128 = scmp.eq.s32.totalorder %s60, 0
      %p129 = por %p127, %p128
      %s130 = ssub.s32 %s61, %s73
      %p131 = scmp.eq.s32.totalorder %s130, 0
      %s133 = sadd.s32 %s132, 1
      %s134 = scalar_select %p131, %s132, %s133
      %p137 = pneg %p131
      %p138 = scmp.eq.s32.totalorder %s54, 3
      %p139 = por %p137, %p138
      %p140 = scmp.ne.s32.totalorder %s132, %s135
      %p141 = scmp.eq.s32.totalorder %s54, 0
      %p142 = por %p140, %p141
      %p143 = scmp.ne.s32.totalorder %s132, %s135
      %p144 = scmp.eq.s32.totalorder %s59, 3
      %p145 = por %p143, %p144
      %p146 = scmp.ne.s32.totalorder %s135, %s136
      %p147 = scmp.eq.s32.totalorder %s59, 0
      %p148 = por %p146, %p147
      %p149 = scmp.ne.s32.totalorder %s135, %s136
      %p150 = scmp.eq.s32.totalorder %s60, 3
      %p151 = por %p149, %p150
      %p153 = scmp.ne.s32.totalorder %s136, %s152
      %p154 = scmp.eq.s32.totalorder %s60, 0
      %p155 = por %p153, %p154
      %s156 = ssub.s32 %s61, %s73
      %p157 = scmp.eq.s32.totalorder %s156, 0
      %s159 = sadd.s32 %s158, 1
      %s160 = scalar_select %p157, %s158, %s159
      %p163 = pneg %p157
      %p164 = scmp.eq.s32.totalorder %s54, 3
      %p165 = por %p163, %p164
      %p166 = scmp.ne.s32.totalorder %s158, %s161
      %p167 = scmp.eq.s32.totalorder %s54, 0
      %p168 = por %p166, %p167
      %p169 = scmp.ne.s32.totalorder %s158, %s161
      %p170 = scmp.eq.s32.totalorder %s59, 3
      %p171 = por %p169, %p170
      %p172 = scmp.ne.s32.totalorder %s161, %s162
      %p173 = scmp.eq.s32.totalorder %s59, 0
      %p174 = por %p172, %p173
      %p175 = scmp.ne.s32.totalorder %s161, %s162
      %p176 = scmp.eq.s32.totalorder %s60, 3
      %p177 = por %p175, %p176
      %p179 = scmp.ne.s32.totalorder %s162, %s178
      %p180 = scmp.eq.s32.totalorder %s60, 0
      %p181 = por %p179, %p180
      %s182 = ssub.s32 %s61, %s73
      %p183 = scmp.eq.s32.totalorder %s182, 0
      %s185 = sadd.s32 %s184, 1
      %s186 = scalar_select %p183, %s184, %s185
      %p189 = pneg %p183
      %p190 = scmp.eq.s32.totalorder %s54, 3
      %p191 = por %p189, %p190
      %p192 = scmp.ne.s32.totalorder %s184, %s187
      %p193 = scmp.eq.s32.totalorder %s54, 0
      %p194 = por %p192, %p193
      %p195 = scmp.ne.s32.totalorder %s184, %s187
      %p196 = scmp.eq.s32.totalorder %s59, 3
      %p197 = por %p195, %p196
      %p198 = scmp.ne.s32.totalorder %s187, %s188
      %p199 = scmp.eq.s32.totalorder %s59, 0
      %p200 = por %p198, %p199
      %p201 = scmp.ne.s32.totalorder %s187, %s188
      %p202 = scmp.eq.s32.totalorder %s60, 3
      %p203 = por %p201, %p202
      %p205 = scmp.ne.s32.totalorder %s188, %s204
      %p206 = scmp.eq.s32.totalorder %s60, 0
      %p207 = por %p205, %p206
      %s208 = ssub.s32 %s61, %s73
      %p209 = scmp.eq.s32.totalorder %s208, 0
      %s211 = sadd.s32 %s210, 1
      %s212 = scalar_select %p209, %s210, %s211
      %p215 = pneg %p209
      %p216 = scmp.eq.s32.totalorder %s54, 3
      %p217 = por %p215, %p216
      %p218 = scmp.ne.s32.totalorder %s210, %s213
      %p219 = scmp.eq.s32.totalorder %s54, 0
      %p220 = por %p218, %p219
      %p221 = scmp.ne.s32.totalorder %s210, %s213
      %p222 = scmp.eq.s32.totalorder %s59, 3
      %p223 = por %p221, %p222
      %p224 = scmp.ne.s32.totalorder %s213, %s214
      %p225 = scmp.eq.s32.totalorder %s59, 0
      %p226 = por %p224, %p225
      %p227 = scmp.ne.s32.totalorder %s213, %s214
      %p228 = scmp.eq.s32.totalorder %s60, 3
      %p229 = por %p227, %p228
      %p231 = scmp.ne.s32.totalorder %s214, %s230
      %p232 = scmp.eq.s32.totalorder %s60, 0
      %p233 = por %p231, %p232
      %s235 = sadd.s32 %s234, 1
      %p238 = scmp.eq.s32.totalorder %s54, 3
      %p239 = scmp.ne.s32.totalorder %s234, %s236
      %p240 = scmp.eq.s32.totalorder %s54, 0
      %p241 = por %p239, %p240
      %p242 = scmp.ne.s32.totalorder %s234, %s236
      %p243 = scmp.eq.s32.totalorder %s59, 3
      %p244 = por %p242, %p243
      %p245 = scmp.ne.s32.totalorder %s236, %s237
      %p246 = scmp.eq.s32.totalorder %s59, 0
      %p247 = por %p245, %p246
      %p248 = scmp.ne.s32.totalorder %s236, %s237
      %p249 = scmp.eq.s32.totalorder %s60, 3
      %p250 = por %p248, %p249
      %p252 = scmp.ne.s32.totalorder %s237, %s251
      %p253 = scmp.eq.s32.totalorder %s60, 0
      %p254 = por %p252, %p253
      %s256 = sadd.s32 %s255, 1
      %p259 = scmp.eq.s32.totalorder %s54, 3
      %p260 = scmp.ne.s32.totalorder %s255, %s257
      %p261 = scmp.eq.s32.totalorder %s54, 0
      %p262 = por %p260, %p261
      %p263 = scmp.ne.s32.totalorder %s255, %s257
      %p264 = scmp.eq.s32.totalorder %s59, 3
      %p265 = por %p263, %p264
      %p266 = scmp.ne.s32.totalorder %s257, %s258
      %p267 = scmp.eq.s32.totalorder %s59, 0
      %p268 = por %p266, %p267
      %p269 = scmp.ne.s32.totalorder %s257, %s258
      %p270 = scmp.eq.s32.totalorder %s60, 3
      %p271 = por %p269, %p270
      %p273 = scmp.ne.s32.totalorder %s258, %s272
      %p274 = scmp.eq.s32.totalorder %s60, 0
      %p275 = por %p273, %p274
      %s277 = sadd.s32 %s276, 1
      %p280 = scmp.eq.s32.totalorder %s54, 3
      %p281 = scmp.ne.s32.totalorder %s276, %s278
      %p282 = scmp.eq.s32.totalorder %s54, 0
      %p283 = por %p281, %p282
      %p284 = scmp.ne.s32.totalorder %s276, %s278
      %p285 = scmp.eq.s32.totalorder %s59, 3
      %p286 = por %p284, %p285
      %p287 = scmp.ne.s32.totalorder %s278, %s279
      %p288 = scmp.eq.s32.totalorder %s59, 0
      %p289 = por %p287, %p288
      %p290 = scmp.ne.s32.totalorder %s278, %s279
      %p291 = scmp.eq.s32.totalorder %s60, 3
      %p292 = por %p290, %p291
      %p294 = scmp.ne.s32.totalorder %s279, %s293
      %p295 = scmp.eq.s32.totalorder %s60, 0
      %p296 = por %p294, %p295
      %s298 = sadd.s32 %s297, 1
      %p301 = scmp.eq.s32.totalorder %s54, 3
      %p302 = scmp.ne.s32.totalorder %s297, %s299
      %p303 = scmp.eq.s32.totalorder %s54, 0
      %p304 = por %p302, %p303
      %p305 = scmp.ne.s32.totalorder %s297, %s299
      %p306 = scmp.eq.s32.totalorder %s59, 3
      %p307 = por %p305, %p306
      %p308 = scmp.ne.s32.totalorder %s299, %s300
      %p309 = scmp.eq.s32.totalorder %s59, 0
      %p310 = por %p308, %p309
      %p311 = scmp.ne.s32.totalorder %s299, %s300
      %p312 = scmp.eq.s32.totalorder %s60, 3
      %p313 = por %p311, %p312
      %p315 = scmp.ne.s32.totalorder %s300, %s314
      %p316 = scmp.eq.s32.totalorder %s60, 0
      %p317 = por %p315, %p316
      %s319 = sadd.s32 %s318, 1
      %p322 = scmp.eq.s32.totalorder %s54, 3
      %p323 = scmp.ne.s32.totalorder %s318, %s320
      %p324 = scmp.eq.s32.totalorder %s54, 0
      %p325 = por %p323, %p324
      %p326 = scmp.ne.s32.totalorder %s318, %s320
      %p327 = scmp.eq.s32.totalorder %s59, 3
      %p328 = por %p326, %p327
      %p329 = scmp.ne.s32.totalorder %s320, %s321
      %p330 = scmp.eq.s32.totalorder %s59, 0
      %p331 = por %p329, %p330
      %p332 = scmp.ne.s32.totalorder %s320, %s321
      %p333 = scmp.eq.s32.totalorder %s60, 3
      %p334 = por %p332, %p333
      %p336 = scmp.ne.s32.totalorder %s321, %s335
      %p337 = scmp.eq.s32.totalorder %s60, 0
      %p338 = por %p336, %p337
      %s340 = sadd.s32 %s339, 1
      %p343 = scmp.eq.s32.totalorder %s54, 3
      %p344 = scmp.ne.s32.totalorder %s339, %s341
      %p345 = scmp.eq.s32.totalorder %s54, 0
      %p346 = por %p344, %p345
      %p347 = scmp.ne.s32.totalorder %s339, %s341
      %p348 = scmp.eq.s32.totalorder %s59, 3
      %p349 = por %p347, %p348
      %p350 = scmp.ne.s32.totalorder %s341, %s342
      %p351 = scmp.eq.s32.totalorder %s59, 0
      %p352 = por %p350, %p351
      %p353 = scmp.ne.s32.totalorder %s341, %s342
      %p354 = scmp.eq.s32.totalorder %s60, 3
      %p355 = por %p353, %p354
      %p357 = scmp.ne.s32.totalorder %s342, %s356
      %p358 = scmp.eq.s32.totalorder %s60, 0
      %p359 = por %p357, %p358
      %s361 = sadd.s32 %s360, 1
      %p364 = scmp.eq.s32.totalorder %s54, 3
      %p365 = scmp.ne.s32.totalorder %s360, %s362
      %p366 = scmp.eq.s32.totalorder %s54, 0
      %p367 = por %p365, %p366
      %p368 = scmp.ne.s32.totalorder %s360, %s362
      %p369 = scmp.eq.s32.totalorder %s59, 3
      %p370 = por %p368, %p369
      %p371 = scmp.ne.s32.totalorder %s362, %s363
      %p372 = scmp.eq.s32.totalorder %s59, 0
      %p373 = por %p371, %p372
      %p374 = scmp.ne.s32.totalorder %s362, %s363
      %p375 = scmp.eq.s32.totalorder %s60, 3
      %p376 = por %p374, %p375
      %p378 = scmp.ne.s32.totalorder %s363, %s377
      %p379 = scmp.eq.s32.totalorder %s60, 0
      %p380 = por %p378, %p379
      %s382 = sadd.s32 %s381, 1
      %p385 = scmp.eq.s32.totalorder %s54, 3
      %p386 = scmp.ne.s32.totalorder %s381, %s383
      %p387 = scmp.eq.s32.totalorder %s54, 0
      %p388 = por %p386, %p387
      %p389 = scmp.ne.s32.totalorder %s381, %s383
      %p390 = scmp.eq.s32.totalorder %s59, 3
      %p391 = por %p389, %p390
      %p392 = scmp.ne.s32.totalorder %s383, %s384
      %p393 = scmp.eq.s32.totalorder %s59, 0
      %p394 = por %p392, %p393
      %p395 = scmp.ne.s32.totalorder %s383, %s384
      %p396 = scmp.eq.s32.totalorder %s60, 3
      %p397 = por %p395, %p396
      %p399 = scmp.ne.s32.totalorder %s384, %s398
      %p400 = scmp.eq.s32.totalorder %s60, 0
      %p401 = por %p399, %p400
      %s403 = sadd.s32 %s402, 1
      %p406 = scmp.eq.s32.totalorder %s54, 3
      %p407 = scmp.ne.s32.totalorder %s402, %s404
      %p408 = scmp.eq.s32.totalorder %s54, 0
      %p409 = por %p407, %p408
      %p410 = scmp.ne.s32.totalorder %s402, %s404
      %p411 = scmp.eq.s32.totalorder %s59, 3
      %p412 = por %p410, %p411
      %p413 = scmp.ne.s32.totalorder %s404, %s405
      %p414 = scmp.eq.s32.totalorder %s59, 0
      %p415 = por %p413, %p414
      %p416 = scmp.ne.s32.totalorder %s404, %s405
      %p417 = scmp.eq.s32.totalorder %s60, 3
      %p418 = por %p416, %p417
      %p420 = scmp.ne.s32.totalorder %s405, %s419
      %p421 = scmp.eq.s32.totalorder %s60, 0
      %p422 = por %p420, %p421
      %s424 = sadd.s32 %s423, 1
      %p427 = scmp.eq.s32.totalorder %s54, 3
      %p428 = scmp.ne.s32.totalorder %s423, %s425
      %p429 = scmp.eq.s32.totalorder %s54, 0
      %p430 = por %p428, %p429
      %p431 = scmp.ne.s32.totalorder %s423, %s425
      %p432 = scmp.eq.s32.totalorder %s59, 3
      %p433 = por %p431, %p432
      %p434 = scmp.ne.s32.totalorder %s425, %s426
      %p435 = scmp.eq.s32.totalorder %s59, 0
      %p436 = por %p434, %p435
      %p437 = scmp.ne.s32.totalorder %s425, %s426
      %p438 = scmp.eq.s32.totalorder %s60, 3
      %p439 = por %p437, %p438
      %p441 = scmp.ne.s32.totalorder %s426, %s440
      %p442 = scmp.eq.s32.totalorder %s60, 0
      %p443 = por %p441, %p442
      %s445 = sadd.s32 %s444, 1
      %p448 = scmp.eq.s32.totalorder %s54, 3
      %p449 = scmp.ne.s32.totalorder %s444, %s446
      %p450 = scmp.eq.s32.totalorder %s54, 0
      %p451 = por %p449, %p450
      %p452 = scmp.ne.s32.totalorder %s444, %s446
      %p453 = scmp.eq.s32.totalorder %s59, 3
      %p454 = por %p452, %p453
      %p455 = scmp.ne.s32.totalorder %s446, %s447
      %p456 = scmp.eq.s32.totalorder %s59, 0
      %p457 = por %p455, %p456
      %p458 = scmp.ne.s32.totalorder %s446, %s447
      %p459 = scmp.eq.s32.totalorder %s60, 3
      %p460 = por %p458, %p459
      %p462 = scmp.ne.s32.totalorder %s447, %s461
      %p463 = scmp.eq.s32.totalorder %s60, 0
      %p464 = por %p462, %p463
      %s466 = sadd.s32 %s465, 1
      %p469 = scmp.eq.s32.totalorder %s54, 3
      %p470 = scmp.ne.s32.totalorder %s465, %s467
      %p471 = scmp.eq.s32.totalorder %s54, 0
      %p472 = por %p470, %p471
      %p473 = scmp.ne.s32.totalorder %s465, %s467
      %p474 = scmp.eq.s32.totalorder %s59, 3
      %p475 = por %p473, %p474
      %p476 = scmp.ne.s32.totalorder %s467, %s468
      %p477 = scmp.eq.s32.totalorder %s59, 0
      %p478 = por %p476, %p477
      %p479 = scmp.ne.s32.totalorder %s467, %s468
      %p480 = scmp.eq.s32.totalorder %s60, 3
      %p481 = por %p479, %p480
      %p483 = scmp.ne.s32.totalorder %s468, %s482
      %p484 = scmp.eq.s32.totalorder %s60, 0
      %p485 = por %p483, %p484
      %s487 = sadd.s32 %s486, 1
      %p490 = scmp.eq.s32.totalorder %s54, 3
      %p491 = scmp.ne.s32.totalorder %s486, %s488
      %p492 = scmp.eq.s32.totalorder %s54, 0
      %p493 = por %p491, %p492
      %p494 = scmp.ne.s32.totalorder %s486, %s488
      %p495 = scmp.eq.s32.totalorder %s59, 3
      %p496 = por %p494, %p495
      %p497 = scmp.ne.s32.totalorder %s488, %s489
      %p498 = scmp.eq.s32.totalorder %s59, 0
      %p499 = por %p497, %p498
      %p500 = scmp.ne.s32.totalorder %s488, %s489
      %p501 = scmp.eq.s32.totalorder %s60, 3
      %p502 = por %p500, %p501
      %p504 = scmp.ne.s32.totalorder %s489, %s503
      %p505 = scmp.eq.s32.totalorder %s60, 0
      %p506 = por %p504, %p505
      %s508 = sadd.s32 %s507, 1
      %p511 = scmp.eq.s32.totalorder %s54, 3
      %p512 = scmp.ne.s32.totalorder %s507, %s509
      %p513 = scmp.eq.s32.totalorder %s54, 0
      %p514 = por %p512, %p513
      %p515 = scmp.ne.s32.totalorder %s507, %s509
      %p516 = scmp.eq.s32.totalorder %s59, 3
      %p517 = por %p515, %p516
      %p518 = scmp.ne.s32.totalorder %s509, %s510
      %p519 = scmp.eq.s32.totalorder %s59, 0
      %p520 = por %p518, %p519
      %p521 = scmp.ne.s32.totalorder %s509, %s510
      %p522 = scmp.eq.s32.totalorder %s60, 3
      %p523 = por %p521, %p522
      %p525 = scmp.ne.s32.totalorder %s510, %s524
      %p526 = scmp.eq.s32.totalorder %s60, 0
      %p527 = por %p525, %p526
      %s529 = sadd.s32 %s528, 1
      %p532 = scmp.eq.s32.totalorder %s54, 3
      %p533 = scmp.ne.s32.totalorder %s528, %s530
      %p534 = scmp.eq.s32.totalorder %s54, 0
      %p535 = por %p533, %p534
      %p536 = scmp.ne.s32.totalorder %s528, %s530
      %p537 = scmp.eq.s32.totalorder %s59, 3
      %p538 = por %p536, %p537
      %p539 = scmp.ne.s32.totalorder %s530, %s531
      %p540 = scmp.eq.s32.totalorder %s59, 0
      %p541 = por %p539, %p540
      %p542 = scmp.ne.s32.totalorder %s530, %s531
      %p543 = scmp.eq.s32.totalorder %s60, 3
      %p544 = por %p542, %p543
      %p546 = scmp.ne.s32.totalorder %s531, %s545
      %p547 = scmp.eq.s32.totalorder %s60, 0
      %p548 = por %p546, %p547
      %s550 = sadd.s32 %s549, 1
      %p553 = scmp.eq.s32.totalorder %s54, 3
      %p554 = scmp.ne.s32.totalorder %s549, %s551
      %p555 = scmp.eq.s32.totalorder %s54, 0
      %p556 = por %p554, %p555
      %p557 = scmp.ne.s32.totalorder %s549, %s551
      %p558 = scmp.eq.s32.totalorder %s59, 3
      %p559 = por %p557, %p558
      %p560 = scmp.ne.s32.totalorder %s551, %s552
      %p561 = scmp.eq.s32.totalorder %s59, 0
      %p562 = por %p560, %p561
      %p563 = scmp.ne.s32.totalorder %s551, %s552
      %p564 = scmp.eq.s32.totalorder %s60, 3
      %p565 = por %p563, %p564
      %p567 = scmp.ne.s32.totalorder %s552, %s566
      %p568 = scmp.eq.s32.totalorder %s60, 0
      %p569 = por %p567, %p568
      %s571 = sadd.s32 %s570, 1
      %p574 = scmp.eq.s32.totalorder %s54, 3
      %p575 = scmp.ne.s32.totalorder %s570, %s572
      %p576 = scmp.eq.s32.totalorder %s54, 0
      %p577 = por %p575, %p576
      %p578 = scmp.ne.s32.totalorder %s570, %s572
      %p579 = scmp.eq.s32.totalorder %s59, 3
      %p580 = por %p578, %p579
      %p581 = scmp.ne.s32.totalorder %s572, %s573
      %p582 = scmp.eq.s32.totalorder %s59, 0
      %p583 = por %p581, %p582
      %p584 = scmp.ne.s32.totalorder %s572, %s573
      %p585 = scmp.eq.s32.totalorder %s60, 3
      %p586 = por %p584, %p585
      %p588 = scmp.ne.s32.totalorder %s573, %s587
      %p589 = scmp.eq.s32.totalorder %s60, 0
      %p590 = por %p588, %p589
      %s592 = sadd.s32 %s591, 1
      %p595 = scmp.eq.s32.totalorder %s54, 3
      %p596 = scmp.ne.s32.totalorder %s591, %s593
      %p597 = scmp.eq.s32.totalorder %s54, 0
      %p598 = por %p596, %p597
      %p599 = scmp.ne.s32.totalorder %s591, %s593
      %p600 = scmp.eq.s32.totalorder %s59, 3
      %p601 = por %p599, %p600
      %p602 = scmp.ne.s32.totalorder %s593, %s594
      %p603 = scmp.eq.s32.totalorder %s59, 0
      %p604 = por %p602, %p603
      %p605 = scmp.ne.s32.totalorder %s593, %s594
      %p606 = scmp.eq.s32.totalorder %s60, 3
      %p607 = por %p605, %p606
      %p609 = scmp.ne.s32.totalorder %s594, %s608
      %p610 = scmp.eq.s32.totalorder %s60, 0
      %p611 = por %p609, %p610
      %s612 = ssub.s32 %s61, %s73
      %s613 = ssub.s32 %s62, %s69
      %s614 = sor.u32 %s612, %s613
      %p615 = scmp.eq.s32.totalorder %s614, 0
      %s617 = sadd.s32 %s616, 1
      %s618 = scalar_select %p615, %s616, %s617
      %p621 = pneg %p615
      %p622 = scmp.eq.s32.totalorder %s54, 3
      %p623 = por %p621, %p622
      %p624 = scmp.ne.s32.totalorder %s616, %s619
      %p625 = scmp.eq.s32.totalorder %s54, 0
      %p626 = por %p624, %p625
      %p627 = scmp.ne.s32.totalorder %s616, %s619
      %p628 = scmp.eq.s32.totalorder %s59, 3
      %p629 = por %p627, %p628
      %p630 = scmp.ne.s32.totalorder %s619, %s620
      %p631 = scmp.eq.s32.totalorder %s59, 0
      %p632 = por %p630, %p631
      %p633 = scmp.ne.s32.totalorder %s619, %s620
      %p634 = scmp.eq.s32.totalorder %s60, 3
      %p635 = por %p633, %p634
      %p637 = scmp.ne.s32.totalorder %s620, %s636
      %p638 = scmp.eq.s32.totalorder %s60, 0
      %p639 = por %p637, %p638
      %p640 = scmp.le.s32.totalorder 1, %s54
      %p641 = scmp.lt.s32.totalorder %s54, 5
      %p642 = pnand %p640, %p641
      %p643 = pneg %p642
      // Predicated region
      $region9: #{spatial_transformer_forward.3} parent=5 // pred_check
        _
      $region10: #{spatial_transformer_forward.3} parent=5 // pred_check_branch
        %645 = sbr.rel (%p642) target = $region12
      $region11: #{spatial_transformer_forward.3} parent=5 // pred_region
        %s646 = ssub.s32 %s54, 1
        // Predicated region
        $region13: #{spatial_transformer_forward.3} parent=11 // pred_check
          %p647 = pneg %p247
        $region14: #{spatial_transformer_forward.3} parent=11 // pred_check_branch
          %649 = sbr.rel (%p647) target = $region16
        $region15: #{spatial_transformer_forward.3} parent=11 // pred_region
          %s651 = ssub.s32 16, 16
          %652 = vsyncadd [#allocation13], %s651
          %s654 = sshll.u32 [#allocation14], 4
          %s655 = int_to_ptr.vmem [resolvable:$true] %s654
          %657 = dma.hbm_to_vmem [thread:$0]  %s6, 16, %s655, [#allocation13]
        $region16: #{spatial_transformer_forward.3} parent=11 // pred_fallthru
          _
        // Predicated region
        $region17: #{spatial_transformer_forward.3} parent=11 // pred_check
          %p658 = pneg %p268
        $region18: #{spatial_transformer_forward.3} parent=11 // pred_check_branch
          %660 = sbr.rel (%p658) target = $region20
        $region19: #{spatial_transformer_forward.3} parent=11 // pred_region
          %s662 = ssub.s32 16, 16
          %663 = vsyncadd [#allocation16], %s662
          %s665 = sshll.u32 [#allocation15], 4
          %s666 = int_to_ptr.vmem [resolvable:$true] %s665
          %668 = dma.hbm_to_vmem [thread:$0]  %s7, 16, %s666, [#allocation16]
        $region20: #{spatial_transformer_forward.3} parent=11 // pred_fallthru
          _
        // Predicated region
        $region21: #{spatial_transformer_forward.3} parent=11 // pred_check
          %p669 = pneg %p289
        $region22: #{spatial_transformer_forward.3} parent=11 // pred_check_branch
          %671 = sbr.rel (%p669) target = $region24
        $region23: #{spatial_transformer_forward.3} parent=11 // pred_region
          %s673 = ssub.s32 256, 256
          %674 = vsyncadd [#allocation16], %s673
          %s675 = sshll.u32 [#allocation17], 4
          %s676 = int_to_ptr.vmem [resolvable:$true] %s675
          %681 = dma.hbm_to_vmem [thread:$0]  %s8, 256, %s676, [#allocation16], 64, 64, 4
        $region24: #{spatial_transformer_forward.3} parent=11 // pred_fallthru
          _
        // Predicated region
        $region25: #{spatial_transformer_forward.3} parent=11 // pred_check
          %p682 = pneg %p310
        $region26: #{spatial_transformer_forward.3} parent=11 // pred_check_branch
          %684 = sbr.rel (%p682) target = $region28
        $region27: #{spatial_transformer_forward.3} parent=11 // pred_region
          %s686 = ssub.s32 256, 256
          %687 = vsyncadd [#allocation19], %s686
          %s688 = sshll.u32 [#allocation18], 4
          %s689 = int_to_ptr.vmem [resolvable:$true] %s688
          %694 = dma.hbm_to_vmem [thread:$0]  %s9, 256, %s689, [#allocation19], 64, 64, 4
        $region28: #{spatial_transformer_forward.3} parent=11 // pred_fallthru
          _
        // Predicated region
        $region29: #{spatial_transformer_forward.3} parent=11 // pred_check
          %p695 = pneg %p331
        $region30: #{spatial_transformer_forward.3} parent=11 // pred_check_branch
          %697 = sbr.rel (%p695) target = $region32
        $region31: #{spatial_transformer_forward.3} parent=11 // pred_region
          %s699 = ssub.s32 16, 16
          %700 = vsyncadd [#allocation19], %s699
          %s702 = sshll.u32 [#allocation20], 4
          %s703 = int_to_ptr.vmem [resolvable:$true] %s702
          %705 = dma.hbm_to_vmem [thread:$0]  %s10, 16, %s703, [#allocation19]
        $region32: #{spatial_transformer_forward.3} parent=11 // pred_fallthru
          _
        // Predicated region
        $region33: #{spatial_transformer_forward.3} parent=11 // pred_check
          %p706 = pneg %p352
        $region34: #{spatial_transformer_forward.3} parent=11 // pred_check_branch
          %708 = sbr.rel (%p706) target = $region36
        $region35: #{spatial_transformer_forward.3} parent=11 // pred_region
          %s710 = ssub.s32 16, 16
          %711 = vsyncadd [#allocation22], %s710
          %s713 = sshll.u32 [#allocation21], 4
          %s714 = int_to_ptr.vmem [resolvable:$true] %s713
          %716 = dma.hbm_to_vmem [thread:$0]  %s11, 16, %s714, [#allocation22]
        $region36: #{spatial_transformer_forward.3} parent=11 // pred_fallthru
          _
        // Predicated region
        $region37: #{spatial_transformer_forward.3} parent=11 // pred_check
          %p717 = pneg %p373
        $region38: #{spatial_transformer_forward.3} parent=11 // pred_check_branch
          %719 = sbr.rel (%p717) target = $region40
        $region39: #{spatial_transformer_forward.3} parent=11 // pred_region
          %s721 = ssub.s32 16, 16
          %722 = vsyncadd [#allocation22], %s721
          %s724 = sshll.u32 [#allocation23], 4
          %s725 = int_to_ptr.vmem [resolvable:$true] %s724
          %727 = dma.hbm_to_vmem [thread:$0]  %s12, 16, %s725, [#allocation22]
        $region40: #{spatial_transformer_forward.3} parent=11 // pred_fallthru
          _
        // Predicated region
        $region41: #{spatial_transformer_forward.3} parent=11 // pred_check
          %p728 = pneg %p394
        $region42: #{spatial_transformer_forward.3} parent=11 // pred_check_branch
          %730 = sbr.rel (%p728) target = $region44
        $region43: #{spatial_transformer_forward.3} parent=11 // pred_region
          %s732 = ssub.s32 256, 256
          %733 = vsyncadd [#allocation25], %s732
          %s734 = sshll.u32 [#allocation24], 4
          %s735 = int_to_ptr.vmem [resolvable:$true] %s734
          %740 = dma.hbm_to_vmem [thread:$0]  %s13, 256, %s735, [#allocation25], 64, 64, 4
        $region44: #{spatial_transformer_forward.3} parent=11 // pred_fallthru
          _
        // Predicated region
        $region45: #{spatial_transformer_forward.3} parent=11 // pred_check
          %p741 = pneg %p415
        $region46: #{spatial_transformer_forward.3} parent=11 // pred_check_branch
          %743 = sbr.rel (%p741) target = $region48
        $region47: #{spatial_transformer_forward.3} parent=11 // pred_region
          %s745 = ssub.s32 256, 256
          %746 = vsyncadd [#allocation25], %s745
          %s747 = sshll.u32 [#allocation26], 4
          %s748 = int_to_ptr.vmem [resolvable:$true] %s747
          %753 = dma.hbm_to_vmem [thread:$0]  %s14, 256, %s748, [#allocation25], 64, 64, 4
        $region48: #{spatial_transformer_forward.3} parent=11 // pred_fallthru
          _
        // Predicated region
        $region49: #{spatial_transformer_forward.3} parent=11 // pred_check
          %p754 = pneg %p436
        $region50: #{spatial_transformer_forward.3} parent=11 // pred_check_branch
          %756 = sbr.rel (%p754) target = $region52
        $region51: #{spatial_transformer_forward.3} parent=11 // pred_region
          %s758 = ssub.s32 16, 16
          %759 = vsyncadd [#allocation28], %s758
          %s761 = sshll.u32 [#allocation27], 4
          %s762 = int_to_ptr.vmem [resolvable:$true] %s761
          %764 = dma.hbm_to_vmem [thread:$0]  %s15, 16, %s762, [#allocation28]
        $region52: #{spatial_transformer_forward.3} parent=11 // pred_fallthru
          _
        // Predicated region
        $region53: #{spatial_transformer_forward.3} parent=11 // pred_check
          %p765 = pneg %p457
        $region54: #{spatial_transformer_forward.3} parent=11 // pred_check_branch
          %767 = sbr.rel (%p765) target = $region56
        $region55: #{spatial_transformer_forward.3} parent=11 // pred_region
          %s769 = ssub.s32 16, 16
          %770 = vsyncadd [#allocation28], %s769
          %s772 = sshll.u32 [#allocation29], 4
          %s773 = int_to_ptr.vmem [resolvable:$true] %s772
          %775 = dma.hbm_to_vmem [thread:$0]  %s16, 16, %s773, [#allocation28]
        $region56: #{spatial_transformer_forward.3} parent=11 // pred_fallthru
          _
        // Predicated region
        $region57: #{spatial_transformer_forward.3} parent=11 // pred_check
          %p776 = pneg %p478
        $region58: #{spatial_transformer_forward.3} parent=11 // pred_check_branch
          %778 = sbr.rel (%p776) target = $region60
        $region59: #{spatial_transformer_forward.3} parent=11 // pred_region
          %s780 = ssub.s32 16, 16
          %781 = vsyncadd [#allocation31], %s780
          %s783 = sshll.u32 [#allocation30], 4
          %s784 = int_to_ptr.vmem [resolvable:$true] %s783
          %786 = dma.hbm_to_vmem [thread:$0]  %s17, 16, %s784, [#allocation31]
        $region60: #{spatial_transformer_forward.3} parent=11 // pred_fallthru
          _
        // Predicated region
        $region61: #{spatial_transformer_forward.3} parent=11 // pred_check
          %p787 = pneg %p499
        $region62: #{spatial_transformer_forward.3} parent=11 // pred_check_branch
          %789 = sbr.rel (%p787) target = $region64
        $region63: #{spatial_transformer_forward.3} parent=11 // pred_region
          %s791 = ssub.s32 512, 512
          %792 = vsyncadd [#allocation31], %s791
          %s793 = sshll.u32 [#allocation32], 4
          %s794 = int_to_ptr.vmem [resolvable:$true] %s793
          %799 = dma.hbm_to_vmem [thread:$0]  %s18, 512, %s794, [#allocation31], 128, 128, 8
        $region64: #{spatial_transformer_forward.3} parent=11 // pred_fallthru
          _
        // Predicated region
        $region65: #{spatial_transformer_forward.3} parent=11 // pred_check
          %p800 = pneg %p520
        $region66: #{spatial_transformer_forward.3} parent=11 // pred_check_branch
          %802 = sbr.rel (%p800) target = $region68
        $region67: #{spatial_transformer_forward.3} parent=11 // pred_region
          %s804 = ssub.s32 32, 32
          %805 = vsyncadd [#allocation34], %s804
          %s807 = sshll.u32 [#allocation33], 4
          %s808 = int_to_ptr.vmem [resolvable:$true] %s807
          %810 = dma.hbm_to_vmem [thread:$0]  %s19, 32, %s808, [#allocation34]
        $region68: #{spatial_transformer_forward.3} parent=11 // pred_fallthru
          _
        // Predicated region
        $region69: #{spatial_transformer_forward.3} parent=11 // pred_check
          %p811 = pneg %p541
        $region70: #{spatial_transformer_forward.3} parent=11 // pred_check_branch
          %813 = sbr.rel (%p811) target = $region72
        $region71: #{spatial_transformer_forward.3} parent=11 // pred_region
          %s815 = ssub.s32 1024, 1024
          %816 = vsyncadd [#allocation34], %s815
          %s817 = sshll.u32 [#allocation35], 4
          %s818 = int_to_ptr.vmem [resolvable:$true] %s817
          %823 = dma.hbm_to_vmem [thread:$0]  %s20, 1024, %s818, [#allocation34], 64, 64, 4
        $region72: #{spatial_transformer_forward.3} parent=11 // pred_fallthru
          _
        // Predicated region
        $region73: #{spatial_transformer_forward.3} parent=11 // pred_check
          %p824 = pneg %p562
        $region74: #{spatial_transformer_forward.3} parent=11 // pred_check_branch
          %826 = sbr.rel (%p824) target = $region76
        $region75: #{spatial_transformer_forward.3} parent=11 // pred_region
          %s828 = ssub.s32 16, 16
          %829 = vsyncadd [#allocation37], %s828
          %s831 = sshll.u32 [#allocation36], 4
          %s832 = int_to_ptr.vmem [resolvable:$true] %s831
          %834 = dma.hbm_to_vmem [thread:$0]  %s21, 16, %s832, [#allocation37]
        $region76: #{spatial_transformer_forward.3} parent=11 // pred_fallthru
          _
        // Predicated region
        $region77: #{spatial_transformer_forward.3} parent=11 // pred_check
          %p835 = pneg %p583
        $region78: #{spatial_transformer_forward.3} parent=11 // pred_check_branch
          %837 = sbr.rel (%p835) target = $region80
        $region79: #{spatial_transformer_forward.3} parent=11 // pred_region
          %s839 = ssub.s32 256, 256
          %840 = vsyncadd [#allocation37], %s839
          %s841 = sshll.u32 [#allocation38], 4
          %s842 = int_to_ptr.vmem [resolvable:$true] %s841
          %847 = dma.hbm_to_vmem [thread:$0]  %s22, 256, %s842, [#allocation37], 64, 64, 4
        $region80: #{spatial_transformer_forward.3} parent=11 // pred_fallthru
          _
        // Predicated region
        $region81: #{spatial_transformer_forward.3} parent=11 // pred_check
          %p848 = pneg %p604
        $region82: #{spatial_transformer_forward.3} parent=11 // pred_check_branch
          %850 = sbr.rel (%p848) target = $region84
        $region83: #{spatial_transformer_forward.3} parent=11 // pred_region
          %s852 = ssub.s32 16, 16
          %853 = vsyncadd [#allocation40], %s852
          %s855 = sshll.u32 [#allocation39], 4
          %s856 = int_to_ptr.vmem [resolvable:$true] %s855
          %858 = dma.hbm_to_vmem [thread:$0]  %s23, 16, %s856, [#allocation40]
        $region84: #{spatial_transformer_forward.3} parent=11 // pred_fallthru
          _
      $region12: #{spatial_transformer_forward.3} parent=5 // pred_fallthru
        _
      %p859 = scmp.lt.s32.totalorder %s54, 4
      // Predicated region
      $region85: #{spatial_transformer_forward.3} parent=5 // pred_check
        %p860 = pneg %p859
      $region86: #{spatial_transformer_forward.3} parent=5 // pred_check_branch
        %862 = sbr.rel (%p860) target = $region88
      $region87: #{spatial_transformer_forward.3} parent=5 // pred_region
        // Predicated region
        $region89: #{spatial_transformer_forward.3} parent=87 // pred_check
          %p863 = pneg %p88
        $region90: #{spatial_transformer_forward.3} parent=87 // pred_check_branch
          %865 = sbr.rel (%p863) target = $region92
        $region91: #{spatial_transformer_forward.3} parent=87 // pred_region
          %s866 = sand.u32 %s78, 1
          %s867 = scalar_lea.sflag [#allocation4], %s866
          %s868 = sand.u32 %s78, 1
          %s869 = smul.addr %s868, 32
          %s870 = scalar_lea.vmem [#allocation3], %s869
          %s871 = smul.u32 4, %s62
          %s873 = ssub.s32 512, 512
          %874 = vsyncadd %s867, %s873
          %s875 = smul.addr %s61, 8
          %s876 = sadd.s32 %s871, %s875
          %s877 = smul.addr %s876, 128
          %s878 = scalar_lea.hbm %s0, %s877
          %s879 = sshll.u32 %s870, 4
          %s880 = int_to_ptr.vmem [resolvable:$true] %s879
          %885 = dma.hbm_to_vmem [thread:$0]  %s878, 512, %s880, %s867, 128, 128, 8
        $region92: #{spatial_transformer_forward.3} parent=87 // pred_fallthru
          _
        // Predicated region
        $region93: #{spatial_transformer_forward.3} parent=87 // pred_check
          %p886 = pneg %p116
        $region94: #{spatial_transformer_forward.3} parent=87 // pred_check_branch
          %888 = sbr.rel (%p886) target = $region96
        $region95: #{spatial_transformer_forward.3} parent=87 // pred_region
          %s889 = sand.u32 %s54, 1
          %s890 = scalar_lea.sflag [#allocation7], %s889
          %s891 = sand.u32 %s106, 1
          %s892 = smul.addr %s891, 32
          %s893 = scalar_lea.vmem [#allocation6], %s892
          %s894 = smul.u32 4, %s62
          %s896 = ssub.s32 512, 512
          %897 = vsyncadd %s890, %s896
          %s898 = smul.addr %s61, 8
          %s899 = sadd.s32 %s894, %s898
          %s900 = smul.addr %s899, 128
          %s901 = scalar_lea.hbm %s1, %s900
          %s902 = sshll.u32 %s893, 4
          %s903 = int_to_ptr.vmem [resolvable:$true] %s902
          %908 = dma.hbm_to_vmem [thread:$0]  %s901, 512, %s903, %s890, 128, 128, 8
        $region96: #{spatial_transformer_forward.3} parent=87 // pred_fallthru
          _
        // Predicated region
        $region97: #{spatial_transformer_forward.3} parent=87 // pred_check
          %p909 = pneg %p142
        $region98: #{spatial_transformer_forward.3} parent=87 // pred_check_branch
          %911 = sbr.rel (%p909) target = $region100
        $region99: #{spatial_transformer_forward.3} parent=87 // pred_region
          %s912 = sand.u32 %s54, 1
          %s913 = scalar_lea.sflag [#allocation7], %s912
          %s914 = sand.u32 %s132, 1
          %s915 = smul.addr %s914, 32
          %s916 = scalar_lea.vmem [#allocation8], %s915
          %s918 = ssub.s32 512, 512
          %919 = vsyncadd %s913, %s918
          %s920 = smul.addr %s61, 8
          %s921 = smul.addr %s920, 64
          %s922 = scalar_lea.hbm %s2, %s921
          %s923 = sshll.u32 %s916, 4
          %s924 = int_to_ptr.vmem [resolvable:$true] %s923
          %929 = dma.hbm_to_vmem [thread:$0]  %s922, 512, %s924, %s913, 64, 64, 4
        $region100: #{spatial_transformer_forward.3} parent=87 // pred_fallthru
          _
        // Predicated region
        $region101: #{spatial_transformer_forward.3} parent=87 // pred_check
          %p930 = pneg %p168
        $region102: #{spatial_transformer_forward.3} parent=87 // pred_check_branch
          %932 = sbr.rel (%p930) target = $region104
        $region103: #{spatial_transformer_forward.3} parent=87 // pred_region
          %s933 = sand.u32 %s54, 1
          %s934 = scalar_lea.sflag [#allocation10], %s933
          %s935 = sand.u32 %s158, 1
          %s936 = smul.addr %s935, 32
          %s937 = scalar_lea.vmem [#allocation9], %s936
          %s939 = ssub.s32 512, 512
          %940 = vsyncadd %s934, %s939
          %s941 = smul.addr %s61, 8
          %s942 = smul.addr %s941, 64
          %s943 = scalar_lea.hbm %s3, %s942
          %s944 = sshll.u32 %s937, 4
          %s945 = int_to_ptr.vmem [resolvable:$true] %s944
          %950 = dma.hbm_to_vmem [thread:$0]  %s943, 512, %s945, %s934, 64, 64, 4
        $region104: #{spatial_transformer_forward.3} parent=87 // pred_fallthru
          _
        // Predicated region
        $region105: #{spatial_transformer_forward.3} parent=87 // pred_check
          %p951 = pneg %p194
        $region106: #{spatial_transformer_forward.3} parent=87 // pred_check_branch
          %953 = sbr.rel (%p951) target = $region108
        $region107: #{spatial_transformer_forward.3} parent=87 // pred_region
          %s954 = sand.u32 %s54, 1
          %s955 = scalar_lea.sflag [#allocation10], %s954
          %s956 = sand.u32 %s184, 1
          %s957 = smul.addr %s956, 64
          %s958 = scalar_lea.vmem [#allocation11], %s957
          %s960 = ssub.s32 1024, 1024
          %961 = vsyncadd %s955, %s960
          %s962 = smul.addr %s61, 16
          %s963 = smul.addr %s962, 64
          %s964 = scalar_lea.hbm %s4, %s963
          %s965 = sshll.u32 %s958, 4
          %s966 = int_to_ptr.vmem [resolvable:$true] %s965
          %971 = dma.hbm_to_vmem [thread:$0]  %s964, 1024, %s966, %s955, 64, 64, 4
        $region108: #{spatial_transformer_forward.3} parent=87 // pred_fallthru
          _
        // Predicated region
        $region109: #{spatial_transformer_forward.3} parent=87 // pred_check
          %p972 = pneg %p220
        $region110: #{spatial_transformer_forward.3} parent=87 // pred_check_branch
          %974 = sbr.rel (%p972) target = $region112
        $region111: #{spatial_transformer_forward.3} parent=87 // pred_region
          %s975 = sand.u32 %s54, 1
          %s976 = scalar_lea.sflag [#allocation13], %s975
          %s977 = sand.u32 %s210, 1
          %s978 = smul.addr %s977, 64
          %s979 = scalar_lea.vmem [#allocation12], %s978
          %s981 = ssub.s32 1024, 1024
          %982 = vsyncadd %s976, %s981
          %s983 = smul.addr %s61, 16
          %s984 = smul.addr %s983, 64
          %s985 = scalar_lea.hbm %s5, %s984
          %s986 = sshll.u32 %s979, 4
          %s987 = int_to_ptr.vmem [resolvable:$true] %s986
          %992 = dma.hbm_to_vmem [thread:$0]  %s985, 1024, %s987, %s976, 64, 64, 4
        $region112: #{spatial_transformer_forward.3} parent=87 // pred_fallthru
          _
      $region88: #{spatial_transformer_forward.3} parent=5 // pred_fallthru
        _
      %p993 = scmp.le.s32.totalorder 1, %s54
      %p994 = scmp.lt.s32.totalorder %s54, 5
      %p995 = pnand %p993, %p994
      %p996 = pneg %p995
      // Predicated region
      $region113: #{spatial_transformer_forward.3} parent=5 // pred_check
        _
      $region114: #{spatial_transformer_forward.3} parent=5 // pred_check_branch
        %998 = sbr.rel (%p995) target = $region116
      $region115: #{spatial_transformer_forward.3} parent=5 // pred_region
        %s999 = ssub.s32 %s54, 1
        %s1000 = sand.u32 %s81, 1
        %s1001 = scalar_lea.sflag [#allocation4], %s1000
        %s1002 = sand.u32 %s81, 1
        %s1003 = smul.addr %s1002, 32
        %s1004 = scalar_lea.vmem [#allocation3], %s1003
        // Predicated region
        $region117: #{spatial_transformer_forward.3} parent=115 // pred_check
          %p1005 = pneg %p94
        $region118: #{spatial_transformer_forward.3} parent=115 // pred_check_branch
          %1007 = sbr.rel (%p1005) target = $region120
        $region119: #{spatial_transformer_forward.3} parent=115 // pred_region
          %1008 = dma.done %s1001, 512
        $region120: #{spatial_transformer_forward.3} parent=115 // pred_fallthru
          _
        %s1009 = sand.u32 %s59, 1
        %s1010 = scalar_lea.sflag [#allocation7], %s1009
        %s1011 = sand.u32 %s109, 1
        %s1012 = smul.addr %s1011, 32
        %s1013 = scalar_lea.vmem [#allocation6], %s1012
        // Predicated region
        $region121: #{spatial_transformer_forward.3} parent=115 // pred_check
          %p1014 = pneg %p122
        $region122: #{spatial_transformer_forward.3} parent=115 // pred_check_branch
          %1016 = sbr.rel (%p1014) target = $region124
        $region123: #{spatial_transformer_forward.3} parent=115 // pred_region
          %1017 = dma.done %s1010, 512
        $region124: #{spatial_transformer_forward.3} parent=115 // pred_fallthru
          _
        %s1018 = sand.u32 %s59, 1
        %s1019 = scalar_lea.sflag [#allocation7], %s1018
        %s1020 = sand.u32 %s135, 1
        %s1021 = smul.addr %s1020, 32
        %s1022 = scalar_lea.vmem [#allocation8], %s1021
        // Predicated region
        $region125: #{spatial_transformer_forward.3} parent=115 // pred_check
          %p1023 = pneg %p148
        $region126: #{spatial_transformer_forward.3} parent=115 // pred_check_branch
          %1025 = sbr.rel (%p1023) target = $region128
        $region127: #{spatial_transformer_forward.3} parent=115 // pred_region
          %1026 = dma.done %s1019, 512
        $region128: #{spatial_transformer_forward.3} parent=115 // pred_fallthru
          _
        %s1027 = sand.u32 %s59, 1
        %s1028 = scalar_lea.sflag [#allocation10], %s1027
        %s1029 = sand.u32 %s161, 1
        %s1030 = smul.addr %s1029, 32
        %s1031 = scalar_lea.vmem [#allocation9], %s1030
        // Predicated region
        $region129: #{spatial_transformer_forward.3} parent=115 // pred_check
          %p1032 = pneg %p174
        $region130: #{spatial_transformer_forward.3} parent=115 // pred_check_branch
          %1034 = sbr.rel (%p1032) target = $region132
        $region131: #{spatial_transformer_forward.3} parent=115 // pred_region
          %1035 = dma.done %s1028, 512
        $region132: #{spatial_transformer_forward.3} parent=115 // pred_fallthru
          _
        %s1036 = sand.u32 %s59, 1
        %s1037 = scalar_lea.sflag [#allocation10], %s1036
        %s1038 = sand.u32 %s187, 1
        %s1039 = smul.addr %s1038, 64
        %s1040 = scalar_lea.vmem [#allocation11], %s1039
        // Predicated region
        $region133: #{spatial_transformer_forward.3} parent=115 // pred_check
          %p1041 = pneg %p200
        $region134: #{spatial_transformer_forward.3} parent=115 // pred_check_branch
          %1043 = sbr.rel (%p1041) target = $region136
        $region135: #{spatial_transformer_forward.3} parent=115 // pred_region
          %1044 = dma.done %s1037, 1024
        $region136: #{spatial_transformer_forward.3} parent=115 // pred_fallthru
          _
        %s1045 = sand.u32 %s59, 1
        %s1046 = scalar_lea.sflag [#allocation13], %s1045
        %s1047 = sand.u32 %s213, 1
        %s1048 = smul.addr %s1047, 64
        %s1049 = scalar_lea.vmem [#allocation12], %s1048
        // Predicated region
        $region137: #{spatial_transformer_forward.3} parent=115 // pred_check
          %p1050 = pneg %p226
        $region138: #{spatial_transformer_forward.3} parent=115 // pred_check_branch
          %1052 = sbr.rel (%p1050) target = $region140
        $region139: #{spatial_transformer_forward.3} parent=115 // pred_region
          %1053 = dma.done %s1046, 1024
        $region140: #{spatial_transformer_forward.3} parent=115 // pred_fallthru
          _
        // Predicated region
        $region141: #{spatial_transformer_forward.3} parent=115 // pred_check
          %p1054 = pneg %p247
        $region142: #{spatial_transformer_forward.3} parent=115 // pred_check_branch
          %1056 = sbr.rel (%p1054) target = $region144
        $region143: #{spatial_transformer_forward.3} parent=115 // pred_region
          %1057 = dma.done [#allocation13], 16
        $region144: #{spatial_transformer_forward.3} parent=115 // pred_fallthru
          _
        // Predicated region
        $region145: #{spatial_transformer_forward.3} parent=115 // pred_check
          %p1058 = pneg %p268
        $region146: #{spatial_transformer_forward.3} parent=115 // pred_check_branch
          %1060 = sbr.rel (%p1058) target = $region148
        $region147: #{spatial_transformer_forward.3} parent=115 // pred_region
          %1061 = dma.done [#allocation16], 16
        $region148: #{spatial_transformer_forward.3} parent=115 // pred_fallthru
          _
        // Predicated region
        $region149: #{spatial_transformer_forward.3} parent=115 // pred_check
          %p1062 = pneg %p289
        $region150: #{spatial_transformer_forward.3} parent=115 // pred_check_branch
          %1064 = sbr.rel (%p1062) target = $region152
        $region151: #{spatial_transformer_forward.3} parent=115 // pred_region
          %1065 = dma.done [#allocation16], 256
        $region152: #{spatial_transformer_forward.3} parent=115 // pred_fallthru
          _
        // Predicated region
        $region153: #{spatial_transformer_forward.3} parent=115 // pred_check
          %p1066 = pneg %p310
        $region154: #{spatial_transformer_forward.3} parent=115 // pred_check_branch
          %1068 = sbr.rel (%p1066) target = $region156
        $region155: #{spatial_transformer_forward.3} parent=115 // pred_region
          %1069 = dma.done [#allocation19], 256
        $region156: #{spatial_transformer_forward.3} parent=115 // pred_fallthru
          _
        // Predicated region
        $region157: #{spatial_transformer_forward.3} parent=115 // pred_check
          %p1070 = pneg %p331
        $region158: #{spatial_transformer_forward.3} parent=115 // pred_check_branch
          %1072 = sbr.rel (%p1070) target = $region160
        $region159: #{spatial_transformer_forward.3} parent=115 // pred_region
          %1073 = dma.done [#allocation19], 16
        $region160: #{spatial_transformer_forward.3} parent=115 // pred_fallthru
          _
        // Predicated region
        $region161: #{spatial_transformer_forward.3} parent=115 // pred_check
          %p1074 = pneg %p352
        $region162: #{spatial_transformer_forward.3} parent=115 // pred_check_branch
          %1076 = sbr.rel (%p1074) target = $region164
        $region163: #{spatial_transformer_forward.3} parent=115 // pred_region
          %1077 = dma.done [#allocation22], 16
        $region164: #{spatial_transformer_forward.3} parent=115 // pred_fallthru
          _
        // Predicated region
        $region165: #{spatial_transformer_forward.3} parent=115 // pred_check
          %p1078 = pneg %p373
        $region166: #{spatial_transformer_forward.3} parent=115 // pred_check_branch
          %1080 = sbr.rel (%p1078) target = $region168
        $region167: #{spatial_transformer_forward.3} parent=115 // pred_region
          %1081 = dma.done [#allocation22], 16
        $region168: #{spatial_transformer_forward.3} parent=115 // pred_fallthru
          _
        // Predicated region
        $region169: #{spatial_transformer_forward.3} parent=115 // pred_check
          %p1082 = pneg %p394
        $region170: #{spatial_transformer_forward.3} parent=115 // pred_check_branch
          %1084 = sbr.rel (%p1082) target = $region172
        $region171: #{spatial_transformer_forward.3} parent=115 // pred_region
          %1085 = dma.done [#allocation25], 256
        $region172: #{spatial_transformer_forward.3} parent=115 // pred_fallthru
          _
        // Predicated region
        $region173: #{spatial_transformer_forward.3} parent=115 // pred_check
          %p1086 = pneg %p415
        $region174: #{spatial_transformer_forward.3} parent=115 // pred_check_branch
          %1088 = sbr.rel (%p1086) target = $region176
        $region175: #{spatial_transformer_forward.3} parent=115 // pred_region
          %1089 = dma.done [#allocation25], 256
        $region176: #{spatial_transformer_forward.3} parent=115 // pred_fallthru
          _
        // Predicated region
        $region177: #{spatial_transformer_forward.3} parent=115 // pred_check
          %p1090 = pneg %p436
        $region178: #{spatial_transformer_forward.3} parent=115 // pred_check_branch
          %1092 = sbr.rel (%p1090) target = $region180
        $region179: #{spatial_transformer_forward.3} parent=115 // pred_region
          %1093 = dma.done [#allocation28], 16
        $region180: #{spatial_transformer_forward.3} parent=115 // pred_fallthru
          _
        // Predicated region
        $region181: #{spatial_transformer_forward.3} parent=115 // pred_check
          %p1094 = pneg %p457
        $region182: #{spatial_transformer_forward.3} parent=115 // pred_check_branch
          %1096 = sbr.rel (%p1094) target = $region184
        $region183: #{spatial_transformer_forward.3} parent=115 // pred_region
          %1097 = dma.done [#allocation28], 16
        $region184: #{spatial_transformer_forward.3} parent=115 // pred_fallthru
          _
        // Predicated region
        $region185: #{spatial_transformer_forward.3} parent=115 // pred_check
          %p1098 = pneg %p478
        $region186: #{spatial_transformer_forward.3} parent=115 // pred_check_branch
          %1100 = sbr.rel (%p1098) target = $region188
        $region187: #{spatial_transformer_forward.3} parent=115 // pred_region
          %1101 = dma.done [#allocation31], 16
        $region188: #{spatial_transformer_forward.3} parent=115 // pred_fallthru
          _
        // Predicated region
        $region189: #{spatial_transformer_forward.3} parent=115 // pred_check
          %p1102 = pneg %p499
        $region190: #{spatial_transformer_forward.3} parent=115 // pred_check_branch
          %1104 = sbr.rel (%p1102) target = $region192
        $region191: #{spatial_transformer_forward.3} parent=115 // pred_region
          %1105 = dma.done [#allocation31], 512
        $region192: #{spatial_transformer_forward.3} parent=115 // pred_fallthru
          _
        // Predicated region
        $region193: #{spatial_transformer_forward.3} parent=115 // pred_check
          %p1106 = pneg %p520
        $region194: #{spatial_transformer_forward.3} parent=115 // pred_check_branch
          %1108 = sbr.rel (%p1106) target = $region196
        $region195: #{spatial_transformer_forward.3} parent=115 // pred_region
          %1109 = dma.done [#allocation34], 32
        $region196: #{spatial_transformer_forward.3} parent=115 // pred_fallthru
          _
        // Predicated region
        $region197: #{spatial_transformer_forward.3} parent=115 // pred_check
          %p1110 = pneg %p541
        $region198: #{spatial_transformer_forward.3} parent=115 // pred_check_branch
          %1112 = sbr.rel (%p1110) target = $region200
        $region199: #{spatial_transformer_forward.3} parent=115 // pred_region
          %1113 = dma.done [#allocation34], 1024
        $region200: #{spatial_transformer_forward.3} parent=115 // pred_fallthru
          _
        // Predicated region
        $region201: #{spatial_transformer_forward.3} parent=115 // pred_check
          %p1114 = pneg %p562
        $region202: #{spatial_transformer_forward.3} parent=115 // pred_check_branch
          %1116 = sbr.rel (%p1114) target = $region204
        $region203: #{spatial_transformer_forward.3} parent=115 // pred_region
          %1117 = dma.done [#allocation37], 16
        $region204: #{spatial_transformer_forward.3} parent=115 // pred_fallthru
          _
        // Predicated region
        $region205: #{spatial_transformer_forward.3} parent=115 // pred_check
          %p1118 = pneg %p583
        $region206: #{spatial_transformer_forward.3} parent=115 // pred_check_branch
          %1120 = sbr.rel (%p1118) target = $region208
        $region207: #{spatial_transformer_forward.3} parent=115 // pred_region
          %1121 = dma.done [#allocation37], 256
        $region208: #{spatial_transformer_forward.3} parent=115 // pred_fallthru
          _
        // Predicated region
        $region209: #{spatial_transformer_forward.3} parent=115 // pred_check
          %p1122 = pneg %p604
        $region210: #{spatial_transformer_forward.3} parent=115 // pred_check_branch
          %1124 = sbr.rel (%p1122) target = $region212
        $region211: #{spatial_transformer_forward.3} parent=115 // pred_region
          %1125 = dma.done [#allocation40], 16
        $region212: #{spatial_transformer_forward.3} parent=115 // pred_fallthru
          _
        %s1126 = sand.u32 %s81, 1
        %s1127 = scalar_lea.sflag [#allocation4], %s1126
        %s1128 = sand.u32 %s81, 1
        %s1129 = smul.addr %s1128, 32
        %s1130 = scalar_lea.vmem [#allocation3], %s1129
        %p1131 = pneg %p94
        %p1132 = pneg %p91
        %s1133 = sand.u32 %s59, 1
        %s1134 = scalar_lea.sflag [#allocation7], %s1133
        %s1135 = sand.u32 %s109, 1
        %s1136 = smul.addr %s1135, 32
        %s1137 = scalar_lea.vmem [#allocation6], %s1136
        %p1138 = pneg %p122
        %p1139 = pneg %p119
        %s1140 = sand.u32 %s59, 1
        %s1141 = scalar_lea.sflag [#allocation7], %s1140
        %s1142 = sand.u32 %s135, 1
        %s1143 = smul.addr %s1142, 32
        %s1144 = scalar_lea.vmem [#allocation8], %s1143
        %p1145 = pneg %p148
        %p1146 = pneg %p145
        %s1147 = sand.u32 %s59, 1
        %s1148 = scalar_lea.sflag [#allocation10], %s1147
        %s1149 = sand.u32 %s161, 1
        %s1150 = smul.addr %s1149, 32
        %s1151 = scalar_lea.vmem [#allocation9], %s1150
        %p1152 = pneg %p174
        %p1153 = pneg %p171
        %s1154 = sand.u32 %s59, 1
        %s1155 = scalar_lea.sflag [#allocation10], %s1154
        %s1156 = sand.u32 %s187, 1
        %s1157 = smul.addr %s1156, 64
        %s1158 = scalar_lea.vmem [#allocation11], %s1157
        %p1159 = pneg %p200
        %p1160 = pneg %p197
        %s1161 = sand.u32 %s59, 1
        %s1162 = scalar_lea.sflag [#allocation13], %s1161
        %s1163 = sand.u32 %s213, 1
        %s1164 = smul.addr %s1163, 64
        %s1165 = scalar_lea.vmem [#allocation12], %s1164
        %p1166 = pneg %p226
        %p1167 = pneg %p223
        %p1168 = pneg %p247
        %p1169 = pneg %p244
        %p1170 = pneg %p268
        %p1171 = pneg %p265
        %p1172 = pneg %p289
        %p1173 = pneg %p286
        %p1174 = pneg %p310
        %p1175 = pneg %p307
        %p1176 = pneg %p331
        %p1177 = pneg %p328
        %p1178 = pneg %p352
        %p1179 = pneg %p349
        %p1180 = pneg %p373
        %p1181 = pneg %p370
        %p1182 = pneg %p394
        %p1183 = pneg %p391
        %p1184 = pneg %p415
        %p1185 = pneg %p412
        %p1186 = pneg %p436
        %p1187 = pneg %p433
        %p1188 = pneg %p457
        %p1189 = pneg %p454
        %p1190 = pneg %p478
        %p1191 = pneg %p475
        %p1192 = pneg %p499
        %p1193 = pneg %p496
        %p1194 = pneg %p520
        %p1195 = pneg %p517
        %p1196 = pneg %p541
        %p1197 = pneg %p538
        %p1198 = pneg %p562
        %p1199 = pneg %p559
        %p1200 = pneg %p583
        %p1201 = pneg %p580
        %p1202 = pneg %p604
        %p1203 = pneg %p601
        %p1204 = pneg %p632
        %p1205 = pneg %p629
        %s1206 = sand.u32 %s619, 1
        %s1207 = scalar_lea.sflag [#allocation5], %s1206
        %s1208 = sand.u32 %s619, 1
        %s1209 = smul.addr %s1208, 32
        %s1210 = scalar_lea.vmem [#allocation41], %s1209
        %s1211 = smul.u32 4, %s64
        %s1212 = smul.u32 4, %s64
        %s1213 = smul.u32 4, %s64
        %v1215 = vld [vmem:[%s1013] sm:$0xff]
        %v1216 = vld [vmem:[%s1013 + $0x8] sm:$0xff]
        %v1217 = vld [vmem:[%s1013 + $0x10] sm:$0xff]
        %v1218 = vld [vmem:[%s1013 + $0x18] sm:$0xff]
        %vm1219 = vcmask 261120
        %v1220 = vsel %vm1219, %v1215, 0.0
        %1221 = vadd.xlane.f32.xlu0 %v1220
        %v1222 = vpop.xlane.xlu0 %1221
        %v1223 = vsel %vm1219, %v1216, 0.0
        %1224 = vadd.xlane.f32.xlu0 %v1223
        %v1225 = vpop.xlane.xlu0 %1224
        %v1226 = vsel %vm1219, %v1217, 0.0
        %1227 = vadd.xlane.f32.xlu0 %v1226
        %v1228 = vpop.xlane.xlu0 %1227
        %v1229 = vsel %vm1219, %v1218, 0.0
        %1230 = vadd.xlane.f32.xlu0 %v1229
        %v1231 = vpop.xlane.xlu0 %1230
        %v1232 = vrcp.pop 32.0
        %v1233 = vmul.f32 %v1222, %v1232
        %v1234 = vmul.f32 %v1225, %v1232
        %v1235 = vmul.f32 %v1228, %v1232
        %v1236 = vmul.f32 %v1231, %v1232
        %v1237 = vsub.f32 %v1215, %v1233
        %v1238 = vsub.f32 %v1216, %v1234
        %v1239 = vsub.f32 %v1217, %v1235
        %v1240 = vsub.f32 %v1218, %v1236
        %v1241 = vmul.f32 %v1237, %v1237
        %v1242 = vmul.f32 %v1238, %v1238
        %v1243 = vmul.f32 %v1239, %v1239
        %v1244 = vmul.f32 %v1240, %v1240
        %v1245 = vsel %vm1219, %v1241, 0.0
        %1246 = vadd.xlane.f32.xlu0 %v1245
        %v1247 = vpop.xlane.xlu0 %1246
        %v1248 = vsel %vm1219, %v1242, 0.0
        %1249 = vadd.xlane.f32.xlu0 %v1248
        %v1250 = vpop.xlane.xlu0 %1249
        %v1251 = vsel %vm1219, %v1243, 0.0
        %1252 = vadd.xlane.f32.xlu0 %v1251
        %v1253 = vpop.xlane.xlu0 %1252
        %v1254 = vsel %vm1219, %v1244, 0.0
        %1255 = vadd.xlane.f32.xlu0 %v1254
        %v1256 = vpop.xlane.xlu0 %1255
        %v1257 = vmul.f32 %v1247, %v1232
        %v1258 = vmul.f32 %v1250, %v1232
        %v1259 = vmul.f32 %v1253, %v1232
        %v1260 = vmul.f32 %v1256, %v1232
        %v1261 = vadd.f32 %v1257, 1e-05
        %v1262 = vadd.f32 %v1258, 1e-05
        %v1263 = vadd.f32 %v1259, 1e-05
        %v1264 = vadd.f32 %v1260, 1e-05
        %v1265 = vrsqrt.pop %v1261
        %v1266 = vrsqrt.pop %v1262
        %v1267 = vrsqrt.pop %v1263
        %v1268 = vrsqrt.pop %v1264
        %v1269 = vmul.f32 %v1237, %v1265
        %v1270 = vmul.f32 %v1238, %v1266
        %v1271 = vmul.f32 %v1239, %v1267
        %v1272 = vmul.f32 %v1240, %v1268
        %v1273 = vld [vmem:[#allocation14] sm:$0x1]
        %v1275 = vlaneseq
        %v1276 = vshrl.u32 %v1275, 7
        %v1277 = vsub.s32 0, %v1276
        %v1278 = vrot.slane %v1273, %v1277
        %v1280 = vmul.f32 %v1269, %v1278
        %v1281 = vmul.f32 %v1270, %v1278
        %v1282 = vmul.f32 %v1271, %v1278
        %v1283 = vmul.f32 %v1272, %v1278
        %v1284 = vld [vmem:[#allocation15] sm:$0x1]
        %v1286 = vlaneseq
        %v1287 = vshrl.u32 %v1286, 7
        %v1288 = vsub.s32 0, %v1287
        %v1289 = vrot.slane %v1284, %v1288
        %v1291 = vadd.f32 %v1280, %v1289
        %v1292 = vadd.f32 %v1281, %v1289
        %v1293 = vadd.f32 %v1282, %v1289
        %v1294 = vadd.f32 %v1283, %v1289
        %v1295 = vpack.c.bf16 %v1292, %v1291
        %v1296 = vpack.c.bf16 %v1294, %v1293
        %v1297 = vld [vmem:[#allocation17] sm:$0xf]
        %v1298 = vld [vmem:[#allocation17 + $0x4] sm:$0xf]
        %v1299 = vld [vmem:[#allocation17 + $0x8] sm:$0xf]
        %v1300 = vld [vmem:[#allocation17 + $0xc] sm:$0xf]
        %v1305 = vunpack.c.l.b16 %v1297
        %v1306 = vunpack.c.l.b16 %v1298
        %v1307 = vunpack.c.l.b16 %v1299
        %v1308 = vunpack.c.l.b16 %v1300
        %v1309 = vpack.c.b16 %v1306, %v1305
        %v1310 = vpack.c.b16 %v1308, %v1307
        %v1314 = vsel %vm1219, %v1295, 0
        %v1317 = vsel %vm1219, %v1296, 0
        %1319 = vmatprep.subr.bf16.mxu0 0
        %1320 = vmatpush1.bf16.msra.mxu0 %v1309
        %1321 = vmatprep.subr.bf16.mxu0 0
        %1322 = vmatpush1.bf16.msra.mxu0 %v1310
        %1323 = vmatprep.subr.bf16.mxu0 0
        %1324 = vmatpush1.bf16.msra.mxu0 0
        %1325 = vmatprep.subr.bf16.mxu0 0
        %1326 = vmatpush1.bf16.msra.mxu0 0
        %1327 = vmatprep.subr.bf16.mxu0 0
        %1328 = vmatpush1.bf16.msra.mxu0 0
        %1329 = vmatprep.subr.bf16.mxu0 0
        %1330 = vmatpush1.bf16.msra.mxu0 0
        %1331 = vmatprep.subr.bf16.mxu0 0
        %1332 = vmatpush1.bf16.msra.mxu0 0
        %1333 = vmatprep.subr.bf16.mxu0 0
        %1334 = vmatpush1.bf16.msra.mxu0 0
        %1335 = vmatprep.subr.bf16.mxu0 0
        %1336 = vmatpush1.bf16.msra.mxu0 0
        %1337 = vmatprep.subr.bf16.mxu0 0
        %1338 = vmatpush1.bf16.msra.mxu0 0
        %1339 = vmatprep.subr.bf16.mxu0 0
        %1340 = vmatpush1.bf16.msra.mxu0 0
        %1341 = vmatprep.subr.bf16.mxu0 0
        %1342 = vmatpush1.bf16.msra.mxu0 0
        %1343 = vmatprep.subr.bf16.mxu0 0
        %1344 = vmatpush1.bf16.msra.mxu0 0
        %1345 = vmatprep.subr.bf16.mxu0 0
        %1346 = vmatpush1.bf16.msra.mxu0 0
        %1347 = vmatprep.subr.bf16.mxu0 0
        %1348 = vmatpush1.bf16.msra.mxu0 0
        %1349 = vmatprep.subr.bf16.mxu0 0
        %1350 = vmatpush1.bf16.msra.mxu0 0
        %1351 = vmatprep.mubr.bf16.mxu0 0
        %1352 = vmatmul.mubr.bf16.gmra.mrb[0].mxu0 %v1314
        %v1353 = vpop.f32.mrb[0].mxu0
        %v1354 = vadd.f32 0.0, %v1353
        %v1355 = vpop.f32.mrb[0].mxu0
        %v1356 = vpop.f32.mrb[0].mxu0
        %v1357 = vadd.f32 0.0, %v1356
        %v1358 = vpop.f32.mrb[0].mxu0
        %1359 = vmatprep.mubr.bf16.mxu0 0
        %1360 = vmatmul.mubr.bf16.gmra.mrb[0].mxu0 %v1317
        %v1361 = vpop.f32.mrb[0].mxu0
        %v1362 = vadd.f32 0.0, %v1361
        %v1363 = vpop.f32.mrb[0].mxu0
        %v1364 = vpop.f32.mrb[0].mxu0
        %v1365 = vadd.f32 0.0, %v1364
        %v1366 = vpop.f32.mrb[0].mxu0
        %1367 = vdwg.mxu0
        %v1368 = vpack.c.bf16 %v1357, %v1354
        %v1369 = vpack.c.bf16 %v1365, %v1362
        loop: start=0, step=1, limit=2
        $region213: #{spatial_transformer_forward.3} parent=115 // loop_pre_header
          _
        $region214: #{spatial_transformer_forward.3} parent=115 // loop_header
          %s1371 = sphi 0, %s1375
          %p1372 = scmp.ge.s32.totalorder %s1371, 2
          %v1376 = vphi -inf, %v1493
          %v1377 = vphi -inf, %v1494
          %v1378 = vphi -inf, %v1495
          %v1379 = vphi -inf, %v1496
          %v1380 = vphi 0.0, %v1537
          %v1381 = vphi 0.0, %v1538
          %v1382 = vphi 0.0, %v1539
          %v1383 = vphi 0.0, %v1540
          %v1384 = vphi 0.0, %v1614
          %v1385 = vphi 0.0, %v1615
          %v1386 = vphi 0.0, %v1616
          %v1387 = vphi 0.0, %v1617
        $region215: #{spatial_transformer_forward.3} parent=115 // loop_header_branch
          %1374 = sbr.rel (%p1372) target = $region219
        $region216: #{spatial_transformer_forward.3} parent=115 // loop_body
          %s1388 = smul.u32 %s1371, 32
          %s1389 = sshra.s32 %s1388, 3
          %s1390 = sand.u32 %s1388, 7
          %s1391 = smul.addr %s1389, 4
          %s1392 = scalar_lea.vmem %s1022, %s1391 [#allocation8]
          %v1393 = vld [vmem:[%s1392] sm:$0xf]
          %v1394 = vld [vmem:[%s1392 + $0x4] sm:$0xf]
          %v1395 = vld [vmem:[%s1392 + $0x8] sm:$0xf]
          %v1396 = vld [vmem:[%s1392 + $0xc] sm:$0xf]
          %s1397 = smul.addr %s1389, 4
          %s1398 = scalar_lea.vmem %s1031, %s1397 [#allocation9]
          %v1399 = vld [vmem:[%s1398] sm:$0xf]
          %v1400 = vld [vmem:[%s1398 + $0x4] sm:$0xf]
          %v1401 = vld [vmem:[%s1398 + $0x8] sm:$0xf]
          %v1402 = vld [vmem:[%s1398 + $0xc] sm:$0xf]
          %v1403 = vlaneseq
          %v1404 = vand.u32 %v1403, 127
          %v1405 = vstv %s1388
          %v1406 = vadd.s32 %v1404, %v1405
          %vm1407 = vcmp.lt.s32.totalorder %v1406, 36
          %v1408 = vsel %vm1407, 0.0, -1e+30
          %v1413 = vunpack.c.l.b16 %v1393
          %v1414 = vunpack.c.l.b16 %v1394
          %v1415 = vunpack.c.l.b16 %v1395
          %v1416 = vunpack.c.l.b16 %v1396
          %v1417 = vpack.c.b16 %v1414, %v1413
          %v1418 = vpack.c.b16 %v1416, %v1415
          %vm1419 = vcmask 130048
          %v1421 = vsel %vm1419, %v1368, 0
          %v1424 = vsel %vm1419, %v1369, 0
          %v1427 = vsel %vm1419, %v1417, 0
          %v1430 = vsel %vm1419, %v1418, 0
          %1432 = vmatprep.subr.bf16.mxu0 0
          %1433 = vmatpush1.bf16.xpose.msra.mxu0 %v1427
          %1434 = vmatprep.subr.bf16.mxu0 0
          %1435 = vmatpush1.bf16.xpose.msra.mxu0 %v1430
          %1436 = vmatprep.subr.bf16.mxu0 0
          %1437 = vmatpush1.bf16.xpose.msra.mxu0 0
          %1438 = vmatprep.subr.bf16.mxu0 0
          %1439 = vmatpush1.bf16.xpose.msra.mxu0 0
          %1440 = vmatprep.subr.bf16.mxu0 0
          %1441 = vmatpush1.bf16.xpose.msra.mxu0 0
          %1442 = vmatprep.subr.bf16.mxu0 0
          %1443 = vmatpush1.bf16.xpose.msra.mxu0 0
          %1444 = vmatprep.subr.bf16.mxu0 0
          %1445 = vmatpush1.bf16.xpose.msra.mxu0 0
          %1446 = vmatprep.subr.bf16.mxu0 0
          %1447 = vmatpush1.bf16.xpose.msra.mxu0 0
          %1448 = vmatprep.subr.bf16.mxu0 0
          %1449 = vmatpush1.bf16.xpose.msra.mxu0 0
          %1450 = vmatprep.subr.bf16.mxu0 0
          %1451 = vmatpush1.bf16.xpose.msra.mxu0 0
          %1452 = vmatprep.subr.bf16.mxu0 0
          %1453 = vmatpush1.bf16.xpose.msra.mxu0 0
          %1454 = vmatprep.subr.bf16.mxu0 0
          %1455 = vmatpush1.bf16.xpose.msra.mxu0 0
          %1456 = vmatprep.subr.bf16.mxu0 0
          %1457 = vmatpush1.bf16.xpose.msra.mxu0 0
          %1458 = vmatprep.subr.bf16.mxu0 0
          %1459 = vmatpush1.bf16.xpose.msra.mxu0 0
          %1460 = vmatprep.subr.bf16.mxu0 0
          %1461 = vmatpush1.bf16.xpose.msra.mxu0 0
          %1462 = vmatprep.subr.bf16.mxu0 0
          %1463 = vmatpush1.bf16.xpose.msra.mxu0 0
          %1464 = vmatprep.mubr.bf16.mxu0 0
          %1465 = vmatmul.mubr.bf16.gmra.mrb[0].mxu0 %v1421
          %v1466 = vpop.f32.mrb[0].mxu0
          %v1467 = vadd.f32 %v1408, %v1466
          %v1468 = vpop.f32.mrb[0].mxu0
          %v1469 = vpop.f32.mrb[0].mxu0
          %v1470 = vadd.f32 %v1408, %v1469
          %v1471 = vpop.f32.mrb[0].mxu0
          %1472 = vmatprep.mubr.bf16.mxu0 0
          %1473 = vmatmul.mubr.bf16.gmra.mrb[0].mxu0 %v1424
          %v1474 = vpop.f32.mrb[0].mxu0
          %v1475 = vadd.f32 %v1408, %v1474
          %v1476 = vpop.f32.mrb[0].mxu0
          %v1477 = vpop.f32.mrb[0].mxu0
          %v1478 = vadd.f32 %v1408, %v1477
          %v1479 = vpop.f32.mrb[0].mxu0
          %1480 = vdwg.mxu0
          %v1481 = vsel %vm1219, %v1467, -inf
          %1482 = vmax.xlane.f32.xlu0 %v1481
          %v1483 = vpop.xlane.xlu0 %1482
          %v1484 = vsel %vm1219, %v1470, -inf
          %1485 = vmax.xlane.f32.xlu0 %v1484
          %v1486 = vpop.xlane.xlu0 %1485
          %v1487 = vsel %vm1219, %v1475, -inf
          %1488 = vmax.xlane.f32.xlu0 %v1487
          %v1489 = vpop.xlane.xlu0 %1488
          %v1490 = vsel %vm1219, %v1478, -inf
          %1491 = vmax.xlane.f32.xlu0 %v1490
          %v1492 = vpop.xlane.xlu0 %1491
          %v1493 = vmax.f32 %v1376, %v1483
          %v1494 = vmax.f32 %v1377, %v1486
          %v1495 = vmax.f32 %v1378, %v1489
          %v1496 = vmax.f32 %v1379, %v1492
          %v1497 = vsub.f32 %v1376, %v1493
          %v1498 = vsub.f32 %v1377, %v1494
          %v1499 = vsub.f32 %v1378, %v1495
          %v1500 = vsub.f32 %v1379, %v1496
          %v1501 = vmul.f32 %v1497, 1.442695
          %v1502 = vpow.pop %v1501
          %v1503 = vmul.f32 %v1498, 1.442695
          %v1504 = vpow.pop %v1503
          %v1505 = vmul.f32 %v1499, 1.442695
          %v1506 = vpow.pop %v1505
          %v1507 = vmul.f32 %v1500, 1.442695
          %v1508 = vpow.pop %v1507
          %v1509 = vsub.f32 %v1467, %v1493
          %v1510 = vsub.f32 %v1470, %v1494
          %v1511 = vsub.f32 %v1475, %v1495
          %v1512 = vsub.f32 %v1478, %v1496
          %v1513 = vmul.f32 %v1509, 1.442695
          %v1514 = vpow.pop %v1513
          %v1515 = vmul.f32 %v1510, 1.442695
          %v1516 = vpow.pop %v1515
          %v1517 = vmul.f32 %v1511, 1.442695
          %v1518 = vpow.pop %v1517
          %v1519 = vmul.f32 %v1512, 1.442695
          %v1520 = vpow.pop %v1519
          %v1521 = vmul.f32 %v1502, %v1380
          %v1522 = vmul.f32 %v1504, %v1381
          %v1523 = vmul.f32 %v1506, %v1382
          %v1524 = vmul.f32 %v1508, %v1383
          %v1525 = vsel %vm1219, %v1514, 0.0
          %1526 = vadd.xlane.f32.xlu0 %v1525
          %v1527 = vpop.xlane.xlu0 %1526
          %v1528 = vsel %vm1219, %v1516, 0.0
          %1529 = vadd.xlane.f32.xlu0 %v1528
          %v1530 = vpop.xlane.xlu0 %1529
          %v1531 = vsel %vm1219, %v1518, 0.0
          %1532 = vadd.xlane.f32.xlu0 %v1531
          %v1533 = vpop.xlane.xlu0 %1532
          %v1534 = vsel %vm1219, %v1520, 0.0
          %1535 = vadd.xlane.f32.xlu0 %v1534
          %v1536 = vpop.xlane.xlu0 %1535
          %v1537 = vadd.f32 %v1521, %v1527
          %v1538 = vadd.f32 %v1522, %v1530
          %v1539 = vadd.f32 %v1523, %v1533
          %v1540 = vadd.f32 %v1524, %v1536
          %v1541 = vmul.f32 %v1502, %v1384
          %v1542 = vmul.f32 %v1504, %v1385
          %v1543 = vmul.f32 %v1506, %v1386
          %v1544 = vmul.f32 %v1508, %v1387
          %v1545 = vpack.c.bf16 %v1516, %v1514
          %v1546 = vpack.c.bf16 %v1520, %v1518
          %v1551 = vunpack.c.l.b16 %v1399
          %v1552 = vunpack.c.l.b16 %v1400
          %v1553 = vunpack.c.l.b16 %v1401
          %v1554 = vunpack.c.l.b16 %v1402
          %v1555 = vpack.c.b16 %v1552, %v1551
          %v1556 = vpack.c.b16 %v1554, %v1553
          %v1560 = vsel %vm1219, %v1545, 0
          %v1563 = vsel %vm1219, %v1546, 0
          %1565 = vmatprep.subr.bf16.mxu0 0
          %1566 = vmatpush1.bf16.msra.mxu0 %v1555
          %1567 = vmatprep.subr.bf16.mxu0 0
          %1568 = vmatpush1.bf16.msra.mxu0 %v1556
          %1569 = vmatprep.subr.bf16.mxu0 0
          %1570 = vmatpush1.bf16.msra.mxu0 0
          %1571 = vmatprep.subr.bf16.mxu0 0
          %1572 = vmatpush1.bf16.msra.mxu0 0
          %1573 = vmatprep.subr.bf16.mxu0 0
          %1574 = vmatpush1.bf16.msra.mxu0 0
          %1575 = vmatprep.subr.bf16.mxu0 0
          %1576 = vmatpush1.bf16.msra.mxu0 0
          %1577 = vmatprep.subr.bf16.mxu0 0
          %1578 = vmatpush1.bf16.msra.mxu0 0
          %1579 = vmatprep.subr.bf16.mxu0 0
          %1580 = vmatpush1.bf16.msra.mxu0 0
          %1581 = vmatprep.subr.bf16.mxu0 0
          %1582 = vmatpush1.bf16.msra.mxu0 0
          %1583 = vmatprep.subr.bf16.mxu0 0
          %1584 = vmatpush1.bf16.msra.mxu0 0
          %1585 = vmatprep.subr.bf16.mxu0 0
          %1586 = vmatpush1.bf16.msra.mxu0 0
          %1587 = vmatprep.subr.bf16.mxu0 0
          %1588 = vmatpush1.bf16.msra.mxu0 0
          %1589 = vmatprep.subr.bf16.mxu0 0
          %1590 = vmatpush1.bf16.msra.mxu0 0
          %1591 = vmatprep.subr.bf16.mxu0 0
          %1592 = vmatpush1.bf16.msra.mxu0 0
          %1593 = vmatprep.subr.bf16.mxu0 0
          %1594 = vmatpush1.bf16.msra.mxu0 0
          %1595 = vmatprep.subr.bf16.mxu0 0
          %1596 = vmatpush1.bf16.msra.mxu0 0
          %1597 = vmatprep.mubr.bf16.mxu0 0
          %1598 = vmatmul.mubr.bf16.gmra.mrb[0].mxu0 %v1560
          %v1599 = vpop.f32.mrb[0].mxu0
          %v1600 = vadd.f32 0.0, %v1599
          %v1601 = vpop.f32.mrb[0].mxu0
          %v1602 = vpop.f32.mrb[0].mxu0
          %v1603 = vadd.f32 0.0, %v1602
          %v1604 = vpop.f32.mrb[0].mxu0
          %1605 = vmatprep.mubr.bf16.mxu0 0
          %1606 = vmatmul.mubr.bf16.gmra.mrb[0].mxu0 %v1563
          %v1607 = vpop.f32.mrb[0].mxu0
          %v1608 = vadd.f32 0.0, %v1607
          %v1609 = vpop.f32.mrb[0].mxu0
          %v1610 = vpop.f32.mrb[0].mxu0
          %v1611 = vadd.f32 0.0, %v1610
          %v1612 = vpop.f32.mrb[0].mxu0
          %1613 = vdwg.mxu0
          %v1614 = vadd.f32 %v1541, %v1600
          %v1615 = vadd.f32 %v1542, %v1603
          %v1616 = vadd.f32 %v1543, %v1608
          %v1617 = vadd.f32 %v1544, %v1611
        $region217: #{spatial_transformer_forward.3} parent=115 // loop_footer
          %s1375 = sadd.s32 1, %s1371
        $region218: #{spatial_transformer_forward.3} parent=115 // loop_footer_branch
          %1370 = sbr.rel target = $region214
        $region219: #{spatial_transformer_forward.3} parent=115 // loop_exit
          _
        %v1618 = vrcp.pop %v1380
        %v1619 = vrcp.pop %v1381
        %v1620 = vrcp.pop %v1382
        %v1621 = vrcp.pop %v1383
        %v1622 = vmul.f32 %v1384, %v1618
        %v1623 = vmul.f32 %v1385, %v1619
        %v1624 = vmul.f32 %v1386, %v1620
        %v1625 = vmul.f32 %v1387, %v1621
        %v1626 = vpack.c.bf16 %v1623, %v1622
        %v1627 = vpack.c.bf16 %v1625, %v1624
        %vm1628 = vcmask 130048
        %1629 = vst.msk [vmem:[#allocation2] sm:$0xff] %vm1628, %v1626
        %1630 = vst.msk [vmem:[#allocation2 + $0x8] sm:$0xff] %vm1628, %v1627
        loop: start=0, step=1, limit=2
        $region220: #{spatial_transformer_forward.3} parent=115 // loop_pre_header
          _
        $region221: #{spatial_transformer_forward.3} parent=115 // loop_header
          %s1632 = sphi 0, %s1636
          %p1633 = scmp.ge.s32.totalorder %s1632, 2
          %v1637 = vphi -inf, %v1763
          %v1638 = vphi -inf, %v1764
          %v1639 = vphi -inf, %v1765
          %v1640 = vphi -inf, %v1766
          %v1641 = vphi 0.0, %v1807
          %v1642 = vphi 0.0, %v1808
          %v1643 = vphi 0.0, %v1809
          %v1644 = vphi 0.0, %v1810
          %v1645 = vphi 0.0, %v1888
          %v1646 = vphi 0.0, %v1889
          %v1647 = vphi 0.0, %v1890
          %v1648 = vphi 0.0, %v1891
        $region222: #{spatial_transformer_forward.3} parent=115 // loop_header_branch
          %1635 = sbr.rel (%p1633) target = $region226
        $region223: #{spatial_transformer_forward.3} parent=115 // loop_body
          %s1649 = smul.u32 %s1632, 32
          %s1650 = sshra.s32 %s1649, 3
          %s1651 = sand.u32 %s1649, 7
          %s1652 = smul.addr %s1650, 4
          %s1653 = scalar_lea.vmem %s1022, %s1652 [#allocation8]
          %v1654 = vld [vmem:[%s1653] sm:$0xf]
          %v1655 = vld [vmem:[%s1653 + $0x4] sm:$0xf]
          %v1656 = vld [vmem:[%s1653 + $0x8] sm:$0xf]
          %v1657 = vld [vmem:[%s1653 + $0xc] sm:$0xf]
          %s1658 = smul.addr %s1650, 4
          %s1659 = scalar_lea.vmem %s1031, %s1658 [#allocation9]
          %v1660 = vld [vmem:[%s1659] sm:$0xf]
          %v1661 = vld [vmem:[%s1659 + $0x4] sm:$0xf]
          %v1662 = vld [vmem:[%s1659 + $0x8] sm:$0xf]
          %v1663 = vld [vmem:[%s1659 + $0xc] sm:$0xf]
          %v1664 = vlaneseq
          %v1665 = vand.u32 %v1664, 127
          %v1666 = vstv %s1649
          %v1667 = vadd.s32 %v1665, %v1666
          %vm1668 = vcmp.lt.s32.totalorder %v1667, 36
          %v1669 = vsel %vm1668, 0.0, -1e+30
          %1672 = vrot.lane.b32.xlu0 %v1368, 112
          %v1673 = vpop.permute.xlu0 %1672
          %1674 = vrot.lane.b32.xlu0 %v1369, 112
          %v1675 = vpop.permute.xlu0 %1674
          %v1680 = vunpack.c.l.b16 %v1654
          %v1681 = vunpack.c.l.b16 %v1655
          %v1682 = vunpack.c.l.b16 %v1656
          %v1683 = vunpack.c.l.b16 %v1657
          %v1684 = vpack.c.b16 %v1681, %v1680
          %v1685 = vpack.c.b16 %v1683, %v1682
          %1686 = vrot.lane.b32.xlu0 %v1684, 112
          %v1687 = vpop.permute.xlu0 %1686
          %1688 = vrot.lane.b32.xlu0 %v1685, 112
          %v1689 = vpop.permute.xlu0 %1688
          %v1691 = vsel %vm1628, %v1673, 0
          %v1694 = vsel %vm1628, %v1675, 0
          %v1697 = vsel %vm1628, %v1687, 0
          %v1700 = vsel %vm1628, %v1689, 0
          %1702 = vmatprep.subr.bf16.mxu0 0
          %1703 = vmatpush1.bf16.xpose.msra.mxu0 %v1697
          %1704 = vmatprep.subr.bf16.mxu0 0
          %1705 = vmatpush1.bf16.xpose.msra.mxu0 %v1700
          %1706 = vmatprep.subr.bf16.mxu0 0
          %1707 = vmatpush1.bf16.xpose.msra.mxu0 0
          %1708 = vmatprep.subr.bf16.mxu0 0
          %1709 = vmatpush1.bf16.xpose.msra.mxu0 0
          %1710 = vmatprep.subr.bf16.mxu0 0
          %1711 = vmatpush1.bf16.xpose.msra.mxu0 0
          %1712 = vmatprep.subr.bf16.mxu0 0
          %1713 = vmatpush1.bf16.xpose.msra.mxu0 0
          %1714 = vmatprep.subr.bf16.mxu0 0
          %1715 = vmatpush1.bf16.xpose.msra.mxu0 0
          %1716 = vmatprep.subr.bf16.mxu0 0
          %1717 = vmatpush1.bf16.xpose.msra.mxu0 0
          %1718 = vmatprep.subr.bf16.mxu0 0
          %1719 = vmatpush1.bf16.xpose.msra.mxu0 0
          %1720 = vmatprep.subr.bf16.mxu0 0
          %1721 = vmatpush1.bf16.xpose.msra.mxu0 0
          %1722 = vmatprep.subr.bf16.mxu0 0
          %1723 = vmatpush1.bf16.xpose.msra.mxu0 0
          %1724 = vmatprep.subr.bf16.mxu0 0
          %1725 = vmatpush1.bf16.xpose.msra.mxu0 0
          %1726 = vmatprep.subr.bf16.mxu0 0
          %1727 = vmatpush1.bf16.xpose.msra.mxu0 0
          %1728 = vmatprep.subr.bf16.mxu0 0
          %1729 = vmatpush1.bf16.xpose.msra.mxu0 0
          %1730 = vmatprep.subr.bf16.mxu0 0
          %1731 = vmatpush1.bf16.xpose.msra.mxu0 0
          %1732 = vmatprep.subr.bf16.mxu0 0
          %1733 = vmatpush1.bf16.xpose.msra.mxu0 0
          %1734 = vmatprep.mubr.bf16.mxu0 0
          %1735 = vmatmul.mubr.bf16.gmra.mrb[0].mxu0 %v1691
          %v1736 = vpop.f32.mrb[0].mxu0
          %v1737 = vadd.f32 %v1669, %v1736
          %v1738 = vpop.f32.mrb[0].mxu0
          %v1739 = vpop.f32.mrb[0].mxu0
          %v1740 = vadd.f32 %v1669, %v1739
          %v1741 = vpop.f32.mrb[0].mxu0
          %1742 = vmatprep.mubr.bf16.mxu0 0
          %1743 = vmatmul.mubr.bf16.gmra.mrb[0].mxu0 %v1694
          %v1744 = vpop.f32.mrb[0].mxu0
          %v1745 = vadd.f32 %v1669, %v1744
          %v1746 = vpop.f32.mrb[0].mxu0
          %v1747 = vpop.f32.mrb[0].mxu0
          %v1748 = vadd.f32 %v1669, %v1747
          %v1749 = vpop.f32.mrb[0].mxu0
          %1750 = vdwg.mxu0
          %v1751 = vsel %vm1219, %v1737, -inf
          %1752 = vmax.xlane.f32.xlu0 %v1751
          %v1753 = vpop.xlane.xlu0 %1752
          %v1754 = vsel %vm1219, %v1740, -inf
          %1755 = vmax.xlane.f32.xlu0 %v1754
          %v1756 = vpop.xlane.xlu0 %1755
          %v1757 = vsel %vm1219, %v1745, -inf
          %1758 = vmax.xlane.f32.xlu0 %v1757
          %v1759 = vpop.xlane.xlu0 %1758
          %v1760 = vsel %vm1219, %v1748, -inf
          %1761 = vmax.xlane.f32.xlu0 %v1760
          %v1762 = vpop.xlane.xlu0 %1761
          %v1763 = vmax.f32 %v1637, %v1753
          %v1764 = vmax.f32 %v1638, %v1756
          %v1765 = vmax.f32 %v1639, %v1759
          %v1766 = vmax.f32 %v1640, %v1762
          %v1767 = vsub.f32 %v1637, %v1763
          %v1768 = vsub.f32 %v1638, %v1764
          %v1769 = vsub.f32 %v1639, %v1765
          %v1770 = vsub.f32 %v1640, %v1766
          %v1771 = vmul.f32 %v1767, 1.442695
          %v1772 = vpow.pop %v1771
          %v1773 = vmul.f32 %v1768, 1.442695
          %v1774 = vpow.pop %v1773
          %v1775 = vmul.f32 %v1769, 1.442695
          %v1776 = vpow.pop %v1775
          %v1777 = vmul.f32 %v1770, 1.442695
          %v1778 = vpow.pop %v1777
          %v1779 = vsub.f32 %v1737, %v1763
          %v1780 = vsub.f32 %v1740, %v1764
          %v1781 = vsub.f32 %v1745, %v1765
          %v1782 = vsub.f32 %v1748, %v1766
          %v1783 = vmul.f32 %v1779, 1.442695
          %v1784 = vpow.pop %v1783
          %v1785 = vmul.f32 %v1780, 1.442695
          %v1786 = vpow.pop %v1785
          %v1787 = vmul.f32 %v1781, 1.442695
          %v1788 = vpow.pop %v1787
          %v1789 = vmul.f32 %v1782, 1.442695
          %v1790 = vpow.pop %v1789
          %v1791 = vmul.f32 %v1772, %v1641
          %v1792 = vmul.f32 %v1774, %v1642
          %v1793 = vmul.f32 %v1776, %v1643
          %v1794 = vmul.f32 %v1778, %v1644
          %v1795 = vsel %vm1219, %v1784, 0.0
          %1796 = vadd.xlane.f32.xlu0 %v1795
          %v1797 = vpop.xlane.xlu0 %1796
          %v1798 = vsel %vm1219, %v1786, 0.0
          %1799 = vadd.xlane.f32.xlu0 %v1798
          %v1800 = vpop.xlane.xlu0 %1799
          %v1801 = vsel %vm1219, %v1788, 0.0
          %1802 = vadd.xlane.f32.xlu0 %v1801
          %v1803 = vpop.xlane.xlu0 %1802
          %v1804 = vsel %vm1219, %v1790, 0.0
          %1805 = vadd.xlane.f32.xlu0 %v1804
          %v1806 = vpop.xlane.xlu0 %1805
          %v1807 = vadd.f32 %v1791, %v1797
          %v1808 = vadd.f32 %v1792, %v1800
          %v1809 = vadd.f32 %v1793, %v1803
          %v1810 = vadd.f32 %v1794, %v1806
          %v1811 = vmul.f32 %v1772, %v1645
          %v1812 = vmul.f32 %v1774, %v1646
          %v1813 = vmul.f32 %v1776, %v1647
          %v1814 = vmul.f32 %v1778, %v1648
          %v1815 = vpack.c.bf16 %v1786, %v1784
          %v1816 = vpack.c.bf16 %v1790, %v1788
          %v1821 = vunpack.c.l.b16 %v1660
          %v1822 = vunpack.c.l.b16 %v1661
          %v1823 = vunpack.c.l.b16 %v1662
          %v1824 = vunpack.c.l.b16 %v1663
          %v1825 = vpack.c.b16 %v1822, %v1821
          %v1826 = vpack.c.b16 %v1824, %v1823
          %1827 = vrot.lane.b32.xlu0 %v1825, 112
          %v1828 = vpop.permute.xlu0 %1827
          %1829 = vrot.lane.b32.xlu0 %v1826, 112
          %v1830 = vpop.permute.xlu0 %1829
          %v1834 = vsel %vm1219, %v1815, 0
          %v1837 = vsel %vm1219, %v1816, 0
          %1839 = vmatprep.subr.bf16.mxu0 0
          %1840 = vmatpush1.bf16.msra.mxu0 %v1828
          %1841 = vmatprep.subr.bf16.mxu0 0
          %1842 = vmatpush1.bf16.msra.mxu0 %v1830
          %1843 = vmatprep.subr.bf16.mxu0 0
          %1844 = vmatpush1.bf16.msra.mxu0 0
          %1845 = vmatprep.subr.bf16.mxu0 0
          %1846 = vmatpush1.bf16.msra.mxu0 0
          %1847 = vmatprep.subr.bf16.mxu0 0
          %1848 = vmatpush1.bf16.msra.mxu0 0
          %1849 = vmatprep.subr.bf16.mxu0 0
          %1850 = vmatpush1.bf16.msra.mxu0 0
          %1851 = vmatprep.subr.bf16.mxu0 0
          %1852 = vmatpush1.bf16.msra.mxu0 0
          %1853 = vmatprep.subr.bf16.mxu0 0
          %1854 = vmatpush1.bf16.msra.mxu0 0
          %1855 = vmatprep.subr.bf16.mxu0 0
          %1856 = vmatpush1.bf16.msra.mxu0 0
          %1857 = vmatprep.subr.bf16.mxu0 0
          %1858 = vmatpush1.bf16.msra.mxu0 0
          %1859 = vmatprep.subr.bf16.mxu0 0
          %1860 = vmatpush1.bf16.msra.mxu0 0
          %1861 = vmatprep.subr.bf16.mxu0 0
          %1862 = vmatpush1.bf16.msra.mxu0 0
          %1863 = vmatprep.subr.bf16.mxu0 0
          %1864 = vmatpush1.bf16.msra.mxu0 0
          %1865 = vmatprep.subr.bf16.mxu0 0
          %1866 = vmatpush1.bf16.msra.mxu0 0
          %1867 = vmatprep.subr.bf16.mxu0 0
          %1868 = vmatpush1.bf16.msra.mxu0 0
          %1869 = vmatprep.subr.bf16.mxu0 0
          %1870 = vmatpush1.bf16.msra.mxu0 0
          %1871 = vmatprep.mubr.bf16.mxu0 0
          %1872 = vmatmul.mubr.bf16.gmra.mrb[0].mxu0 %v1834
          %v1873 = vpop.f32.mrb[0].mxu0
          %v1874 = vadd.f32 0.0, %v1873
          %v1875 = vpop.f32.mrb[0].mxu0
          %v1876 = vpop.f32.mrb[0].mxu0
          %v1877 = vadd.f32 0.0, %v1876
          %v1878 = vpop.f32.mrb[0].mxu0
          %1879 = vmatprep.mubr.bf16.mxu0 0
          %1880 = vmatmul.mubr.bf16.gmra.mrb[0].mxu0 %v1837
          %v1881 = vpop.f32.mrb[0].mxu0
          %v1882 = vadd.f32 0.0, %v1881
          %v1883 = vpop.f32.mrb[0].mxu0
          %v1884 = vpop.f32.mrb[0].mxu0
          %v1885 = vadd.f32 0.0, %v1884
          %v1886 = vpop.f32.mrb[0].mxu0
          %1887 = vdwg.mxu0
          %v1888 = vadd.f32 %v1811, %v1874
          %v1889 = vadd.f32 %v1812, %v1877
          %v1890 = vadd.f32 %v1813, %v1882
          %v1891 = vadd.f32 %v1814, %v1885
        $region224: #{spatial_transformer_forward.3} parent=115 // loop_footer
          %s1636 = sadd.s32 1, %s1632
        $region225: #{spatial_transformer_forward.3} parent=115 // loop_footer_branch
          %1631 = sbr.rel target = $region221
        $region226: #{spatial_transformer_forward.3} parent=115 // loop_exit
          _
        %v1892 = vrcp.pop %v1641
        %v1893 = vrcp.pop %v1642
        %v1894 = vrcp.pop %v1643
        %v1895 = vrcp.pop %v1644
        %v1896 = vmul.f32 %v1645, %v1892
        %v1897 = vmul.f32 %v1646, %v1893
        %v1898 = vmul.f32 %v1647, %v1894
        %v1899 = vmul.f32 %v1648, %v1895
        %v1900 = vpack.c.bf16 %v1897, %v1896
        %v1901 = vpack.c.bf16 %v1899, %v1898
        %1904 = vrot.lane.b32.xlu0 %v1900, 16
        %v1905 = vpop.permute.xlu0 %1904
        %1906 = vrot.lane.b32.xlu0 %v1901, 16
        %v1907 = vpop.permute.xlu0 %1906
        %vm1910 = vcmask 261248
        %1911 = vst.msk [vmem:[#allocation2] sm:$0xff] %vm1910, %v1905
        %1912 = vst.msk [vmem:[#allocation2 + $0x8] sm:$0xff] %vm1910, %v1907
        %v1913 = vld [vmem:[#allocation2] sm:$0xff]
        %v1914 = vld [vmem:[#allocation2 + $0x8] sm:$0xff]
        %v1915 = vld [vmem:[#allocation18] sm:$0xf]
        %v1916 = vld [vmem:[#allocation18 + $0x4] sm:$0xf]
        %v1917 = vld [vmem:[#allocation18 + $0x8] sm:$0xf]
        %v1918 = vld [vmem:[#allocation18 + $0xc] sm:$0xf]
        %v1923 = vunpack.c.l.b16 %v1915
        %v1924 = vunpack.c.l.b16 %v1916
        %v1925 = vunpack.c.l.b16 %v1917
        %v1926 = vunpack.c.l.b16 %v1918
        %v1927 = vpack.c.b16 %v1924, %v1923
        %v1928 = vpack.c.b16 %v1926, %v1925
        %v1932 = vsel %vm1219, %v1913, 0
        %v1935 = vsel %vm1219, %v1914, 0
        %1937 = vmatprep.subr.bf16.mxu0 0
        %1938 = vmatpush1.bf16.msra.mxu0 %v1927
        %1939 = vmatprep.subr.bf16.mxu0 0
        %1940 = vmatpush1.bf16.msra.mxu0 %v1928
        %1941 = vmatprep.subr.bf16.mxu0 0
        %1942 = vmatpush1.bf16.msra.mxu0 0
        %1943 = vmatprep.subr.bf16.mxu0 0
        %1944 = vmatpush1.bf16.msra.mxu0 0
        %1945 = vmatprep.subr.bf16.mxu0 0
        %1946 = vmatpush1.bf16.msra.mxu0 0
        %1947 = vmatprep.subr.bf16.mxu0 0
        %1948 = vmatpush1.bf16.msra.mxu0 0
        %1949 = vmatprep.subr.bf16.mxu0 0
        %1950 = vmatpush1.bf16.msra.mxu0 0
        %1951 = vmatprep.subr.bf16.mxu0 0
        %1952 = vmatpush1.bf16.msra.mxu0 0
        %1953 = vmatprep.subr.bf16.mxu0 0
        %1954 = vmatpush1.bf16.msra.mxu0 0
        %1955 = vmatprep.subr.bf16.mxu0 0
        %1956 = vmatpush1.bf16.msra.mxu0 0
        %1957 = vmatprep.subr.bf16.mxu0 0
        %1958 = vmatpush1.bf16.msra.mxu0 0
        %1959 = vmatprep.subr.bf16.mxu0 0
        %1960 = vmatpush1.bf16.msra.mxu0 0
        %1961 = vmatprep.subr.bf16.mxu0 0
        %1962 = vmatpush1.bf16.msra.mxu0 0
        %1963 = vmatprep.subr.bf16.mxu0 0
        %1964 = vmatpush1.bf16.msra.mxu0 0
        %1965 = vmatprep.subr.bf16.mxu0 0
        %1966 = vmatpush1.bf16.msra.mxu0 0
        %1967 = vmatprep.subr.bf16.mxu0 0
        %1968 = vmatpush1.bf16.msra.mxu0 0
        %1969 = vmatprep.mubr.bf16.mxu0 0
        %1970 = vmatmul.mubr.bf16.gmra.mrb[0].mxu0 %v1932
        %v1971 = vpop.f32.mrb[0].mxu0
        %v1972 = vadd.f32 0.0, %v1971
        %v1973 = vpop.f32.mrb[0].mxu0
        %v1974 = vpop.f32.mrb[0].mxu0
        %v1975 = vadd.f32 0.0, %v1974
        %v1976 = vpop.f32.mrb[0].mxu0
        %1977 = vmatprep.mubr.bf16.mxu0 0
        %1978 = vmatmul.mubr.bf16.gmra.mrb[0].mxu0 %v1935
        %v1979 = vpop.f32.mrb[0].mxu0
        %v1980 = vadd.f32 0.0, %v1979
        %v1981 = vpop.f32.mrb[0].mxu0
        %v1982 = vpop.f32.mrb[0].mxu0
        %v1983 = vadd.f32 0.0, %v1982
        %v1984 = vpop.f32.mrb[0].mxu0
        %1985 = vdwg.mxu0
        %v1986 = vadd.f32 %v1215, %v1972
        %v1987 = vadd.f32 %v1216, %v1975
        %v1988 = vadd.f32 %v1217, %v1980
        %v1989 = vadd.f32 %v1218, %v1983
        %v1990 = vld [vmem:[#allocation20] sm:$0x1]
        %v1992 = vlaneseq
        %v1993 = vshrl.u32 %v1992, 7
        %v1994 = vsub.s32 0, %v1993
        %v1995 = vrot.slane %v1990, %v1994
        %v1997 = vadd.f32 %v1986, %v1995
        %v1998 = vadd.f32 %v1987, %v1995
        %v1999 = vadd.f32 %v1988, %v1995
        %v2000 = vadd.f32 %v1989, %v1995
        %v2001 = vsel %vm1219, %v1997, 0.0
        %2002 = vadd.xlane.f32.xlu0 %v2001
        %v2003 = vpop.xlane.xlu0 %2002
        %v2004 = vsel %vm1219, %v1998, 0.0
        %2005 = vadd.xlane.f32.xlu0 %v2004
        %v2006 = vpop.xlane.xlu0 %2005
        %v2007 = vsel %vm1219, %v1999, 0.0
        %2008 = vadd.xlane.f32.xlu0 %v2007
        %v2009 = vpop.xlane.xlu0 %2008
        %v2010 = vsel %vm1219, %v2000, 0.0
        %2011 = vadd.xlane.f32.xlu0 %v2010
        %v2012 = vpop.xlane.xlu0 %2011
        %v2013 = vmul.f32 %v2003, %v1232
        %v2014 = vmul.f32 %v2006, %v1232
        %v2015 = vmul.f32 %v2009, %v1232
        %v2016 = vmul.f32 %v2012, %v1232
        %v2017 = vsub.f32 %v1997, %v2013
        %v2018 = vsub.f32 %v1998, %v2014
        %v2019 = vsub.f32 %v1999, %v2015
        %v2020 = vsub.f32 %v2000, %v2016
        %v2021 = vmul.f32 %v2017, %v2017
        %v2022 = vmul.f32 %v2018, %v2018
        %v2023 = vmul.f32 %v2019, %v2019
        %v2024 = vmul.f32 %v2020, %v2020
        %v2025 = vsel %vm1219, %v2021, 0.0
        %2026 = vadd.xlane.f32.xlu0 %v2025
        %v2027 = vpop.xlane.xlu0 %2026
        %v2028 = vsel %vm1219, %v2022, 0.0
        %2029 = vadd.xlane.f32.xlu0 %v2028
        %v2030 = vpop.xlane.xlu0 %2029
        %v2031 = vsel %vm1219, %v2023, 0.0
        %2032 = vadd.xlane.f32.xlu0 %v2031
        %v2033 = vpop.xlane.xlu0 %2032
        %v2034 = vsel %vm1219, %v2024, 0.0
        %2035 = vadd.xlane.f32.xlu0 %v2034
        %v2036 = vpop.xlane.xlu0 %2035
        %v2037 = vmul.f32 %v2027, %v1232
        %v2038 = vmul.f32 %v2030, %v1232
        %v2039 = vmul.f32 %v2033, %v1232
        %v2040 = vmul.f32 %v2036, %v1232
        %v2041 = vadd.f32 %v2037, 1e-05
        %v2042 = vadd.f32 %v2038, 1e-05
        %v2043 = vadd.f32 %v2039, 1e-05
        %v2044 = vadd.f32 %v2040, 1e-05
        %v2045 = vrsqrt.pop %v2041
        %v2046 = vrsqrt.pop %v2042
        %v2047 = vrsqrt.pop %v2043
        %v2048 = vrsqrt.pop %v2044
        %v2049 = vmul.f32 %v2017, %v2045
        %v2050 = vmul.f32 %v2018, %v2046
        %v2051 = vmul.f32 %v2019, %v2047
        %v2052 = vmul.f32 %v2020, %v2048
        %v2053 = vld [vmem:[#allocation21] sm:$0x1]
        %v2055 = vlaneseq
        %v2056 = vshrl.u32 %v2055, 7
        %v2057 = vsub.s32 0, %v2056
        %v2058 = vrot.slane %v2053, %v2057
        %v2060 = vmul.f32 %v2049, %v2058
        %v2061 = vmul.f32 %v2050, %v2058
        %v2062 = vmul.f32 %v2051, %v2058
        %v2063 = vmul.f32 %v2052, %v2058
        %v2064 = vld [vmem:[#allocation23] sm:$0x1]
        %v2066 = vlaneseq
        %v2067 = vshrl.u32 %v2066, 7
        %v2068 = vsub.s32 0, %v2067
        %v2069 = vrot.slane %v2064, %v2068
        %v2071 = vadd.f32 %v2060, %v2069
        %v2072 = vadd.f32 %v2061, %v2069
        %v2073 = vadd.f32 %v2062, %v2069
        %v2074 = vadd.f32 %v2063, %v2069
        %v2075 = vpack.c.bf16 %v2072, %v2071
        %v2076 = vpack.c.bf16 %v2074, %v2073
        %v2077 = vld [vmem:[#allocation24] sm:$0xf]
        %v2078 = vld [vmem:[#allocation24 + $0x4] sm:$0xf]
        %v2079 = vld [vmem:[#allocation24 + $0x8] sm:$0xf]
        %v2080 = vld [vmem:[#allocation24 + $0xc] sm:$0xf]
        %v2085 = vunpack.c.l.b16 %v2077
        %v2086 = vunpack.c.l.b16 %v2078
        %v2087 = vunpack.c.l.b16 %v2079
        %v2088 = vunpack.c.l.b16 %v2080
        %v2089 = vpack.c.b16 %v2086, %v2085
        %v2090 = vpack.c.b16 %v2088, %v2087
        %v2094 = vsel %vm1219, %v2075, 0
        %v2097 = vsel %vm1219, %v2076, 0
        %2099 = vmatprep.subr.bf16.mxu0 0
        %2100 = vmatpush1.bf16.msra.mxu0 %v2089
        %2101 = vmatprep.subr.bf16.mxu0 0
        %2102 = vmatpush1.bf16.msra.mxu0 %v2090
        %2103 = vmatprep.subr.bf16.mxu0 0
        %2104 = vmatpush1.bf16.msra.mxu0 0
        %2105 = vmatprep.subr.bf16.mxu0 0
        %2106 = vmatpush1.bf16.msra.mxu0 0
        %2107 = vmatprep.subr.bf16.mxu0 0
        %2108 = vmatpush1.bf16.msra.mxu0 0
        %2109 = vmatprep.subr.bf16.mxu0 0
        %2110 = vmatpush1.bf16.msra.mxu0 0
        %2111 = vmatprep.subr.bf16.mxu0 0
        %2112 = vmatpush1.bf16.msra.mxu0 0
        %2113 = vmatprep.subr.bf16.mxu0 0
        %2114 = vmatpush1.bf16.msra.mxu0 0
        %2115 = vmatprep.subr.bf16.mxu0 0
        %2116 = vmatpush1.bf16.msra.mxu0 0
        %2117 = vmatprep.subr.bf16.mxu0 0
        %2118 = vmatpush1.bf16.msra.mxu0 0
        %2119 = vmatprep.subr.bf16.mxu0 0
        %2120 = vmatpush1.bf16.msra.mxu0 0
        %2121 = vmatprep.subr.bf16.mxu0 0
        %2122 = vmatpush1.bf16.msra.mxu0 0
        %2123 = vmatprep.subr.bf16.mxu0 0
        %2124 = vmatpush1.bf16.msra.mxu0 0
        %2125 = vmatprep.subr.bf16.mxu0 0
        %2126 = vmatpush1.bf16.msra.mxu0 0
        %2127 = vmatprep.subr.bf16.mxu0 0
        %2128 = vmatpush1.bf16.msra.mxu0 0
        %2129 = vmatprep.subr.bf16.mxu0 0
        %2130 = vmatpush1.bf16.msra.mxu0 0
        %2131 = vmatprep.mubr.bf16.mxu0 0
        %2132 = vmatmul.mubr.bf16.gmra.mrb[0].mxu0 %v2094
        %v2133 = vpop.f32.mrb[0].mxu0
        %v2134 = vadd.f32 0.0, %v2133
        %v2135 = vpop.f32.mrb[0].mxu0
        %v2136 = vpop.f32.mrb[0].mxu0
        %v2137 = vadd.f32 0.0, %v2136
        %v2138 = vpop.f32.mrb[0].mxu0
        %2139 = vmatprep.mubr.bf16.mxu0 0
        %2140 = vmatmul.mubr.bf16.gmra.mrb[0].mxu0 %v2097
        %v2141 = vpop.f32.mrb[0].mxu0
        %v2142 = vadd.f32 0.0, %v2141
        %v2143 = vpop.f32.mrb[0].mxu0
        %v2144 = vpop.f32.mrb[0].mxu0
        %v2145 = vadd.f32 0.0, %v2144
        %v2146 = vpop.f32.mrb[0].mxu0
        %2147 = vdwg.mxu0
        %v2148 = vpack.c.bf16 %v2137, %v2134
        %v2149 = vpack.c.bf16 %v2145, %v2142
        %v2150 = vlaneseq
        %v2151 = vand.u32 %v2150, 127
        %vm2152 = vcmp.lt.s32.totalorder %v2151, 8
        %v2153 = vsel %vm2152, 0.0, -1e+30
        %v2154 = vld [vmem:[%s1040] sm:$0xf]
        %v2155 = vld [vmem:[%s1040 + $0x4] sm:$0xf]
        %v2156 = vld [vmem:[%s1040 + $0x8] sm:$0xf]
        %v2157 = vld [vmem:[%s1040 + $0xc] sm:$0xf]
        %v2158 = vld [vmem:[%s1040 + $0x10] sm:$0xf]
        %v2159 = vld [vmem:[%s1040 + $0x14] sm:$0xf]
        %v2160 = vld [vmem:[%s1040 + $0x18] sm:$0xf]
        %v2161 = vld [vmem:[%s1040 + $0x1c] sm:$0xf]
        %v2162 = vld [vmem:[%s1040 + $0x20] sm:$0xf]
        %v2163 = vld [vmem:[%s1040 + $0x24] sm:$0xf]
        %v2164 = vld [vmem:[%s1040 + $0x28] sm:$0xf]
        %v2165 = vld [vmem:[%s1040 + $0x2c] sm:$0xf]
        %v2166 = vld [vmem:[%s1040 + $0x30] sm:$0xf]
        %v2167 = vld [vmem:[%s1040 + $0x34] sm:$0xf]
        %v2168 = vld [vmem:[%s1040 + $0x38] sm:$0xf]
        %v2169 = vld [vmem:[%s1040 + $0x3c] sm:$0xf]
        %v2170 = vld [vmem:[%s1049] sm:$0xf]
        %v2171 = vld [vmem:[%s1049 + $0x4] sm:$0xf]
        %v2172 = vld [vmem:[%s1049 + $0x8] sm:$0xf]
        %v2173 = vld [vmem:[%s1049 + $0xc] sm:$0xf]
        %v2174 = vld [vmem:[%s1049 + $0x10] sm:$0xf]
        %v2175 = vld [vmem:[%s1049 + $0x14] sm:$0xf]
        %v2176 = vld [vmem:[%s1049 + $0x18] sm:$0xf]
        %v2177 = vld [vmem:[%s1049 + $0x1c] sm:$0xf]
        %v2178 = vld [vmem:[%s1049 + $0x20] sm:$0xf]
        %v2179 = vld [vmem:[%s1049 + $0x24] sm:$0xf]
        %v2180 = vld [vmem:[%s1049 + $0x28] sm:$0xf]
        %v2181 = vld [vmem:[%s1049 + $0x2c] sm:$0xf]
        %v2182 = vld [vmem:[%s1049 + $0x30] sm:$0xf]
        %v2183 = vld [vmem:[%s1049 + $0x34] sm:$0xf]
        %v2184 = vld [vmem:[%s1049 + $0x38] sm:$0xf]
        %v2185 = vld [vmem:[%s1049 + $0x3c] sm:$0xf]
        %v2202 = vunpack.c.l.b16 %v2154
        %v2203 = vunpack.c.l.b16 %v2155
        %v2204 = vunpack.c.l.b16 %v2156
        %v2205 = vunpack.c.l.b16 %v2157
        %v2206 = vunpack.c.l.b16 %v2158
        %v2207 = vunpack.c.l.b16 %v2159
        %v2208 = vunpack.c.l.b16 %v2160
        %v2209 = vunpack.c.l.b16 %v2161
        %v2210 = vunpack.c.l.b16 %v2162
        %v2211 = vunpack.c.l.b16 %v2163
        %v2212 = vunpack.c.l.b16 %v2164
        %v2213 = vunpack.c.l.b16 %v2165
        %v2214 = vunpack.c.l.b16 %v2166
        %v2215 = vunpack.c.l.b16 %v2167
        %v2216 = vunpack.c.l.b16 %v2168
        %v2217 = vunpack.c.l.b16 %v2169
        %v2218 = vpack.c.b16 %v2203, %v2202
        %v2219 = vpack.c.b16 %v2205, %v2204
        %v2220 = vpack.c.b16 %v2207, %v2206
        %v2221 = vpack.c.b16 %v2209, %v2208
        %v2222 = vpack.c.b16 %v2211, %v2210
        %v2223 = vpack.c.b16 %v2213, %v2212
        %v2224 = vpack.c.b16 %v2215, %v2214
        %v2225 = vpack.c.b16 %v2217, %v2216
        %v2227 = vsel %vm1628, %v2148, 0
        %v2230 = vsel %vm1628, %v2149, 0
        %v2233 = vsel %vm1628, %v2218, 0
        %v2236 = vsel %vm1628, %v2219, 0
        %v2239 = vsel %vm1628, %v2220, 0
        %v2242 = vsel %vm1628, %v2221, 0
        %v2245 = vsel %vm1628, %v2222, 0
        %v2248 = vsel %vm1628, %v2223, 0
        %v2251 = vsel %vm1628, %v2224, 0
        %v2254 = vsel %vm1628, %v2225, 0
        %2256 = vmatprep.subr.bf16.mxu0 0
        %2257 = vmatpush1.bf16.xpose.msra.mxu0 %v2233
        %2258 = vmatprep.subr.bf16.mxu0 0
        %2259 = vmatpush1.bf16.xpose.msra.mxu0 %v2236
        %2260 = vmatprep.subr.bf16.mxu0 0
        %2261 = vmatpush1.bf16.xpose.msra.mxu0 %v2239
        %2262 = vmatprep.subr.bf16.mxu0 0
        %2263 = vmatpush1.bf16.xpose.msra.mxu0 %v2242
        %2264 = vmatprep.subr.bf16.mxu0 0
        %2265 = vmatpush1.bf16.xpose.msra.mxu0 %v2245
        %2266 = vmatprep.subr.bf16.mxu0 0
        %2267 = vmatpush1.bf16.xpose.msra.mxu0 %v2248
        %2268 = vmatprep.subr.bf16.mxu0 0
        %2269 = vmatpush1.bf16.xpose.msra.mxu0 %v2251
        %2270 = vmatprep.subr.bf16.mxu0 0
        %2271 = vmatpush1.bf16.xpose.msra.mxu0 %v2254
        %2272 = vmatprep.subr.bf16.mxu0 0
        %2273 = vmatpush1.bf16.xpose.msra.mxu0 0
        %2274 = vmatprep.subr.bf16.mxu0 0
        %2275 = vmatpush1.bf16.xpose.msra.mxu0 0
        %2276 = vmatprep.subr.bf16.mxu0 0
        %2277 = vmatpush1.bf16.xpose.msra.mxu0 0
        %2278 = vmatprep.subr.bf16.mxu0 0
        %2279 = vmatpush1.bf16.xpose.msra.mxu0 0
        %2280 = vmatprep.subr.bf16.mxu0 0
        %2281 = vmatpush1.bf16.xpose.msra.mxu0 0
        %2282 = vmatprep.subr.bf16.mxu0 0
        %2283 = vmatpush1.bf16.xpose.msra.mxu0 0
        %2284 = vmatprep.subr.bf16.mxu0 0
        %2285 = vmatpush1.bf16.xpose.msra.mxu0 0
        %2286 = vmatprep.subr.bf16.mxu0 0
        %2287 = vmatpush1.bf16.xpose.msra.mxu0 0
        %2288 = vmatprep.mubr.bf16.mxu0 0
        %2289 = vmatmul.mubr.bf16.gmra.mrb[0].mxu0 %v2227
        %v2290 = vpop.f32.mrb[0].mxu0
        %v2291 = vadd.f32 %v2153, %v2290
        %v2292 = vpop.f32.mrb[0].mxu0
        %v2293 = vpop.f32.mrb[0].mxu0
        %v2294 = vadd.f32 %v2153, %v2293
        %v2295 = vpop.f32.mrb[0].mxu0
        %2296 = vmatprep.mubr.bf16.mxu0 0
        %2297 = vmatmul.mubr.bf16.gmra.mrb[0].mxu0 %v2230
        %v2298 = vpop.f32.mrb[0].mxu0
        %v2299 = vadd.f32 %v2153, %v2298
        %v2300 = vpop.f32.mrb[0].mxu0
        %v2301 = vpop.f32.mrb[0].mxu0
        %v2302 = vadd.f32 %v2153, %v2301
        %v2303 = vpop.f32.mrb[0].mxu0
        %2304 = vdwg.mxu0
        %2305 = vmax.xlane.f32.xlu0 %v2291
        %v2306 = vpop.xlane.xlu0 %2305
        %2307 = vmax.xlane.f32.xlu0 %v2294
        %v2308 = vpop.xlane.xlu0 %2307
        %2309 = vmax.xlane.f32.xlu0 %v2299
        %v2310 = vpop.xlane.xlu0 %2309
        %2311 = vmax.xlane.f32.xlu0 %v2302
        %v2312 = vpop.xlane.xlu0 %2311
        %v2313 = vsub.f32 %v2291, %v2306
        %v2314 = vsub.f32 %v2294, %v2308
        %v2315 = vsub.f32 %v2299, %v2310
        %v2316 = vsub.f32 %v2302, %v2312
        %v2317 = vmul.f32 %v2313, 1.442695
        %v2318 = vpow.pop %v2317
        %v2319 = vmul.f32 %v2314, 1.442695
        %v2320 = vpow.pop %v2319
        %v2321 = vmul.f32 %v2315, 1.442695
        %v2322 = vpow.pop %v2321
        %v2323 = vmul.f32 %v2316, 1.442695
        %v2324 = vpow.pop %v2323
        %2325 = vadd.xlane.f32.xlu0 %v2318
        %v2326 = vpop.xlane.xlu0 %2325
        %2327 = vadd.xlane.f32.xlu0 %v2320
        %v2328 = vpop.xlane.xlu0 %2327
        %2329 = vadd.xlane.f32.xlu0 %v2322
        %v2330 = vpop.xlane.xlu0 %2329
        %2331 = vadd.xlane.f32.xlu0 %v2324
        %v2332 = vpop.xlane.xlu0 %2331
        %v2333 = vrcp.pop %v2326
        %v2334 = vrcp.pop %v2328
        %v2335 = vrcp.pop %v2330
        %v2336 = vrcp.pop %v2332
        %v2337 = vmul.f32 %v2318, %v2333
        %v2338 = vmul.f32 %v2320, %v2334
        %v2339 = vmul.f32 %v2322, %v2335
        %v2340 = vmul.f32 %v2324, %v2336
        %v2341 = vpack.c.bf16 %v2338, %v2337
        %v2342 = vpack.c.bf16 %v2340, %v2339
        %v2359 = vunpack.c.l.b16 %v2170
        %v2360 = vunpack.c.l.b16 %v2171
        %v2361 = vunpack.c.l.b16 %v2172
        %v2362 = vunpack.c.l.b16 %v2173
        %v2363 = vunpack.c.l.b16 %v2174
        %v2364 = vunpack.c.l.b16 %v2175
        %v2365 = vunpack.c.l.b16 %v2176
        %v2366 = vunpack.c.l.b16 %v2177
        %v2367 = vunpack.c.l.b16 %v2178
        %v2368 = vunpack.c.l.b16 %v2179
        %v2369 = vunpack.c.l.b16 %v2180
        %v2370 = vunpack.c.l.b16 %v2181
        %v2371 = vunpack.c.l.b16 %v2182
        %v2372 = vunpack.c.l.b16 %v2183
        %v2373 = vunpack.c.l.b16 %v2184
        %v2374 = vunpack.c.l.b16 %v2185
        %v2375 = vpack.c.b16 %v2360, %v2359
        %v2376 = vpack.c.b16 %v2362, %v2361
        %v2377 = vpack.c.b16 %v2364, %v2363
        %v2378 = vpack.c.b16 %v2366, %v2365
        %v2379 = vpack.c.b16 %v2368, %v2367
        %v2380 = vpack.c.b16 %v2370, %v2369
        %v2381 = vpack.c.b16 %v2372, %v2371
        %v2382 = vpack.c.b16 %v2374, %v2373
        %2391 = vmatprep.subr.bf16.mxu0 0
        %2392 = vmatpush1.bf16.msra.mxu0 %v2375
        %2393 = vmatprep.subr.bf16.mxu0 0
        %2394 = vmatpush1.bf16.msra.mxu0 %v2376
        %2395 = vmatprep.subr.bf16.mxu0 0
        %2396 = vmatpush1.bf16.msra.mxu0 %v2377
        %2397 = vmatprep.subr.bf16.mxu0 0
        %2398 = vmatpush1.bf16.msra.mxu0 %v2378
        %2399 = vmatprep.subr.bf16.mxu0 0
        %2400 = vmatpush1.bf16.msra.mxu0 %v2379
        %2401 = vmatprep.subr.bf16.mxu0 0
        %2402 = vmatpush1.bf16.msra.mxu0 %v2380
        %2403 = vmatprep.subr.bf16.mxu0 0
        %2404 = vmatpush1.bf16.msra.mxu0 %v2381
        %2405 = vmatprep.subr.bf16.mxu0 0
        %2406 = vmatpush1.bf16.msra.mxu0 %v2382
        %2407 = vmatprep.subr.bf16.mxu0 0
        %2408 = vmatpush1.bf16.msra.mxu0 0
        %2409 = vmatprep.subr.bf16.mxu0 0
        %2410 = vmatpush1.bf16.msra.mxu0 0
        %2411 = vmatprep.subr.bf16.mxu0 0
        %2412 = vmatpush1.bf16.msra.mxu0 0
        %2413 = vmatprep.subr.bf16.mxu0 0
        %2414 = vmatpush1.bf16.msra.mxu0 0
        %2415 = vmatprep.subr.bf16.mxu0 0
        %2416 = vmatpush1.bf16.msra.mxu0 0
        %2417 = vmatprep.subr.bf16.mxu0 0
        %2418 = vmatpush1.bf16.msra.mxu0 0
        %2419 = vmatprep.subr.bf16.mxu0 0
        %2420 = vmatpush1.bf16.msra.mxu0 0
        %2421 = vmatprep.subr.bf16.mxu0 0
        %2422 = vmatpush1.bf16.msra.mxu0 0
        %2423 = vmatprep.mubr.bf16.mxu0 0
        %2424 = vmatmul.mubr.bf16.gmra.mrb[0].mxu0 %v2341
        %v2425 = vpop.f32.mrb[0].mxu0
        %v2426 = vadd.f32 0.0, %v2425
        %v2427 = vpop.f32.mrb[0].mxu0
        %v2428 = vpop.f32.mrb[0].mxu0
        %v2429 = vadd.f32 0.0, %v2428
        %v2430 = vpop.f32.mrb[0].mxu0
        %2431 = vmatprep.mubr.bf16.mxu0 0
        %2432 = vmatmul.mubr.bf16.gmra.mrb[0].mxu0 %v2342
        %v2433 = vpop.f32.mrb[0].mxu0
        %v2434 = vadd.f32 0.0, %v2433
        %v2435 = vpop.f32.mrb[0].mxu0
        %v2436 = vpop.f32.mrb[0].mxu0
        %v2437 = vadd.f32 0.0, %v2436
        %v2438 = vpop.f32.mrb[0].mxu0
        %2439 = vdwg.mxu0
        %v2440 = vpack.c.bf16 %v2429, %v2426
        %v2441 = vpack.c.bf16 %v2437, %v2434
        %2442 = vst.msk [vmem:[#allocation2] sm:$0xff] %vm1628, %v2440
        %2443 = vst.msk [vmem:[#allocation2 + $0x8] sm:$0xff] %vm1628, %v2441
        %v2444 = vld [vmem:[%s1040] sm:$0xf]
        %v2445 = vld [vmem:[%s1040 + $0x4] sm:$0xf]
        %v2446 = vld [vmem:[%s1040 + $0x8] sm:$0xf]
        %v2447 = vld [vmem:[%s1040 + $0xc] sm:$0xf]
        %v2448 = vld [vmem:[%s1040 + $0x10] sm:$0xf]
        %v2449 = vld [vmem:[%s1040 + $0x14] sm:$0xf]
        %v2450 = vld [vmem:[%s1040 + $0x18] sm:$0xf]
        %v2451 = vld [vmem:[%s1040 + $0x1c] sm:$0xf]
        %v2452 = vld [vmem:[%s1040 + $0x20] sm:$0xf]
        %v2453 = vld [vmem:[%s1040 + $0x24] sm:$0xf]
        %v2454 = vld [vmem:[%s1040 + $0x28] sm:$0xf]
        %v2455 = vld [vmem:[%s1040 + $0x2c] sm:$0xf]
        %v2456 = vld [vmem:[%s1040 + $0x30] sm:$0xf]
        %v2457 = vld [vmem:[%s1040 + $0x34] sm:$0xf]
        %v2458 = vld [vmem:[%s1040 + $0x38] sm:$0xf]
        %v2459 = vld [vmem:[%s1040 + $0x3c] sm:$0xf]
        %v2460 = vld [vmem:[%s1049] sm:$0xf]
        %v2461 = vld [vmem:[%s1049 + $0x4] sm:$0xf]
        %v2462 = vld [vmem:[%s1049 + $0x8] sm:$0xf]
        %v2463 = vld [vmem:[%s1049 + $0xc] sm:$0xf]
        %v2464 = vld [vmem:[%s1049 + $0x10] sm:$0xf]
        %v2465 = vld [vmem:[%s1049 + $0x14] sm:$0xf]
        %v2466 = vld [vmem:[%s1049 + $0x18] sm:$0xf]
        %v2467 = vld [vmem:[%s1049 + $0x1c] sm:$0xf]
        %v2468 = vld [vmem:[%s1049 + $0x20] sm:$0xf]
        %v2469 = vld [vmem:[%s1049 + $0x24] sm:$0xf]
        %v2470 = vld [vmem:[%s1049 + $0x28] sm:$0xf]
        %v2471 = vld [vmem:[%s1049 + $0x2c] sm:$0xf]
        %v2472 = vld [vmem:[%s1049 + $0x30] sm:$0xf]
        %v2473 = vld [vmem:[%s1049 + $0x34] sm:$0xf]
        %v2474 = vld [vmem:[%s1049 + $0x38] sm:$0xf]
        %v2475 = vld [vmem:[%s1049 + $0x3c] sm:$0xf]
        %2478 = vrot.lane.b32.xlu0 %v2148, 112
        %v2479 = vpop.permute.xlu0 %2478
        %2480 = vrot.lane.b32.xlu0 %v2149, 112
        %v2481 = vpop.permute.xlu0 %2480
        %v2498 = vunpack.c.l.b16 %v2444
        %v2499 = vunpack.c.l.b16 %v2445
        %v2500 = vunpack.c.l.b16 %v2446
        %v2501 = vunpack.c.l.b16 %v2447
        %v2502 = vunpack.c.l.b16 %v2448
        %v2503 = vunpack.c.l.b16 %v2449
        %v2504 = vunpack.c.l.b16 %v2450
        %v2505 = vunpack.c.l.b16 %v2451
        %v2506 = vunpack.c.l.b16 %v2452
        %v2507 = vunpack.c.l.b16 %v2453
        %v2508 = vunpack.c.l.b16 %v2454
        %v2509 = vunpack.c.l.b16 %v2455
        %v2510 = vunpack.c.l.b16 %v2456
        %v2511 = vunpack.c.l.b16 %v2457
        %v2512 = vunpack.c.l.b16 %v2458
        %v2513 = vunpack.c.l.b16 %v2459
        %v2514 = vpack.c.b16 %v2499, %v2498
        %v2515 = vpack.c.b16 %v2501, %v2500
        %v2516 = vpack.c.b16 %v2503, %v2502
        %v2517 = vpack.c.b16 %v2505, %v2504
        %v2518 = vpack.c.b16 %v2507, %v2506
        %v2519 = vpack.c.b16 %v2509, %v2508
        %v2520 = vpack.c.b16 %v2511, %v2510
        %v2521 = vpack.c.b16 %v2513, %v2512
        %2522 = vrot.lane.b32.xlu0 %v2514, 112
        %v2523 = vpop.permute.xlu0 %2522
        %2524 = vrot.lane.b32.xlu0 %v2515, 112
        %v2525 = vpop.permute.xlu0 %2524
        %2526 = vrot.lane.b32.xlu0 %v2516, 112
        %v2527 = vpop.permute.xlu0 %2526
        %2528 = vrot.lane.b32.xlu0 %v2517, 112
        %v2529 = vpop.permute.xlu0 %2528
        %2530 = vrot.lane.b32.xlu0 %v2518, 112
        %v2531 = vpop.permute.xlu0 %2530
        %2532 = vrot.lane.b32.xlu0 %v2519, 112
        %v2533 = vpop.permute.xlu0 %2532
        %2534 = vrot.lane.b32.xlu0 %v2520, 112
        %v2535 = vpop.permute.xlu0 %2534
        %2536 = vrot.lane.b32.xlu0 %v2521, 112
        %v2537 = vpop.permute.xlu0 %2536
        %v2539 = vsel %vm1628, %v2479, 0
        %v2542 = vsel %vm1628, %v2481, 0
        %v2545 = vsel %vm1628, %v2523, 0
        %v2548 = vsel %vm1628, %v2525, 0
        %v2551 = vsel %vm1628, %v2527, 0
        %v2554 = vsel %vm1628, %v2529, 0
        %v2557 = vsel %vm1628, %v2531, 0
        %v2560 = vsel %vm1628, %v2533, 0
        %v2563 = vsel %vm1628, %v2535, 0
        %v2566 = vsel %vm1628, %v2537, 0
        %2568 = vmatprep.subr.bf16.mxu0 0
        %2569 = vmatpush1.bf16.xpose.msra.mxu0 %v2545
        %2570 = vmatprep.subr.bf16.mxu0 0
        %2571 = vmatpush1.bf16.xpose.msra.mxu0 %v2548
        %2572 = vmatprep.subr.bf16.mxu0 0
        %2573 = vmatpush1.bf16.xpose.msra.mxu0 %v2551
        %2574 = vmatprep.subr.bf16.mxu0 0
        %2575 = vmatpush1.bf16.xpose.msra.mxu0 %v2554
        %2576 = vmatprep.subr.bf16.mxu0 0
        %2577 = vmatpush1.bf16.xpose.msra.mxu0 %v2557
        %2578 = vmatprep.subr.bf16.mxu0 0
        %2579 = vmatpush1.bf16.xpose.msra.mxu0 %v2560
        %2580 = vmatprep.subr.bf16.mxu0 0
        %2581 = vmatpush1.bf16.xpose.msra.mxu0 %v2563
        %2582 = vmatprep.subr.bf16.mxu0 0
        %2583 = vmatpush1.bf16.xpose.msra.mxu0 %v2566
        %2584 = vmatprep.subr.bf16.mxu0 0
        %2585 = vmatpush1.bf16.xpose.msra.mxu0 0
        %2586 = vmatprep.subr.bf16.mxu0 0
        %2587 = vmatpush1.bf16.xpose.msra.mxu0 0
        %2588 = vmatprep.subr.bf16.mxu0 0
        %2589 = vmatpush1.bf16.xpose.msra.mxu0 0
        %2590 = vmatprep.subr.bf16.mxu0 0
        %2591 = vmatpush1.bf16.xpose.msra.mxu0 0
        %2592 = vmatprep.subr.bf16.mxu0 0
        %2593 = vmatpush1.bf16.xpose.msra.mxu0 0
        %2594 = vmatprep.subr.bf16.mxu0 0
        %2595 = vmatpush1.bf16.xpose.msra.mxu0 0
        %2596 = vmatprep.subr.bf16.mxu0 0
        %2597 = vmatpush1.bf16.xpose.msra.mxu0 0
        %2598 = vmatprep.subr.bf16.mxu0 0
        %2599 = vmatpush1.bf16.xpose.msra.mxu0 0
        %2600 = vmatprep.mubr.bf16.mxu0 0
        %2601 = vmatmul.mubr.bf16.gmra.mrb[0].mxu0 %v2539
        %v2602 = vpop.f32.mrb[0].mxu0
        %v2603 = vadd.f32 %v2153, %v2602
        %v2604 = vpop.f32.mrb[0].mxu0
        %v2605 = vpop.f32.mrb[0].mxu0
        %v2606 = vadd.f32 %v2153, %v2605
        %v2607 = vpop.f32.mrb[0].mxu0
        %2608 = vmatprep.mubr.bf16.mxu0 0
        %2609 = vmatmul.mubr.bf16.gmra.mrb[0].mxu0 %v2542
        %v2610 = vpop.f32.mrb[0].mxu0
        %v2611 = vadd.f32 %v2153, %v2610
        %v2612 = vpop.f32.mrb[0].mxu0
        %v2613 = vpop.f32.mrb[0].mxu0
        %v2614 = vadd.f32 %v2153, %v2613
        %v2615 = vpop.f32.mrb[0].mxu0
        %2616 = vdwg.mxu0
        %2617 = vmax.xlane.f32.xlu0 %v2603
        %v2618 = vpop.xlane.xlu0 %2617
        %2619 = vmax.xlane.f32.xlu0 %v2606
        %v2620 = vpop.xlane.xlu0 %2619
        %2621 = vmax.xlane.f32.xlu0 %v2611
        %v2622 = vpop.xlane.xlu0 %2621
        %2623 = vmax.xlane.f32.xlu0 %v2614
        %v2624 = vpop.xlane.xlu0 %2623
        %v2625 = vsub.f32 %v2603, %v2618
        %v2626 = vsub.f32 %v2606, %v2620
        %v2627 = vsub.f32 %v2611, %v2622
        %v2628 = vsub.f32 %v2614, %v2624
        %v2629 = vmul.f32 %v2625, 1.442695
        %v2630 = vpow.pop %v2629
        %v2631 = vmul.f32 %v2626, 1.442695
        %v2632 = vpow.pop %v2631
        %v2633 = vmul.f32 %v2627, 1.442695
        %v2634 = vpow.pop %v2633
        %v2635 = vmul.f32 %v2628, 1.442695
        %v2636 = vpow.pop %v2635
        %2637 = vadd.xlane.f32.xlu0 %v2630
        %v2638 = vpop.xlane.xlu0 %2637
        %2639 = vadd.xlane.f32.xlu0 %v2632
        %v2640 = vpop.xlane.xlu0 %2639
        %2641 = vadd.xlane.f32.xlu0 %v2634
        %v2642 = vpop.xlane.xlu0 %2641
        %2643 = vadd.xlane.f32.xlu0 %v2636
        %v2644 = vpop.xlane.xlu0 %2643
        %v2645 = vrcp.pop %v2638
        %v2646 = vrcp.pop %v2640
        %v2647 = vrcp.pop %v2642
        %v2648 = vrcp.pop %v2644
        %v2649 = vmul.f32 %v2630, %v2645
        %v2650 = vmul.f32 %v2632, %v2646
        %v2651 = vmul.f32 %v2634, %v2647
        %v2652 = vmul.f32 %v2636, %v2648
        %v2653 = vpack.c.bf16 %v2650, %v2649
        %v2654 = vpack.c.bf16 %v2652, %v2651
        %v2671 = vunpack.c.l.b16 %v2460
        %v2672 = vunpack.c.l.b16 %v2461
        %v2673 = vunpack.c.l.b16 %v2462
        %v2674 = vunpack.c.l.b16 %v2463
        %v2675 = vunpack.c.l.b16 %v2464
        %v2676 = vunpack.c.l.b16 %v2465
        %v2677 = vunpack.c.l.b16 %v2466
        %v2678 = vunpack.c.l.b16 %v2467
        %v2679 = vunpack.c.l.b16 %v2468
        %v2680 = vunpack.c.l.b16 %v2469
        %v2681 = vunpack.c.l.b16 %v2470
        %v2682 = vunpack.c.l.b16 %v2471
        %v2683 = vunpack.c.l.b16 %v2472
        %v2684 = vunpack.c.l.b16 %v2473
        %v2685 = vunpack.c.l.b16 %v2474
        %v2686 = vunpack.c.l.b16 %v2475
        %v2687 = vpack.c.b16 %v2672, %v2671
        %v2688 = vpack.c.b16 %v2674, %v2673
        %v2689 = vpack.c.b16 %v2676, %v2675
        %v2690 = vpack.c.b16 %v2678, %v2677
        %v2691 = vpack.c.b16 %v2680, %v2679
        %v2692 = vpack.c.b16 %v2682, %v2681
        %v2693 = vpack.c.b16 %v2684, %v2683
        %v2694 = vpack.c.b16 %v2686, %v2685
        %2695 = vrot.lane.b32.xlu0 %v2687, 112
        %v2696 = vpop.permute.xlu0 %2695
        %2697 = vrot.lane.b32.xlu0 %v2688, 112
        %v2698 = vpop.permute.xlu0 %2697
        %2699 = vrot.lane.b32.xlu0 %v2689, 112
        %v2700 = vpop.permute.xlu0 %2699
        %2701 = vrot.lane.b32.xlu0 %v2690, 112
        %v2702 = vpop.permute.xlu0 %2701
        %2703 = vrot.lane.b32.xlu0 %v2691, 112
        %v2704 = vpop.permute.xlu0 %2703
        %2705 = vrot.lane.b32.xlu0 %v2692, 112
        %v2706 = vpop.permute.xlu0 %2705
        %2707 = vrot.lane.b32.xlu0 %v2693, 112
        %v2708 = vpop.permute.xlu0 %2707
        %2709 = vrot.lane.b32.xlu0 %v2694, 112
        %v2710 = vpop.permute.xlu0 %2709
        %2719 = vmatprep.subr.bf16.mxu0 0
        %2720 = vmatpush1.bf16.msra.mxu0 %v2696
        %2721 = vmatprep.subr.bf16.mxu0 0
        %2722 = vmatpush1.bf16.msra.mxu0 %v2698
        %2723 = vmatprep.subr.bf16.mxu0 0
        %2724 = vmatpush1.bf16.msra.mxu0 %v2700
        %2725 = vmatprep.subr.bf16.mxu0 0
        %2726 = vmatpush1.bf16.msra.mxu0 %v2702
        %2727 = vmatprep.subr.bf16.mxu0 0
        %2728 = vmatpush1.bf16.msra.mxu0 %v2704
        %2729 = vmatprep.subr.bf16.mxu0 0
        %2730 = vmatpush1.bf16.msra.mxu0 %v2706
        %2731 = vmatprep.subr.bf16.mxu0 0
        %2732 = vmatpush1.bf16.msra.mxu0 %v2708
        %2733 = vmatprep.subr.bf16.mxu0 0
        %2734 = vmatpush1.bf16.msra.mxu0 %v2710
        %2735 = vmatprep.subr.bf16.mxu0 0
        %2736 = vmatpush1.bf16.msra.mxu0 0
        %2737 = vmatprep.subr.bf16.mxu0 0
        %2738 = vmatpush1.bf16.msra.mxu0 0
        %2739 = vmatprep.subr.bf16.mxu0 0
        %2740 = vmatpush1.bf16.msra.mxu0 0
        %2741 = vmatprep.subr.bf16.mxu0 0
        %2742 = vmatpush1.bf16.msra.mxu0 0
        %2743 = vmatprep.subr.bf16.mxu0 0
        %2744 = vmatpush1.bf16.msra.mxu0 0
        %2745 = vmatprep.subr.bf16.mxu0 0
        %2746 = vmatpush1.bf16.msra.mxu0 0
        %2747 = vmatprep.subr.bf16.mxu0 0
        %2748 = vmatpush1.bf16.msra.mxu0 0
        %2749 = vmatprep.subr.bf16.mxu0 0
        %2750 = vmatpush1.bf16.msra.mxu0 0
        %2751 = vmatprep.mubr.bf16.mxu0 0
        %2752 = vmatmul.mubr.bf16.gmra.mrb[0].mxu0 %v2653
        %v2753 = vpop.f32.mrb[0].mxu0
        %v2754 = vadd.f32 0.0, %v2753
        %v2755 = vpop.f32.mrb[0].mxu0
        %v2756 = vpop.f32.mrb[0].mxu0
        %v2757 = vadd.f32 0.0, %v2756
        %v2758 = vpop.f32.mrb[0].mxu0
        %2759 = vmatprep.mubr.bf16.mxu0 0
        %2760 = vmatmul.mubr.bf16.gmra.mrb[0].mxu0 %v2654
        %v2761 = vpop.f32.mrb[0].mxu0
        %v2762 = vadd.f32 0.0, %v2761
        %v2763 = vpop.f32.mrb[0].mxu0
        %v2764 = vpop.f32.mrb[0].mxu0
        %v2765 = vadd.f32 0.0, %v2764
        %v2766 = vpop.f32.mrb[0].mxu0
        %2767 = vdwg.mxu0
        %v2768 = vpack.c.bf16 %v2757, %v2754
        %v2769 = vpack.c.bf16 %v2765, %v2762
        %2772 = vrot.lane.b32.xlu0 %v2768, 16
        %v2773 = vpop.permute.xlu0 %2772
        %2774 = vrot.lane.b32.xlu0 %v2769, 16
        %v2775 = vpop.permute.xlu0 %2774
        %2778 = vst.msk [vmem:[#allocation2] sm:$0xff] %vm1910, %v2773
        %2779 = vst.msk [vmem:[#allocation2 + $0x8] sm:$0xff] %vm1910, %v2775
        %v2780 = vld [vmem:[#allocation2] sm:$0xff]
        %v2781 = vld [vmem:[#allocation2 + $0x8] sm:$0xff]
        %v2782 = vld [vmem:[#allocation26] sm:$0xf]
        %v2783 = vld [vmem:[#allocation26 + $0x4] sm:$0xf]
        %v2784 = vld [vmem:[#allocation26 + $0x8] sm:$0xf]
        %v2785 = vld [vmem:[#allocation26 + $0xc] sm:$0xf]
        %v2790 = vunpack.c.l.b16 %v2782
        %v2791 = vunpack.c.l.b16 %v2783
        %v2792 = vunpack.c.l.b16 %v2784
        %v2793 = vunpack.c.l.b16 %v2785
        %v2794 = vpack.c.b16 %v2791, %v2790
        %v2795 = vpack.c.b16 %v2793, %v2792
        %v2799 = vsel %vm1219, %v2780, 0
        %v2802 = vsel %vm1219, %v2781, 0
        %2804 = vmatprep.subr.bf16.mxu0 0
        %2805 = vmatpush1.bf16.msra.mxu0 %v2794
        %2806 = vmatprep.subr.bf16.mxu0 0
        %2807 = vmatpush1.bf16.msra.mxu0 %v2795
        %2808 = vmatprep.subr.bf16.mxu0 0
        %2809 = vmatpush1.bf16.msra.mxu0 0
        %2810 = vmatprep.subr.bf16.mxu0 0
        %2811 = vmatpush1.bf16.msra.mxu0 0
        %2812 = vmatprep.subr.bf16.mxu0 0
        %2813 = vmatpush1.bf16.msra.mxu0 0
        %2814 = vmatprep.subr.bf16.mxu0 0
        %2815 = vmatpush1.bf16.msra.mxu0 0
        %2816 = vmatprep.subr.bf16.mxu0 0
        %2817 = vmatpush1.bf16.msra.mxu0 0
        %2818 = vmatprep.subr.bf16.mxu0 0
        %2819 = vmatpush1.bf16.msra.mxu0 0
        %2820 = vmatprep.subr.bf16.mxu0 0
        %2821 = vmatpush1.bf16.msra.mxu0 0
        %2822 = vmatprep.subr.bf16.mxu0 0
        %2823 = vmatpush1.bf16.msra.mxu0 0
        %2824 = vmatprep.subr.bf16.mxu0 0
        %2825 = vmatpush1.bf16.msra.mxu0 0
        %2826 = vmatprep.subr.bf16.mxu0 0
        %2827 = vmatpush1.bf16.msra.mxu0 0
        %2828 = vmatprep.subr.bf16.mxu0 0
        %2829 = vmatpush1.bf16.msra.mxu0 0
        %2830 = vmatprep.subr.bf16.mxu0 0
        %2831 = vmatpush1.bf16.msra.mxu0 0
        %2832 = vmatprep.subr.bf16.mxu0 0
        %2833 = vmatpush1.bf16.msra.mxu0 0
        %2834 = vmatprep.subr.bf16.mxu0 0
        %2835 = vmatpush1.bf16.msra.mxu0 0
        %2836 = vmatprep.mubr.bf16.mxu0 0
        %2837 = vmatmul.mubr.bf16.gmra.mrb[0].mxu0 %v2799
        %v2838 = vpop.f32.mrb[0].mxu0
        %v2839 = vadd.f32 0.0, %v2838
        %v2840 = vpop.f32.mrb[0].mxu0
        %v2841 = vpop.f32.mrb[0].mxu0
        %v2842 = vadd.f32 0.0, %v2841
        %v2843 = vpop.f32.mrb[0].mxu0
        %2844 = vmatprep.mubr.bf16.mxu0 0
        %2845 = vmatmul.mubr.bf16.gmra.mrb[0].mxu0 %v2802
        %v2846 = vpop.f32.mrb[0].mxu0
        %v2847 = vadd.f32 0.0, %v2846
        %v2848 = vpop.f32.mrb[0].mxu0
        %v2849 = vpop.f32.mrb[0].mxu0
        %v2850 = vadd.f32 0.0, %v2849
        %v2851 = vpop.f32.mrb[0].mxu0
        %2852 = vdwg.mxu0
        %v2853 = vadd.f32 %v1997, %v2839
        %v2854 = vadd.f32 %v1998, %v2842
        %v2855 = vadd.f32 %v1999, %v2847
        %v2856 = vadd.f32 %v2000, %v2850
        %v2857 = vld [vmem:[#allocation27] sm:$0x1]
        %v2859 = vlaneseq
        %v2860 = vshrl.u32 %v2859, 7
        %v2861 = vsub.s32 0, %v2860
        %v2862 = vrot.slane %v2857, %v2861
        %v2864 = vadd.f32 %v2853, %v2862
        %v2865 = vadd.f32 %v2854, %v2862
        %v2866 = vadd.f32 %v2855, %v2862
        %v2867 = vadd.f32 %v2856, %v2862
        %v2868 = vsel %vm1219, %v2864, 0.0
        %2869 = vadd.xlane.f32.xlu0 %v2868
        %v2870 = vpop.xlane.xlu0 %2869
        %v2871 = vsel %vm1219, %v2865, 0.0
        %2872 = vadd.xlane.f32.xlu0 %v2871
        %v2873 = vpop.xlane.xlu0 %2872
        %v2874 = vsel %vm1219, %v2866, 0.0
        %2875 = vadd.xlane.f32.xlu0 %v2874
        %v2876 = vpop.xlane.xlu0 %2875
        %v2877 = vsel %vm1219, %v2867, 0.0
        %2878 = vadd.xlane.f32.xlu0 %v2877
        %v2879 = vpop.xlane.xlu0 %2878
        %v2880 = vmul.f32 %v2870, %v1232
        %v2881 = vmul.f32 %v2873, %v1232
        %v2882 = vmul.f32 %v2876, %v1232
        %v2883 = vmul.f32 %v2879, %v1232
        %v2884 = vsub.f32 %v2864, %v2880
        %v2885 = vsub.f32 %v2865, %v2881
        %v2886 = vsub.f32 %v2866, %v2882
        %v2887 = vsub.f32 %v2867, %v2883
        %v2888 = vmul.f32 %v2884, %v2884
        %v2889 = vmul.f32 %v2885, %v2885
        %v2890 = vmul.f32 %v2886, %v2886
        %v2891 = vmul.f32 %v2887, %v2887
        %v2892 = vsel %vm1219, %v2888, 0.0
        %2893 = vadd.xlane.f32.xlu0 %v2892
        %v2894 = vpop.xlane.xlu0 %2893
        %v2895 = vsel %vm1219, %v2889, 0.0
        %2896 = vadd.xlane.f32.xlu0 %v2895
        %v2897 = vpop.xlane.xlu0 %2896
        %v2898 = vsel %vm1219, %v2890, 0.0
        %2899 = vadd.xlane.f32.xlu0 %v2898
        %v2900 = vpop.xlane.xlu0 %2899
        %v2901 = vsel %vm1219, %v2891, 0.0
        %2902 = vadd.xlane.f32.xlu0 %v2901
        %v2903 = vpop.xlane.xlu0 %2902
        %v2904 = vmul.f32 %v2894, %v1232
        %v2905 = vmul.f32 %v2897, %v1232
        %v2906 = vmul.f32 %v2900, %v1232
        %v2907 = vmul.f32 %v2903, %v1232
        %v2908 = vadd.f32 %v2904, 1e-05
        %v2909 = vadd.f32 %v2905, 1e-05
        %v2910 = vadd.f32 %v2906, 1e-05
        %v2911 = vadd.f32 %v2907, 1e-05
        %v2912 = vrsqrt.pop %v2908
        %v2913 = vrsqrt.pop %v2909
        %v2914 = vrsqrt.pop %v2910
        %v2915 = vrsqrt.pop %v2911
        %v2916 = vmul.f32 %v2884, %v2912
        %v2917 = vmul.f32 %v2885, %v2913
        %v2918 = vmul.f32 %v2886, %v2914
        %v2919 = vmul.f32 %v2887, %v2915
        %v2920 = vld [vmem:[#allocation29] sm:$0x1]
        %v2922 = vlaneseq
        %v2923 = vshrl.u32 %v2922, 7
        %v2924 = vsub.s32 0, %v2923
        %v2925 = vrot.slane %v2920, %v2924
        %v2927 = vmul.f32 %v2916, %v2925
        %v2928 = vmul.f32 %v2917, %v2925
        %v2929 = vmul.f32 %v2918, %v2925
        %v2930 = vmul.f32 %v2919, %v2925
        %v2931 = vld [vmem:[#allocation30] sm:$0x1]
        %v2933 = vlaneseq
        %v2934 = vshrl.u32 %v2933, 7
        %v2935 = vsub.s32 0, %v2934
        %v2936 = vrot.slane %v2931, %v2935
        %v2938 = vadd.f32 %v2927, %v2936
        %v2939 = vadd.f32 %v2928, %v2936
        %v2940 = vadd.f32 %v2929, %v2936
        %v2941 = vadd.f32 %v2930, %v2936
        %v2942 = vpack.c.bf16 %v2939, %v2938
        %v2943 = vpack.c.bf16 %v2941, %v2940
        %v2944 = vld [vmem:[#allocation32] sm:$0xff]
        %v2945 = vld [vmem:[#allocation32 + $0x8] sm:$0xff]
        %v2946 = vld [vmem:[#allocation32 + $0x10] sm:$0xff]
        %v2947 = vld [vmem:[#allocation32 + $0x18] sm:$0xff]
        %v2948 = vld [vmem:[#allocation33] sm:$0x3]
        %v2950 = vlaneseq
        %v2951 = vshrl.u32 %v2950, 7
        %v2952 = vsub.s32 0, %v2951
        %v2953 = vrot.slane %v2948, %v2952
        %v2954 = vlaneseq
        %v2955 = vshrl.u32 %v2954, 7
        %v2956 = vsub.s32 1, %v2955
        %v2957 = vrot.slane %v2948, %v2956
        %v2964 = vunpack.c.l.b16 %v2944
        %v2965 = vunpack.c.h.b16 %v2944
        %v2966 = vunpack.c.l.b16 %v2945
        %v2967 = vunpack.c.h.b16 %v2945
        %v2968 = vunpack.c.l.b16 %v2946
        %v2969 = vunpack.c.h.b16 %v2946
        %v2970 = vunpack.c.l.b16 %v2947
        %v2971 = vunpack.c.h.b16 %v2947
        %v2972 = vpack.c.b16 %v2966, %v2964
        %v2973 = vpack.c.b16 %v2967, %v2965
        %v2974 = vpack.c.b16 %v2970, %v2968
        %v2975 = vpack.c.b16 %v2971, %v2969
        %v2981 = vsel %vm1219, %v2942, 0
        %v2984 = vsel %vm1219, %v2943, 0
        %2986 = vmatprep.subr.bf16.mxu0 %v2973
        %2987 = vmatpush1.bf16.msra.mxu0 %v2972
        %2988 = vmatprep.subr.bf16.mxu0 %v2975
        %2989 = vmatpush1.bf16.msra.mxu0 %v2974
        %2990 = vmatprep.subr.bf16.mxu0 0
        %2991 = vmatpush1.bf16.msra.mxu0 0
        %2992 = vmatprep.subr.bf16.mxu0 0
        %2993 = vmatpush1.bf16.msra.mxu0 0
        %2994 = vmatprep.subr.bf16.mxu0 0
        %2995 = vmatpush1.bf16.msra.mxu0 0
        %2996 = vmatprep.subr.bf16.mxu0 0
        %2997 = vmatpush1.bf16.msra.mxu0 0
        %2998 = vmatprep.subr.bf16.mxu0 0
        %2999 = vmatpush1.bf16.msra.mxu0 0
        %3000 = vmatprep.subr.bf16.mxu0 0
        %3001 = vmatpush1.bf16.msra.mxu0 0
        %3002 = vmatprep.subr.bf16.mxu0 0
        %3003 = vmatpush1.bf16.msra.mxu0 0
        %3004 = vmatprep.subr.bf16.mxu0 0
        %3005 = vmatpush1.bf16.msra.mxu0 0
        %3006 = vmatprep.subr.bf16.mxu0 0
        %3007 = vmatpush1.bf16.msra.mxu0 0
        %3008 = vmatprep.subr.bf16.mxu0 0
        %3009 = vmatpush1.bf16.msra.mxu0 0
        %3010 = vmatprep.subr.bf16.mxu0 0
        %3011 = vmatpush1.bf16.msra.mxu0 0
        %3012 = vmatprep.subr.bf16.mxu0 0
        %3013 = vmatpush1.bf16.msra.mxu0 0
        %3014 = vmatprep.subr.bf16.mxu0 0
        %3015 = vmatpush1.bf16.msra.mxu0 0
        %3016 = vmatprep.subr.bf16.mxu0 0
        %3017 = vmatpush1.bf16.msra.mxu0 0
        %3018 = vmatprep.mubr.bf16.mxu0 0
        %3019 = vmatmul.mubr.bf16.gmra.mrb[0].mxu0 %v2981
        %v3020 = vpop.f32.mrb[0].mxu0
        %v3021 = vadd.f32 %v2953, %v3020
        %v3022 = vpop.f32.mrb[0].mxu0
        %v3023 = vadd.f32 %v2957, %v3022
        %v3024 = vpop.f32.mrb[0].mxu0
        %v3025 = vadd.f32 %v2953, %v3024
        %v3026 = vpop.f32.mrb[0].mxu0
        %v3027 = vadd.f32 %v2957, %v3026
        %3028 = vmatprep.mubr.bf16.mxu0 0
        %3029 = vmatmul.mubr.bf16.gmra.mrb[0].mxu0 %v2984
        %v3030 = vpop.f32.mrb[0].mxu0
        %v3031 = vadd.f32 %v2953, %v3030
        %v3032 = vpop.f32.mrb[0].mxu0
        %v3033 = vadd.f32 %v2957, %v3032
        %v3034 = vpop.f32.mrb[0].mxu0
        %v3035 = vadd.f32 %v2953, %v3034
        %v3036 = vpop.f32.mrb[0].mxu0
        %v3037 = vadd.f32 %v2957, %v3036
        %3038 = vdwg.mxu0
        %v3039 = vmul.f32 %v3023, %v3023
        %v3040 = vmul.f32 %v3027, %v3027
        %v3041 = vmul.f32 %v3033, %v3033
        %v3042 = vmul.f32 %v3037, %v3037
        %v3043 = vmul.f32 %v3023, %v3039
        %v3044 = vmul.f32 %v3027, %v3040
        %v3045 = vmul.f32 %v3033, %v3041
        %v3046 = vmul.f32 %v3037, %v3042
        %v3047 = vmul.f32 %v3043, 0.044715
        %v3048 = vmul.f32 %v3044, 0.044715
        %v3049 = vmul.f32 %v3045, 0.044715
        %v3050 = vmul.f32 %v3046, 0.044715
        %v3051 = vadd.f32 %v3023, %v3047
        %v3052 = vadd.f32 %v3027, %v3048
        %v3053 = vadd.f32 %v3033, %v3049
        %v3054 = vadd.f32 %v3037, %v3050
        %v3055 = vmul.f32 %v3051, 0.7978846
        %v3056 = vmul.f32 %v3052, 0.7978846
        %v3057 = vmul.f32 %v3053, 0.7978846
        %v3058 = vmul.f32 %v3054, 0.7978846
        %v3059 = vtanh.pop %v3055
        %v3060 = vtanh.pop %v3056
        %v3061 = vtanh.pop %v3057
        %v3062 = vtanh.pop %v3058
        %v3063 = vadd.f32 %v3059, 1.0
        %v3064 = vadd.f32 %v3060, 1.0
        %v3065 = vadd.f32 %v3061, 1.0
        %v3066 = vadd.f32 %v3062, 1.0
        %v3067 = vmul.f32 %v3063, 0.5
        %v3068 = vmul.f32 %v3064, 0.5
        %v3069 = vmul.f32 %v3065, 0.5
        %v3070 = vmul.f32 %v3066, 0.5
        %v3071 = vmul.f32 %v3023, %v3067
        %v3072 = vmul.f32 %v3027, %v3068
        %v3073 = vmul.f32 %v3033, %v3069
        %v3074 = vmul.f32 %v3037, %v3070
        %v3075 = vmul.f32 %v3021, %v3071
        %v3076 = vmul.f32 %v3025, %v3072
        %v3077 = vmul.f32 %v3031, %v3073
        %v3078 = vmul.f32 %v3035, %v3074
        %v3079 = vpack.c.bf16 %v3076, %v3075
        %v3080 = vpack.c.bf16 %v3078, %v3077
        %v3081 = vld [vmem:[#allocation35] sm:$0xf]
        %v3082 = vld [vmem:[#allocation35 + $0x4] sm:$0xf]
        %v3083 = vld [vmem:[#allocation35 + $0x8] sm:$0xf]
        %v3084 = vld [vmem:[#allocation35 + $0xc] sm:$0xf]
        %v3085 = vld [vmem:[#allocation35 + $0x10] sm:$0xf]
        %v3086 = vld [vmem:[#allocation35 + $0x14] sm:$0xf]
        %v3087 = vld [vmem:[#allocation35 + $0x18] sm:$0xf]
        %v3088 = vld [vmem:[#allocation35 + $0x1c] sm:$0xf]
        %v3089 = vld [vmem:[#allocation35 + $0x20] sm:$0xf]
        %v3090 = vld [vmem:[#allocation35 + $0x24] sm:$0xf]
        %v3091 = vld [vmem:[#allocation35 + $0x28] sm:$0xf]
        %v3092 = vld [vmem:[#allocation35 + $0x2c] sm:$0xf]
        %v3093 = vld [vmem:[#allocation35 + $0x30] sm:$0xf]
        %v3094 = vld [vmem:[#allocation35 + $0x34] sm:$0xf]
        %v3095 = vld [vmem:[#allocation35 + $0x38] sm:$0xf]
        %v3096 = vld [vmem:[#allocation35 + $0x3c] sm:$0xf]
        %v3113 = vunpack.c.l.b16 %v3081
        %v3114 = vunpack.c.l.b16 %v3082
        %v3115 = vunpack.c.l.b16 %v3083
        %v3116 = vunpack.c.l.b16 %v3084
        %v3117 = vunpack.c.l.b16 %v3085
        %v3118 = vunpack.c.l.b16 %v3086
        %v3119 = vunpack.c.l.b16 %v3087
        %v3120 = vunpack.c.l.b16 %v3088
        %v3121 = vunpack.c.l.b16 %v3089
        %v3122 = vunpack.c.l.b16 %v3090
        %v3123 = vunpack.c.l.b16 %v3091
        %v3124 = vunpack.c.l.b16 %v3092
        %v3125 = vunpack.c.l.b16 %v3093
        %v3126 = vunpack.c.l.b16 %v3094
        %v3127 = vunpack.c.l.b16 %v3095
        %v3128 = vunpack.c.l.b16 %v3096
        %v3129 = vpack.c.b16 %v3114, %v3113
        %v3130 = vpack.c.b16 %v3116, %v3115
        %v3131 = vpack.c.b16 %v3118, %v3117
        %v3132 = vpack.c.b16 %v3120, %v3119
        %v3133 = vpack.c.b16 %v3122, %v3121
        %v3134 = vpack.c.b16 %v3124, %v3123
        %v3135 = vpack.c.b16 %v3126, %v3125
        %v3136 = vpack.c.b16 %v3128, %v3127
        %3145 = vmatprep.subr.bf16.mxu0 0
        %3146 = vmatpush1.bf16.msra.mxu0 %v3129
        %3147 = vmatprep.subr.bf16.mxu0 0
        %3148 = vmatpush1.bf16.msra.mxu0 %v3130
        %3149 = vmatprep.subr.bf16.mxu0 0
        %3150 = vmatpush1.bf16.msra.mxu0 %v3131
        %3151 = vmatprep.subr.bf16.mxu0 0
        %3152 = vmatpush1.bf16.msra.mxu0 %v3132
        %3153 = vmatprep.subr.bf16.mxu0 0
        %3154 = vmatpush1.bf16.msra.mxu0 %v3133
        %3155 = vmatprep.subr.bf16.mxu0 0
        %3156 = vmatpush1.bf16.msra.mxu0 %v3134
        %3157 = vmatprep.subr.bf16.mxu0 0
        %3158 = vmatpush1.bf16.msra.mxu0 %v3135
        %3159 = vmatprep.subr.bf16.mxu0 0
        %3160 = vmatpush1.bf16.msra.mxu0 %v3136
        %3161 = vmatprep.subr.bf16.mxu0 0
        %3162 = vmatpush1.bf16.msra.mxu0 0
        %3163 = vmatprep.subr.bf16.mxu0 0
        %3164 = vmatpush1.bf16.msra.mxu0 0
        %3165 = vmatprep.subr.bf16.mxu0 0
        %3166 = vmatpush1.bf16.msra.mxu0 0
        %3167 = vmatprep.subr.bf16.mxu0 0
        %3168 = vmatpush1.bf16.msra.mxu0 0
        %3169 = vmatprep.subr.bf16.mxu0 0
        %3170 = vmatpush1.bf16.msra.mxu0 0
        %3171 = vmatprep.subr.bf16.mxu0 0
        %3172 = vmatpush1.bf16.msra.mxu0 0
        %3173 = vmatprep.subr.bf16.mxu0 0
        %3174 = vmatpush1.bf16.msra.mxu0 0
        %3175 = vmatprep.subr.bf16.mxu0 0
        %3176 = vmatpush1.bf16.msra.mxu0 0
        %3177 = vmatprep.mubr.bf16.mxu0 0
        %3178 = vmatmul.mubr.bf16.gmra.mrb[0].mxu0 %v3079
        %v3179 = vpop.f32.mrb[0].mxu0
        %v3180 = vadd.f32 0.0, %v3179
        %v3181 = vpop.f32.mrb[0].mxu0
        %v3182 = vpop.f32.mrb[0].mxu0
        %v3183 = vadd.f32 0.0, %v3182
        %v3184 = vpop.f32.mrb[0].mxu0
        %3185 = vmatprep.mubr.bf16.mxu0 0
        %3186 = vmatmul.mubr.bf16.gmra.mrb[0].mxu0 %v3080
        %v3187 = vpop.f32.mrb[0].mxu0
        %v3188 = vadd.f32 0.0, %v3187
        %v3189 = vpop.f32.mrb[0].mxu0
        %v3190 = vpop.f32.mrb[0].mxu0
        %v3191 = vadd.f32 0.0, %v3190
        %v3192 = vpop.f32.mrb[0].mxu0
        %3193 = vdwg.mxu0
        %v3194 = vadd.f32 %v2864, %v3180
        %v3195 = vadd.f32 %v2865, %v3183
        %v3196 = vadd.f32 %v2866, %v3188
        %v3197 = vadd.f32 %v2867, %v3191
        %v3198 = vld [vmem:[#allocation36] sm:$0x1]
        %v3200 = vlaneseq
        %v3201 = vshrl.u32 %v3200, 7
        %v3202 = vsub.s32 0, %v3201
        %v3203 = vrot.slane %v3198, %v3202
        %v3205 = vadd.f32 %v3194, %v3203
        %v3206 = vadd.f32 %v3195, %v3203
        %v3207 = vadd.f32 %v3196, %v3203
        %v3208 = vadd.f32 %v3197, %v3203
        %v3209 = vpack.c.bf16 %v3206, %v3205
        %v3210 = vpack.c.bf16 %v3208, %v3207
        %v3211 = vld [vmem:[#allocation38] sm:$0xf]
        %v3212 = vld [vmem:[#allocation38 + $0x4] sm:$0xf]
        %v3213 = vld [vmem:[#allocation38 + $0x8] sm:$0xf]
        %v3214 = vld [vmem:[#allocation38 + $0xc] sm:$0xf]
        %v3215 = vld [vmem:[#allocation39] sm:$0x1]
        %v3217 = vlaneseq
        %v3218 = vshrl.u32 %v3217, 7
        %v3219 = vsub.s32 0, %v3218
        %v3220 = vrot.slane %v3215, %v3219
        %v3226 = vunpack.c.l.b16 %v3211
        %v3227 = vunpack.c.l.b16 %v3212
        %v3228 = vunpack.c.l.b16 %v3213
        %v3229 = vunpack.c.l.b16 %v3214
        %v3230 = vpack.c.b16 %v3227, %v3226
        %v3231 = vpack.c.b16 %v3229, %v3228
        %v3235 = vsel %vm1219, %v3209, 0
        %v3238 = vsel %vm1219, %v3210, 0
        %3240 = vmatprep.subr.bf16.mxu0 0
        %3241 = vmatpush1.bf16.msra.mxu0 %v3230
        %3242 = vmatprep.subr.bf16.mxu0 0
        %3243 = vmatpush1.bf16.msra.mxu0 %v3231
        %3244 = vmatprep.subr.bf16.mxu0 0
        %3245 = vmatpush1.bf16.msra.mxu0 0
        %3246 = vmatprep.subr.bf16.mxu0 0
        %3247 = vmatpush1.bf16.msra.mxu0 0
        %3248 = vmatprep.subr.bf16.mxu0 0
        %3249 = vmatpush1.bf16.msra.mxu0 0
        %3250 = vmatprep.subr.bf16.mxu0 0
        %3251 = vmatpush1.bf16.msra.mxu0 0
        %3252 = vmatprep.subr.bf16.mxu0 0
        %3253 = vmatpush1.bf16.msra.mxu0 0
        %3254 = vmatprep.subr.bf16.mxu0 0
        %3255 = vmatpush1.bf16.msra.mxu0 0
        %3256 = vmatprep.subr.bf16.mxu0 0
        %3257 = vmatpush1.bf16.msra.mxu0 0
        %3258 = vmatprep.subr.bf16.mxu0 0
        %3259 = vmatpush1.bf16.msra.mxu0 0
        %3260 = vmatprep.subr.bf16.mxu0 0
        %3261 = vmatpush1.bf16.msra.mxu0 0
        %3262 = vmatprep.subr.bf16.mxu0 0
        %3263 = vmatpush1.bf16.msra.mxu0 0
        %3264 = vmatprep.subr.bf16.mxu0 0
        %3265 = vmatpush1.bf16.msra.mxu0 0
        %3266 = vmatprep.subr.bf16.mxu0 0
        %3267 = vmatpush1.bf16.msra.mxu0 0
        %3268 = vmatprep.subr.bf16.mxu0 0
        %3269 = vmatpush1.bf16.msra.mxu0 0
        %3270 = vmatprep.subr.bf16.mxu0 0
        %3271 = vmatpush1.bf16.msra.mxu0 0
        %3272 = vmatprep.mubr.bf16.mxu0 0
        %3273 = vmatmul.mubr.bf16.gmra.mrb[0].mxu0 %v3235
        %v3274 = vpop.f32.mrb[0].mxu0
        %v3275 = vadd.f32 %v3220, %v3274
        %v3276 = vpop.f32.mrb[0].mxu0
        %v3277 = vpop.f32.mrb[0].mxu0
        %v3278 = vadd.f32 %v3220, %v3277
        %v3279 = vpop.f32.mrb[0].mxu0
        %3280 = vmatprep.mubr.bf16.mxu0 0
        %3281 = vmatmul.mubr.bf16.gmra.mrb[0].mxu0 %v3238
        %v3282 = vpop.f32.mrb[0].mxu0
        %v3283 = vadd.f32 %v3220, %v3282
        %v3284 = vpop.f32.mrb[0].mxu0
        %v3285 = vpop.f32.mrb[0].mxu0
        %v3286 = vadd.f32 %v3220, %v3285
        %v3287 = vpop.f32.mrb[0].mxu0
        %3288 = vdwg.mxu0
        %v3289 = vld [vmem:[%s1004] sm:$0xff]
        %v3290 = vld [vmem:[%s1004 + $0x8] sm:$0xff]
        %v3291 = vld [vmem:[%s1004 + $0x10] sm:$0xff]
        %v3292 = vld [vmem:[%s1004 + $0x18] sm:$0xff]
        %v3293 = vadd.f32 %v3275, %v3289
        %v3294 = vadd.f32 %v3278, %v3290
        %v3295 = vadd.f32 %v3283, %v3291
        %v3296 = vadd.f32 %v3286, %v3292
        %3297 = vst [vmem:[%s1210] sm:$0xff] %v3293
        %3298 = vst [vmem:[%s1210 + $0x8] sm:$0xff] %v3294
        %3299 = vst [vmem:[%s1210 + $0x10] sm:$0xff] %v3295
        %3300 = vst [vmem:[%s1210 + $0x18] sm:$0xff] %v3296
        %s3301 = sand.u32 %s619, 1
        %s3302 = scalar_lea.sflag [#allocation5], %s3301
        %s3303 = sand.u32 %s619, 1
        %s3304 = smul.addr %s3303, 32
        %s3305 = scalar_lea.vmem [#allocation41], %s3304
        // Predicated region
        $region227: #{spatial_transformer_forward.3} parent=115 // pred_check
          %p3306 = pneg %p629
        $region228: #{spatial_transformer_forward.3} parent=115 // pred_check_branch
          %3308 = sbr.rel (%p3306) target = $region230
        $region229: #{spatial_transformer_forward.3} parent=115 // pred_region
          %s3309 = smul.u32 4, %s64
          %s3311 = ssub.s32 512, 512
          %3312 = vsyncadd %s3302, %s3311
          %s3313 = smul.addr %s63, 8
          %s3314 = sadd.s32 %s3309, %s3313
          %s3315 = smul.addr %s3314, 128
          %s3316 = scalar_lea.hbm %s24, %s3315
          %s3317 = sshll.u32 %s3305, 4
          %s3318 = int_to_ptr.vmem [resolvable:$true] %s3317
          %3323 = dma.vmem_to_hbm [thread:$0]  %s3318, 512, %s3316, %s3302, 128, 128, 8
        $region230: #{spatial_transformer_forward.3} parent=115 // pred_fallthru
          _
      $region116: #{spatial_transformer_forward.3} parent=5 // pred_fallthru
        _
      %p3324 = scmp.le.s32.totalorder 2, %s54
      // Predicated region
      $region231: #{spatial_transformer_forward.3} parent=5 // pred_check
        %p3325 = pneg %p3324
      $region232: #{spatial_transformer_forward.3} parent=5 // pred_check_branch
        %3327 = sbr.rel (%p3325) target = $region234
      $region233: #{spatial_transformer_forward.3} parent=5 // pred_region
        %s3328 = ssub.s32 %s54, 2
        // Predicated region
        $region235: #{spatial_transformer_forward.3} parent=233 // pred_check
          %p3329 = pneg %p635
        $region236: #{spatial_transformer_forward.3} parent=233 // pred_check_branch
          %3331 = sbr.rel (%p3329) target = $region238
        $region237: #{spatial_transformer_forward.3} parent=233 // pred_region
          %s3332 = sand.u32 %s620, 1
          %s3333 = scalar_lea.sflag [#allocation5], %s3332
          %s3334 = sand.u32 %s620, 1
          %s3335 = smul.addr %s3334, 32
          %s3336 = scalar_lea.vmem [#allocation41], %s3335
          %3337 = dma.done %s3333, 512
        $region238: #{spatial_transformer_forward.3} parent=233 // pred_fallthru
          _
      $region234: #{spatial_transformer_forward.3} parent=5 // pred_fallthru
        _
    $region6: #{spatial_transformer_forward.3} parent=1 // loop_footer
      %s58 = sadd.s32 1, %s54
    $region7: #{spatial_transformer_forward.3} parent=1 // loop_footer_branch
      %53 = sbr.rel target = $region3
    $region8: #{spatial_transformer_forward.3} parent=1 // loop_exit
      _
    %3338 = vsyncpa [#allocation4], 1
    %s3339 = scalar_lea.sflag [#allocation4], 1
    %3340 = vsyncpa %s3339, 1
    %3341 = vsyncpa [#allocation7], 1
    %s3342 = scalar_lea.sflag [#allocation7], 1
    %3343 = vsyncpa %s3342, 1
    %3344 = vsyncpa [#allocation10], 1
    %s3345 = scalar_lea.sflag [#allocation10], 1
    %3346 = vsyncpa %s3345, 1
    %3347 = vsyncpa [#allocation13], 1
    %s3348 = scalar_lea.sflag [#allocation13], 1
    %3349 = vsyncpa %s3348, 1
    %3350 = vsyncpa [#allocation16], 1
    %3351 = vsyncpa [#allocation19], 1
    %3352 = vsyncpa [#allocation22], 1
    %3353 = vsyncpa [#allocation25], 1
    %3354 = vsyncpa [#allocation28], 1
    %3355 = vsyncpa [#allocation31], 1
    %3356 = vsyncpa [#allocation34], 1
    %3357 = vsyncpa [#allocation37], 1
    %3358 = vsyncpa [#allocation40], 1
    %3359 = vsyncpa [#allocation5], 1
    %s3360 = scalar_lea.sflag [#allocation5], 1
    %3361 = vsyncpa %s3360, 1

</llo_original>
